<compile_context>
chip_gen: v6e
topology: v6e:2x2x1
jax: 0.10.0
libtpu: 0.0.40
codegen_flags: <defaults>
</compile_context>

<pallas_src>
import functools

import jax
import jax.numpy as jnp
from jax.experimental import pallas as pl
from jax.experimental.pallas import tpu as pltpu


# ----------------------------------------------------------------------------
# Fused whole-stack kernel. grid = (batch_blocks, n_layers); one grid step is
# one bottleneck layer applied to one batch block, with the activation held in
# a VMEM scratch across the layer axis.
# ----------------------------------------------------------------------------
def _se_stack_kernel(x_ref, w1ds_ref, w2_ref, w3_ref, sew1_ref, sew2_ref,
                     s1_ref, b1_ref, s2_ref, b2_ref, s3_ref, b3_ref,
                     dsb_ref, flag_ref, o_ref, act_ref, pad_ref, *, d):
    BB, H, W, Cpad = x_ref.shape
    width = w3_ref.shape[1]
    Cout = w3_ref.shape[2]
    HW = H * W
    M = BB * HW
    Hp = H + 2 * d
    Wp = W + 2 * d
    bf16 = jnp.bfloat16

    l = pl.program_id(1)
    n_layers = pl.num_programs(1)

    # ---- layer 0 of each batch block: init resident activation + halo -------
    @pl.when(l == 0)
    def _():
        act_ref[...] = x_ref[...].reshape(M, Cpad)
        # Zero only the halo border strips; the interior is fully overwritten
        # each layer and nothing ever writes the halo, so it stays zero for
        # every layer of this (and following) batch blocks on this core.
        zrow = jnp.zeros((BB, d, Wp, width), bf16)
        pad_ref[:, :d, :, :] = zrow
        pad_ref[:, Hp - d:, :, :] = zrow
        zcol = jnp.zeros((BB, H, d, width), bf16)
        pad_ref[:, d:d + H, :d, :] = zcol
        pad_ref[:, d:d + H, Wp - d:, :] = zcol

    xin = act_ref[...]                              # (M, Cpad) f32
    xin_bf = xin.astype(bf16)

    # ---- conv1 (1x1) fused with the downsample 1x1 conv (shared LHS) ---------
    r = jnp.dot(xin_bf, w1ds_ref[0], preferred_element_type=jnp.float32)
    h1 = r[:, :width]                               # conv1 raw output (M, width)
    ds = r[:, width:width + Cout] + dsb_ref[0]      # downsample output (M, Cout)

    h1 = jnp.maximum(h1 * s1_ref[0] + b1_ref[0], 0.0)     # bn1 + relu

    # ---- conv2 (3x3, dilation d): zero-halo scratch + 9 accumulating matmuls -
    pad_ref[:, d:d + H, d:d + W, :] = h1.reshape(BB, H, W, width).astype(bf16)

    h2 = None
    for k in range(9):
        ky, kx = divmod(k, 3)
        tap = pad_ref[:, ky * d:ky * d + H, kx * d:kx * d + W, :]
        part = jnp.dot(tap.reshape(M, width), w2_ref[0, k],
                       preferred_element_type=jnp.float32)
        h2 = part if h2 is None else h2 + part
    h2 = jnp.maximum(h2 * s2_ref[0] + b2_ref[0], 0.0)      # bn2 + relu

    # ---- conv3 (1x1) + bn3 ----------------------------------------------------
    out = jnp.dot(h2.astype(bf16), w3_ref[0], preferred_element_type=jnp.float32)
    out = out * s3_ref[0] + b3_ref[0]               # (M, Cout) f32

    # ---- Squeeze-Excitation: GAP -> fc -> relu -> fc -> sigmoid ---------------
    out3 = out.reshape(BB, HW, Cout)
    pooled = jnp.mean(out3, axis=1)                 # (BB, Cout) f32
    hse = jnp.maximum(
        jnp.dot(pooled.astype(bf16), sew1_ref[0],
                preferred_element_type=jnp.float32), 0.0)
    gate = jax.nn.sigmoid(
        jnp.dot(hse.astype(bf16), sew2_ref[0],
                preferred_element_type=jnp.float32))        # (BB, Cout) f32

    # ---- residual: downsample conv vs f32 identity (per-layer flag) ----------
    flag = flag_ref[0]                              # (1, 1) f32; 1.0 => downsample
    res = flag * ds + (1.0 - flag) * xin[:, :Cout]  # (M, Cout) f32

    # ---- SE scale + residual add + relu ---------------------------------------
    y3 = jnp.maximum(out3 * gate[:, None, :] + res.reshape(BB, HW, Cout), 0.0)

    # Keep the activation resident for the next layer; write HBM only once.
    @pl.when(l < n_layers - 1)
    def _():
        act_ref[:, :Cout] = y3.reshape(M, Cout)

    @pl.when(l == n_layers - 1)
    def _():
        o_ref[...] = y3.reshape(BB, H, W, Cout).astype(o_ref.dtype)


# ----------------------------------------------------------------------------
# BN folding + per-layer parameter stacking for the fused stack kernel
# ----------------------------------------------------------------------------
def _bn_affine(bn, eps=1e-5):
    scale = bn["gamma"] / jnp.sqrt(bn["var"] + eps)
    shift = bn["beta"] - bn["mean"] * scale
    return scale, shift


def _stack_layer_params(params, Cpad):
    L = len(params)
    width = params[0]["w1"].shape[1]
    Cout = params[0]["w3"].shape[1]
    bf16 = jnp.bfloat16

    w1ds, w2s, w3s, sew1s, sew2s = [], [], [], [], []
    s1s, b1s, s2s, b2s, s3s, b3s, dsbs, flags = [], [], [], [], [], [], [], []
    for p in params:
        cin = p["w1"].shape[0]
        w1p = jnp.zeros((Cpad, width), jnp.float32).at[:cin].set(p["w1"])
        if p["ds_w"] is not None:
            dsp = jnp.zeros((Cpad, Cout), jnp.float32).at[:cin].set(p["ds_w"])
            dsb = p["ds_b"]
            flag = 1.0
        else:
            dsp = jnp.zeros((Cpad, Cout), jnp.float32)
            dsb = jnp.zeros((Cout,), jnp.float32)
            flag = 0.0
        w1ds.append(jnp.concatenate([w1p, dsp], axis=1).astype(bf16))
        w2s.append(p["w2"].reshape(9, width, width).astype(bf16))
        w3s.append(p["w3"].astype(bf16))
        sew1s.append(p["se_w1"].astype(bf16))
        sew2s.append(p["se_w2"].astype(bf16))
        s1, b1 = _bn_affine(p["bn1"])
        s2, b2 = _bn_affine(p["bn2"])
        s3, b3 = _bn_affine(p["bn3"])
        s1s.append(s1); b1s.append(b1)
        s2s.append(s2); b2s.append(b2)
        s3s.append(s3); b3s.append(b3)
        dsbs.append(dsb); flags.append(flag)

    stk = lambda xs: jnp.stack(xs, axis=0)
    return dict(
        w1ds=stk(w1ds),                                   # (L, Cpad, width+Cout) bf16
        w2=stk(w2s),                                      # (L, 9, width, width) bf16
        w3=stk(w3s),                                      # (L, width, Cout) bf16
        sew1=stk(sew1s), sew2=stk(sew2s),
        s1=stk(s1s).reshape(L, 1, width), b1=stk(b1s).reshape(L, 1, width),
        s2=stk(s2s).reshape(L, 1, width), b2=stk(b2s).reshape(L, 1, width),
        s3=stk(s3s).reshape(L, 1, Cout), b3=stk(b3s).reshape(L, 1, Cout),
        dsb=stk(dsbs).reshape(L, 1, Cout),
        flag=jnp.array(flags, jnp.float32).reshape(L, 1, 1),
    )


def _pick_batch_block(B):
    """Single-TC chips (v5e/v6e): fold the batch; dual-TC (v7x): keep >=2 steps."""
    try:
        kind = jax.devices()[0].device_kind.lower()
    except Exception:
        return 1
    single_tc = any(t in kind for t in ("v5 lite", "v5e", "v5litepod",
                                        "v6 lite", "v6e"))
    if single_tc:
        return B
    return 1 if B >= 2 else B


# ----------------------------------------------------------------------------
# Stack forward (NCHW in / NCHW out, like the PyTorch module stack)
# ----------------------------------------------------------------------------
def encoder_block_pallas(x_nchw, params, dilation, batch_block=None):
    x = jnp.transpose(x_nchw, (0, 2, 3, 1))          # NCHW -> NHWC
    B, H, W, Cin = x.shape
    width = params[0]["w1"].shape[1]
    Cout = params[0]["w3"].shape[1]
    red = params[0]["se_w1"].shape[1]
    L = len(params)
    d = dilation
    Cpad = max(Cin, Cout)
    if Cpad > Cin:
        x = jnp.pad(x, ((0, 0), (0, 0), (0, 0), (0, Cpad - Cin)))

    BB = _pick_batch_block(B) if batch_block is None else batch_block
    if B % BB != 0:
        BB = 1
    nb = B // BB

    st = _stack_layer_params(params, Cpad)

    in_specs = [
        pl.BlockSpec((BB, H, W, Cpad), lambda b, l: (b, 0, 0, 0)),          # x
        pl.BlockSpec((1, Cpad, width + Cout), lambda b, l: (l, 0, 0)),      # w1|ds
        pl.BlockSpec((1, 9, width, width), lambda b, l: (l, 0, 0, 0)),      # w2
        pl.BlockSpec((1, width, Cout), lambda b, l: (l, 0, 0)),             # w3
        pl.BlockSpec((1, Cout, red), lambda b, l: (l, 0, 0)),               # se_w1
        pl.BlockSpec((1, red, Cout), lambda b, l: (l, 0, 0)),               # se_w2
        pl.BlockSpec((1, 1, width), lambda b, l: (l, 0, 0)),                # s1
        pl.BlockSpec((1, 1, width), lambda b, l: (l, 0, 0)),                # b1
        pl.BlockSpec((1, 1, width), lambda b, l: (l, 0, 0)),                # s2
        pl.BlockSpec((1, 1, width), lambda b, l: (l, 0, 0)),                # b2
        pl.BlockSpec((1, 1, Cout), lambda b, l: (l, 0, 0)),                 # s3
        pl.BlockSpec((1, 1, Cout), lambda b, l: (l, 0, 0)),                 # b3
        pl.BlockSpec((1, 1, Cout), lambda b, l: (l, 0, 0)),                 # ds_b
        pl.BlockSpec((1, 1, 1), lambda b, l: (l, 0, 0)),                    # flag
    ]

    out = pl.pallas_call(
        functools.partial(_se_stack_kernel, d=d),
        out_shape=jax.ShapeDtypeStruct((B, H, W, Cout), jnp.float32),
        grid=(nb, L),
        in_specs=in_specs,
        out_specs=pl.BlockSpec((BB, H, W, Cout), lambda b, l: (b, 0, 0, 0)),
        scratch_shapes=[
            pltpu.VMEM((BB * H * W, Cpad), jnp.float32),                 # activation
            pltpu.VMEM((BB, H + 2 * d, W + 2 * d, width), jnp.bfloat16), # conv2 halo
        ],
        compiler_params=pltpu.CompilerParams(
            dimension_semantics=("parallel", "arbitrary")),
    )(x, st["w1ds"], st["w2"], st["w3"], st["sew1"], st["sew2"],
      st["s1"], st["b1"], st["s2"], st["b2"], st["s3"], st["b3"],
      st["dsb"], st["flag"])

    return jnp.transpose(out, (0, 3, 1, 2))          # NHWC -> NCHW


# ----------------------------------------------------------------------------
# Parameter construction (deterministic, synthetic)
# ----------------------------------------------------------------------------
def _make_bn(key, c):
    k1, k2, k3, k4 = jax.random.split(key, 4)
    return dict(
        gamma=1.0 + 0.1 * jax.random.normal(k1, (c,), jnp.float32),
        beta=0.1 * jax.random.normal(k2, (c,), jnp.float32),
        mean=0.1 * jax.random.normal(k3, (c,), jnp.float32),
        var=0.5 + 0.1 * jnp.abs(jax.random.normal(k4, (c,), jnp.float32)),
    )


def encoder_block_params(key, in_channels, out_channels, n_layers, reduction=16):
    layers = []
    cin = in_channels
    expansion = 4
    for _ in range(n_layers):
        key, *ks = jax.random.split(key, 11)
        width = out_channels // expansion
        red = out_channels // reduction
        has_ds = cin != out_channels
        p = dict(
            w1=0.1 * jax.random.normal(ks[0], (cin, width), jnp.float32),
            bn1=_make_bn(ks[1], width),
            w2=0.1 * jax.random.normal(ks[2], (3, 3, width, width), jnp.float32),
            bn2=_make_bn(ks[3], width),
            w3=0.1 * jax.random.normal(ks[4], (width, out_channels), jnp.float32),
            bn3=_make_bn(ks[5], out_channels),
            se_w1=0.1 * jax.random.normal(ks[6], (out_channels, red), jnp.float32),
            se_w2=0.1 * jax.random.normal(ks[7], (red, out_channels), jnp.float32),
            ds_w=(0.1 * jax.random.normal(ks[8], (cin, out_channels), jnp.float32)
                  if has_ds else None),
            ds_b=(0.1 * jax.random.normal(ks[9], (out_channels,), jnp.float32)
                  if has_ds else None),
        )
        layers.append(p)
        cin = out_channels
    return layers


# ----------------------------------------------------------------------------
# Pure-JAX reference (same bf16-operand / f32-accumulate convention)
# ----------------------------------------------------------------------------
def ref_bottleneck(x, p, dilation):
    bf16 = jnp.bfloat16

    def bn(y, b):
        s, sh = _bn_affine(b)
        return y * s + sh

    out = jnp.einsum("bhwc,cd->bhwd", x.astype(bf16), p["w1"].astype(bf16),
                     preferred_element_type=jnp.float32)
    out = jax.nn.relu(bn(out, p["bn1"]))
    out = jax.lax.conv_general_dilated(
        out.astype(bf16), p["w2"].astype(bf16), window_strides=(1, 1),
        padding=((dilation, dilation), (dilation, dilation)),
        rhs_dilation=(dilation, dilation),
        dimension_numbers=("NHWC", "HWIO", "NHWC"),
        preferred_element_type=jnp.float32)
    out = jax.nn.relu(bn(out, p["bn2"]))
    out = jnp.einsum("bhwc,cd->bhwd", out.astype(bf16), p["w3"].astype(bf16),
                     preferred_element_type=jnp.float32)
    out = bn(out, p["bn3"])
    pooled = out.mean(axis=(1, 2))
    h = jax.nn.relu(jnp.dot(pooled.astype(bf16), p["se_w1"].astype(bf16),
                            preferred_element_type=jnp.float32))
    gate = jax.nn.sigmoid(jnp.dot(h.astype(bf16), p["se_w2"].astype(bf16),
                                  preferred_element_type=jnp.float32))
    out = out * gate[:, None, None, :]
    if p["ds_w"] is not None:
        res = jnp.einsum("bhwc,cd->bhwd", x.astype(bf16),
                         p["ds_w"].astype(bf16),
                         preferred_element_type=jnp.float32) + p["ds_b"]
    else:
        res = x
    return jax.nn.relu(out + res)


def encoder_block_ref(x_nchw, params, dilation):
    x = jnp.transpose(x_nchw, (0, 2, 3, 1))
    for p in params:
        x = ref_bottleneck(x, p, dilation)
    return jnp.transpose(x, (0, 3, 1, 2))


# ----------------------------------------------------------------------------
if __name__ == "__main__":
    B, Cin, H, W = 2, 32, 16, 16
    Cout = 64
    dilation = 1
    n_layers = 2  # first layer uses the downsample conv, second uses Identity

    key = jax.random.PRNGKey(0)
    kx, kp = jax.random.split(key)
    x = jax.random.normal(kx, (B, Cin, H, W), jnp.float32)  # NCHW like PyTorch
    params = encoder_block_params(kp, Cin, Cout, n_layers)

    out = jax.block_until_ready(encoder_block_pallas(x, params, dilation))
    ref = jax.block_until_ready(encoder_block_ref(x, params, dilation))

    assert out.shape == (B, Cout, H, W)
    assert jnp.allclose(out, ref, atol=5e-3, rtol=5e-3), "mismatch vs reference"

    print("KERNEL_OK")
</pallas_src>

<mosaic_0001>
module attributes {stable_mosaic.version = 11 : i64} {
  func.func @_se_stack_kernel(%arg0: i32, %arg1: i32, %arg2: memref<1x16x16x64xf32, #tpu.memory_space<vmem>>, %arg3: memref<1x64x80xbf16, #tpu.memory_space<vmem>>, %arg4: memref<1x9x16x16xbf16, #tpu.memory_space<vmem>>, %arg5: memref<1x16x64xbf16, #tpu.memory_space<vmem>>, %arg6: memref<1x64x4xbf16, #tpu.memory_space<vmem>>, %arg7: memref<1x4x64xbf16, #tpu.memory_space<vmem>>, %arg8: memref<1x1x16xf32, #tpu.memory_space<vmem>>, %arg9: memref<1x1x16xf32, #tpu.memory_space<vmem>>, %arg10: memref<1x1x16xf32, #tpu.memory_space<vmem>>, %arg11: memref<1x1x16xf32, #tpu.memory_space<vmem>>, %arg12: memref<1x1x64xf32, #tpu.memory_space<vmem>>, %arg13: memref<1x1x64xf32, #tpu.memory_space<vmem>>, %arg14: memref<1x1x64xf32, #tpu.memory_space<vmem>>, %arg15: memref<1x1x1xf32, #tpu.memory_space<vmem>>, %arg16: memref<1x16x16x64xf32, #tpu.memory_space<vmem>>, %arg17: memref<256x64xf32, #tpu.memory_space<vmem>>, %arg18: memref<1x18x18x16xbf16, #tpu.memory_space<vmem>>) attributes {dimension_semantics = [#tpu.dimension_semantics<parallel>, #tpu.dimension_semantics<arbitrary>], iteration_bounds = array<i64: 2, 2>, scalar_prefetch = 0 : i64, scratch_operands = 2 : i64, tpu.core_type = #tpu.core_type<tc>, window_params = [{transform_indices = @transform_0, window_bounds = array<i64: 1, 16, 16, 64>}, {transform_indices = @transform_1, window_bounds = array<i64: 1, 64, 80>}, {transform_indices = @transform_2, window_bounds = array<i64: 1, 9, 16, 16>}, {transform_indices = @transform_3, window_bounds = array<i64: 1, 16, 64>}, {transform_indices = @transform_4, window_bounds = array<i64: 1, 64, 4>}, {transform_indices = @transform_5, window_bounds = array<i64: 1, 4, 64>}, {transform_indices = @transform_6, window_bounds = array<i64: 1, 1, 16>}, {transform_indices = @transform_7, window_bounds = array<i64: 1, 1, 16>}, {transform_indices = @transform_8, window_bounds = array<i64: 1, 1, 16>}, {transform_indices = @transform_9, window_bounds = array<i64: 1, 1, 16>}, {transform_indices = @transform_10, window_bounds = array<i64: 1, 1, 64>}, {transform_indices = @transform_11, window_bounds = array<i64: 1, 1, 64>}, {transform_indices = @transform_12, window_bounds = array<i64: 1, 1, 64>}, {transform_indices = @transform_13, window_bounds = array<i64: 1, 1, 1>}, {transform_indices = @transform_14, window_bounds = array<i64: 1, 16, 16, 64>}]} {
    %c0_i32 = arith.constant 0 : i32
    %0 = arith.cmpi eq, %arg1, %c0_i32 : i32
    %1 = arith.extui %0 : i1 to i32
    %c0_i32_0 = arith.constant 0 : i32
    %2 = arith.cmpi ne, %1, %c0_i32_0 : i32
    scf.if %2 {
      %c0_129 = arith.constant 0 : index
      %c0_130 = arith.constant 0 : index
      %c0_131 = arith.constant 0 : index
      %c0_132 = arith.constant 0 : index
      %143 = vector.load %arg2[%c0_129, %c0_130, %c0_131, %c0_132] : memref<1x16x16x64xf32, #tpu.memory_space<vmem>>, vector<1x16x16x64xf32>
      %144 = vector.shape_cast %143 : vector<1x16x16x64xf32> to vector<256x64xf32>
      %c0_133 = arith.constant 0 : index
      %c0_134 = arith.constant 0 : index
      %145 = vector.load %arg17[%c0_133, %c0_134] : memref<256x64xf32, #tpu.memory_space<vmem>>, vector<256x64xf32>
      tpu.vector_store %arg17[%c0_133, %c0_134], %144 {strides = array<i32>} : memref<256x64xf32, #tpu.memory_space<vmem>>, vector<256x64xf32>,
      %cst_135 = arith.constant 0.000000e+00 : bf16
      %146 = vector.broadcast %cst_135 : bf16 to vector<1x1x18x16xbf16>
      %c0_136 = arith.constant 0 : index
      %c0_137 = arith.constant 0 : index
      %c0_138 = arith.constant 0 : index
      %c0_139 = arith.constant 0 : index
      %147 = vector.load %arg18[%c0_136, %c0_137, %c0_138, %c0_139] : memref<1x18x18x16xbf16, #tpu.memory_space<vmem>>, vector<1x1x18x16xbf16>
      tpu.vector_store %arg18[%c0_136, %c0_137, %c0_138, %c0_139], %146 {strides = array<i32>} : memref<1x18x18x16xbf16, #tpu.memory_space<vmem>>, vector<1x1x18x16xbf16>,
      %c0_140 = arith.constant 0 : index
      %c17 = arith.constant 17 : index
      %c0_141 = arith.constant 0 : index
      %c0_142 = arith.constant 0 : index
      %148 = vector.load %arg18[%c0_140, %c17, %c0_141, %c0_142] : memref<1x18x18x16xbf16, #tpu.memory_space<vmem>>, vector<1x1x18x16xbf16>
      tpu.vector_store %arg18[%c0_140, %c17, %c0_141, %c0_142], %146 {strides = array<i32>} : memref<1x18x18x16xbf16, #tpu.memory_space<vmem>>, vector<1x1x18x16xbf16>,
      %cst_143 = arith.constant 0.000000e+00 : bf16
      %149 = vector.broadcast %cst_143 : bf16 to vector<1x16x1x16xbf16>
      %c0_144 = arith.constant 0 : index
      %c1_145 = arith.constant 1 : index
      %c0_146 = arith.constant 0 : index
      %c0_147 = arith.constant 0 : index
      %150 = vector.load %arg18[%c0_144, %c1_145, %c0_146, %c0_147] : memref<1x18x18x16xbf16, #tpu.memory_space<vmem>>, vector<1x16x1x16xbf16>
      tpu.vector_store %arg18[%c0_144, %c1_145, %c0_146, %c0_147], %149 {strides = array<i32>} : memref<1x18x18x16xbf16, #tpu.memory_space<vmem>>, vector<1x16x1x16xbf16>,
      %c0_148 = arith.constant 0 : index
      %c1_149 = arith.constant 1 : index
      %c17_150 = arith.constant 17 : index
      %c0_151 = arith.constant 0 : index
      %151 = vector.load %arg18[%c0_148, %c1_149, %c17_150, %c0_151] : memref<1x18x18x16xbf16, #tpu.memory_space<vmem>>, vector<1x16x1x16xbf16>
      tpu.vector_store %arg18[%c0_148, %c1_149, %c17_150, %c0_151], %149 {strides = array<i32>} : memref<1x18x18x16xbf16, #tpu.memory_space<vmem>>, vector<1x16x1x16xbf16>,
    } else {
    }
    %c0 = arith.constant 0 : index
    %c0_1 = arith.constant 0 : index
    %3 = vector.load %arg17[%c0, %c0_1] : memref<256x64xf32, #tpu.memory_space<vmem>>, vector<256x64xf32>
    %4 = arith.truncf %3 : vector<256x64xf32> to vector<256x64xbf16>
    %c0_2 = arith.constant 0 : index
    %c0_3 = arith.constant 0 : index
    %c0_4 = arith.constant 0 : index
    %5 = vector.load %arg3[%c0_2, %c0_3, %c0_4] : memref<1x64x80xbf16, #tpu.memory_space<vmem>>, vector<1x64x80xbf16>
    %6 = vector.shape_cast %5 : vector<1x64x80xbf16> to vector<64x80xbf16>
    %cst = arith.constant dense<0.000000e+00> : vector<256x80xf32>
    %7 = tpu.matmul %4, %6, %cst {dimension_numbers = #tpu.dot_dimension_numbers<[1], [0], [0], [1], [0, 0, 1, 1], [], []>} : vector<256x64xbf16>, vector<64x80xbf16>, vector<256x80xf32> -> vector<256x80xf32>
    %8 = vector.extract_strided_slice %7 {offsets = [0, 0], sizes = [256, 16], strides = [1, 1]} : vector<256x80xf32> to vector<256x16xf32>
    %9 = vector.extract_strided_slice %7 {offsets = [0, 16], sizes = [256, 64], strides = [1, 1]} : vector<256x80xf32> to vector<256x64xf32>
    %c0_5 = arith.constant 0 : index
    %c0_6 = arith.constant 0 : index
    %c0_7 = arith.constant 0 : index
    %10 = vector.load %arg14[%c0_5, %c0_6, %c0_7] : memref<1x1x64xf32, #tpu.memory_space<vmem>>, vector<1x1x64xf32>
    %11 = vector.shape_cast %10 : vector<1x1x64xf32> to vector<1x64xf32>
    %12 = vector.broadcast %11 : vector<1x64xf32> to vector<256x64xf32>
    %13 = arith.addf %9, %12 : vector<256x64xf32>
    %c0_8 = arith.constant 0 : index
    %c0_9 = arith.constant 0 : index
    %c0_10 = arith.constant 0 : index
    %14 = vector.load %arg8[%c0_8, %c0_9, %c0_10] : memref<1x1x16xf32, #tpu.memory_space<vmem>>, vector<1x1x16xf32>
    %15 = vector.shape_cast %14 : vector<1x1x16xf32> to vector<1x16xf32>
    %16 = vector.broadcast %15 : vector<1x16xf32> to vector<256x16xf32>
    %17 = arith.mulf %8, %16 : vector<256x16xf32>
    %c0_11 = arith.constant 0 : index
    %c0_12 = arith.constant 0 : index
    %c0_13 = arith.constant 0 : index
    %18 = vector.load %arg9[%c0_11, %c0_12, %c0_13] : memref<1x1x16xf32, #tpu.memory_space<vmem>>, vector<1x1x16xf32>
    %19 = vector.shape_cast %18 : vector<1x1x16xf32> to vector<1x16xf32>
    %20 = vector.broadcast %19 : vector<1x16xf32> to vector<256x16xf32>
    %21 = arith.addf %17, %20 : vector<256x16xf32>
    %cst_14 = arith.constant 0.000000e+00 : f32
    %22 = vector.broadcast %cst_14 : f32 to vector<256x16xf32>
    %23 = arith.maximumf %21, %22 : vector<256x16xf32>
    %24 = vector.shape_cast %23 : vector<256x16xf32> to vector<1x16x16x16xf32>
    %25 = arith.truncf %24 : vector<1x16x16x16xf32> to vector<1x16x16x16xbf16>
    %c0_15 = arith.constant 0 : index
    %c1 = arith.constant 1 : index
    %c1_16 = arith.constant 1 : index
    %c0_17 = arith.constant 0 : index
    %26 = vector.load %arg18[%c0_15, %c1, %c1_16, %c0_17] : memref<1x18x18x16xbf16, #tpu.memory_space<vmem>>, vector<1x16x16x16xbf16>
    tpu.vector_store %arg18[%c0_15, %c1, %c1_16, %c0_17], %25 {strides = array<i32>} : memref<1x18x18x16xbf16, #tpu.memory_space<vmem>>, vector<1x16x16x16xbf16>,
    %c0_18 = arith.constant 0 : index
    %c0_19 = arith.constant 0 : index
    %c0_20 = arith.constant 0 : index
    %c0_21 = arith.constant 0 : index
    %27 = vector.load %arg18[%c0_18, %c0_19, %c0_20, %c0_21] : memref<1x18x18x16xbf16, #tpu.memory_space<vmem>>, vector<1x16x16x16xbf16>
    %28 = vector.shape_cast %27 : vector<1x16x16x16xbf16> to vector<256x16xbf16>
    %c0_22 = arith.constant 0 : index
    %c0_23 = arith.constant 0 : index
    %c0_24 = arith.constant 0 : index
    %c0_25 = arith.constant 0 : index
    %29 = vector.load %arg4[%c0_22, %c0_23, %c0_24, %c0_25] : memref<1x9x16x16xbf16, #tpu.memory_space<vmem>>, vector<1x1x16x16xbf16>
    %30 = vector.shape_cast %29 : vector<1x1x16x16xbf16> to vector<16x16xbf16>
    %cst_26 = arith.constant dense<0.000000e+00> : vector<256x16xf32>
    %31 = tpu.matmul %28, %30, %cst_26 {dimension_numbers = #tpu.dot_dimension_numbers<[1], [0], [0], [1], [0, 0, 1, 1], [], []>} : vector<256x16xbf16>, vector<16x16xbf16>, vector<256x16xf32> -> vector<256x16xf32>
    %c0_27 = arith.constant 0 : index
    %c0_28 = arith.constant 0 : index
    %c1_29 = arith.constant 1 : index
    %c0_30 = arith.constant 0 : index
    %32 = vector.load %arg18[%c0_27, %c0_28, %c1_29, %c0_30] : memref<1x18x18x16xbf16, #tpu.memory_space<vmem>>, vector<1x16x16x16xbf16>
    %33 = vector.shape_cast %32 : vector<1x16x16x16xbf16> to vector<256x16xbf16>
    %c0_31 = arith.constant 0 : index
    %c1_32 = arith.constant 1 : index
    %c0_33 = arith.constant 0 : index
    %c0_34 = arith.constant 0 : index
    %34 = vector.load %arg4[%c0_31, %c1_32, %c0_33, %c0_34] : memref<1x9x16x16xbf16, #tpu.memory_space<vmem>>, vector<1x1x16x16xbf16>
    %35 = vector.shape_cast %34 : vector<1x1x16x16xbf16> to vector<16x16xbf16>
    %cst_35 = arith.constant dense<0.000000e+00> : vector<256x16xf32>
    %36 = tpu.matmul %33, %35, %cst_35 {dimension_numbers = #tpu.dot_dimension_numbers<[1], [0], [0], [1], [0, 0, 1, 1], [], []>} : vector<256x16xbf16>, vector<16x16xbf16>, vector<256x16xf32> -> vector<256x16xf32>
    %37 = arith.addf %31, %36 : vector<256x16xf32>
    %c0_36 = arith.constant 0 : index
    %c0_37 = arith.constant 0 : index
    %c2 = arith.constant 2 : index
    %c0_38 = arith.constant 0 : index
    %38 = vector.load %arg18[%c0_36, %c0_37, %c2, %c0_38] : memref<1x18x18x16xbf16, #tpu.memory_space<vmem>>, vector<1x16x16x16xbf16>
    %39 = vector.shape_cast %38 : vector<1x16x16x16xbf16> to vector<256x16xbf16>
    %c0_39 = arith.constant 0 : index
    %c2_40 = arith.constant 2 : index
    %c0_41 = arith.constant 0 : index
    %c0_42 = arith.constant 0 : index
    %40 = vector.load %arg4[%c0_39, %c2_40, %c0_41, %c0_42] : memref<1x9x16x16xbf16, #tpu.memory_space<vmem>>, vector<1x1x16x16xbf16>
    %41 = vector.shape_cast %40 : vector<1x1x16x16xbf16> to vector<16x16xbf16>
    %cst_43 = arith.constant dense<0.000000e+00> : vector<256x16xf32>
    %42 = tpu.matmul %39, %41, %cst_43 {dimension_numbers = #tpu.dot_dimension_numbers<[1], [0], [0], [1], [0, 0, 1, 1], [], []>} : vector<256x16xbf16>, vector<16x16xbf16>, vector<256x16xf32> -> vector<256x16xf32>
    %43 = arith.addf %37, %42 : vector<256x16xf32>
    %c0_44 = arith.constant 0 : index
    %c1_45 = arith.constant 1 : index
    %c0_46 = arith.constant 0 : index
    %c0_47 = arith.constant 0 : index
    %44 = vector.load %arg18[%c0_44, %c1_45, %c0_46, %c0_47] : memref<1x18x18x16xbf16, #tpu.memory_space<vmem>>, vector<1x16x16x16xbf16>
    %45 = vector.shape_cast %44 : vector<1x16x16x16xbf16> to vector<256x16xbf16>
    %c0_48 = arith.constant 0 : index
    %c3 = arith.constant 3 : index
    %c0_49 = arith.constant 0 : index
    %c0_50 = arith.constant 0 : index
    %46 = vector.load %arg4[%c0_48, %c3, %c0_49, %c0_50] : memref<1x9x16x16xbf16, #tpu.memory_space<vmem>>, vector<1x1x16x16xbf16>
    %47 = vector.shape_cast %46 : vector<1x1x16x16xbf16> to vector<16x16xbf16>
    %cst_51 = arith.constant dense<0.000000e+00> : vector<256x16xf32>
    %48 = tpu.matmul %45, %47, %cst_51 {dimension_numbers = #tpu.dot_dimension_numbers<[1], [0], [0], [1], [0, 0, 1, 1], [], []>} : vector<256x16xbf16>, vector<16x16xbf16>, vector<256x16xf32> -> vector<256x16xf32>
    %49 = arith.addf %43, %48 : vector<256x16xf32>
    %c0_52 = arith.constant 0 : index
    %c1_53 = arith.constant 1 : index
    %c1_54 = arith.constant 1 : index
    %c0_55 = arith.constant 0 : index
    %50 = vector.load %arg18[%c0_52, %c1_53, %c1_54, %c0_55] : memref<1x18x18x16xbf16, #tpu.memory_space<vmem>>, vector<1x16x16x16xbf16>
    %51 = vector.shape_cast %50 : vector<1x16x16x16xbf16> to vector<256x16xbf16>
    %c0_56 = arith.constant 0 : index
    %c4 = arith.constant 4 : index
    %c0_57 = arith.constant 0 : index
    %c0_58 = arith.constant 0 : index
    %52 = vector.load %arg4[%c0_56, %c4, %c0_57, %c0_58] : memref<1x9x16x16xbf16, #tpu.memory_space<vmem>>, vector<1x1x16x16xbf16>
    %53 = vector.shape_cast %52 : vector<1x1x16x16xbf16> to vector<16x16xbf16>
    %cst_59 = arith.constant dense<0.000000e+00> : vector<256x16xf32>
    %54 = tpu.matmul %51, %53, %cst_59 {dimension_numbers = #tpu.dot_dimension_numbers<[1], [0], [0], [1], [0, 0, 1, 1], [], []>} : vector<256x16xbf16>, vector<16x16xbf16>, vector<256x16xf32> -> vector<256x16xf32>
    %55 = arith.addf %49, %54 : vector<256x16xf32>
    %c0_60 = arith.constant 0 : index
    %c1_61 = arith.constant 1 : index
    %c2_62 = arith.constant 2 : index
    %c0_63 = arith.constant 0 : index
    %56 = vector.load %arg18[%c0_60, %c1_61, %c2_62, %c0_63] : memref<1x18x18x16xbf16, #tpu.memory_space<vmem>>, vector<1x16x16x16xbf16>
    %57 = vector.shape_cast %56 : vector<1x16x16x16xbf16> to vector<256x16xbf16>
    %c0_64 = arith.constant 0 : index
    %c5 = arith.constant 5 : index
    %c0_65 = arith.constant 0 : index
    %c0_66 = arith.constant 0 : index
    %58 = vector.load %arg4[%c0_64, %c5, %c0_65, %c0_66] : memref<1x9x16x16xbf16, #tpu.memory_space<vmem>>, vector<1x1x16x16xbf16>
    %59 = vector.shape_cast %58 : vector<1x1x16x16xbf16> to vector<16x16xbf16>
    %cst_67 = arith.constant dense<0.000000e+00> : vector<256x16xf32>
    %60 = tpu.matmul %57, %59, %cst_67 {dimension_numbers = #tpu.dot_dimension_numbers<[1], [0], [0], [1], [0, 0, 1, 1], [], []>} : vector<256x16xbf16>, vector<16x16xbf16>, vector<256x16xf32> -> vector<256x16xf32>
    %61 = arith.addf %55, %60 : vector<256x16xf32>
    %c0_68 = arith.constant 0 : index
    %c2_69 = arith.constant 2 : index
    %c0_70 = arith.constant 0 : index
    %c0_71 = arith.constant 0 : index
    %62 = vector.load %arg18[%c0_68, %c2_69, %c0_70, %c0_71] : memref<1x18x18x16xbf16, #tpu.memory_space<vmem>>, vector<1x16x16x16xbf16>
    %63 = vector.shape_cast %62 : vector<1x16x16x16xbf16> to vector<256x16xbf16>
    %c0_72 = arith.constant 0 : index
    %c6 = arith.constant 6 : index
    %c0_73 = arith.constant 0 : index
    %c0_74 = arith.constant 0 : index
    %64 = vector.load %arg4[%c0_72, %c6, %c0_73, %c0_74] : memref<1x9x16x16xbf16, #tpu.memory_space<vmem>>, vector<1x1x16x16xbf16>
    %65 = vector.shape_cast %64 : vector<1x1x16x16xbf16> to vector<16x16xbf16>
    %cst_75 = arith.constant dense<0.000000e+00> : vector<256x16xf32>
    %66 = tpu.matmul %63, %65, %cst_75 {dimension_numbers = #tpu.dot_dimension_numbers<[1], [0], [0], [1], [0, 0, 1, 1], [], []>} : vector<256x16xbf16>, vector<16x16xbf16>, vector<256x16xf32> -> vector<256x16xf32>
    %67 = arith.addf %61, %66 : vector<256x16xf32>
    %c0_76 = arith.constant 0 : index
    %c2_77 = arith.constant 2 : index
    %c1_78 = arith.constant 1 : index
    %c0_79 = arith.constant 0 : index
    %68 = vector.load %arg18[%c0_76, %c2_77, %c1_78, %c0_79] : memref<1x18x18x16xbf16, #tpu.memory_space<vmem>>, vector<1x16x16x16xbf16>
    %69 = vector.shape_cast %68 : vector<1x16x16x16xbf16> to vector<256x16xbf16>
    %c0_80 = arith.constant 0 : index
    %c7 = arith.constant 7 : index
    %c0_81 = arith.constant 0 : index
    %c0_82 = arith.constant 0 : index
    %70 = vector.load %arg4[%c0_80, %c7, %c0_81, %c0_82] : memref<1x9x16x16xbf16, #tpu.memory_space<vmem>>, vector<1x1x16x16xbf16>
    %71 = vector.shape_cast %70 : vector<1x1x16x16xbf16> to vector<16x16xbf16>
    %cst_83 = arith.constant dense<0.000000e+00> : vector<256x16xf32>
    %72 = tpu.matmul %69, %71, %cst_83 {dimension_numbers = #tpu.dot_dimension_numbers<[1], [0], [0], [1], [0, 0, 1, 1], [], []>} : vector<256x16xbf16>, vector<16x16xbf16>, vector<256x16xf32> -> vector<256x16xf32>
    %73 = arith.addf %67, %72 : vector<256x16xf32>
    %c0_84 = arith.constant 0 : index
    %c2_85 = arith.constant 2 : index
    %c2_86 = arith.constant 2 : index
    %c0_87 = arith.constant 0 : index
    %74 = vector.load %arg18[%c0_84, %c2_85, %c2_86, %c0_87] : memref<1x18x18x16xbf16, #tpu.memory_space<vmem>>, vector<1x16x16x16xbf16>
    %75 = vector.shape_cast %74 : vector<1x16x16x16xbf16> to vector<256x16xbf16>
    %c0_88 = arith.constant 0 : index
    %c8 = arith.constant 8 : index
    %c0_89 = arith.constant 0 : index
    %c0_90 = arith.constant 0 : index
    %76 = vector.load %arg4[%c0_88, %c8, %c0_89, %c0_90] : memref<1x9x16x16xbf16, #tpu.memory_space<vmem>>, vector<1x1x16x16xbf16>
    %77 = vector.shape_cast %76 : vector<1x1x16x16xbf16> to vector<16x16xbf16>
    %cst_91 = arith.constant dense<0.000000e+00> : vector<256x16xf32>
    %78 = tpu.matmul %75, %77, %cst_91 {dimension_numbers = #tpu.dot_dimension_numbers<[1], [0], [0], [1], [0, 0, 1, 1], [], []>} : vector<256x16xbf16>, vector<16x16xbf16>, vector<256x16xf32> -> vector<256x16xf32>
    %79 = arith.addf %73, %78 : vector<256x16xf32>
    %c0_92 = arith.constant 0 : index
    %c0_93 = arith.constant 0 : index
    %c0_94 = arith.constant 0 : index
    %80 = vector.load %arg10[%c0_92, %c0_93, %c0_94] : memref<1x1x16xf32, #tpu.memory_space<vmem>>, vector<1x1x16xf32>
    %81 = vector.shape_cast %80 : vector<1x1x16xf32> to vector<1x16xf32>
    %82 = vector.broadcast %81 : vector<1x16xf32> to vector<256x16xf32>
    %83 = arith.mulf %79, %82 : vector<256x16xf32>
    %c0_95 = arith.constant 0 : index
    %c0_96 = arith.constant 0 : index
    %c0_97 = arith.constant 0 : index
    %84 = vector.load %arg11[%c0_95, %c0_96, %c0_97] : memref<1x1x16xf32, #tpu.memory_space<vmem>>, vector<1x1x16xf32>
    %85 = vector.shape_cast %84 : vector<1x1x16xf32> to vector<1x16xf32>
    %86 = vector.broadcast %85 : vector<1x16xf32> to vector<256x16xf32>
    %87 = arith.addf %83, %86 : vector<256x16xf32>
    %cst_98 = arith.constant 0.000000e+00 : f32
    %88 = vector.broadcast %cst_98 : f32 to vector<256x16xf32>
    %89 = arith.maximumf %87, %88 : vector<256x16xf32>
    %90 = arith.truncf %89 : vector<256x16xf32> to vector<256x16xbf16>
    %c0_99 = arith.constant 0 : index
    %c0_100 = arith.constant 0 : index
    %c0_101 = arith.constant 0 : index
    %91 = vector.load %arg5[%c0_99, %c0_100, %c0_101] : memref<1x16x64xbf16, #tpu.memory_space<vmem>>, vector<1x16x64xbf16>
    %92 = vector.shape_cast %91 : vector<1x16x64xbf16> to vector<16x64xbf16>
    %cst_102 = arith.constant dense<0.000000e+00> : vector<256x64xf32>
    %93 = tpu.matmul %90, %92, %cst_102 {dimension_numbers = #tpu.dot_dimension_numbers<[1], [0], [0], [1], [0, 0, 1, 1], [], []>} : vector<256x16xbf16>, vector<16x64xbf16>, vector<256x64xf32> -> vector<256x64xf32>
    %c0_103 = arith.constant 0 : index
    %c0_104 = arith.constant 0 : index
    %c0_105 = arith.constant 0 : index
    %94 = vector.load %arg12[%c0_103, %c0_104, %c0_105] : memref<1x1x64xf32, #tpu.memory_space<vmem>>, vector<1x1x64xf32>
    %95 = vector.shape_cast %94 : vector<1x1x64xf32> to vector<1x64xf32>
    %96 = vector.broadcast %95 : vector<1x64xf32> to vector<256x64xf32>
    %97 = arith.mulf %93, %96 : vector<256x64xf32>
    %c0_106 = arith.constant 0 : index
    %c0_107 = arith.constant 0 : index
    %c0_108 = arith.constant 0 : index
    %98 = vector.load %arg13[%c0_106, %c0_107, %c0_108] : memref<1x1x64xf32, #tpu.memory_space<vmem>>, vector<1x1x64xf32>
    %99 = vector.shape_cast %98 : vector<1x1x64xf32> to vector<1x64xf32>
    %100 = vector.broadcast %99 : vector<1x64xf32> to vector<256x64xf32>
    %101 = arith.addf %97, %100 : vector<256x64xf32>
    %102 = vector.shape_cast %101 : vector<256x64xf32> to vector<1x256x64xf32>
    %cst_109 = arith.constant dense<0.000000e+00> : vector<1x64xf32>
    %103 = vector.multi_reduction <add>, %102, %cst_109 [1] : vector<1x256x64xf32> to vector<1x64xf32>
    %cst_110 = arith.constant 2.560000e+02 : f32
    %104 = vector.broadcast %cst_110 : f32 to vector<1x64xf32>
    %105 = arith.divf %103, %104 : vector<1x64xf32>
    %106 = arith.truncf %105 : vector<1x64xf32> to vector<1x64xbf16>
    %c0_111 = arith.constant 0 : index
    %c0_112 = arith.constant 0 : index
    %c0_113 = arith.constant 0 : index
    %107 = vector.load %arg6[%c0_111, %c0_112, %c0_113] : memref<1x64x4xbf16, #tpu.memory_space<vmem>>, vector<1x64x4xbf16>
    %108 = vector.shape_cast %107 : vector<1x64x4xbf16> to vector<64x4xbf16>
    %cst_114 = arith.constant dense<0.000000e+00> : vector<1x4xf32>
    %109 = tpu.matmul %106, %108, %cst_114 {dimension_numbers = #tpu.dot_dimension_numbers<[1], [0], [0], [1], [0, 0, 1, 1], [], []>} : vector<1x64xbf16>, vector<64x4xbf16>, vector<1x4xf32> -> vector<1x4xf32>
    %cst_115 = arith.constant 0.000000e+00 : f32
    %110 = vector.broadcast %cst_115 : f32 to vector<1x4xf32>
    %111 = arith.maximumf %109, %110 : vector<1x4xf32>
    %112 = arith.truncf %111 : vector<1x4xf32> to vector<1x4xbf16>
    %c0_116 = arith.constant 0 : index
    %c0_117 = arith.constant 0 : index
    %c0_118 = arith.constant 0 : index
    %113 = vector.load %arg7[%c0_116, %c0_117, %c0_118] : memref<1x4x64xbf16, #tpu.memory_space<vmem>>, vector<1x4x64xbf16>
    %114 = vector.shape_cast %113 : vector<1x4x64xbf16> to vector<4x64xbf16>
    %cst_119 = arith.constant dense<0.000000e+00> : vector<1x64xf32>
    %115 = tpu.matmul %112, %114, %cst_119 {dimension_numbers = #tpu.dot_dimension_numbers<[1], [0], [0], [1], [0, 0, 1, 1], [], []>} : vector<1x4xbf16>, vector<4x64xbf16>, vector<1x64xf32> -> vector<1x64xf32>
    %116 = arith.negf %115 : vector<1x64xf32>
    %117 = math.exp %116 : vector<1x64xf32>
    %cst_120 = arith.constant 1.000000e+00 : f32
    %118 = vector.broadcast %cst_120 : f32 to vector<1x64xf32>
    %119 = arith.addf %118, %117 : vector<1x64xf32>
    %120 = arith.divf %118, %119 : vector<1x64xf32>
    %c0_121 = arith.constant 0 : index
    %c0_122 = arith.constant 0 : index
    %c0_123 = arith.constant 0 : index
    %121 = vector.load %arg15[%c0_121, %c0_122, %c0_123] : memref<1x1x1xf32, #tpu.memory_space<vmem>>, vector<1x1x1xf32>
    %122 = vector.shape_cast %121 : vector<1x1x1xf32> to vector<1x1xf32>
    %123 = vector.broadcast %122 : vector<1x1xf32> to vector<256x64xf32>
    %124 = arith.mulf %123, %13 : vector<256x64xf32>
    %cst_124 = arith.constant 1.000000e+00 : f32
    %125 = vector.broadcast %cst_124 : f32 to vector<1x1xf32>
    %126 = arith.subf %125, %122 : vector<1x1xf32>
    %127 = vector.broadcast %126 : vector<1x1xf32> to vector<256x64xf32>
    %128 = arith.mulf %127, %3 : vector<256x64xf32>
    %129 = arith.addf %124, %128 : vector<256x64xf32>
    %130 = vector.shape_cast %120 : vector<1x64xf32> to vector<1x1x64xf32>
    %131 = vector.broadcast %130 : vector<1x1x64xf32> to vector<1x256x64xf32>
    %132 = arith.mulf %102, %131 : vector<1x256x64xf32>
    %133 = vector.shape_cast %129 : vector<256x64xf32> to vector<1x256x64xf32>
    %134 = arith.addf %132, %133 : vector<1x256x64xf32>
    %cst_125 = arith.constant 0.000000e+00 : f32
    %135 = vector.broadcast %cst_125 : f32 to vector<1x256x64xf32>
    %136 = arith.maximumf %134, %135 : vector<1x256x64xf32>
    %c1_i32 = arith.constant 1 : i32
    %137 = arith.cmpi slt, %arg1, %c1_i32 : i32
    %138 = arith.extui %137 : i1 to i32
    %c0_i32_126 = arith.constant 0 : i32
    %139 = arith.cmpi ne, %138, %c0_i32_126 : i32
    scf.if %139 {
      %143 = vector.shape_cast %136 : vector<1x256x64xf32> to vector<256x64xf32>
      %c0_129 = arith.constant 0 : index
      %c0_130 = arith.constant 0 : index
      %144 = vector.load %arg17[%c0_129, %c0_130] : memref<256x64xf32, #tpu.memory_space<vmem>>, vector<256x64xf32>
      tpu.vector_store %arg17[%c0_129, %c0_130], %143 {strides = array<i32>} : memref<256x64xf32, #tpu.memory_space<vmem>>, vector<256x64xf32>,
    } else {
    }
    %c1_i32_127 = arith.constant 1 : i32
    %140 = arith.cmpi eq, %arg1, %c1_i32_127 : i32
    %141 = arith.extui %140 : i1 to i32
    %c0_i32_128 = arith.constant 0 : i32
    %142 = arith.cmpi ne, %141, %c0_i32_128 : i32
    scf.if %142 {
      %143 = vector.shape_cast %136 : vector<1x256x64xf32> to vector<1x16x16x64xf32>
      %c0_129 = arith.constant 0 : index
      %c0_130 = arith.constant 0 : index
      %c0_131 = arith.constant 0 : index
      %c0_132 = arith.constant 0 : index
      %144 = vector.load %arg16[%c0_129, %c0_130, %c0_131, %c0_132] : memref<1x16x16x64xf32, #tpu.memory_space<vmem>>, vector<1x16x16x64xf32>
      tpu.vector_store %arg16[%c0_129, %c0_130, %c0_131, %c0_132], %143 {strides = array<i32>} : memref<1x16x16x64xf32, #tpu.memory_space<vmem>>, vector<1x16x16x64xf32>,
    } else {
    }
    return
  }
  func.func @transform_0(%arg0: i32, %arg1: i32) -> (i32, i32, i32, i32) {
    %c0_i32 = arith.constant 0 : i32
    %c0_i32_0 = arith.constant 0 : i32
    %c0_i32_1 = arith.constant 0 : i32
    %c0_i32_2 = arith.constant 0 : i32
    return %arg0, %c0_i32, %c0_i32_0, %c0_i32_1 : i32, i32, i32, i32
  }
  func.func @transform_1(%arg0: i32, %arg1: i32) -> (i32, i32, i32) {
    %c0_i32 = arith.constant 0 : i32
    %c0_i32_0 = arith.constant 0 : i32
    %c0_i32_1 = arith.constant 0 : i32
    return %arg1, %c0_i32, %c0_i32_0 : i32, i32, i32
  }
  func.func @transform_2(%arg0: i32, %arg1: i32) -> (i32, i32, i32, i32) {
    %c0_i32 = arith.constant 0 : i32
    %c0_i32_0 = arith.constant 0 : i32
    %c0_i32_1 = arith.constant 0 : i32
    %c0_i32_2 = arith.constant 0 : i32
    return %arg1, %c0_i32, %c0_i32_0, %c0_i32_1 : i32, i32, i32, i32
  }
  func.func @transform_3(%arg0: i32, %arg1: i32) -> (i32, i32, i32) {
    %c0_i32 = arith.constant 0 : i32
    %c0_i32_0 = arith.constant 0 : i32
    %c0_i32_1 = arith.constant 0 : i32
    return %arg1, %c0_i32, %c0_i32_0 : i32, i32, i32
  }
  func.func @transform_4(%arg0: i32, %arg1: i32) -> (i32, i32, i32) {
    %c0_i32 = arith.constant 0 : i32
    %c0_i32_0 = arith.constant 0 : i32
    %c0_i32_1 = arith.constant 0 : i32
    return %arg1, %c0_i32, %c0_i32_0 : i32, i32, i32
  }
  func.func @transform_5(%arg0: i32, %arg1: i32) -> (i32, i32, i32) {
    %c0_i32 = arith.constant 0 : i32
    %c0_i32_0 = arith.constant 0 : i32
    %c0_i32_1 = arith.constant 0 : i32
    return %arg1, %c0_i32, %c0_i32_0 : i32, i32, i32
  }
  func.func @transform_6(%arg0: i32, %arg1: i32) -> (i32, i32, i32) {
    %c0_i32 = arith.constant 0 : i32
    %c0_i32_0 = arith.constant 0 : i32
    %c0_i32_1 = arith.constant 0 : i32
    return %arg1, %c0_i32, %c0_i32_0 : i32, i32, i32
  }
  func.func @transform_7(%arg0: i32, %arg1: i32) -> (i32, i32, i32) {
    %c0_i32 = arith.constant 0 : i32
    %c0_i32_0 = arith.constant 0 : i32
    %c0_i32_1 = arith.constant 0 : i32
    return %arg1, %c0_i32, %c0_i32_0 : i32, i32, i32
  }
  func.func @transform_8(%arg0: i32, %arg1: i32) -> (i32, i32, i32) {
    %c0_i32 = arith.constant 0 : i32
    %c0_i32_0 = arith.constant 0 : i32
    %c0_i32_1 = arith.constant 0 : i32
    return %arg1, %c0_i32, %c0_i32_0 : i32, i32, i32
  }
  func.func @transform_9(%arg0: i32, %arg1: i32) -> (i32, i32, i32) {
    %c0_i32 = arith.constant 0 : i32
    %c0_i32_0 = arith.constant 0 : i32
    %c0_i32_1 = arith.constant 0 : i32
    return %arg1, %c0_i32, %c0_i32_0 : i32, i32, i32
  }
  func.func @transform_10(%arg0: i32, %arg1: i32) -> (i32, i32, i32) {
    %c0_i32 = arith.constant 0 : i32
    %c0_i32_0 = arith.constant 0 : i32
    %c0_i32_1 = arith.constant 0 : i32
    return %arg1, %c0_i32, %c0_i32_0 : i32, i32, i32
  }
  func.func @transform_11(%arg0: i32, %arg1: i32) -> (i32, i32, i32) {
    %c0_i32 = arith.constant 0 : i32
    %c0_i32_0 = arith.constant 0 : i32
    %c0_i32_1 = arith.constant 0 : i32
    return %arg1, %c0_i32, %c0_i32_0 : i32, i32, i32
  }
  func.func @transform_12(%arg0: i32, %arg1: i32) -> (i32, i32, i32) {
    %c0_i32 = arith.constant 0 : i32
    %c0_i32_0 = arith.constant 0 : i32
    %c0_i32_1 = arith.constant 0 : i32
    return %arg1, %c0_i32, %c0_i32_0 : i32, i32, i32
  }
  func.func @transform_13(%arg0: i32, %arg1: i32) -> (i32, i32, i32) {
    %c0_i32 = arith.constant 0 : i32
    %c0_i32_0 = arith.constant 0 : i32
    %c0_i32_1 = arith.constant 0 : i32
    return %arg1, %c0_i32, %c0_i32_0 : i32, i32, i32
  }
  func.func @transform_14(%arg0: i32, %arg1: i32) -> (i32, i32, i32, i32) {
    %c0_i32 = arith.constant 0 : i32
    %c0_i32_0 = arith.constant 0 : i32
    %c0_i32_1 = arith.constant 0 : i32
    %c0_i32_2 = arith.constant 0 : i32
    return %arg0, %c0_i32, %c0_i32_0, %c0_i32_1 : i32, i32, i32, i32
  }
}

</mosaic_0001>

<llo_original>
// kernel: tpu_custom_call.1
$region0: #{tpu_custom_call.1}
  #allocation0 [shape = 'u32[]', space=smem, size = 0x4, offset = 0x4, fixed_abs, tag = 'smem constant byte address 0x4 - core index']
  #allocation1 [shape = 'u32[144,128]{1,0:T(1,128)}', space=vmem, size = 0x12000, scoped, tag = 'internal scratch']
  #allocation2 [shape = 'f32[256,64]{1,0:T(8,128)}', space=vmem, size = 0x20000, scoped, tag = 'scratch operand']
  #allocation3 [shape = 'bf16[1,18,18,16]{3,2,1,0:T(8,128)(2,1)}', space=vmem, size = 0x1b000, scoped, tag = 'scratch operand']
  %s0 = inlined_call_operand.hbm [shape: f32[2,16,16,64], index: 0, kind: input, shape index: {}]
  %s1 = inlined_call_operand.vmem [shape: bf16[2,64,80], index: 1, kind: input, shape index: {}]
  %s2 = inlined_call_operand.hbm [shape: bf16[2,9,16,16], index: 2, kind: input, shape index: {}]
  %s3 = inlined_call_operand.hbm [shape: bf16[2,16,64], index: 3, kind: input, shape index: {}]
  %s4 = inlined_call_operand.vmem [shape: bf16[2,64,4], index: 4, kind: input, shape index: {}]
  %s5 = inlined_call_operand.vmem [shape: bf16[2,4,64], index: 5, kind: input, shape index: {}]
  %s6 = inlined_call_operand.vmem [shape: f32[2,1,16], index: 6, kind: input, shape index: {}]
  %s7 = inlined_call_operand.vmem [shape: f32[2,1,16], index: 7, kind: input, shape index: {}]
  %s8 = inlined_call_operand.vmem [shape: f32[2,1,16], index: 8, kind: input, shape index: {}]
  %s9 = inlined_call_operand.vmem [shape: f32[2,1,16], index: 9, kind: input, shape index: {}]
  %s10 = inlined_call_operand.vmem [shape: f32[2,1,64], index: 10, kind: input, shape index: {}]
  %s11 = inlined_call_operand.vmem [shape: f32[2,1,64], index: 11, kind: input, shape index: {}]
  %s12 = inlined_call_operand.vmem [shape: f32[2,1,64], index: 12, kind: input, shape index: {}]
  %s13 = inlined_call_operand.vmem [shape: f32[2,1,1], index: 13, kind: input, shape index: {}]
  %s14 = inlined_call_operand.hbm [shape: f32[2,16,16,64], index: 14, kind: output, shape index: {}]
  %s15 = sld [smem:[#allocation0]]
  $region113: #{tpu_custom_call.1} parent=0
    _
  %s17 = ssub.s32 1, %s15
  %s18 = scalar_select 0, %s17, %s15
  $region1: #{tpu_custom_call.1} parent=0
    #allocation4 [shape = 'u8[262144]{0}', space=vmem, size = 0x40000, scoped, tag = 'input window, operand 0']
    #allocation5 [shape = 's32[2]{0}', space=sflag, size = 0x8, scoped, tag = 'scoped memory for tpu_custom_call.1']
    #allocation6 [shape = 's32[2]{0}', space=sflag, size = 0x8, scoped, tag = 'scoped memory for tpu_custom_call.1']
    #allocation7 [shape = 'u8[73728]{0}', space=vmem, size = 0x12000, scoped, tag = 'input window, operand 2']
    #allocation8 [shape = 's32[2]{0}', space=sflag, size = 0x8, scoped, tag = 'scoped memory for tpu_custom_call.1']
    #allocation9 [shape = 'u8[8192]{0}', space=vmem, size = 0x2000, scoped, tag = 'input window, operand 3']
    #allocation10 [shape = 'u8[262144]{0}', space=vmem, size = 0x40000, scoped, tag = 'output window, operand 0']
    %19 = vsyncpa [#allocation5], 0
    %s20 = scalar_lea.sflag [#allocation5], 1
    %21 = vsyncpa %s20, 0
    %22 = vsyncpa [#allocation8], 0
    %s23 = scalar_lea.sflag [#allocation8], 1
    %24 = vsyncpa %s23, 0
    %25 = vsyncpa [#allocation6], 0
    %s26 = scalar_lea.sflag [#allocation6], 1
    %27 = vsyncpa %s26, 0
    loop: start=0, step=1, limit=6
    $region2: #{tpu_custom_call.1} parent=1 // loop_pre_header
      _
    $region3: #{tpu_custom_call.1} parent=1 // loop_header
      %s29 = sphi 0, %s33
      %p30 = scmp.ge.s32.totalorder %s29, 6
      %s36 = sphi 0, %s48
      %s37 = sphi 0, %s44
      %s38 = sphi 0, %s36
      %s39 = sphi 0, %s37
      %s40 = sphi 0, %s38
      %s41 = sphi 0, %s39
      %s51 = sphi 0, %s53
      %s54 = sphi 0, %s51
      %s55 = sphi 0, %s54
      %s71 = sphi 0, %s55
      %s77 = sphi 0, %s79
      %s80 = sphi 0, %s77
      %s81 = sphi 0, %s80
      %s97 = sphi 0, %s81
      %s103 = sphi 0, %s105
      %s106 = sphi 0, %s103
      %s107 = sphi 0, %s106
      %s123 = sphi 0, %s107
      %s129 = sphi 0, %s131
      %s132 = sphi 0, %s129
      %s133 = sphi 0, %s132
      %s149 = sphi 0, %s133
      %s155 = sphi 0, %s157
      %s158 = sphi 0, %s155
      %s159 = sphi 0, %s158
      %s175 = sphi 0, %s159
      %s181 = sphi 0, %s183
      %s184 = sphi 0, %s181
      %s185 = sphi 0, %s184
      %s201 = sphi 0, %s185
      %s207 = sphi 0, %s209
      %s210 = sphi 0, %s207
      %s211 = sphi 0, %s210
      %s227 = sphi 0, %s211
      %s233 = sphi 0, %s235
      %s236 = sphi 0, %s233
      %s237 = sphi 0, %s236
      %s253 = sphi 0, %s237
      %s259 = sphi 0, %s261
      %s262 = sphi 0, %s259
      %s263 = sphi 0, %s262
      %s279 = sphi 0, %s263
      %s285 = sphi 0, %s287
      %s288 = sphi 0, %s285
      %s289 = sphi 0, %s288
      %s305 = sphi 0, %s289
      %s311 = sphi 0, %s313
      %s314 = sphi 0, %s311
      %s315 = sphi 0, %s314
      %s331 = sphi 0, %s315
      %s337 = sphi 0, %s339
      %s340 = sphi 0, %s337
      %s341 = sphi 0, %s340
      %s357 = sphi 0, %s341
      %s363 = sphi 0, %s365
      %s366 = sphi 0, %s363
      %s367 = sphi 0, %s366
      %s383 = sphi 0, %s367
      %s389 = sphi 0, %s391
      %s392 = sphi 0, %s389
      %s393 = sphi 0, %s392
      %s409 = sphi 0, %s393
      %s415 = sphi 0, %s417
      %s418 = sphi 0, %s415
      %s419 = sphi 0, %s418
      %s435 = sphi 0, %s419
    $region4: #{tpu_custom_call.1} parent=1 // loop_header_branch
      %32 = sbr.rel (%p30) target = $region8
    $region5: #{tpu_custom_call.1} parent=1 // loop_body
      %s34 = ssub.s32 %s29, 1
      %s35 = ssub.s32 %s29, 2
      %s42 = sadd.s32 1, %s37
      %p43 = scmp.ge.s32.totalorder %s42, 2
      %s44 = scalar_select %p43, 0, %s42
      %s45 = sadd.s32 1, %s36
      %s46 = scalar_select %p43, %s45, %s36
      %p47 = scmp.ge.s32.totalorder %s46, 2
      %s48 = scalar_select %p47, 0, %s46
      %s49 = ssub.s32 %s36, %s48
      %p50 = scmp.eq.s32.totalorder %s49, 0
      %s52 = sadd.s32 %s51, 1
      %s53 = scalar_select %p50, %s51, %s52
      %p56 = pneg %p50
      %p57 = scmp.eq.s32.totalorder %s29, 3
      %p58 = por %p56, %p57
      %p59 = scmp.ne.s32.totalorder %s51, %s54
      %p60 = scmp.eq.s32.totalorder %s29, 0
      %p61 = por %p59, %p60
      %p62 = scmp.ne.s32.totalorder %s51, %s54
      %p63 = scmp.eq.s32.totalorder %s34, 3
      %p64 = por %p62, %p63
      %p65 = scmp.ne.s32.totalorder %s54, %s55
      %p66 = scmp.eq.s32.totalorder %s34, 0
      %p67 = por %p65, %p66
      %p68 = scmp.ne.s32.totalorder %s54, %s55
      %p69 = scmp.eq.s32.totalorder %s35, 3
      %p70 = por %p68, %p69
      %p72 = scmp.ne.s32.totalorder %s55, %s71
      %p73 = scmp.eq.s32.totalorder %s35, 0
      %p74 = por %p72, %p73
      %s75 = ssub.s32 %s37, %s44
      %p76 = scmp.eq.s32.totalorder %s75, 0
      %s78 = sadd.s32 %s77, 1
      %s79 = scalar_select %p76, %s77, %s78
      %p82 = pneg %p76
      %p83 = scmp.eq.s32.totalorder %s29, 3
      %p84 = por %p82, %p83
      %p85 = scmp.ne.s32.totalorder %s77, %s80
      %p86 = scmp.eq.s32.totalorder %s29, 0
      %p87 = por %p85, %p86
      %p88 = scmp.ne.s32.totalorder %s77, %s80
      %p89 = scmp.eq.s32.totalorder %s34, 3
      %p90 = por %p88, %p89
      %p91 = scmp.ne.s32.totalorder %s80, %s81
      %p92 = scmp.eq.s32.totalorder %s34, 0
      %p93 = por %p91, %p92
      %p94 = scmp.ne.s32.totalorder %s80, %s81
      %p95 = scmp.eq.s32.totalorder %s35, 3
      %p96 = por %p94, %p95
      %p98 = scmp.ne.s32.totalorder %s81, %s97
      %p99 = scmp.eq.s32.totalorder %s35, 0
      %p100 = por %p98, %p99
      %s101 = ssub.s32 %s37, %s44
      %p102 = scmp.eq.s32.totalorder %s101, 0
      %s104 = sadd.s32 %s103, 1
      %s105 = scalar_select %p102, %s103, %s104
      %p108 = pneg %p102
      %p109 = scmp.eq.s32.totalorder %s29, 3
      %p110 = por %p108, %p109
      %p111 = scmp.ne.s32.totalorder %s103, %s106
      %p112 = scmp.eq.s32.totalorder %s29, 0
      %p113 = por %p111, %p112
      %p114 = scmp.ne.s32.totalorder %s103, %s106
      %p115 = scmp.eq.s32.totalorder %s34, 3
      %p116 = por %p114, %p115
      %p117 = scmp.ne.s32.totalorder %s106, %s107
      %p118 = scmp.eq.s32.totalorder %s34, 0
      %p119 = por %p117, %p118
      %p120 = scmp.ne.s32.totalorder %s106, %s107
      %p121 = scmp.eq.s32.totalorder %s35, 3
      %p122 = por %p120, %p121
      %p124 = scmp.ne.s32.totalorder %s107, %s123
      %p125 = scmp.eq.s32.totalorder %s35, 0
      %p126 = por %p124, %p125
      %s127 = ssub.s32 %s37, %s44
      %p128 = scmp.eq.s32.totalorder %s127, 0
      %s130 = sadd.s32 %s129, 1
      %s131 = scalar_select %p128, %s129, %s130
      %p134 = pneg %p128
      %p135 = scmp.eq.s32.totalorder %s29, 3
      %p136 = por %p134, %p135
      %p137 = scmp.ne.s32.totalorder %s129, %s132
      %p138 = scmp.eq.s32.totalorder %s29, 0
      %p139 = por %p137, %p138
      %p140 = scmp.ne.s32.totalorder %s129, %s132
      %p141 = scmp.eq.s32.totalorder %s34, 3
      %p142 = por %p140, %p141
      %p143 = scmp.ne.s32.totalorder %s132, %s133
      %p144 = scmp.eq.s32.totalorder %s34, 0
      %p145 = por %p143, %p144
      %p146 = scmp.ne.s32.totalorder %s132, %s133
      %p147 = scmp.eq.s32.totalorder %s35, 3
      %p148 = por %p146, %p147
      %p150 = scmp.ne.s32.totalorder %s133, %s149
      %p151 = scmp.eq.s32.totalorder %s35, 0
      %p152 = por %p150, %p151
      %s153 = ssub.s32 %s37, %s44
      %p154 = scmp.eq.s32.totalorder %s153, 0
      %s156 = sadd.s32 %s155, 1
      %s157 = scalar_select %p154, %s155, %s156
      %p160 = pneg %p154
      %p161 = scmp.eq.s32.totalorder %s29, 3
      %p162 = por %p160, %p161
      %p163 = scmp.ne.s32.totalorder %s155, %s158
      %p164 = scmp.eq.s32.totalorder %s29, 0
      %p165 = por %p163, %p164
      %p166 = scmp.ne.s32.totalorder %s155, %s158
      %p167 = scmp.eq.s32.totalorder %s34, 3
      %p168 = por %p166, %p167
      %p169 = scmp.ne.s32.totalorder %s158, %s159
      %p170 = scmp.eq.s32.totalorder %s34, 0
      %p171 = por %p169, %p170
      %p172 = scmp.ne.s32.totalorder %s158, %s159
      %p173 = scmp.eq.s32.totalorder %s35, 3
      %p174 = por %p172, %p173
      %p176 = scmp.ne.s32.totalorder %s159, %s175
      %p177 = scmp.eq.s32.totalorder %s35, 0
      %p178 = por %p176, %p177
      %s179 = ssub.s32 %s37, %s44
      %p180 = scmp.eq.s32.totalorder %s179, 0
      %s182 = sadd.s32 %s181, 1
      %s183 = scalar_select %p180, %s181, %s182
      %p186 = pneg %p180
      %p187 = scmp.eq.s32.totalorder %s29, 3
      %p188 = por %p186, %p187
      %p189 = scmp.ne.s32.totalorder %s181, %s184
      %p190 = scmp.eq.s32.totalorder %s29, 0
      %p191 = por %p189, %p190
      %p192 = scmp.ne.s32.totalorder %s181, %s184
      %p193 = scmp.eq.s32.totalorder %s34, 3
      %p194 = por %p192, %p193
      %p195 = scmp.ne.s32.totalorder %s184, %s185
      %p196 = scmp.eq.s32.totalorder %s34, 0
      %p197 = por %p195, %p196
      %p198 = scmp.ne.s32.totalorder %s184, %s185
      %p199 = scmp.eq.s32.totalorder %s35, 3
      %p200 = por %p198, %p199
      %p202 = scmp.ne.s32.totalorder %s185, %s201
      %p203 = scmp.eq.s32.totalorder %s35, 0
      %p204 = por %p202, %p203
      %s205 = ssub.s32 %s37, %s44
      %p206 = scmp.eq.s32.totalorder %s205, 0
      %s208 = sadd.s32 %s207, 1
      %s209 = scalar_select %p206, %s207, %s208
      %p212 = pneg %p206
      %p213 = scmp.eq.s32.totalorder %s29, 3
      %p214 = por %p212, %p213
      %p215 = scmp.ne.s32.totalorder %s207, %s210
      %p216 = scmp.eq.s32.totalorder %s29, 0
      %p217 = por %p215, %p216
      %p218 = scmp.ne.s32.totalorder %s207, %s210
      %p219 = scmp.eq.s32.totalorder %s34, 3
      %p220 = por %p218, %p219
      %p221 = scmp.ne.s32.totalorder %s210, %s211
      %p222 = scmp.eq.s32.totalorder %s34, 0
      %p223 = por %p221, %p222
      %p224 = scmp.ne.s32.totalorder %s210, %s211
      %p225 = scmp.eq.s32.totalorder %s35, 3
      %p226 = por %p224, %p225
      %p228 = scmp.ne.s32.totalorder %s211, %s227
      %p229 = scmp.eq.s32.totalorder %s35, 0
      %p230 = por %p228, %p229
      %s231 = ssub.s32 %s37, %s44
      %p232 = scmp.eq.s32.totalorder %s231, 0
      %s234 = sadd.s32 %s233, 1
      %s235 = scalar_select %p232, %s233, %s234
      %p238 = pneg %p232
      %p239 = scmp.eq.s32.totalorder %s29, 3
      %p240 = por %p238, %p239
      %p241 = scmp.ne.s32.totalorder %s233, %s236
      %p242 = scmp.eq.s32.totalorder %s29, 0
      %p243 = por %p241, %p242
      %p244 = scmp.ne.s32.totalorder %s233, %s236
      %p245 = scmp.eq.s32.totalorder %s34, 3
      %p246 = por %p244, %p245
      %p247 = scmp.ne.s32.totalorder %s236, %s237
      %p248 = scmp.eq.s32.totalorder %s34, 0
      %p249 = por %p247, %p248
      %p250 = scmp.ne.s32.totalorder %s236, %s237
      %p251 = scmp.eq.s32.totalorder %s35, 3
      %p252 = por %p250, %p251
      %p254 = scmp.ne.s32.totalorder %s237, %s253
      %p255 = scmp.eq.s32.totalorder %s35, 0
      %p256 = por %p254, %p255
      %s257 = ssub.s32 %s37, %s44
      %p258 = scmp.eq.s32.totalorder %s257, 0
      %s260 = sadd.s32 %s259, 1
      %s261 = scalar_select %p258, %s259, %s260
      %p264 = pneg %p258
      %p265 = scmp.eq.s32.totalorder %s29, 3
      %p266 = por %p264, %p265
      %p267 = scmp.ne.s32.totalorder %s259, %s262
      %p268 = scmp.eq.s32.totalorder %s29, 0
      %p269 = por %p267, %p268
      %p270 = scmp.ne.s32.totalorder %s259, %s262
      %p271 = scmp.eq.s32.totalorder %s34, 3
      %p272 = por %p270, %p271
      %p273 = scmp.ne.s32.totalorder %s262, %s263
      %p274 = scmp.eq.s32.totalorder %s34, 0
      %p275 = por %p273, %p274
      %p276 = scmp.ne.s32.totalorder %s262, %s263
      %p277 = scmp.eq.s32.totalorder %s35, 3
      %p278 = por %p276, %p277
      %p280 = scmp.ne.s32.totalorder %s263, %s279
      %p281 = scmp.eq.s32.totalorder %s35, 0
      %p282 = por %p280, %p281
      %s283 = ssub.s32 %s37, %s44
      %p284 = scmp.eq.s32.totalorder %s283, 0
      %s286 = sadd.s32 %s285, 1
      %s287 = scalar_select %p284, %s285, %s286
      %p290 = pneg %p284
      %p291 = scmp.eq.s32.totalorder %s29, 3
      %p292 = por %p290, %p291
      %p293 = scmp.ne.s32.totalorder %s285, %s288
      %p294 = scmp.eq.s32.totalorder %s29, 0
      %p295 = por %p293, %p294
      %p296 = scmp.ne.s32.totalorder %s285, %s288
      %p297 = scmp.eq.s32.totalorder %s34, 3
      %p298 = por %p296, %p297
      %p299 = scmp.ne.s32.totalorder %s288, %s289
      %p300 = scmp.eq.s32.totalorder %s34, 0
      %p301 = por %p299, %p300
      %p302 = scmp.ne.s32.totalorder %s288, %s289
      %p303 = scmp.eq.s32.totalorder %s35, 3
      %p304 = por %p302, %p303
      %p306 = scmp.ne.s32.totalorder %s289, %s305
      %p307 = scmp.eq.s32.totalorder %s35, 0
      %p308 = por %p306, %p307
      %s309 = ssub.s32 %s37, %s44
      %p310 = scmp.eq.s32.totalorder %s309, 0
      %s312 = sadd.s32 %s311, 1
      %s313 = scalar_select %p310, %s311, %s312
      %p316 = pneg %p310
      %p317 = scmp.eq.s32.totalorder %s29, 3
      %p318 = por %p316, %p317
      %p319 = scmp.ne.s32.totalorder %s311, %s314
      %p320 = scmp.eq.s32.totalorder %s29, 0
      %p321 = por %p319, %p320
      %p322 = scmp.ne.s32.totalorder %s311, %s314
      %p323 = scmp.eq.s32.totalorder %s34, 3
      %p324 = por %p322, %p323
      %p325 = scmp.ne.s32.totalorder %s314, %s315
      %p326 = scmp.eq.s32.totalorder %s34, 0
      %p327 = por %p325, %p326
      %p328 = scmp.ne.s32.totalorder %s314, %s315
      %p329 = scmp.eq.s32.totalorder %s35, 3
      %p330 = por %p328, %p329
      %p332 = scmp.ne.s32.totalorder %s315, %s331
      %p333 = scmp.eq.s32.totalorder %s35, 0
      %p334 = por %p332, %p333
      %s335 = ssub.s32 %s37, %s44
      %p336 = scmp.eq.s32.totalorder %s335, 0
      %s338 = sadd.s32 %s337, 1
      %s339 = scalar_select %p336, %s337, %s338
      %p342 = pneg %p336
      %p343 = scmp.eq.s32.totalorder %s29, 3
      %p344 = por %p342, %p343
      %p345 = scmp.ne.s32.totalorder %s337, %s340
      %p346 = scmp.eq.s32.totalorder %s29, 0
      %p347 = por %p345, %p346
      %p348 = scmp.ne.s32.totalorder %s337, %s340
      %p349 = scmp.eq.s32.totalorder %s34, 3
      %p350 = por %p348, %p349
      %p351 = scmp.ne.s32.totalorder %s340, %s341
      %p352 = scmp.eq.s32.totalorder %s34, 0
      %p353 = por %p351, %p352
      %p354 = scmp.ne.s32.totalorder %s340, %s341
      %p355 = scmp.eq.s32.totalorder %s35, 3
      %p356 = por %p354, %p355
      %p358 = scmp.ne.s32.totalorder %s341, %s357
      %p359 = scmp.eq.s32.totalorder %s35, 0
      %p360 = por %p358, %p359
      %s361 = ssub.s32 %s37, %s44
      %p362 = scmp.eq.s32.totalorder %s361, 0
      %s364 = sadd.s32 %s363, 1
      %s365 = scalar_select %p362, %s363, %s364
      %p368 = pneg %p362
      %p369 = scmp.eq.s32.totalorder %s29, 3
      %p370 = por %p368, %p369
      %p371 = scmp.ne.s32.totalorder %s363, %s366
      %p372 = scmp.eq.s32.totalorder %s29, 0
      %p373 = por %p371, %p372
      %p374 = scmp.ne.s32.totalorder %s363, %s366
      %p375 = scmp.eq.s32.totalorder %s34, 3
      %p376 = por %p374, %p375
      %p377 = scmp.ne.s32.totalorder %s366, %s367
      %p378 = scmp.eq.s32.totalorder %s34, 0
      %p379 = por %p377, %p378
      %p380 = scmp.ne.s32.totalorder %s366, %s367
      %p381 = scmp.eq.s32.totalorder %s35, 3
      %p382 = por %p380, %p381
      %p384 = scmp.ne.s32.totalorder %s367, %s383
      %p385 = scmp.eq.s32.totalorder %s35, 0
      %p386 = por %p384, %p385
      %s387 = ssub.s32 %s37, %s44
      %p388 = scmp.eq.s32.totalorder %s387, 0
      %s390 = sadd.s32 %s389, 1
      %s391 = scalar_select %p388, %s389, %s390
      %p394 = pneg %p388
      %p395 = scmp.eq.s32.totalorder %s29, 3
      %p396 = por %p394, %p395
      %p397 = scmp.ne.s32.totalorder %s389, %s392
      %p398 = scmp.eq.s32.totalorder %s29, 0
      %p399 = por %p397, %p398
      %p400 = scmp.ne.s32.totalorder %s389, %s392
      %p401 = scmp.eq.s32.totalorder %s34, 3
      %p402 = por %p400, %p401
      %p403 = scmp.ne.s32.totalorder %s392, %s393
      %p404 = scmp.eq.s32.totalorder %s34, 0
      %p405 = por %p403, %p404
      %p406 = scmp.ne.s32.totalorder %s392, %s393
      %p407 = scmp.eq.s32.totalorder %s35, 3
      %p408 = por %p406, %p407
      %p410 = scmp.ne.s32.totalorder %s393, %s409
      %p411 = scmp.eq.s32.totalorder %s35, 0
      %p412 = por %p410, %p411
      %s413 = ssub.s32 %s36, %s48
      %p414 = scmp.eq.s32.totalorder %s413, 0
      %s416 = sadd.s32 %s415, 1
      %s417 = scalar_select %p414, %s415, %s416
      %p420 = pneg %p414
      %p421 = scmp.eq.s32.totalorder %s29, 3
      %p422 = por %p420, %p421
      %p423 = scmp.ne.s32.totalorder %s415, %s418
      %p424 = scmp.eq.s32.totalorder %s29, 0
      %p425 = por %p423, %p424
      %p426 = scmp.ne.s32.totalorder %s415, %s418
      %p427 = scmp.eq.s32.totalorder %s34, 3
      %p428 = por %p426, %p427
      %p429 = scmp.ne.s32.totalorder %s418, %s419
      %p430 = scmp.eq.s32.totalorder %s34, 0
      %p431 = por %p429, %p430
      %p432 = scmp.ne.s32.totalorder %s418, %s419
      %p433 = scmp.eq.s32.totalorder %s35, 3
      %p434 = por %p432, %p433
      %p436 = scmp.ne.s32.totalorder %s419, %s435
      %p437 = scmp.eq.s32.totalorder %s35, 0
      %p438 = por %p436, %p437
      %p439 = scmp.le.s32.totalorder 1, %s29
      %p440 = scmp.lt.s32.totalorder %s29, 5
      %p441 = pnand %p439, %p440
      %p442 = pneg %p441
      // Predicated region
      $region9: #{tpu_custom_call.1} parent=5 // pred_check
        _
      $region10: #{tpu_custom_call.1} parent=5 // pred_check_branch
        %444 = sbr.rel (%p441) target = $region12
      $region11: #{tpu_custom_call.1} parent=5 // pred_region
        %s445 = ssub.s32 %s29, 1
      $region12: #{tpu_custom_call.1} parent=5 // pred_fallthru
        _
      %p446 = scmp.lt.s32.totalorder %s29, 4
      // Predicated region
      $region13: #{tpu_custom_call.1} parent=5 // pred_check
        %p447 = pneg %p446
      $region14: #{tpu_custom_call.1} parent=5 // pred_check_branch
        %449 = sbr.rel (%p447) target = $region16
      $region15: #{tpu_custom_call.1} parent=5 // pred_region
        // Predicated region
        $region17: #{tpu_custom_call.1} parent=15 // pred_check
          %p450 = pneg %p61
        $region18: #{tpu_custom_call.1} parent=15 // pred_check_branch
          %452 = sbr.rel (%p450) target = $region20
        $region19: #{tpu_custom_call.1} parent=15 // pred_region
          %s453 = sand.u32 %s51, 1
          %s454 = scalar_lea.sflag [#allocation5], %s453
          %s455 = sand.u32 %s51, 1
          %s456 = smul.addr %s455, 256
          %s457 = scalar_lea.vmem [#allocation4], %s456
          %s459 = ssub.s32 4096, 4096
          %460 = vsyncadd %s454, %s459
          %s461 = smul.addr %s36, 32
          %s462 = smul.addr %s461, 128
          %s463 = scalar_lea.hbm %s0, %s462
          %s464 = sshll.u32 %s457, 4
          %s465 = int_to_ptr.vmem [resolvable:$true] %s464
          %470 = dma.hbm_to_vmem [thread:$0]  %s463, 4096, %s465, %s454, 128, 128, 8
        $region20: #{tpu_custom_call.1} parent=15 // pred_fallthru
          _
        // Predicated region
        $region21: #{tpu_custom_call.1} parent=15 // pred_check
          %p471 = pneg %p87
        $region22: #{tpu_custom_call.1} parent=15 // pred_check_branch
          %473 = sbr.rel (%p471) target = $region24
        $region23: #{tpu_custom_call.1} parent=15 // pred_region
          %p474 = scmp.lt.s32.totalorder %s37, 1
          %s475 = scalar_select %p474, %s37, 1
          %s476 = smul.addr %s475, 8
          %s477 = smul.addr %s476, 4
          %s478 = scalar_lea.vmem %s1, %s477
        $region24: #{tpu_custom_call.1} parent=15 // pred_fallthru
          _
        // Predicated region
        $region25: #{tpu_custom_call.1} parent=15 // pred_check
          %p479 = pneg %p113
        $region26: #{tpu_custom_call.1} parent=15 // pred_check_branch
          %481 = sbr.rel (%p479) target = $region28
        $region27: #{tpu_custom_call.1} parent=15 // pred_region
          %s482 = sand.u32 %s29, 1
          %s483 = scalar_lea.sflag [#allocation8], %s482
          %s484 = sand.u32 %s103, 1
          %s485 = smul.addr %s484, 72
          %s486 = scalar_lea.vmem [#allocation7], %s485
          %s488 = ssub.s32 1152, 1152
          %489 = vsyncadd %s483, %s488
          %s490 = smul.addr %s37, 18
          %s491 = smul.addr %s490, 64
          %s492 = scalar_lea.hbm %s2, %s491
          %s493 = sshll.u32 %s486, 4
          %s494 = int_to_ptr.vmem [resolvable:$true] %s493
          %499 = dma.hbm_to_vmem [thread:$0]  %s492, 1152, %s494, %s483, 64, 64, 4
        $region28: #{tpu_custom_call.1} parent=15 // pred_fallthru
          _
        // Predicated region
        $region29: #{tpu_custom_call.1} parent=15 // pred_check
          %p500 = pneg %p139
        $region30: #{tpu_custom_call.1} parent=15 // pred_check_branch
          %502 = sbr.rel (%p500) target = $region32
        $region31: #{tpu_custom_call.1} parent=15 // pred_region
          %s503 = sand.u32 %s29, 1
          %s504 = scalar_lea.sflag [#allocation8], %s503
          %s505 = sand.u32 %s129, 1
          %s506 = smul.addr %s505, 8
          %s507 = scalar_lea.vmem [#allocation9], %s506
          %s509 = ssub.s32 128, 128
          %510 = vsyncadd %s504, %s509
          %s511 = smul.addr %s37, 2
          %s512 = smul.addr %s511, 64
          %s513 = scalar_lea.hbm %s3, %s512
          %s514 = sshll.u32 %s507, 4
          %s515 = int_to_ptr.vmem [resolvable:$true] %s514
          %520 = dma.hbm_to_vmem [thread:$0]  %s513, 128, %s515, %s504, 64, 64, 4
        $region32: #{tpu_custom_call.1} parent=15 // pred_fallthru
          _
        // Predicated region
        $region33: #{tpu_custom_call.1} parent=15 // pred_check
          %p521 = pneg %p165
        $region34: #{tpu_custom_call.1} parent=15 // pred_check_branch
          %523 = sbr.rel (%p521) target = $region36
        $region35: #{tpu_custom_call.1} parent=15 // pred_region
          %p524 = scmp.lt.s32.totalorder %s37, 1
          %s525 = scalar_select %p524, %s37, 1
          %s526 = smul.addr %s525, 8
          %s527 = smul.addr %s526, 4
          %s528 = scalar_lea.vmem %s4, %s527
        $region36: #{tpu_custom_call.1} parent=15 // pred_fallthru
          _
        // Predicated region
        $region37: #{tpu_custom_call.1} parent=15 // pred_check
          %p529 = pneg %p191
        $region38: #{tpu_custom_call.1} parent=15 // pred_check_branch
          %531 = sbr.rel (%p529) target = $region40
        $region39: #{tpu_custom_call.1} parent=15 // pred_region
          %p532 = scmp.lt.s32.totalorder %s37, 1
          %s533 = scalar_select %p532, %s37, 1
          %s534 = smul.addr %s533, 2
          %s535 = scalar_lea.vmem %s5, %s534
        $region40: #{tpu_custom_call.1} parent=15 // pred_fallthru
          _
        // Predicated region
        $region41: #{tpu_custom_call.1} parent=15 // pred_check
          %p536 = pneg %p217
        $region42: #{tpu_custom_call.1} parent=15 // pred_check_branch
          %538 = sbr.rel (%p536) target = $region44
        $region43: #{tpu_custom_call.1} parent=15 // pred_region
          %p539 = scmp.lt.s32.totalorder %s37, 1
          %s540 = scalar_select %p539, %s37, 1
          %s541 = scalar_lea.vmem %s6, %s540
        $region44: #{tpu_custom_call.1} parent=15 // pred_fallthru
          _
        // Predicated region
        $region45: #{tpu_custom_call.1} parent=15 // pred_check
          %p542 = pneg %p243
        $region46: #{tpu_custom_call.1} parent=15 // pred_check_branch
          %544 = sbr.rel (%p542) target = $region48
        $region47: #{tpu_custom_call.1} parent=15 // pred_region
          %p545 = scmp.lt.s32.totalorder %s37, 1
          %s546 = scalar_select %p545, %s37, 1
          %s547 = scalar_lea.vmem %s7, %s546
        $region48: #{tpu_custom_call.1} parent=15 // pred_fallthru
          _
        // Predicated region
        $region49: #{tpu_custom_call.1} parent=15 // pred_check
          %p548 = pneg %p269
        $region50: #{tpu_custom_call.1} parent=15 // pred_check_branch
          %550 = sbr.rel (%p548) target = $region52
        $region51: #{tpu_custom_call.1} parent=15 // pred_region
          %p551 = scmp.lt.s32.totalorder %s37, 1
          %s552 = scalar_select %p551, %s37, 1
          %s553 = scalar_lea.vmem %s8, %s552
        $region52: #{tpu_custom_call.1} parent=15 // pred_fallthru
          _
        // Predicated region
        $region53: #{tpu_custom_call.1} parent=15 // pred_check
          %p554 = pneg %p295
        $region54: #{tpu_custom_call.1} parent=15 // pred_check_branch
          %556 = sbr.rel (%p554) target = $region56
        $region55: #{tpu_custom_call.1} parent=15 // pred_region
          %p557 = scmp.lt.s32.totalorder %s37, 1
          %s558 = scalar_select %p557, %s37, 1
          %s559 = scalar_lea.vmem %s9, %s558
        $region56: #{tpu_custom_call.1} parent=15 // pred_fallthru
          _
        // Predicated region
        $region57: #{tpu_custom_call.1} parent=15 // pred_check
          %p560 = pneg %p321
        $region58: #{tpu_custom_call.1} parent=15 // pred_check_branch
          %562 = sbr.rel (%p560) target = $region60
        $region59: #{tpu_custom_call.1} parent=15 // pred_region
          %p563 = scmp.lt.s32.totalorder %s37, 1
          %s564 = scalar_select %p563, %s37, 1
          %s565 = scalar_lea.vmem %s10, %s564
        $region60: #{tpu_custom_call.1} parent=15 // pred_fallthru
          _
        // Predicated region
        $region61: #{tpu_custom_call.1} parent=15 // pred_check
          %p566 = pneg %p347
        $region62: #{tpu_custom_call.1} parent=15 // pred_check_branch
          %568 = sbr.rel (%p566) target = $region64
        $region63: #{tpu_custom_call.1} parent=15 // pred_region
          %p569 = scmp.lt.s32.totalorder %s37, 1
          %s570 = scalar_select %p569, %s37, 1
          %s571 = scalar_lea.vmem %s11, %s570
        $region64: #{tpu_custom_call.1} parent=15 // pred_fallthru
          _
        // Predicated region
        $region65: #{tpu_custom_call.1} parent=15 // pred_check
          %p572 = pneg %p373
        $region66: #{tpu_custom_call.1} parent=15 // pred_check_branch
          %574 = sbr.rel (%p572) target = $region68
        $region67: #{tpu_custom_call.1} parent=15 // pred_region
          %p575 = scmp.lt.s32.totalorder %s37, 1
          %s576 = scalar_select %p575, %s37, 1
          %s577 = scalar_lea.vmem %s12, %s576
        $region68: #{tpu_custom_call.1} parent=15 // pred_fallthru
          _
        // Predicated region
        $region69: #{tpu_custom_call.1} parent=15 // pred_check
          %p578 = pneg %p399
        $region70: #{tpu_custom_call.1} parent=15 // pred_check_branch
          %580 = sbr.rel (%p578) target = $region72
        $region71: #{tpu_custom_call.1} parent=15 // pred_region
          %p581 = scmp.lt.s32.totalorder %s37, 1
          %s582 = scalar_select %p581, %s37, 1
          %s583 = scalar_lea.vmem %s13, %s582
        $region72: #{tpu_custom_call.1} parent=15 // pred_fallthru
          _
      $region16: #{tpu_custom_call.1} parent=5 // pred_fallthru
        _
      %p584 = scmp.le.s32.totalorder 1, %s29
      %p585 = scmp.lt.s32.totalorder %s29, 5
      %p586 = pnand %p584, %p585
      %p587 = pneg %p586
      // Predicated region
      $region73: #{tpu_custom_call.1} parent=5 // pred_check
        _
      $region74: #{tpu_custom_call.1} parent=5 // pred_check_branch
        %589 = sbr.rel (%p586) target = $region76
      $region75: #{tpu_custom_call.1} parent=5 // pred_region
        %s590 = ssub.s32 %s29, 1
        %s591 = sand.u32 %s54, 1
        %s592 = scalar_lea.sflag [#allocation5], %s591
        %s593 = sand.u32 %s54, 1
        %s594 = smul.addr %s593, 256
        %s595 = scalar_lea.vmem [#allocation4], %s594
        // Predicated region
        $region77: #{tpu_custom_call.1} parent=75 // pred_check
          %p596 = pneg %p67
        $region78: #{tpu_custom_call.1} parent=75 // pred_check_branch
          %598 = sbr.rel (%p596) target = $region80
        $region79: #{tpu_custom_call.1} parent=75 // pred_region
          %599 = dma.done %s592, 4096
        $region80: #{tpu_custom_call.1} parent=75 // pred_fallthru
          _
        %s600 = sand.u32 %s34, 1
        %s601 = scalar_lea.sflag [#allocation8], %s600
        %s602 = sand.u32 %s106, 1
        %s603 = smul.addr %s602, 72
        %s604 = scalar_lea.vmem [#allocation7], %s603
        // Predicated region
        $region81: #{tpu_custom_call.1} parent=75 // pred_check
          %p605 = pneg %p119
        $region82: #{tpu_custom_call.1} parent=75 // pred_check_branch
          %607 = sbr.rel (%p605) target = $region84
        $region83: #{tpu_custom_call.1} parent=75 // pred_region
          %608 = dma.done %s601, 1152
        $region84: #{tpu_custom_call.1} parent=75 // pred_fallthru
          _
        %s609 = sand.u32 %s34, 1
        %s610 = scalar_lea.sflag [#allocation8], %s609
        %s611 = sand.u32 %s132, 1
        %s612 = smul.addr %s611, 8
        %s613 = scalar_lea.vmem [#allocation9], %s612
        // Predicated region
        $region85: #{tpu_custom_call.1} parent=75 // pred_check
          %p614 = pneg %p145
        $region86: #{tpu_custom_call.1} parent=75 // pred_check_branch
          %616 = sbr.rel (%p614) target = $region88
        $region87: #{tpu_custom_call.1} parent=75 // pred_region
          %617 = dma.done %s610, 128
        $region88: #{tpu_custom_call.1} parent=75 // pred_fallthru
          _
        %s618 = sand.u32 %s54, 1
        %s619 = scalar_lea.sflag [#allocation5], %s618
        %s620 = sand.u32 %s54, 1
        %s621 = smul.addr %s620, 256
        %s622 = scalar_lea.vmem [#allocation4], %s621
        %p623 = pneg %p67
        %p624 = pneg %p64
        %p625 = scmp.lt.s32.totalorder %s39, 1
        %s626 = scalar_select %p625, %s39, 1
        %s627 = smul.addr %s626, 8
        %s628 = smul.addr %s627, 4
        %s629 = scalar_lea.vmem %s1, %s628
        %p630 = pneg %p93
        %p631 = pneg %p90
        %s632 = sand.u32 %s34, 1
        %s633 = scalar_lea.sflag [#allocation8], %s632
        %s634 = sand.u32 %s106, 1
        %s635 = smul.addr %s634, 72
        %s636 = scalar_lea.vmem [#allocation7], %s635
        %p637 = pneg %p119
        %p638 = pneg %p116
        %s639 = sand.u32 %s34, 1
        %s640 = scalar_lea.sflag [#allocation8], %s639
        %s641 = sand.u32 %s132, 1
        %s642 = smul.addr %s641, 8
        %s643 = scalar_lea.vmem [#allocation9], %s642
        %p644 = pneg %p145
        %p645 = pneg %p142
        %p646 = scmp.lt.s32.totalorder %s39, 1
        %s647 = scalar_select %p646, %s39, 1
        %s648 = smul.addr %s647, 8
        %s649 = smul.addr %s648, 4
        %s650 = scalar_lea.vmem %s4, %s649
        %p651 = pneg %p171
        %p652 = pneg %p168
        %p653 = scmp.lt.s32.totalorder %s39, 1
        %s654 = scalar_select %p653, %s39, 1
        %s655 = smul.addr %s654, 2
        %s656 = scalar_lea.vmem %s5, %s655
        %p657 = pneg %p197
        %p658 = pneg %p194
        %p659 = scmp.lt.s32.totalorder %s39, 1
        %s660 = scalar_select %p659, %s39, 1
        %s661 = scalar_lea.vmem %s6, %s660
        %p662 = pneg %p223
        %p663 = pneg %p220
        %p664 = scmp.lt.s32.totalorder %s39, 1
        %s665 = scalar_select %p664, %s39, 1
        %s666 = scalar_lea.vmem %s7, %s665
        %p667 = pneg %p249
        %p668 = pneg %p246
        %p669 = scmp.lt.s32.totalorder %s39, 1
        %s670 = scalar_select %p669, %s39, 1
        %s671 = scalar_lea.vmem %s8, %s670
        %p672 = pneg %p275
        %p673 = pneg %p272
        %p674 = scmp.lt.s32.totalorder %s39, 1
        %s675 = scalar_select %p674, %s39, 1
        %s676 = scalar_lea.vmem %s9, %s675
        %p677 = pneg %p301
        %p678 = pneg %p298
        %p679 = scmp.lt.s32.totalorder %s39, 1
        %s680 = scalar_select %p679, %s39, 1
        %s681 = scalar_lea.vmem %s10, %s680
        %p682 = pneg %p327
        %p683 = pneg %p324
        %p684 = scmp.lt.s32.totalorder %s39, 1
        %s685 = scalar_select %p684, %s39, 1
        %s686 = scalar_lea.vmem %s11, %s685
        %p687 = pneg %p353
        %p688 = pneg %p350
        %p689 = scmp.lt.s32.totalorder %s39, 1
        %s690 = scalar_select %p689, %s39, 1
        %s691 = scalar_lea.vmem %s12, %s690
        %p692 = pneg %p379
        %p693 = pneg %p376
        %p694 = scmp.lt.s32.totalorder %s39, 1
        %s695 = scalar_select %p694, %s39, 1
        %s696 = scalar_lea.vmem %s13, %s695
        %p697 = pneg %p405
        %p698 = pneg %p402
        %p699 = pneg %p431
        %p700 = pneg %p428
        %s701 = sand.u32 %s418, 1
        %s702 = scalar_lea.sflag [#allocation6], %s701
        %s703 = sand.u32 %s418, 1
        %s704 = smul.addr %s703, 256
        %s705 = scalar_lea.vmem [#allocation10], %s704
        %p706 = scmp.lt.s32.totalorder %s39, 1
        %s707 = scalar_select %p706, %s39, 1
        %s708 = smul.addr %s707, 8
        %s709 = smul.addr %s708, 4
        %s710 = scalar_lea.vmem %s1, %s709
        %p711 = scmp.lt.s32.totalorder %s39, 1
        %s712 = scalar_select %p711, %s39, 1
        %s713 = smul.addr %s712, 8
        %s714 = smul.addr %s713, 4
        %s715 = scalar_lea.vmem %s4, %s714
        %p716 = scmp.lt.s32.totalorder %s39, 1
        %s717 = scalar_select %p716, %s39, 1
        %s718 = smul.addr %s717, 2
        %s719 = scalar_lea.vmem %s5, %s718
        %p720 = scmp.lt.s32.totalorder %s39, 1
        %s721 = scalar_select %p720, %s39, 1
        %s722 = scalar_lea.vmem %s6, %s721
        %p723 = scmp.lt.s32.totalorder %s39, 1
        %s724 = scalar_select %p723, %s39, 1
        %s725 = scalar_lea.vmem %s7, %s724
        %p726 = scmp.lt.s32.totalorder %s39, 1
        %s727 = scalar_select %p726, %s39, 1
        %s728 = scalar_lea.vmem %s8, %s727
        %p729 = scmp.lt.s32.totalorder %s39, 1
        %s730 = scalar_select %p729, %s39, 1
        %s731 = scalar_lea.vmem %s9, %s730
        %p732 = scmp.lt.s32.totalorder %s39, 1
        %s733 = scalar_select %p732, %s39, 1
        %s734 = scalar_lea.vmem %s10, %s733
        %p735 = scmp.lt.s32.totalorder %s39, 1
        %s736 = scalar_select %p735, %s39, 1
        %s737 = scalar_lea.vmem %s11, %s736
        %p738 = scmp.lt.s32.totalorder %s39, 1
        %s739 = scalar_select %p738, %s39, 1
        %s740 = scalar_lea.vmem %s12, %s739
        %p741 = scmp.lt.s32.totalorder %s39, 1
        %s742 = scalar_select %p741, %s39, 1
        %s743 = scalar_lea.vmem %s13, %s742
        %p745 = scmp.eq.s32.totalorder %s39, 0
        // Predicated region
        $region89: #{tpu_custom_call.1} parent=75 // pred_check
          %p746 = pneg %p745
        $region90: #{tpu_custom_call.1} parent=75 // pred_check_branch
          %748 = sbr.rel (%p746) target = $region92
        $region91: #{tpu_custom_call.1} parent=75 // pred_region
          %v749 = vld [vmem:[%s595] sm:$0xff]
          %v750 = vld [vmem:[%s595 + $0x8] sm:$0xff]
          %v751 = vld [vmem:[%s595 + $0x10] sm:$0xff]
          %v752 = vld [vmem:[%s595 + $0x18] sm:$0xff]
          %v753 = vld [vmem:[%s595 + $0x20] sm:$0xff]
          %v754 = vld [vmem:[%s595 + $0x28] sm:$0xff]
          %v755 = vld [vmem:[%s595 + $0x30] sm:$0xff]
          %v756 = vld [vmem:[%s595 + $0x38] sm:$0xff]
          %v757 = vld [vmem:[%s595 + $0x40] sm:$0xff]
          %v758 = vld [vmem:[%s595 + $0x48] sm:$0xff]
          %v759 = vld [vmem:[%s595 + $0x50] sm:$0xff]
          %v760 = vld [vmem:[%s595 + $0x58] sm:$0xff]
          %v761 = vld [vmem:[%s595 + $0x60] sm:$0xff]
          %v762 = vld [vmem:[%s595 + $0x68] sm:$0xff]
          %v763 = vld [vmem:[%s595 + $0x70] sm:$0xff]
          %v764 = vld [vmem:[%s595 + $0x78] sm:$0xff]
          %v765 = vld [vmem:[%s595 + $0x80] sm:$0xff]
          %v766 = vld [vmem:[%s595 + $0x88] sm:$0xff]
          %v767 = vld [vmem:[%s595 + $0x90] sm:$0xff]
          %v768 = vld [vmem:[%s595 + $0x98] sm:$0xff]
          %v769 = vld [vmem:[%s595 + $0xa0] sm:$0xff]
          %v770 = vld [vmem:[%s595 + $0xa8] sm:$0xff]
          %v771 = vld [vmem:[%s595 + $0xb0] sm:$0xff]
          %v772 = vld [vmem:[%s595 + $0xb8] sm:$0xff]
          %v773 = vld [vmem:[%s595 + $0xc0] sm:$0xff]
          %v774 = vld [vmem:[%s595 + $0xc8] sm:$0xff]
          %v775 = vld [vmem:[%s595 + $0xd0] sm:$0xff]
          %v776 = vld [vmem:[%s595 + $0xd8] sm:$0xff]
          %v777 = vld [vmem:[%s595 + $0xe0] sm:$0xff]
          %v778 = vld [vmem:[%s595 + $0xe8] sm:$0xff]
          %v779 = vld [vmem:[%s595 + $0xf0] sm:$0xff]
          %v780 = vld [vmem:[%s595 + $0xf8] sm:$0xff]
          %vm781 = vcmask 523264
          %782 = vst.msk [vmem:[#allocation2] sm:$0xff] %vm781, %v749
          %783 = vst.msk [vmem:[#allocation2 + $0x8] sm:$0xff] %vm781, %v750
          %784 = vst.msk [vmem:[#allocation2 + $0x10] sm:$0xff] %vm781, %v751
          %785 = vst.msk [vmem:[#allocation2 + $0x18] sm:$0xff] %vm781, %v752
          %786 = vst.msk [vmem:[#allocation2 + $0x20] sm:$0xff] %vm781, %v753
          %787 = vst.msk [vmem:[#allocation2 + $0x28] sm:$0xff] %vm781, %v754
          %788 = vst.msk [vmem:[#allocation2 + $0x30] sm:$0xff] %vm781, %v755
          %789 = vst.msk [vmem:[#allocation2 + $0x38] sm:$0xff] %vm781, %v756
          %790 = vst.msk [vmem:[#allocation2 + $0x40] sm:$0xff] %vm781, %v757
          %791 = vst.msk [vmem:[#allocation2 + $0x48] sm:$0xff] %vm781, %v758
          %792 = vst.msk [vmem:[#allocation2 + $0x50] sm:$0xff] %vm781, %v759
          %793 = vst.msk [vmem:[#allocation2 + $0x58] sm:$0xff] %vm781, %v760
          %794 = vst.msk [vmem:[#allocation2 + $0x60] sm:$0xff] %vm781, %v761
          %795 = vst.msk [vmem:[#allocation2 + $0x68] sm:$0xff] %vm781, %v762
          %796 = vst.msk [vmem:[#allocation2 + $0x70] sm:$0xff] %vm781, %v763
          %797 = vst.msk [vmem:[#allocation2 + $0x78] sm:$0xff] %vm781, %v764
          %798 = vst.msk [vmem:[#allocation2 + $0x80] sm:$0xff] %vm781, %v765
          %799 = vst.msk [vmem:[#allocation2 + $0x88] sm:$0xff] %vm781, %v766
          %800 = vst.msk [vmem:[#allocation2 + $0x90] sm:$0xff] %vm781, %v767
          %801 = vst.msk [vmem:[#allocation2 + $0x98] sm:$0xff] %vm781, %v768
          %802 = vst.msk [vmem:[#allocation2 + $0xa0] sm:$0xff] %vm781, %v769
          %803 = vst.msk [vmem:[#allocation2 + $0xa8] sm:$0xff] %vm781, %v770
          %804 = vst.msk [vmem:[#allocation2 + $0xb0] sm:$0xff] %vm781, %v771
          %805 = vst.msk [vmem:[#allocation2 + $0xb8] sm:$0xff] %vm781, %v772
          %806 = vst.msk [vmem:[#allocation2 + $0xc0] sm:$0xff] %vm781, %v773
          %807 = vst.msk [vmem:[#allocation2 + $0xc8] sm:$0xff] %vm781, %v774
          %808 = vst.msk [vmem:[#allocation2 + $0xd0] sm:$0xff] %vm781, %v775
          %809 = vst.msk [vmem:[#allocation2 + $0xd8] sm:$0xff] %vm781, %v776
          %810 = vst.msk [vmem:[#allocation2 + $0xe0] sm:$0xff] %vm781, %v777
          %811 = vst.msk [vmem:[#allocation2 + $0xe8] sm:$0xff] %vm781, %v778
          %812 = vst.msk [vmem:[#allocation2 + $0xf0] sm:$0xff] %vm781, %v779
          %813 = vst.msk [vmem:[#allocation2 + $0xf8] sm:$0xff] %vm781, %v780
          %vm814 = vcmask 125952
          %815 = vst.msk [vmem:[#allocation3] sm:$0xf] %vm814, 0
          %816 = vst.msk [vmem:[#allocation3 + $0x4] sm:$0xf] %vm814, 0
          %vm817 = vcmask 122880
          %818 = vst.msk [vmem:[#allocation3 + $0x8] sm:$0x1] %vm817, 0
          %s819 = scalar_lea.vmem [#allocation3], 204
          %820 = vst.msk [vmem:[%s819] sm:$0xf] %vm814, 0
          %821 = vst.msk [vmem:[%s819 + $0x4] sm:$0xf] %vm814, 0
          %822 = vst.msk [vmem:[%s819 + $0x8] sm:$0x1] %vm817, 0
          %s823 = scalar_lea.vmem [#allocation3], 12
          %vm824 = vcmask 122880
          %vm825 = vsmask.f32 256
          %vm826 = vmand %vm824, %vm825
          %v827 = vld [vmem:[%s823] sm:$0x1]
          %v828 = vsel %vm826, 0, %v827
          %829 = vst [vmem:[%s823] sm:$0x1] %v828
          %v830 = vld [vmem:[%s823 + $0xc] sm:$0x1]
          %v831 = vsel %vm826, 0, %v830
          %832 = vst [vmem:[%s823 + $0xc] sm:$0x1] %v831
          %v833 = vld [vmem:[%s823 + $0x18] sm:$0x1]
          %v834 = vsel %vm826, 0, %v833
          %835 = vst [vmem:[%s823 + $0x18] sm:$0x1] %v834
          %v836 = vld [vmem:[%s823 + $0x24] sm:$0x1]
          %v837 = vsel %vm826, 0, %v836
          %838 = vst [vmem:[%s823 + $0x24] sm:$0x1] %v837
          %v839 = vld [vmem:[%s823 + $0x30] sm:$0x1]
          %v840 = vsel %vm826, 0, %v839
          %841 = vst [vmem:[%s823 + $0x30] sm:$0x1] %v840
          %v842 = vld [vmem:[%s823 + $0x3c] sm:$0x1]
          %v843 = vsel %vm826, 0, %v842
          %844 = vst [vmem:[%s823 + $0x3c] sm:$0x1] %v843
          %v845 = vld [vmem:[%s823 + $0x48] sm:$0x1]
          %v846 = vsel %vm826, 0, %v845
          %847 = vst [vmem:[%s823 + $0x48] sm:$0x1] %v846
          %v848 = vld [vmem:[%s823 + $0x54] sm:$0x1]
          %v849 = vsel %vm826, 0, %v848
          %850 = vst [vmem:[%s823 + $0x54] sm:$0x1] %v849
          %v851 = vld [vmem:[%s823 + $0x60] sm:$0x1]
          %v852 = vsel %vm826, 0, %v851
          %853 = vst [vmem:[%s823 + $0x60] sm:$0x1] %v852
          %v854 = vld [vmem:[%s823 + $0x6c] sm:$0x1]
          %v855 = vsel %vm826, 0, %v854
          %856 = vst [vmem:[%s823 + $0x6c] sm:$0x1] %v855
          %v857 = vld [vmem:[%s823 + $0x78] sm:$0x1]
          %v858 = vsel %vm826, 0, %v857
          %859 = vst [vmem:[%s823 + $0x78] sm:$0x1] %v858
          %v860 = vld [vmem:[%s823 + $0x84] sm:$0x1]
          %v861 = vsel %vm826, 0, %v860
          %862 = vst [vmem:[%s823 + $0x84] sm:$0x1] %v861
          %v863 = vld [vmem:[%s823 + $0x90] sm:$0x1]
          %v864 = vsel %vm826, 0, %v863
          %865 = vst [vmem:[%s823 + $0x90] sm:$0x1] %v864
          %v866 = vld [vmem:[%s823 + $0x9c] sm:$0x1]
          %v867 = vsel %vm826, 0, %v866
          %868 = vst [vmem:[%s823 + $0x9c] sm:$0x1] %v867
          %v869 = vld [vmem:[%s823 + $0xa8] sm:$0x1]
          %v870 = vsel %vm826, 0, %v869
          %871 = vst [vmem:[%s823 + $0xa8] sm:$0x1] %v870
          %v872 = vld [vmem:[%s823 + $0xb4] sm:$0x1]
          %v873 = vsel %vm826, 0, %v872
          %874 = vst [vmem:[%s823 + $0xb4] sm:$0x1] %v873
          %vm875 = vsmask.f32 7938
          %vm876 = vmand %vm824, %vm875
          %v877 = vld [vmem:[%s823 + $0x8] sm:$0x1]
          %v878 = vsel %vm876, 0, %v877
          %879 = vst [vmem:[%s823 + $0x8] sm:$0x1] %v878
          %v880 = vld [vmem:[%s823 + $0x14] sm:$0x1]
          %v881 = vsel %vm876, 0, %v880
          %882 = vst [vmem:[%s823 + $0x14] sm:$0x1] %v881
          %v883 = vld [vmem:[%s823 + $0x20] sm:$0x1]
          %v884 = vsel %vm876, 0, %v883
          %885 = vst [vmem:[%s823 + $0x20] sm:$0x1] %v884
          %v886 = vld [vmem:[%s823 + $0x2c] sm:$0x1]
          %v887 = vsel %vm876, 0, %v886
          %888 = vst [vmem:[%s823 + $0x2c] sm:$0x1] %v887
          %v889 = vld [vmem:[%s823 + $0x38] sm:$0x1]
          %v890 = vsel %vm876, 0, %v889
          %891 = vst [vmem:[%s823 + $0x38] sm:$0x1] %v890
          %v892 = vld [vmem:[%s823 + $0x44] sm:$0x1]
          %v893 = vsel %vm876, 0, %v892
          %894 = vst [vmem:[%s823 + $0x44] sm:$0x1] %v893
          %v895 = vld [vmem:[%s823 + $0x50] sm:$0x1]
          %v896 = vsel %vm876, 0, %v895
          %897 = vst [vmem:[%s823 + $0x50] sm:$0x1] %v896
          %v898 = vld [vmem:[%s823 + $0x5c] sm:$0x1]
          %v899 = vsel %vm876, 0, %v898
          %900 = vst [vmem:[%s823 + $0x5c] sm:$0x1] %v899
          %v901 = vld [vmem:[%s823 + $0x68] sm:$0x1]
          %v902 = vsel %vm876, 0, %v901
          %903 = vst [vmem:[%s823 + $0x68] sm:$0x1] %v902
          %v904 = vld [vmem:[%s823 + $0x74] sm:$0x1]
          %v905 = vsel %vm876, 0, %v904
          %906 = vst [vmem:[%s823 + $0x74] sm:$0x1] %v905
          %v907 = vld [vmem:[%s823 + $0x80] sm:$0x1]
          %v908 = vsel %vm876, 0, %v907
          %909 = vst [vmem:[%s823 + $0x80] sm:$0x1] %v908
          %v910 = vld [vmem:[%s823 + $0x8c] sm:$0x1]
          %v911 = vsel %vm876, 0, %v910
          %912 = vst [vmem:[%s823 + $0x8c] sm:$0x1] %v911
          %v913 = vld [vmem:[%s823 + $0x98] sm:$0x1]
          %v914 = vsel %vm876, 0, %v913
          %915 = vst [vmem:[%s823 + $0x98] sm:$0x1] %v914
          %v916 = vld [vmem:[%s823 + $0xa4] sm:$0x1]
          %v917 = vsel %vm876, 0, %v916
          %918 = vst [vmem:[%s823 + $0xa4] sm:$0x1] %v917
          %v919 = vld [vmem:[%s823 + $0xb0] sm:$0x1]
          %v920 = vsel %vm876, 0, %v919
          %921 = vst [vmem:[%s823 + $0xb0] sm:$0x1] %v920
          %v922 = vld [vmem:[%s823 + $0xbc] sm:$0x1]
          %v923 = vsel %vm876, 0, %v922
          %924 = vst [vmem:[%s823 + $0xbc] sm:$0x1] %v923
        $region92: #{tpu_custom_call.1} parent=75 // pred_fallthru
          _
        %v925 = vld [vmem:[#allocation2] sm:$0xff]
        %v926 = vld [vmem:[#allocation2 + $0x8] sm:$0xff]
        %v927 = vld [vmem:[#allocation2 + $0x10] sm:$0xff]
        %v928 = vld [vmem:[#allocation2 + $0x18] sm:$0xff]
        %v929 = vld [vmem:[#allocation2 + $0x20] sm:$0xff]
        %v930 = vld [vmem:[#allocation2 + $0x28] sm:$0xff]
        %v931 = vld [vmem:[#allocation2 + $0x30] sm:$0xff]
        %v932 = vld [vmem:[#allocation2 + $0x38] sm:$0xff]
        %v933 = vld [vmem:[#allocation2 + $0x40] sm:$0xff]
        %v934 = vld [vmem:[#allocation2 + $0x48] sm:$0xff]
        %v935 = vld [vmem:[#allocation2 + $0x50] sm:$0xff]
        %v936 = vld [vmem:[#allocation2 + $0x58] sm:$0xff]
        %v937 = vld [vmem:[#allocation2 + $0x60] sm:$0xff]
        %v938 = vld [vmem:[#allocation2 + $0x68] sm:$0xff]
        %v939 = vld [vmem:[#allocation2 + $0x70] sm:$0xff]
        %v940 = vld [vmem:[#allocation2 + $0x78] sm:$0xff]
        %v941 = vld [vmem:[#allocation2 + $0x80] sm:$0xff]
        %v942 = vld [vmem:[#allocation2 + $0x88] sm:$0xff]
        %v943 = vld [vmem:[#allocation2 + $0x90] sm:$0xff]
        %v944 = vld [vmem:[#allocation2 + $0x98] sm:$0xff]
        %v945 = vld [vmem:[#allocation2 + $0xa0] sm:$0xff]
        %v946 = vld [vmem:[#allocation2 + $0xa8] sm:$0xff]
        %v947 = vld [vmem:[#allocation2 + $0xb0] sm:$0xff]
        %v948 = vld [vmem:[#allocation2 + $0xb8] sm:$0xff]
        %v949 = vld [vmem:[#allocation2 + $0xc0] sm:$0xff]
        %v950 = vld [vmem:[#allocation2 + $0xc8] sm:$0xff]
        %v951 = vld [vmem:[#allocation2 + $0xd0] sm:$0xff]
        %v952 = vld [vmem:[#allocation2 + $0xd8] sm:$0xff]
        %v953 = vld [vmem:[#allocation2 + $0xe0] sm:$0xff]
        %v954 = vld [vmem:[#allocation2 + $0xe8] sm:$0xff]
        %v955 = vld [vmem:[#allocation2 + $0xf0] sm:$0xff]
        %v956 = vld [vmem:[#allocation2 + $0xf8] sm:$0xff]
        %v957 = vpack.c.bf16 %v926, %v925
        %v958 = vpack.c.bf16 %v928, %v927
        %v959 = vpack.c.bf16 %v930, %v929
        %v960 = vpack.c.bf16 %v932, %v931
        %v961 = vpack.c.bf16 %v934, %v933
        %v962 = vpack.c.bf16 %v936, %v935
        %v963 = vpack.c.bf16 %v938, %v937
        %v964 = vpack.c.bf16 %v940, %v939
        %v965 = vpack.c.bf16 %v942, %v941
        %v966 = vpack.c.bf16 %v944, %v943
        %v967 = vpack.c.bf16 %v946, %v945
        %v968 = vpack.c.bf16 %v948, %v947
        %v969 = vpack.c.bf16 %v950, %v949
        %v970 = vpack.c.bf16 %v952, %v951
        %v971 = vpack.c.bf16 %v954, %v953
        %v972 = vpack.c.bf16 %v956, %v955
        %v973 = vld [vmem:[%s710] sm:$0xf]
        %v974 = vld [vmem:[%s710 + $0x4] sm:$0xf]
        %v975 = vld [vmem:[%s710 + $0x8] sm:$0xf]
        %v976 = vld [vmem:[%s710 + $0xc] sm:$0xf]
        %v977 = vld [vmem:[%s710 + $0x10] sm:$0xf]
        %v978 = vld [vmem:[%s710 + $0x14] sm:$0xf]
        %v979 = vld [vmem:[%s710 + $0x18] sm:$0xf]
        %v980 = vld [vmem:[%s710 + $0x1c] sm:$0xf]
        %v989 = vunpack.c.l.b16 %v973
        %v990 = vunpack.c.l.b16 %v974
        %v991 = vunpack.c.l.b16 %v975
        %v992 = vunpack.c.l.b16 %v976
        %v993 = vunpack.c.l.b16 %v977
        %v994 = vunpack.c.l.b16 %v978
        %v995 = vunpack.c.l.b16 %v979
        %v996 = vunpack.c.l.b16 %v980
        %v997 = vpack.c.b16 %v990, %v989
        %v998 = vpack.c.b16 %v992, %v991
        %v999 = vpack.c.b16 %v994, %v993
        %v1000 = vpack.c.b16 %v996, %v995
        %vm1005 = vcmask 523264
        %v1007 = vsel %vm1005, %v957, 0
        %v1010 = vsel %vm1005, %v958, 0
        %v1013 = vsel %vm1005, %v959, 0
        %v1016 = vsel %vm1005, %v960, 0
        %v1019 = vsel %vm1005, %v961, 0
        %v1022 = vsel %vm1005, %v962, 0
        %v1025 = vsel %vm1005, %v963, 0
        %v1028 = vsel %vm1005, %v964, 0
        %v1031 = vsel %vm1005, %v965, 0
        %v1034 = vsel %vm1005, %v966, 0
        %v1037 = vsel %vm1005, %v967, 0
        %v1040 = vsel %vm1005, %v968, 0
        %v1043 = vsel %vm1005, %v969, 0
        %v1046 = vsel %vm1005, %v970, 0
        %v1049 = vsel %vm1005, %v971, 0
        %v1052 = vsel %vm1005, %v972, 0
        %1054 = vmatprep.subr.bf16.mxu0 0
        %1055 = vmatpush1.bf16.msra.mxu0 0
        %1056 = vmatprep.subr.bf16.mxu0 0
        %1057 = vmatpush1.bf16.msra.mxu0 0
        %1058 = vmatprep.subr.bf16.mxu0 0
        %1059 = vmatpush1.bf16.msra.mxu0 0
        %1060 = vmatprep.subr.bf16.mxu0 0
        %1061 = vmatpush1.bf16.msra.mxu0 0
        %1062 = vmatprep.subr.bf16.mxu0 0
        %1063 = vmatpush1.bf16.msra.mxu0 %v1000
        %1064 = vmatprep.subr.bf16.mxu0 0
        %1065 = vmatpush1.bf16.msra.mxu0 %v999
        %1066 = vmatprep.subr.bf16.mxu0 0
        %1067 = vmatpush1.bf16.msra.mxu0 %v998
        %1068 = vmatprep.subr.bf16.mxu0 0
        %1069 = vmatpush1.bf16.msra.mxu0 %v997
        %1070 = vmatprep.subr.bf16.mxu0 0
        %1071 = vmatpush2.bf16.msra.mxu0 0
        %1072 = vmatprep.subr.bf16.mxu0 0
        %1073 = vmatpush2.bf16.msra.mxu0 0
        %1074 = vmatprep.subr.bf16.mxu0 0
        %1075 = vmatpush2.bf16.msra.mxu0 0
        %1076 = vmatprep.subr.bf16.mxu0 0
        %1077 = vmatpush2.bf16.msra.mxu0 0
        %1078 = vmatprep.subr.bf16.mxu0 0
        %1079 = vmatpush2.bf16.msra.mxu0 0
        %1080 = vmatprep.subr.bf16.mxu0 0
        %1081 = vmatpush2.bf16.msra.mxu0 0
        %1082 = vmatprep.subr.bf16.mxu0 0
        %1083 = vmatpush2.bf16.msra.mxu0 0
        %1084 = vmatprep.subr.bf16.mxu0 0
        %1085 = vmatpush2.bf16.msra.mxu0 0
        %1086 = vmatprep.mubr.bf16.mxu0 0
        %1087 = vmatmul.mubr.bf16.gmra.mxu0 %v1007
        %v1088 = vpop.f32.mrf.mxu0
        %v1089 = vadd.f32 0.0, %v1088
        %v1090 = vpop.f32.mrf.mxu0
        %v1091 = vpop.f32.mrf.mxu0
        %v1092 = vadd.f32 0.0, %v1091
        %v1093 = vpop.f32.mrf.mxu0
        %1094 = vmatprep.mubr.bf16.mxu0 0
        %1095 = vmatmul.mubr.bf16.gmra.mxu0 %v1010
        %v1096 = vpop.f32.mrf.mxu0
        %v1097 = vadd.f32 0.0, %v1096
        %v1098 = vpop.f32.mrf.mxu0
        %v1099 = vpop.f32.mrf.mxu0
        %v1100 = vadd.f32 0.0, %v1099
        %v1101 = vpop.f32.mrf.mxu0
        %1102 = vmatprep.mubr.bf16.mxu0 0
        %1103 = vmatmul.mubr.bf16.gmra.mxu0 %v1013
        %v1104 = vpop.f32.mrf.mxu0
        %v1105 = vadd.f32 0.0, %v1104
        %v1106 = vpop.f32.mrf.mxu0
        %v1107 = vpop.f32.mrf.mxu0
        %v1108 = vadd.f32 0.0, %v1107
        %v1109 = vpop.f32.mrf.mxu0
        %1110 = vmatprep.mubr.bf16.mxu0 0
        %1111 = vmatmul.mubr.bf16.gmra.mxu0 %v1016
        %v1112 = vpop.f32.mrf.mxu0
        %v1113 = vadd.f32 0.0, %v1112
        %v1114 = vpop.f32.mrf.mxu0
        %v1115 = vpop.f32.mrf.mxu0
        %v1116 = vadd.f32 0.0, %v1115
        %v1117 = vpop.f32.mrf.mxu0
        %1118 = vmatprep.mubr.bf16.mxu0 0
        %1119 = vmatmul.mubr.bf16.gmra.mxu0 %v1019
        %v1120 = vpop.f32.mrf.mxu0
        %v1121 = vadd.f32 0.0, %v1120
        %v1122 = vpop.f32.mrf.mxu0
        %v1123 = vpop.f32.mrf.mxu0
        %v1124 = vadd.f32 0.0, %v1123
        %v1125 = vpop.f32.mrf.mxu0
        %1126 = vmatprep.mubr.bf16.mxu0 0
        %1127 = vmatmul.mubr.bf16.gmra.mxu0 %v1022
        %v1128 = vpop.f32.mrf.mxu0
        %v1129 = vadd.f32 0.0, %v1128
        %v1130 = vpop.f32.mrf.mxu0
        %v1131 = vpop.f32.mrf.mxu0
        %v1132 = vadd.f32 0.0, %v1131
        %v1133 = vpop.f32.mrf.mxu0
        %1134 = vmatprep.mubr.bf16.mxu0 0
        %1135 = vmatmul.mubr.bf16.gmra.mxu0 %v1025
        %v1136 = vpop.f32.mrf.mxu0
        %v1137 = vadd.f32 0.0, %v1136
        %v1138 = vpop.f32.mrf.mxu0
        %v1139 = vpop.f32.mrf.mxu0
        %v1140 = vadd.f32 0.0, %v1139
        %v1141 = vpop.f32.mrf.mxu0
        %1142 = vmatprep.mubr.bf16.mxu0 0
        %1143 = vmatmul.mubr.bf16.gmra.mxu0 %v1028
        %v1144 = vpop.f32.mrf.mxu0
        %v1145 = vadd.f32 0.0, %v1144
        %v1146 = vpop.f32.mrf.mxu0
        %v1147 = vpop.f32.mrf.mxu0
        %v1148 = vadd.f32 0.0, %v1147
        %v1149 = vpop.f32.mrf.mxu0
        %1150 = vmatprep.mubr.bf16.mxu0 0
        %1151 = vmatmul.mubr.bf16.gmra.mxu0 %v1031
        %v1152 = vpop.f32.mrf.mxu0
        %v1153 = vadd.f32 0.0, %v1152
        %v1154 = vpop.f32.mrf.mxu0
        %v1155 = vpop.f32.mrf.mxu0
        %v1156 = vadd.f32 0.0, %v1155
        %v1157 = vpop.f32.mrf.mxu0
        %1158 = vmatprep.mubr.bf16.mxu0 0
        %1159 = vmatmul.mubr.bf16.gmra.mxu0 %v1034
        %v1160 = vpop.f32.mrf.mxu0
        %v1161 = vadd.f32 0.0, %v1160
        %v1162 = vpop.f32.mrf.mxu0
        %v1163 = vpop.f32.mrf.mxu0
        %v1164 = vadd.f32 0.0, %v1163
        %v1165 = vpop.f32.mrf.mxu0
        %1166 = vmatprep.mubr.bf16.mxu0 0
        %1167 = vmatmul.mubr.bf16.gmra.mxu0 %v1037
        %v1168 = vpop.f32.mrf.mxu0
        %v1169 = vadd.f32 0.0, %v1168
        %v1170 = vpop.f32.mrf.mxu0
        %v1171 = vpop.f32.mrf.mxu0
        %v1172 = vadd.f32 0.0, %v1171
        %v1173 = vpop.f32.mrf.mxu0
        %1174 = vmatprep.mubr.bf16.mxu0 0
        %1175 = vmatmul.mubr.bf16.gmra.mxu0 %v1040
        %v1176 = vpop.f32.mrf.mxu0
        %v1177 = vadd.f32 0.0, %v1176
        %v1178 = vpop.f32.mrf.mxu0
        %v1179 = vpop.f32.mrf.mxu0
        %v1180 = vadd.f32 0.0, %v1179
        %v1181 = vpop.f32.mrf.mxu0
        %1182 = vmatprep.mubr.bf16.mxu0 0
        %1183 = vmatmul.mubr.bf16.gmra.mxu0 %v1043
        %v1184 = vpop.f32.mrf.mxu0
        %v1185 = vadd.f32 0.0, %v1184
        %v1186 = vpop.f32.mrf.mxu0
        %v1187 = vpop.f32.mrf.mxu0
        %v1188 = vadd.f32 0.0, %v1187
        %v1189 = vpop.f32.mrf.mxu0
        %1190 = vmatprep.mubr.bf16.mxu0 0
        %1191 = vmatmul.mubr.bf16.gmra.mxu0 %v1046
        %v1192 = vpop.f32.mrf.mxu0
        %v1193 = vadd.f32 0.0, %v1192
        %v1194 = vpop.f32.mrf.mxu0
        %v1195 = vpop.f32.mrf.mxu0
        %v1196 = vadd.f32 0.0, %v1195
        %v1197 = vpop.f32.mrf.mxu0
        %1198 = vmatprep.mubr.bf16.mxu0 0
        %1199 = vmatmul.mubr.bf16.gmra.mxu0 %v1049
        %v1200 = vpop.f32.mrf.mxu0
        %v1201 = vadd.f32 0.0, %v1200
        %v1202 = vpop.f32.mrf.mxu0
        %v1203 = vpop.f32.mrf.mxu0
        %v1204 = vadd.f32 0.0, %v1203
        %v1205 = vpop.f32.mrf.mxu0
        %1206 = vmatprep.mubr.bf16.mxu0 0
        %1207 = vmatmul.mubr.bf16.gmra.mxu0 %v1052
        %v1208 = vpop.f32.mrf.mxu0
        %v1209 = vadd.f32 0.0, %v1208
        %v1210 = vpop.f32.mrf.mxu0
        %v1211 = vpop.f32.mrf.mxu0
        %v1212 = vadd.f32 0.0, %v1211
        %v1213 = vpop.f32.mrf.mxu0
        %1214 = vdwg.mxu0
        %v1215 = vld [vmem:[%s740] sm:$0x1]
        %v1217 = vlaneseq
        %v1218 = vshrl.u32 %v1217, 7
        %v1219 = vsub.s32 0, %v1218
        %v1220 = vrot.slane %v1215, %v1219
        %1221 = vrot.lane.b32.xlu0 %v1220, 16
        %v1222 = vpop.permute.xlu0 %1221
        %v1224 = vadd.f32 %v1089, %v1222
        %v1225 = vadd.f32 %v1092, %v1222
        %v1226 = vadd.f32 %v1097, %v1222
        %v1227 = vadd.f32 %v1100, %v1222
        %v1228 = vadd.f32 %v1105, %v1222
        %v1229 = vadd.f32 %v1108, %v1222
        %v1230 = vadd.f32 %v1113, %v1222
        %v1231 = vadd.f32 %v1116, %v1222
        %v1232 = vadd.f32 %v1121, %v1222
        %v1233 = vadd.f32 %v1124, %v1222
        %v1234 = vadd.f32 %v1129, %v1222
        %v1235 = vadd.f32 %v1132, %v1222
        %v1236 = vadd.f32 %v1137, %v1222
        %v1237 = vadd.f32 %v1140, %v1222
        %v1238 = vadd.f32 %v1145, %v1222
        %v1239 = vadd.f32 %v1148, %v1222
        %v1240 = vadd.f32 %v1153, %v1222
        %v1241 = vadd.f32 %v1156, %v1222
        %v1242 = vadd.f32 %v1161, %v1222
        %v1243 = vadd.f32 %v1164, %v1222
        %v1244 = vadd.f32 %v1169, %v1222
        %v1245 = vadd.f32 %v1172, %v1222
        %v1246 = vadd.f32 %v1177, %v1222
        %v1247 = vadd.f32 %v1180, %v1222
        %v1248 = vadd.f32 %v1185, %v1222
        %v1249 = vadd.f32 %v1188, %v1222
        %v1250 = vadd.f32 %v1193, %v1222
        %v1251 = vadd.f32 %v1196, %v1222
        %v1252 = vadd.f32 %v1201, %v1222
        %v1253 = vadd.f32 %v1204, %v1222
        %v1254 = vadd.f32 %v1209, %v1222
        %v1255 = vadd.f32 %v1212, %v1222
        %v1256 = vld [vmem:[%s722] sm:$0x1]
        %v1258 = vlaneseq
        %v1259 = vshrl.u32 %v1258, 7
        %v1260 = vsub.s32 0, %v1259
        %v1261 = vrot.slane %v1256, %v1260
        %v1263 = vmul.f32 %v1089, %v1261
        %v1264 = vmul.f32 %v1092, %v1261
        %v1265 = vmul.f32 %v1097, %v1261
        %v1266 = vmul.f32 %v1100, %v1261
        %v1267 = vmul.f32 %v1105, %v1261
        %v1268 = vmul.f32 %v1108, %v1261
        %v1269 = vmul.f32 %v1113, %v1261
        %v1270 = vmul.f32 %v1116, %v1261
        %v1271 = vmul.f32 %v1121, %v1261
        %v1272 = vmul.f32 %v1124, %v1261
        %v1273 = vmul.f32 %v1129, %v1261
        %v1274 = vmul.f32 %v1132, %v1261
        %v1275 = vmul.f32 %v1137, %v1261
        %v1276 = vmul.f32 %v1140, %v1261
        %v1277 = vmul.f32 %v1145, %v1261
        %v1278 = vmul.f32 %v1148, %v1261
        %v1279 = vmul.f32 %v1153, %v1261
        %v1280 = vmul.f32 %v1156, %v1261
        %v1281 = vmul.f32 %v1161, %v1261
        %v1282 = vmul.f32 %v1164, %v1261
        %v1283 = vmul.f32 %v1169, %v1261
        %v1284 = vmul.f32 %v1172, %v1261
        %v1285 = vmul.f32 %v1177, %v1261
        %v1286 = vmul.f32 %v1180, %v1261
        %v1287 = vmul.f32 %v1185, %v1261
        %v1288 = vmul.f32 %v1188, %v1261
        %v1289 = vmul.f32 %v1193, %v1261
        %v1290 = vmul.f32 %v1196, %v1261
        %v1291 = vmul.f32 %v1201, %v1261
        %v1292 = vmul.f32 %v1204, %v1261
        %v1293 = vmul.f32 %v1209, %v1261
        %v1294 = vmul.f32 %v1212, %v1261
        %v1295 = vld [vmem:[%s725] sm:$0x1]
        %v1297 = vlaneseq
        %v1298 = vshrl.u32 %v1297, 7
        %v1299 = vsub.s32 0, %v1298
        %v1300 = vrot.slane %v1295, %v1299
        %v1302 = vadd.f32 %v1263, %v1300
        %v1303 = vadd.f32 %v1264, %v1300
        %v1304 = vadd.f32 %v1265, %v1300
        %v1305 = vadd.f32 %v1266, %v1300
        %v1306 = vadd.f32 %v1267, %v1300
        %v1307 = vadd.f32 %v1268, %v1300
        %v1308 = vadd.f32 %v1269, %v1300
        %v1309 = vadd.f32 %v1270, %v1300
        %v1310 = vadd.f32 %v1271, %v1300
        %v1311 = vadd.f32 %v1272, %v1300
        %v1312 = vadd.f32 %v1273, %v1300
        %v1313 = vadd.f32 %v1274, %v1300
        %v1314 = vadd.f32 %v1275, %v1300
        %v1315 = vadd.f32 %v1276, %v1300
        %v1316 = vadd.f32 %v1277, %v1300
        %v1317 = vadd.f32 %v1278, %v1300
        %v1318 = vadd.f32 %v1279, %v1300
        %v1319 = vadd.f32 %v1280, %v1300
        %v1320 = vadd.f32 %v1281, %v1300
        %v1321 = vadd.f32 %v1282, %v1300
        %v1322 = vadd.f32 %v1283, %v1300
        %v1323 = vadd.f32 %v1284, %v1300
        %v1324 = vadd.f32 %v1285, %v1300
        %v1325 = vadd.f32 %v1286, %v1300
        %v1326 = vadd.f32 %v1287, %v1300
        %v1327 = vadd.f32 %v1288, %v1300
        %v1328 = vadd.f32 %v1289, %v1300
        %v1329 = vadd.f32 %v1290, %v1300
        %v1330 = vadd.f32 %v1291, %v1300
        %v1331 = vadd.f32 %v1292, %v1300
        %v1332 = vadd.f32 %v1293, %v1300
        %v1333 = vadd.f32 %v1294, %v1300
        %v1334 = vmax.f32 %v1302, 0.0
        %v1335 = vmax.f32 %v1303, 0.0
        %v1336 = vmax.f32 %v1304, 0.0
        %v1337 = vmax.f32 %v1305, 0.0
        %v1338 = vmax.f32 %v1306, 0.0
        %v1339 = vmax.f32 %v1307, 0.0
        %v1340 = vmax.f32 %v1308, 0.0
        %v1341 = vmax.f32 %v1309, 0.0
        %v1342 = vmax.f32 %v1310, 0.0
        %v1343 = vmax.f32 %v1311, 0.0
        %v1344 = vmax.f32 %v1312, 0.0
        %v1345 = vmax.f32 %v1313, 0.0
        %v1346 = vmax.f32 %v1314, 0.0
        %v1347 = vmax.f32 %v1315, 0.0
        %v1348 = vmax.f32 %v1316, 0.0
        %v1349 = vmax.f32 %v1317, 0.0
        %v1350 = vmax.f32 %v1318, 0.0
        %v1351 = vmax.f32 %v1319, 0.0
        %v1352 = vmax.f32 %v1320, 0.0
        %v1353 = vmax.f32 %v1321, 0.0
        %v1354 = vmax.f32 %v1322, 0.0
        %v1355 = vmax.f32 %v1323, 0.0
        %v1356 = vmax.f32 %v1324, 0.0
        %v1357 = vmax.f32 %v1325, 0.0
        %v1358 = vmax.f32 %v1326, 0.0
        %v1359 = vmax.f32 %v1327, 0.0
        %v1360 = vmax.f32 %v1328, 0.0
        %v1361 = vmax.f32 %v1329, 0.0
        %v1362 = vmax.f32 %v1330, 0.0
        %v1363 = vmax.f32 %v1331, 0.0
        %v1364 = vmax.f32 %v1332, 0.0
        %v1365 = vmax.f32 %v1333, 0.0
        %v1366 = vpack.c.bf16 %v1335, %v1334
        %v1367 = vpack.c.bf16 %v1337, %v1336
        %v1368 = vpack.c.bf16 %v1339, %v1338
        %v1369 = vpack.c.bf16 %v1341, %v1340
        %v1370 = vpack.c.bf16 %v1343, %v1342
        %v1371 = vpack.c.bf16 %v1345, %v1344
        %v1372 = vpack.c.bf16 %v1347, %v1346
        %v1373 = vpack.c.bf16 %v1349, %v1348
        %v1374 = vpack.c.bf16 %v1351, %v1350
        %v1375 = vpack.c.bf16 %v1353, %v1352
        %v1376 = vpack.c.bf16 %v1355, %v1354
        %v1377 = vpack.c.bf16 %v1357, %v1356
        %v1378 = vpack.c.bf16 %v1359, %v1358
        %v1379 = vpack.c.bf16 %v1361, %v1360
        %v1380 = vpack.c.bf16 %v1363, %v1362
        %v1381 = vpack.c.bf16 %v1365, %v1364
        %v1398 = vunpack.c.l.b16 %v1366
        %v1399 = vunpack.c.h.b16 %v1366
        %v1400 = vunpack.c.l.b16 %v1367
        %v1401 = vunpack.c.h.b16 %v1367
        %v1402 = vunpack.c.l.b16 %v1368
        %v1403 = vunpack.c.h.b16 %v1368
        %v1404 = vunpack.c.l.b16 %v1369
        %v1405 = vunpack.c.h.b16 %v1369
        %v1406 = vunpack.c.l.b16 %v1370
        %v1407 = vunpack.c.h.b16 %v1370
        %v1408 = vunpack.c.l.b16 %v1371
        %v1409 = vunpack.c.h.b16 %v1371
        %v1410 = vunpack.c.l.b16 %v1372
        %v1411 = vunpack.c.h.b16 %v1372
        %v1412 = vunpack.c.l.b16 %v1373
        %v1413 = vunpack.c.h.b16 %v1373
        %v1414 = vunpack.c.l.b16 %v1374
        %v1415 = vunpack.c.h.b16 %v1374
        %v1416 = vunpack.c.l.b16 %v1375
        %v1417 = vunpack.c.h.b16 %v1375
        %v1418 = vunpack.c.l.b16 %v1376
        %v1419 = vunpack.c.h.b16 %v1376
        %v1420 = vunpack.c.l.b16 %v1377
        %v1421 = vunpack.c.h.b16 %v1377
        %v1422 = vunpack.c.l.b16 %v1378
        %v1423 = vunpack.c.h.b16 %v1378
        %v1424 = vunpack.c.l.b16 %v1379
        %v1425 = vunpack.c.h.b16 %v1379
        %v1426 = vunpack.c.l.b16 %v1380
        %v1427 = vunpack.c.h.b16 %v1380
        %v1428 = vunpack.c.l.b16 %v1381
        %v1429 = vunpack.c.h.b16 %v1381
        %v1430 = vpack.c.b16 %v1398, %v1398
        %v1431 = vpack.c.b16 %v1399, %v1399
        %v1432 = vpack.c.b16 %v1400, %v1400
        %v1433 = vpack.c.b16 %v1401, %v1401
        %v1434 = vpack.c.b16 %v1402, %v1402
        %v1435 = vpack.c.b16 %v1403, %v1403
        %v1436 = vpack.c.b16 %v1404, %v1404
        %v1437 = vpack.c.b16 %v1405, %v1405
        %v1438 = vpack.c.b16 %v1406, %v1406
        %v1439 = vpack.c.b16 %v1407, %v1407
        %v1440 = vpack.c.b16 %v1408, %v1408
        %v1441 = vpack.c.b16 %v1409, %v1409
        %v1442 = vpack.c.b16 %v1410, %v1410
        %v1443 = vpack.c.b16 %v1411, %v1411
        %v1444 = vpack.c.b16 %v1412, %v1412
        %v1445 = vpack.c.b16 %v1413, %v1413
        %v1446 = vpack.c.b16 %v1414, %v1414
        %v1447 = vpack.c.b16 %v1415, %v1415
        %v1448 = vpack.c.b16 %v1416, %v1416
        %v1449 = vpack.c.b16 %v1417, %v1417
        %v1450 = vpack.c.b16 %v1418, %v1418
        %v1451 = vpack.c.b16 %v1419, %v1419
        %v1452 = vpack.c.b16 %v1420, %v1420
        %v1453 = vpack.c.b16 %v1421, %v1421
        %v1454 = vpack.c.b16 %v1422, %v1422
        %v1455 = vpack.c.b16 %v1423, %v1423
        %v1456 = vpack.c.b16 %v1424, %v1424
        %v1457 = vpack.c.b16 %v1425, %v1425
        %v1458 = vpack.c.b16 %v1426, %v1426
        %v1459 = vpack.c.b16 %v1427, %v1427
        %v1460 = vpack.c.b16 %v1428, %v1428
        %v1461 = vpack.c.b16 %v1429, %v1429
        %vm1462 = vsmask.f32 256
        %vm1463 = vsmask.f32 4368
        %vm1464 = vmor %vm1462, %vm1463
        %v1466 = vshrl.u32 %v1430, 16
        %v1468 = vrot.slane %v1466, 7
        %v1469 = vshll.u32 %v1430, 16
        %v1471 = vor.u32 %v1468, %v1469
        %v1472 = vrot.slane %v1468, 4
        %v1474 = vshrl.u32 %v1431, 16
        %v1476 = vrot.slane %v1474, 7
        %v1477 = vshll.u32 %v1431, 16
        %v1479 = vor.u32 %v1476, %v1477
        %v1480 = vsel %vm1464, %v1472, %v1479
        %v1481 = vrot.slane %v1476, 4
        %v1483 = vshrl.u32 %v1432, 16
        %v1485 = vrot.slane %v1483, 7
        %v1486 = vshll.u32 %v1432, 16
        %v1488 = vor.u32 %v1485, %v1486
        %v1489 = vrot.slane %v1485, 4
        %v1491 = vshrl.u32 %v1433, 16
        %v1493 = vrot.slane %v1491, 7
        %v1494 = vshll.u32 %v1433, 16
        %v1496 = vor.u32 %v1493, %v1494
        %v1497 = vsel %vm1464, %v1489, %v1496
        %v1498 = vrot.slane %v1493, 4
        %v1500 = vshrl.u32 %v1434, 16
        %v1502 = vrot.slane %v1500, 7
        %v1503 = vshll.u32 %v1434, 16
        %v1505 = vor.u32 %v1502, %v1503
        %v1506 = vrot.slane %v1502, 4
        %v1508 = vshrl.u32 %v1435, 16
        %v1510 = vrot.slane %v1508, 7
        %v1511 = vshll.u32 %v1435, 16
        %v1513 = vor.u32 %v1510, %v1511
        %v1514 = vsel %vm1464, %v1506, %v1513
        %v1515 = vrot.slane %v1510, 4
        %v1517 = vshrl.u32 %v1436, 16
        %v1519 = vrot.slane %v1517, 7
        %v1520 = vshll.u32 %v1436, 16
        %v1522 = vor.u32 %v1519, %v1520
        %v1523 = vrot.slane %v1519, 4
        %v1525 = vshrl.u32 %v1437, 16
        %v1527 = vrot.slane %v1525, 7
        %v1528 = vshll.u32 %v1437, 16
        %v1530 = vor.u32 %v1527, %v1528
        %v1531 = vsel %vm1464, %v1523, %v1530
        %v1532 = vrot.slane %v1527, 4
        %v1534 = vshrl.u32 %v1438, 16
        %v1536 = vrot.slane %v1534, 7
        %v1537 = vshll.u32 %v1438, 16
        %v1539 = vor.u32 %v1536, %v1537
        %v1540 = vrot.slane %v1536, 4
        %v1542 = vshrl.u32 %v1439, 16
        %v1544 = vrot.slane %v1542, 7
        %v1545 = vshll.u32 %v1439, 16
        %v1547 = vor.u32 %v1544, %v1545
        %v1548 = vsel %vm1464, %v1540, %v1547
        %v1549 = vrot.slane %v1544, 4
        %v1551 = vshrl.u32 %v1440, 16
        %v1553 = vrot.slane %v1551, 7
        %v1554 = vshll.u32 %v1440, 16
        %v1556 = vor.u32 %v1553, %v1554
        %v1557 = vrot.slane %v1553, 4
        %v1559 = vshrl.u32 %v1441, 16
        %v1561 = vrot.slane %v1559, 7
        %v1562 = vshll.u32 %v1441, 16
        %v1564 = vor.u32 %v1561, %v1562
        %v1565 = vsel %vm1464, %v1557, %v1564
        %v1566 = vrot.slane %v1561, 4
        %v1568 = vshrl.u32 %v1442, 16
        %v1570 = vrot.slane %v1568, 7
        %v1571 = vshll.u32 %v1442, 16
        %v1573 = vor.u32 %v1570, %v1571
        %v1574 = vrot.slane %v1570, 4
        %v1576 = vshrl.u32 %v1443, 16
        %v1578 = vrot.slane %v1576, 7
        %v1579 = vshll.u32 %v1443, 16
        %v1581 = vor.u32 %v1578, %v1579
        %v1582 = vsel %vm1464, %v1574, %v1581
        %v1583 = vrot.slane %v1578, 4
        %v1585 = vshrl.u32 %v1444, 16
        %v1587 = vrot.slane %v1585, 7
        %v1588 = vshll.u32 %v1444, 16
        %v1590 = vor.u32 %v1587, %v1588
        %v1591 = vrot.slane %v1587, 4
        %v1593 = vshrl.u32 %v1445, 16
        %v1595 = vrot.slane %v1593, 7
        %v1596 = vshll.u32 %v1445, 16
        %v1598 = vor.u32 %v1595, %v1596
        %v1599 = vsel %vm1464, %v1591, %v1598
        %v1600 = vrot.slane %v1595, 4
        %v1602 = vshrl.u32 %v1446, 16
        %v1604 = vrot.slane %v1602, 7
        %v1605 = vshll.u32 %v1446, 16
        %v1607 = vor.u32 %v1604, %v1605
        %v1608 = vrot.slane %v1604, 4
        %v1610 = vshrl.u32 %v1447, 16
        %v1612 = vrot.slane %v1610, 7
        %v1613 = vshll.u32 %v1447, 16
        %v1615 = vor.u32 %v1612, %v1613
        %v1616 = vsel %vm1464, %v1608, %v1615
        %v1617 = vrot.slane %v1612, 4
        %v1619 = vshrl.u32 %v1448, 16
        %v1621 = vrot.slane %v1619, 7
        %v1622 = vshll.u32 %v1448, 16
        %v1624 = vor.u32 %v1621, %v1622
        %v1625 = vrot.slane %v1621, 4
        %v1627 = vshrl.u32 %v1449, 16
        %v1629 = vrot.slane %v1627, 7
        %v1630 = vshll.u32 %v1449, 16
        %v1632 = vor.u32 %v1629, %v1630
        %v1633 = vsel %vm1464, %v1625, %v1632
        %v1634 = vrot.slane %v1629, 4
        %v1636 = vshrl.u32 %v1450, 16
        %v1638 = vrot.slane %v1636, 7
        %v1639 = vshll.u32 %v1450, 16
        %v1641 = vor.u32 %v1638, %v1639
        %v1642 = vrot.slane %v1638, 4
        %v1644 = vshrl.u32 %v1451, 16
        %v1646 = vrot.slane %v1644, 7
        %v1647 = vshll.u32 %v1451, 16
        %v1649 = vor.u32 %v1646, %v1647
        %v1650 = vsel %vm1464, %v1642, %v1649
        %v1651 = vrot.slane %v1646, 4
        %v1653 = vshrl.u32 %v1452, 16
        %v1655 = vrot.slane %v1653, 7
        %v1656 = vshll.u32 %v1452, 16
        %v1658 = vor.u32 %v1655, %v1656
        %v1659 = vrot.slane %v1655, 4
        %v1661 = vshrl.u32 %v1453, 16
        %v1663 = vrot.slane %v1661, 7
        %v1664 = vshll.u32 %v1453, 16
        %v1666 = vor.u32 %v1663, %v1664
        %v1667 = vsel %vm1464, %v1659, %v1666
        %v1668 = vrot.slane %v1663, 4
        %v1670 = vshrl.u32 %v1454, 16
        %v1672 = vrot.slane %v1670, 7
        %v1673 = vshll.u32 %v1454, 16
        %v1675 = vor.u32 %v1672, %v1673
        %v1676 = vrot.slane %v1672, 4
        %v1678 = vshrl.u32 %v1455, 16
        %v1680 = vrot.slane %v1678, 7
        %v1681 = vshll.u32 %v1455, 16
        %v1683 = vor.u32 %v1680, %v1681
        %v1684 = vsel %vm1464, %v1676, %v1683
        %v1685 = vrot.slane %v1680, 4
        %v1687 = vshrl.u32 %v1456, 16
        %v1689 = vrot.slane %v1687, 7
        %v1690 = vshll.u32 %v1456, 16
        %v1692 = vor.u32 %v1689, %v1690
        %v1693 = vrot.slane %v1689, 4
        %v1695 = vshrl.u32 %v1457, 16
        %v1697 = vrot.slane %v1695, 7
        %v1698 = vshll.u32 %v1457, 16
        %v1700 = vor.u32 %v1697, %v1698
        %v1701 = vsel %vm1464, %v1693, %v1700
        %v1702 = vrot.slane %v1697, 4
        %v1704 = vshrl.u32 %v1458, 16
        %v1706 = vrot.slane %v1704, 7
        %v1707 = vshll.u32 %v1458, 16
        %v1709 = vor.u32 %v1706, %v1707
        %v1710 = vrot.slane %v1706, 4
        %v1712 = vshrl.u32 %v1459, 16
        %v1714 = vrot.slane %v1712, 7
        %v1715 = vshll.u32 %v1459, 16
        %v1717 = vor.u32 %v1714, %v1715
        %v1718 = vsel %vm1464, %v1710, %v1717
        %v1719 = vrot.slane %v1714, 4
        %v1721 = vshrl.u32 %v1460, 16
        %v1723 = vrot.slane %v1721, 7
        %v1724 = vshll.u32 %v1460, 16
        %v1726 = vor.u32 %v1723, %v1724
        %v1727 = vrot.slane %v1723, 4
        %v1729 = vshrl.u32 %v1461, 16
        %v1731 = vrot.slane %v1729, 7
        %v1732 = vshll.u32 %v1461, 16
        %v1734 = vor.u32 %v1731, %v1732
        %v1735 = vsel %vm1464, %v1727, %v1734
        %v1736 = vrot.slane %v1731, 4
        %s1785 = scalar_lea.vmem [#allocation3], 12
        %vm1786 = vcmask 125952
        %vm1787 = vsmask.f32 7938
        %vm1788 = vmand %vm1786, %vm1787
        %v1789 = vld [vmem:[%s1785] sm:$0xf]
        %v1790 = vsel %vm1788, %v1471, %v1789
        %1791 = vst [vmem:[%s1785] sm:$0xf] %v1790
        %vm1792 = vcmask 125952
        %1793 = vst.msk [vmem:[%s1785 + $0x4] sm:$0xf] %vm1792, %v1480
        %vm1794 = vcmask 122880
        %vm1795 = vmand %vm1794, %vm1462
        %v1796 = vld [vmem:[%s1785 + $0x8] sm:$0x1]
        %v1797 = vsel %vm1795, %v1481, %v1796
        %1798 = vst [vmem:[%s1785 + $0x8] sm:$0x1] %v1797
        %v1799 = vld [vmem:[%s1785 + $0xc] sm:$0xf]
        %v1800 = vsel %vm1788, %v1488, %v1799
        %1801 = vst [vmem:[%s1785 + $0xc] sm:$0xf] %v1800
        %1802 = vst.msk [vmem:[%s1785 + $0x10] sm:$0xf] %vm1792, %v1497
        %v1803 = vld [vmem:[%s1785 + $0x14] sm:$0x1]
        %v1804 = vsel %vm1795, %v1498, %v1803
        %1805 = vst [vmem:[%s1785 + $0x14] sm:$0x1] %v1804
        %v1806 = vld [vmem:[%s1785 + $0x18] sm:$0xf]
        %v1807 = vsel %vm1788, %v1505, %v1806
        %1808 = vst [vmem:[%s1785 + $0x18] sm:$0xf] %v1807
        %1809 = vst.msk [vmem:[%s1785 + $0x1c] sm:$0xf] %vm1792, %v1514
        %v1810 = vld [vmem:[%s1785 + $0x20] sm:$0x1]
        %v1811 = vsel %vm1795, %v1515, %v1810
        %1812 = vst [vmem:[%s1785 + $0x20] sm:$0x1] %v1811
        %v1813 = vld [vmem:[%s1785 + $0x24] sm:$0xf]
        %v1814 = vsel %vm1788, %v1522, %v1813
        %1815 = vst [vmem:[%s1785 + $0x24] sm:$0xf] %v1814
        %1816 = vst.msk [vmem:[%s1785 + $0x28] sm:$0xf] %vm1792, %v1531
        %v1817 = vld [vmem:[%s1785 + $0x2c] sm:$0x1]
        %v1818 = vsel %vm1795, %v1532, %v1817
        %1819 = vst [vmem:[%s1785 + $0x2c] sm:$0x1] %v1818
        %v1820 = vld [vmem:[%s1785 + $0x30] sm:$0xf]
        %v1821 = vsel %vm1788, %v1539, %v1820
        %1822 = vst [vmem:[%s1785 + $0x30] sm:$0xf] %v1821
        %1823 = vst.msk [vmem:[%s1785 + $0x34] sm:$0xf] %vm1792, %v1548
        %v1824 = vld [vmem:[%s1785 + $0x38] sm:$0x1]
        %v1825 = vsel %vm1795, %v1549, %v1824
        %1826 = vst [vmem:[%s1785 + $0x38] sm:$0x1] %v1825
        %v1827 = vld [vmem:[%s1785 + $0x3c] sm:$0xf]
        %v1828 = vsel %vm1788, %v1556, %v1827
        %1829 = vst [vmem:[%s1785 + $0x3c] sm:$0xf] %v1828
        %1830 = vst.msk [vmem:[%s1785 + $0x40] sm:$0xf] %vm1792, %v1565
        %v1831 = vld [vmem:[%s1785 + $0x44] sm:$0x1]
        %v1832 = vsel %vm1795, %v1566, %v1831
        %1833 = vst [vmem:[%s1785 + $0x44] sm:$0x1] %v1832
        %v1834 = vld [vmem:[%s1785 + $0x48] sm:$0xf]
        %v1835 = vsel %vm1788, %v1573, %v1834
        %1836 = vst [vmem:[%s1785 + $0x48] sm:$0xf] %v1835
        %1837 = vst.msk [vmem:[%s1785 + $0x4c] sm:$0xf] %vm1792, %v1582
        %v1838 = vld [vmem:[%s1785 + $0x50] sm:$0x1]
        %v1839 = vsel %vm1795, %v1583, %v1838
        %1840 = vst [vmem:[%s1785 + $0x50] sm:$0x1] %v1839
        %v1841 = vld [vmem:[%s1785 + $0x54] sm:$0xf]
        %v1842 = vsel %vm1788, %v1590, %v1841
        %1843 = vst [vmem:[%s1785 + $0x54] sm:$0xf] %v1842
        %1844 = vst.msk [vmem:[%s1785 + $0x58] sm:$0xf] %vm1792, %v1599
        %v1845 = vld [vmem:[%s1785 + $0x5c] sm:$0x1]
        %v1846 = vsel %vm1795, %v1600, %v1845
        %1847 = vst [vmem:[%s1785 + $0x5c] sm:$0x1] %v1846
        %v1848 = vld [vmem:[%s1785 + $0x60] sm:$0xf]
        %v1849 = vsel %vm1788, %v1607, %v1848
        %1850 = vst [vmem:[%s1785 + $0x60] sm:$0xf] %v1849
        %1851 = vst.msk [vmem:[%s1785 + $0x64] sm:$0xf] %vm1792, %v1616
        %v1852 = vld [vmem:[%s1785 + $0x68] sm:$0x1]
        %v1853 = vsel %vm1795, %v1617, %v1852
        %1854 = vst [vmem:[%s1785 + $0x68] sm:$0x1] %v1853
        %v1855 = vld [vmem:[%s1785 + $0x6c] sm:$0xf]
        %v1856 = vsel %vm1788, %v1624, %v1855
        %1857 = vst [vmem:[%s1785 + $0x6c] sm:$0xf] %v1856
        %1858 = vst.msk [vmem:[%s1785 + $0x70] sm:$0xf] %vm1792, %v1633
        %v1859 = vld [vmem:[%s1785 + $0x74] sm:$0x1]
        %v1860 = vsel %vm1795, %v1634, %v1859
        %1861 = vst [vmem:[%s1785 + $0x74] sm:$0x1] %v1860
        %v1862 = vld [vmem:[%s1785 + $0x78] sm:$0xf]
        %v1863 = vsel %vm1788, %v1641, %v1862
        %1864 = vst [vmem:[%s1785 + $0x78] sm:$0xf] %v1863
        %1865 = vst.msk [vmem:[%s1785 + $0x7c] sm:$0xf] %vm1792, %v1650
        %v1866 = vld [vmem:[%s1785 + $0x80] sm:$0x1]
        %v1867 = vsel %vm1795, %v1651, %v1866
        %1868 = vst [vmem:[%s1785 + $0x80] sm:$0x1] %v1867
        %v1869 = vld [vmem:[%s1785 + $0x84] sm:$0xf]
        %v1870 = vsel %vm1788, %v1658, %v1869
        %1871 = vst [vmem:[%s1785 + $0x84] sm:$0xf] %v1870
        %1872 = vst.msk [vmem:[%s1785 + $0x88] sm:$0xf] %vm1792, %v1667
        %v1873 = vld [vmem:[%s1785 + $0x8c] sm:$0x1]
        %v1874 = vsel %vm1795, %v1668, %v1873
        %1875 = vst [vmem:[%s1785 + $0x8c] sm:$0x1] %v1874
        %v1876 = vld [vmem:[%s1785 + $0x90] sm:$0xf]
        %v1877 = vsel %vm1788, %v1675, %v1876
        %1878 = vst [vmem:[%s1785 + $0x90] sm:$0xf] %v1877
        %1879 = vst.msk [vmem:[%s1785 + $0x94] sm:$0xf] %vm1792, %v1684
        %v1880 = vld [vmem:[%s1785 + $0x98] sm:$0x1]
        %v1881 = vsel %vm1795, %v1685, %v1880
        %1882 = vst [vmem:[%s1785 + $0x98] sm:$0x1] %v1881
        %v1883 = vld [vmem:[%s1785 + $0x9c] sm:$0xf]
        %v1884 = vsel %vm1788, %v1692, %v1883
        %1885 = vst [vmem:[%s1785 + $0x9c] sm:$0xf] %v1884
        %1886 = vst.msk [vmem:[%s1785 + $0xa0] sm:$0xf] %vm1792, %v1701
        %v1887 = vld [vmem:[%s1785 + $0xa4] sm:$0x1]
        %v1888 = vsel %vm1795, %v1702, %v1887
        %1889 = vst [vmem:[%s1785 + $0xa4] sm:$0x1] %v1888
        %v1890 = vld [vmem:[%s1785 + $0xa8] sm:$0xf]
        %v1891 = vsel %vm1788, %v1709, %v1890
        %1892 = vst [vmem:[%s1785 + $0xa8] sm:$0xf] %v1891
        %1893 = vst.msk [vmem:[%s1785 + $0xac] sm:$0xf] %vm1792, %v1718
        %v1894 = vld [vmem:[%s1785 + $0xb0] sm:$0x1]
        %v1895 = vsel %vm1795, %v1719, %v1894
        %1896 = vst [vmem:[%s1785 + $0xb0] sm:$0x1] %v1895
        %v1897 = vld [vmem:[%s1785 + $0xb4] sm:$0xf]
        %v1898 = vsel %vm1788, %v1726, %v1897
        %1899 = vst [vmem:[%s1785 + $0xb4] sm:$0xf] %v1898
        %1900 = vst.msk [vmem:[%s1785 + $0xb8] sm:$0xf] %vm1792, %v1735
        %v1901 = vld [vmem:[%s1785 + $0xbc] sm:$0x1]
        %v1902 = vsel %vm1795, %v1736, %v1901
        %1903 = vst [vmem:[%s1785 + $0xbc] sm:$0x1] %v1902
        %v1904 = vld [vmem:[#allocation3] sm:$0xf]
        %v1905 = vld [vmem:[#allocation3 + $0x4] sm:$0xf]
        %v1906 = vld [vmem:[#allocation3 + $0xc] sm:$0xf]
        %v1907 = vld [vmem:[#allocation3 + $0x10] sm:$0xf]
        %v1908 = vld [vmem:[#allocation3 + $0x18] sm:$0xf]
        %v1909 = vld [vmem:[#allocation3 + $0x1c] sm:$0xf]
        %v1910 = vld [vmem:[#allocation3 + $0x24] sm:$0xf]
        %v1911 = vld [vmem:[#allocation3 + $0x28] sm:$0xf]
        %v1912 = vld [vmem:[#allocation3 + $0x30] sm:$0xf]
        %v1913 = vld [vmem:[#allocation3 + $0x34] sm:$0xf]
        %v1914 = vld [vmem:[#allocation3 + $0x3c] sm:$0xf]
        %v1915 = vld [vmem:[#allocation3 + $0x40] sm:$0xf]
        %v1916 = vld [vmem:[#allocation3 + $0x48] sm:$0xf]
        %v1917 = vld [vmem:[#allocation3 + $0x4c] sm:$0xf]
        %v1918 = vld [vmem:[#allocation3 + $0x54] sm:$0xf]
        %v1919 = vld [vmem:[#allocation3 + $0x58] sm:$0xf]
        %v1920 = vld [vmem:[#allocation3 + $0x60] sm:$0xf]
        %v1921 = vld [vmem:[#allocation3 + $0x64] sm:$0xf]
        %v1922 = vld [vmem:[#allocation3 + $0x6c] sm:$0xf]
        %v1923 = vld [vmem:[#allocation3 + $0x70] sm:$0xf]
        %v1924 = vld [vmem:[#allocation3 + $0x78] sm:$0xf]
        %v1925 = vld [vmem:[#allocation3 + $0x7c] sm:$0xf]
        %v1926 = vld [vmem:[#allocation3 + $0x84] sm:$0xf]
        %v1927 = vld [vmem:[#allocation3 + $0x88] sm:$0xf]
        %v1928 = vld [vmem:[#allocation3 + $0x90] sm:$0xf]
        %v1929 = vld [vmem:[#allocation3 + $0x94] sm:$0xf]
        %v1930 = vld [vmem:[#allocation3 + $0x9c] sm:$0xf]
        %v1931 = vld [vmem:[#allocation3 + $0xa0] sm:$0xf]
        %v1932 = vld [vmem:[#allocation3 + $0xa8] sm:$0xf]
        %v1933 = vld [vmem:[#allocation3 + $0xac] sm:$0xf]
        %v1934 = vld [vmem:[#allocation3 + $0xb4] sm:$0xf]
        %v1935 = vld [vmem:[#allocation3 + $0xb8] sm:$0xf]
        %v1936 = vld [vmem:[%s604] sm:$0xf]
        %v1937 = vld [vmem:[%s604 + $0x4] sm:$0xf]
        %v1938 = vld [vmem:[#allocation3 + $0x8] sm:$0x1]
        %v1939 = vld [vmem:[#allocation3 + $0x14] sm:$0x1]
        %v1940 = vld [vmem:[#allocation3 + $0x20] sm:$0x1]
        %v1941 = vld [vmem:[#allocation3 + $0x2c] sm:$0x1]
        %v1942 = vld [vmem:[#allocation3 + $0x38] sm:$0x1]
        %v1943 = vld [vmem:[#allocation3 + $0x44] sm:$0x1]
        %v1944 = vld [vmem:[#allocation3 + $0x50] sm:$0x1]
        %v1945 = vld [vmem:[#allocation3 + $0x5c] sm:$0x1]
        %v1946 = vld [vmem:[#allocation3 + $0x68] sm:$0x1]
        %v1947 = vld [vmem:[#allocation3 + $0x74] sm:$0x1]
        %v1948 = vld [vmem:[#allocation3 + $0x80] sm:$0x1]
        %v1949 = vld [vmem:[#allocation3 + $0x8c] sm:$0x1]
        %v1950 = vld [vmem:[#allocation3 + $0x98] sm:$0x1]
        %v1951 = vld [vmem:[#allocation3 + $0xa4] sm:$0x1]
        %v1952 = vld [vmem:[#allocation3 + $0xb0] sm:$0x1]
        %v1953 = vld [vmem:[#allocation3 + $0xbc] sm:$0x1]
        %vm1954 = vsmask.f32 3328
        %vm1955 = vsmask.f32 7440
        %vm1956 = vmor %vm1954, %vm1955
        %v1958 = vshrl.u32 %v1904, 16
        %v1960 = vrot.slane %v1958, 4
        %v1961 = vshll.u32 %v1904, 16
        %v1963 = vrot.slane %v1961, 5
        %v1964 = vor.u32 %v1960, %v1963
        %v1965 = vrot.slane %v1964, 4
        %v1967 = vshll.u32 %v1905, 16
        %v1969 = vrot.slane %v1967, 5
        %v1970 = vsel %vm1956, %v1965, %v1969
        %v1971 = vshrl.u32 %v1905, 16
        %v1973 = vrot.slane %v1971, 4
        %v1974 = vor.u32 %v1973, %v1969
        %v1975 = vrot.slane %v1974, 4
        %v1977 = vshll.u32 %v1938, 16
        %v1979 = vrot.slane %v1977, 5
        %v1980 = vsel %vm1956, %v1975, %v1979
        %v1982 = vshrl.u32 %v1906, 16
        %v1984 = vrot.slane %v1982, 4
        %v1985 = vshll.u32 %v1906, 16
        %v1987 = vrot.slane %v1985, 5
        %v1988 = vor.u32 %v1984, %v1987
        %v1989 = vrot.slane %v1988, 4
        %v1991 = vshll.u32 %v1907, 16
        %v1993 = vrot.slane %v1991, 5
        %v1994 = vsel %vm1956, %v1989, %v1993
        %v1995 = vshrl.u32 %v1907, 16
        %v1997 = vrot.slane %v1995, 4
        %v1998 = vor.u32 %v1997, %v1993
        %v1999 = vrot.slane %v1998, 4
        %v2001 = vshll.u32 %v1939, 16
        %v2003 = vrot.slane %v2001, 5
        %v2004 = vsel %vm1956, %v1999, %v2003
        %v2006 = vshrl.u32 %v1908, 16
        %v2008 = vrot.slane %v2006, 4
        %v2009 = vshll.u32 %v1908, 16
        %v2011 = vrot.slane %v2009, 5
        %v2012 = vor.u32 %v2008, %v2011
        %v2013 = vrot.slane %v2012, 4
        %v2015 = vshll.u32 %v1909, 16
        %v2017 = vrot.slane %v2015, 5
        %v2018 = vsel %vm1956, %v2013, %v2017
        %v2019 = vshrl.u32 %v1909, 16
        %v2021 = vrot.slane %v2019, 4
        %v2022 = vor.u32 %v2021, %v2017
        %v2023 = vrot.slane %v2022, 4
        %v2025 = vshll.u32 %v1940, 16
        %v2027 = vrot.slane %v2025, 5
        %v2028 = vsel %vm1956, %v2023, %v2027
        %v2030 = vshrl.u32 %v1910, 16
        %v2032 = vrot.slane %v2030, 4
        %v2033 = vshll.u32 %v1910, 16
        %v2035 = vrot.slane %v2033, 5
        %v2036 = vor.u32 %v2032, %v2035
        %v2037 = vrot.slane %v2036, 4
        %v2039 = vshll.u32 %v1911, 16
        %v2041 = vrot.slane %v2039, 5
        %v2042 = vsel %vm1956, %v2037, %v2041
        %v2043 = vshrl.u32 %v1911, 16
        %v2045 = vrot.slane %v2043, 4
        %v2046 = vor.u32 %v2045, %v2041
        %v2047 = vrot.slane %v2046, 4
        %v2049 = vshll.u32 %v1941, 16
        %v2051 = vrot.slane %v2049, 5
        %v2052 = vsel %vm1956, %v2047, %v2051
        %v2054 = vshrl.u32 %v1912, 16
        %v2056 = vrot.slane %v2054, 4
        %v2057 = vshll.u32 %v1912, 16
        %v2059 = vrot.slane %v2057, 5
        %v2060 = vor.u32 %v2056, %v2059
        %v2061 = vrot.slane %v2060, 4
        %v2063 = vshll.u32 %v1913, 16
        %v2065 = vrot.slane %v2063, 5
        %v2066 = vsel %vm1956, %v2061, %v2065
        %v2067 = vshrl.u32 %v1913, 16
        %v2069 = vrot.slane %v2067, 4
        %v2070 = vor.u32 %v2069, %v2065
        %v2071 = vrot.slane %v2070, 4
        %v2073 = vshll.u32 %v1942, 16
        %v2075 = vrot.slane %v2073, 5
        %v2076 = vsel %vm1956, %v2071, %v2075
        %v2078 = vshrl.u32 %v1914, 16
        %v2080 = vrot.slane %v2078, 4
        %v2081 = vshll.u32 %v1914, 16
        %v2083 = vrot.slane %v2081, 5
        %v2084 = vor.u32 %v2080, %v2083
        %v2085 = vrot.slane %v2084, 4
        %v2087 = vshll.u32 %v1915, 16
        %v2089 = vrot.slane %v2087, 5
        %v2090 = vsel %vm1956, %v2085, %v2089
        %v2091 = vshrl.u32 %v1915, 16
        %v2093 = vrot.slane %v2091, 4
        %v2094 = vor.u32 %v2093, %v2089
        %v2095 = vrot.slane %v2094, 4
        %v2097 = vshll.u32 %v1943, 16
        %v2099 = vrot.slane %v2097, 5
        %v2100 = vsel %vm1956, %v2095, %v2099
        %v2102 = vshrl.u32 %v1916, 16
        %v2104 = vrot.slane %v2102, 4
        %v2105 = vshll.u32 %v1916, 16
        %v2107 = vrot.slane %v2105, 5
        %v2108 = vor.u32 %v2104, %v2107
        %v2109 = vrot.slane %v2108, 4
        %v2111 = vshll.u32 %v1917, 16
        %v2113 = vrot.slane %v2111, 5
        %v2114 = vsel %vm1956, %v2109, %v2113
        %v2115 = vshrl.u32 %v1917, 16
        %v2117 = vrot.slane %v2115, 4
        %v2118 = vor.u32 %v2117, %v2113
        %v2119 = vrot.slane %v2118, 4
        %v2121 = vshll.u32 %v1944, 16
        %v2123 = vrot.slane %v2121, 5
        %v2124 = vsel %vm1956, %v2119, %v2123
        %v2126 = vshrl.u32 %v1918, 16
        %v2128 = vrot.slane %v2126, 4
        %v2129 = vshll.u32 %v1918, 16
        %v2131 = vrot.slane %v2129, 5
        %v2132 = vor.u32 %v2128, %v2131
        %v2133 = vrot.slane %v2132, 4
        %v2135 = vshll.u32 %v1919, 16
        %v2137 = vrot.slane %v2135, 5
        %v2138 = vsel %vm1956, %v2133, %v2137
        %v2139 = vshrl.u32 %v1919, 16
        %v2141 = vrot.slane %v2139, 4
        %v2142 = vor.u32 %v2141, %v2137
        %v2143 = vrot.slane %v2142, 4
        %v2145 = vshll.u32 %v1945, 16
        %v2147 = vrot.slane %v2145, 5
        %v2148 = vsel %vm1956, %v2143, %v2147
        %v2150 = vshrl.u32 %v1920, 16
        %v2152 = vrot.slane %v2150, 4
        %v2153 = vshll.u32 %v1920, 16
        %v2155 = vrot.slane %v2153, 5
        %v2156 = vor.u32 %v2152, %v2155
        %v2157 = vrot.slane %v2156, 4
        %v2159 = vshll.u32 %v1921, 16
        %v2161 = vrot.slane %v2159, 5
        %v2162 = vsel %vm1956, %v2157, %v2161
        %v2163 = vshrl.u32 %v1921, 16
        %v2165 = vrot.slane %v2163, 4
        %v2166 = vor.u32 %v2165, %v2161
        %v2167 = vrot.slane %v2166, 4
        %v2169 = vshll.u32 %v1946, 16
        %v2171 = vrot.slane %v2169, 5
        %v2172 = vsel %vm1956, %v2167, %v2171
        %v2174 = vshrl.u32 %v1922, 16
        %v2176 = vrot.slane %v2174, 4
        %v2177 = vshll.u32 %v1922, 16
        %v2179 = vrot.slane %v2177, 5
        %v2180 = vor.u32 %v2176, %v2179
        %v2181 = vrot.slane %v2180, 4
        %v2183 = vshll.u32 %v1923, 16
        %v2185 = vrot.slane %v2183, 5
        %v2186 = vsel %vm1956, %v2181, %v2185
        %v2187 = vshrl.u32 %v1923, 16
        %v2189 = vrot.slane %v2187, 4
        %v2190 = vor.u32 %v2189, %v2185
        %v2191 = vrot.slane %v2190, 4
        %v2193 = vshll.u32 %v1947, 16
        %v2195 = vrot.slane %v2193, 5
        %v2196 = vsel %vm1956, %v2191, %v2195
        %v2198 = vshrl.u32 %v1924, 16
        %v2200 = vrot.slane %v2198, 4
        %v2201 = vshll.u32 %v1924, 16
        %v2203 = vrot.slane %v2201, 5
        %v2204 = vor.u32 %v2200, %v2203
        %v2205 = vrot.slane %v2204, 4
        %v2207 = vshll.u32 %v1925, 16
        %v2209 = vrot.slane %v2207, 5
        %v2210 = vsel %vm1956, %v2205, %v2209
        %v2211 = vshrl.u32 %v1925, 16
        %v2213 = vrot.slane %v2211, 4
        %v2214 = vor.u32 %v2213, %v2209
        %v2215 = vrot.slane %v2214, 4
        %v2217 = vshll.u32 %v1948, 16
        %v2219 = vrot.slane %v2217, 5
        %v2220 = vsel %vm1956, %v2215, %v2219
        %v2222 = vshrl.u32 %v1926, 16
        %v2224 = vrot.slane %v2222, 4
        %v2225 = vshll.u32 %v1926, 16
        %v2227 = vrot.slane %v2225, 5
        %v2228 = vor.u32 %v2224, %v2227
        %v2229 = vrot.slane %v2228, 4
        %v2231 = vshll.u32 %v1927, 16
        %v2233 = vrot.slane %v2231, 5
        %v2234 = vsel %vm1956, %v2229, %v2233
        %v2235 = vshrl.u32 %v1927, 16
        %v2237 = vrot.slane %v2235, 4
        %v2238 = vor.u32 %v2237, %v2233
        %v2239 = vrot.slane %v2238, 4
        %v2241 = vshll.u32 %v1949, 16
        %v2243 = vrot.slane %v2241, 5
        %v2244 = vsel %vm1956, %v2239, %v2243
        %v2246 = vshrl.u32 %v1928, 16
        %v2248 = vrot.slane %v2246, 4
        %v2249 = vshll.u32 %v1928, 16
        %v2251 = vrot.slane %v2249, 5
        %v2252 = vor.u32 %v2248, %v2251
        %v2253 = vrot.slane %v2252, 4
        %v2255 = vshll.u32 %v1929, 16
        %v2257 = vrot.slane %v2255, 5
        %v2258 = vsel %vm1956, %v2253, %v2257
        %v2259 = vshrl.u32 %v1929, 16
        %v2261 = vrot.slane %v2259, 4
        %v2262 = vor.u32 %v2261, %v2257
        %v2263 = vrot.slane %v2262, 4
        %v2265 = vshll.u32 %v1950, 16
        %v2267 = vrot.slane %v2265, 5
        %v2268 = vsel %vm1956, %v2263, %v2267
        %v2270 = vshrl.u32 %v1930, 16
        %v2272 = vrot.slane %v2270, 4
        %v2273 = vshll.u32 %v1930, 16
        %v2275 = vrot.slane %v2273, 5
        %v2276 = vor.u32 %v2272, %v2275
        %v2277 = vrot.slane %v2276, 4
        %v2279 = vshll.u32 %v1931, 16
        %v2281 = vrot.slane %v2279, 5
        %v2282 = vsel %vm1956, %v2277, %v2281
        %v2283 = vshrl.u32 %v1931, 16
        %v2285 = vrot.slane %v2283, 4
        %v2286 = vor.u32 %v2285, %v2281
        %v2287 = vrot.slane %v2286, 4
        %v2289 = vshll.u32 %v1951, 16
        %v2291 = vrot.slane %v2289, 5
        %v2292 = vsel %vm1956, %v2287, %v2291
        %v2294 = vshrl.u32 %v1932, 16
        %v2296 = vrot.slane %v2294, 4
        %v2297 = vshll.u32 %v1932, 16
        %v2299 = vrot.slane %v2297, 5
        %v2300 = vor.u32 %v2296, %v2299
        %v2301 = vrot.slane %v2300, 4
        %v2303 = vshll.u32 %v1933, 16
        %v2305 = vrot.slane %v2303, 5
        %v2306 = vsel %vm1956, %v2301, %v2305
        %v2307 = vshrl.u32 %v1933, 16
        %v2309 = vrot.slane %v2307, 4
        %v2310 = vor.u32 %v2309, %v2305
        %v2311 = vrot.slane %v2310, 4
        %v2313 = vshll.u32 %v1952, 16
        %v2315 = vrot.slane %v2313, 5
        %v2316 = vsel %vm1956, %v2311, %v2315
        %v2318 = vshrl.u32 %v1934, 16
        %v2320 = vrot.slane %v2318, 4
        %v2321 = vshll.u32 %v1934, 16
        %v2323 = vrot.slane %v2321, 5
        %v2324 = vor.u32 %v2320, %v2323
        %v2325 = vrot.slane %v2324, 4
        %v2327 = vshll.u32 %v1935, 16
        %v2329 = vrot.slane %v2327, 5
        %v2330 = vsel %vm1956, %v2325, %v2329
        %v2331 = vshrl.u32 %v1935, 16
        %v2333 = vrot.slane %v2331, 4
        %v2334 = vor.u32 %v2333, %v2329
        %v2335 = vrot.slane %v2334, 4
        %v2337 = vshll.u32 %v1953, 16
        %v2339 = vrot.slane %v2337, 5
        %v2340 = vsel %vm1956, %v2335, %v2339
        %s2341 = scalar_lea.vmem %s604, 8 [#allocation7]
        %v2342 = vld [vmem:[%s2341] sm:$0xf]
        %v2343 = vld [vmem:[%s2341 + $0x4] sm:$0xf]
        %v2344 = vunpack.c.l.b16 %v1970
        %v2345 = vunpack.c.l.b16 %v1980
        %v2346 = vunpack.c.l.b16 %v1994
        %v2347 = vunpack.c.l.b16 %v2004
        %v2348 = vunpack.c.l.b16 %v2018
        %v2349 = vunpack.c.l.b16 %v2028
        %v2350 = vunpack.c.l.b16 %v2042
        %v2351 = vunpack.c.l.b16 %v2052
        %v2352 = vunpack.c.l.b16 %v2066
        %v2353 = vunpack.c.l.b16 %v2076
        %v2354 = vunpack.c.l.b16 %v2090
        %v2355 = vunpack.c.l.b16 %v2100
        %v2356 = vunpack.c.l.b16 %v2114
        %v2357 = vunpack.c.l.b16 %v2124
        %v2358 = vunpack.c.l.b16 %v2138
        %v2359 = vunpack.c.l.b16 %v2148
        %v2360 = vunpack.c.l.b16 %v2162
        %v2361 = vunpack.c.l.b16 %v2172
        %v2362 = vunpack.c.l.b16 %v2186
        %v2363 = vunpack.c.l.b16 %v2196
        %v2364 = vunpack.c.l.b16 %v2210
        %v2365 = vunpack.c.l.b16 %v2220
        %v2366 = vunpack.c.l.b16 %v2234
        %v2367 = vunpack.c.l.b16 %v2244
        %v2368 = vunpack.c.l.b16 %v2258
        %v2369 = vunpack.c.l.b16 %v2268
        %v2370 = vunpack.c.l.b16 %v2282
        %v2371 = vunpack.c.l.b16 %v2292
        %v2372 = vunpack.c.l.b16 %v2306
        %v2373 = vunpack.c.l.b16 %v2316
        %v2374 = vunpack.c.l.b16 %v2330
        %v2375 = vunpack.c.l.b16 %v2340
        %v2376 = vpack.c.b16 %v2345, %v2344
        %v2377 = vpack.c.b16 %v2347, %v2346
        %v2378 = vpack.c.b16 %v2349, %v2348
        %v2379 = vpack.c.b16 %v2351, %v2350
        %v2380 = vpack.c.b16 %v2353, %v2352
        %v2381 = vpack.c.b16 %v2355, %v2354
        %v2382 = vpack.c.b16 %v2357, %v2356
        %v2383 = vpack.c.b16 %v2359, %v2358
        %v2384 = vpack.c.b16 %v2361, %v2360
        %v2385 = vpack.c.b16 %v2363, %v2362
        %v2386 = vpack.c.b16 %v2365, %v2364
        %v2387 = vpack.c.b16 %v2367, %v2366
        %v2388 = vpack.c.b16 %v2369, %v2368
        %v2389 = vpack.c.b16 %v2371, %v2370
        %v2390 = vpack.c.b16 %v2373, %v2372
        %v2391 = vpack.c.b16 %v2375, %v2374
        %v2394 = vunpack.c.l.b16 %v2342
        %v2395 = vunpack.c.l.b16 %v2343
        %v2396 = vpack.c.b16 %v2395, %v2394
        %vm2398 = vcmask 130048
        %v2400 = vsel %vm2398, %v2376, 0
        %v2403 = vsel %vm2398, %v2377, 0
        %v2406 = vsel %vm2398, %v2378, 0
        %v2409 = vsel %vm2398, %v2379, 0
        %v2412 = vsel %vm2398, %v2380, 0
        %v2415 = vsel %vm2398, %v2381, 0
        %v2418 = vsel %vm2398, %v2382, 0
        %v2421 = vsel %vm2398, %v2383, 0
        %v2424 = vsel %vm2398, %v2384, 0
        %v2427 = vsel %vm2398, %v2385, 0
        %v2430 = vsel %vm2398, %v2386, 0
        %v2433 = vsel %vm2398, %v2387, 0
        %v2436 = vsel %vm2398, %v2388, 0
        %v2439 = vsel %vm2398, %v2389, 0
        %v2442 = vsel %vm2398, %v2390, 0
        %v2445 = vsel %vm2398, %v2391, 0
        %2447 = vmatprep.subr.bf16.mxu0 0
        %2448 = vmatpush1.bf16.msra.mxu0 0
        %2449 = vmatprep.subr.bf16.mxu0 0
        %2450 = vmatpush1.bf16.msra.mxu0 0
        %2451 = vmatprep.subr.bf16.mxu0 0
        %2452 = vmatpush1.bf16.msra.mxu0 0
        %2453 = vmatprep.subr.bf16.mxu0 0
        %2454 = vmatpush1.bf16.msra.mxu0 0
        %2455 = vmatprep.subr.bf16.mxu0 0
        %2456 = vmatpush1.bf16.msra.mxu0 0
        %2457 = vmatprep.subr.bf16.mxu0 0
        %2458 = vmatpush1.bf16.msra.mxu0 0
        %2459 = vmatprep.subr.bf16.mxu0 0
        %2460 = vmatpush1.bf16.msra.mxu0 0
        %2461 = vmatprep.subr.bf16.mxu0 0
        %2462 = vmatpush1.bf16.msra.mxu0 %v2396
        %2463 = vmatprep.subr.bf16.mxu0 0
        %2464 = vmatpush2.bf16.msra.mxu0 0
        %2465 = vmatprep.subr.bf16.mxu0 0
        %2466 = vmatpush2.bf16.msra.mxu0 0
        %2467 = vmatprep.subr.bf16.mxu0 0
        %2468 = vmatpush2.bf16.msra.mxu0 0
        %2469 = vmatprep.subr.bf16.mxu0 0
        %2470 = vmatpush2.bf16.msra.mxu0 0
        %2471 = vmatprep.subr.bf16.mxu0 0
        %2472 = vmatpush2.bf16.msra.mxu0 0
        %2473 = vmatprep.subr.bf16.mxu0 0
        %2474 = vmatpush2.bf16.msra.mxu0 0
        %2475 = vmatprep.subr.bf16.mxu0 0
        %2476 = vmatpush2.bf16.msra.mxu0 0
        %2477 = vmatprep.subr.bf16.mxu0 0
        %2478 = vmatpush2.bf16.msra.mxu0 0
        %2479 = vmatprep.mubr.bf16.mxu0 0
        %2480 = vmatmul.mubr.bf16.gmra.mxu0 %v2400
        %v2481 = vpop.f32.mrf.mxu0
        %v2482 = vadd.f32 0.0, %v2481
        %v2483 = vpop.f32.mrf.mxu0
        %v2484 = vpop.f32.mrf.mxu0
        %v2485 = vadd.f32 0.0, %v2484
        %v2486 = vpop.f32.mrf.mxu0
        %2487 = vmatprep.mubr.bf16.mxu0 0
        %2488 = vmatmul.mubr.bf16.gmra.mxu0 %v2403
        %v2489 = vpop.f32.mrf.mxu0
        %v2490 = vadd.f32 0.0, %v2489
        %v2491 = vpop.f32.mrf.mxu0
        %v2492 = vpop.f32.mrf.mxu0
        %v2493 = vadd.f32 0.0, %v2492
        %v2494 = vpop.f32.mrf.mxu0
        %2495 = vmatprep.mubr.bf16.mxu0 0
        %2496 = vmatmul.mubr.bf16.gmra.mxu0 %v2406
        %v2497 = vpop.f32.mrf.mxu0
        %v2498 = vadd.f32 0.0, %v2497
        %v2499 = vpop.f32.mrf.mxu0
        %v2500 = vpop.f32.mrf.mxu0
        %v2501 = vadd.f32 0.0, %v2500
        %v2502 = vpop.f32.mrf.mxu0
        %2503 = vmatprep.mubr.bf16.mxu0 0
        %2504 = vmatmul.mubr.bf16.gmra.mxu0 %v2409
        %v2505 = vpop.f32.mrf.mxu0
        %v2506 = vadd.f32 0.0, %v2505
        %v2507 = vpop.f32.mrf.mxu0
        %v2508 = vpop.f32.mrf.mxu0
        %v2509 = vadd.f32 0.0, %v2508
        %v2510 = vpop.f32.mrf.mxu0
        %2511 = vmatprep.mubr.bf16.mxu0 0
        %2512 = vmatmul.mubr.bf16.gmra.mxu0 %v2412
        %v2513 = vpop.f32.mrf.mxu0
        %v2514 = vadd.f32 0.0, %v2513
        %v2515 = vpop.f32.mrf.mxu0
        %v2516 = vpop.f32.mrf.mxu0
        %v2517 = vadd.f32 0.0, %v2516
        %v2518 = vpop.f32.mrf.mxu0
        %2519 = vmatprep.mubr.bf16.mxu0 0
        %2520 = vmatmul.mubr.bf16.gmra.mxu0 %v2415
        %v2521 = vpop.f32.mrf.mxu0
        %v2522 = vadd.f32 0.0, %v2521
        %v2523 = vpop.f32.mrf.mxu0
        %v2524 = vpop.f32.mrf.mxu0
        %v2525 = vadd.f32 0.0, %v2524
        %v2526 = vpop.f32.mrf.mxu0
        %2527 = vmatprep.mubr.bf16.mxu0 0
        %2528 = vmatmul.mubr.bf16.gmra.mxu0 %v2418
        %v2529 = vpop.f32.mrf.mxu0
        %v2530 = vadd.f32 0.0, %v2529
        %v2531 = vpop.f32.mrf.mxu0
        %v2532 = vpop.f32.mrf.mxu0
        %v2533 = vadd.f32 0.0, %v2532
        %v2534 = vpop.f32.mrf.mxu0
        %2535 = vmatprep.mubr.bf16.mxu0 0
        %2536 = vmatmul.mubr.bf16.gmra.mxu0 %v2421
        %v2537 = vpop.f32.mrf.mxu0
        %v2538 = vadd.f32 0.0, %v2537
        %v2539 = vpop.f32.mrf.mxu0
        %v2540 = vpop.f32.mrf.mxu0
        %v2541 = vadd.f32 0.0, %v2540
        %v2542 = vpop.f32.mrf.mxu0
        %2543 = vmatprep.mubr.bf16.mxu0 0
        %2544 = vmatmul.mubr.bf16.gmra.mxu0 %v2424
        %v2545 = vpop.f32.mrf.mxu0
        %v2546 = vadd.f32 0.0, %v2545
        %v2547 = vpop.f32.mrf.mxu0
        %v2548 = vpop.f32.mrf.mxu0
        %v2549 = vadd.f32 0.0, %v2548
        %v2550 = vpop.f32.mrf.mxu0
        %2551 = vmatprep.mubr.bf16.mxu0 0
        %2552 = vmatmul.mubr.bf16.gmra.mxu0 %v2427
        %v2553 = vpop.f32.mrf.mxu0
        %v2554 = vadd.f32 0.0, %v2553
        %v2555 = vpop.f32.mrf.mxu0
        %v2556 = vpop.f32.mrf.mxu0
        %v2557 = vadd.f32 0.0, %v2556
        %v2558 = vpop.f32.mrf.mxu0
        %2559 = vmatprep.mubr.bf16.mxu0 0
        %2560 = vmatmul.mubr.bf16.gmra.mxu0 %v2430
        %v2561 = vpop.f32.mrf.mxu0
        %v2562 = vadd.f32 0.0, %v2561
        %v2563 = vpop.f32.mrf.mxu0
        %v2564 = vpop.f32.mrf.mxu0
        %v2565 = vadd.f32 0.0, %v2564
        %v2566 = vpop.f32.mrf.mxu0
        %2567 = vmatprep.mubr.bf16.mxu0 0
        %2568 = vmatmul.mubr.bf16.gmra.mxu0 %v2433
        %v2569 = vpop.f32.mrf.mxu0
        %v2570 = vadd.f32 0.0, %v2569
        %v2571 = vpop.f32.mrf.mxu0
        %v2572 = vpop.f32.mrf.mxu0
        %v2573 = vadd.f32 0.0, %v2572
        %v2574 = vpop.f32.mrf.mxu0
        %2575 = vmatprep.mubr.bf16.mxu0 0
        %2576 = vmatmul.mubr.bf16.gmra.mxu0 %v2436
        %v2577 = vpop.f32.mrf.mxu0
        %v2578 = vadd.f32 0.0, %v2577
        %v2579 = vpop.f32.mrf.mxu0
        %v2580 = vpop.f32.mrf.mxu0
        %v2581 = vadd.f32 0.0, %v2580
        %v2582 = vpop.f32.mrf.mxu0
        %2583 = vmatprep.mubr.bf16.mxu0 0
        %2584 = vmatmul.mubr.bf16.gmra.mxu0 %v2439
        %v2585 = vpop.f32.mrf.mxu0
        %v2586 = vadd.f32 0.0, %v2585
        %v2587 = vpop.f32.mrf.mxu0
        %v2588 = vpop.f32.mrf.mxu0
        %v2589 = vadd.f32 0.0, %v2588
        %v2590 = vpop.f32.mrf.mxu0
        %2591 = vmatprep.mubr.bf16.mxu0 0
        %2592 = vmatmul.mubr.bf16.gmra.mxu0 %v2442
        %v2593 = vpop.f32.mrf.mxu0
        %v2594 = vadd.f32 0.0, %v2593
        %v2595 = vpop.f32.mrf.mxu0
        %v2596 = vpop.f32.mrf.mxu0
        %v2597 = vadd.f32 0.0, %v2596
        %v2598 = vpop.f32.mrf.mxu0
        %2599 = vmatprep.mubr.bf16.mxu0 0
        %2600 = vmatmul.mubr.bf16.gmra.mxu0 %v2445
        %v2601 = vpop.f32.mrf.mxu0
        %v2602 = vadd.f32 0.0, %v2601
        %v2603 = vpop.f32.mrf.mxu0
        %v2604 = vpop.f32.mrf.mxu0
        %v2605 = vadd.f32 0.0, %v2604
        %v2606 = vpop.f32.mrf.mxu0
        %2607 = vdwg.mxu0
        %v2640 = vunpack.c.l.b16 %v1904
        %v2641 = vunpack.c.l.b16 %v1905
        %v2642 = vunpack.c.l.b16 %v1906
        %v2643 = vunpack.c.l.b16 %v1907
        %v2644 = vunpack.c.l.b16 %v1908
        %v2645 = vunpack.c.l.b16 %v1909
        %v2646 = vunpack.c.l.b16 %v1910
        %v2647 = vunpack.c.l.b16 %v1911
        %v2648 = vunpack.c.l.b16 %v1912
        %v2649 = vunpack.c.l.b16 %v1913
        %v2650 = vunpack.c.l.b16 %v1914
        %v2651 = vunpack.c.l.b16 %v1915
        %v2652 = vunpack.c.l.b16 %v1916
        %v2653 = vunpack.c.l.b16 %v1917
        %v2654 = vunpack.c.l.b16 %v1918
        %v2655 = vunpack.c.l.b16 %v1919
        %v2656 = vunpack.c.l.b16 %v1920
        %v2657 = vunpack.c.l.b16 %v1921
        %v2658 = vunpack.c.l.b16 %v1922
        %v2659 = vunpack.c.l.b16 %v1923
        %v2660 = vunpack.c.l.b16 %v1924
        %v2661 = vunpack.c.l.b16 %v1925
        %v2662 = vunpack.c.l.b16 %v1926
        %v2663 = vunpack.c.l.b16 %v1927
        %v2664 = vunpack.c.l.b16 %v1928
        %v2665 = vunpack.c.l.b16 %v1929
        %v2666 = vunpack.c.l.b16 %v1930
        %v2667 = vunpack.c.l.b16 %v1931
        %v2668 = vunpack.c.l.b16 %v1932
        %v2669 = vunpack.c.l.b16 %v1933
        %v2670 = vunpack.c.l.b16 %v1934
        %v2671 = vunpack.c.l.b16 %v1935
        %v2672 = vpack.c.b16 %v2641, %v2640
        %v2673 = vpack.c.b16 %v2643, %v2642
        %v2674 = vpack.c.b16 %v2645, %v2644
        %v2675 = vpack.c.b16 %v2647, %v2646
        %v2676 = vpack.c.b16 %v2649, %v2648
        %v2677 = vpack.c.b16 %v2651, %v2650
        %v2678 = vpack.c.b16 %v2653, %v2652
        %v2679 = vpack.c.b16 %v2655, %v2654
        %v2680 = vpack.c.b16 %v2657, %v2656
        %v2681 = vpack.c.b16 %v2659, %v2658
        %v2682 = vpack.c.b16 %v2661, %v2660
        %v2683 = vpack.c.b16 %v2663, %v2662
        %v2684 = vpack.c.b16 %v2665, %v2664
        %v2685 = vpack.c.b16 %v2667, %v2666
        %v2686 = vpack.c.b16 %v2669, %v2668
        %v2687 = vpack.c.b16 %v2671, %v2670
        %v2690 = vunpack.c.l.b16 %v1936
        %v2691 = vunpack.c.l.b16 %v1937
        %v2692 = vpack.c.b16 %v2691, %v2690
        %v2695 = vsel %vm2398, %v2672, 0
        %v2698 = vsel %vm2398, %v2673, 0
        %v2701 = vsel %vm2398, %v2674, 0
        %v2704 = vsel %vm2398, %v2675, 0
        %v2707 = vsel %vm2398, %v2676, 0
        %v2710 = vsel %vm2398, %v2677, 0
        %v2713 = vsel %vm2398, %v2678, 0
        %v2716 = vsel %vm2398, %v2679, 0
        %v2719 = vsel %vm2398, %v2680, 0
        %v2722 = vsel %vm2398, %v2681, 0
        %v2725 = vsel %vm2398, %v2682, 0
        %v2728 = vsel %vm2398, %v2683, 0
        %v2731 = vsel %vm2398, %v2684, 0
        %v2734 = vsel %vm2398, %v2685, 0
        %v2737 = vsel %vm2398, %v2686, 0
        %v2740 = vsel %vm2398, %v2687, 0
        %2742 = vmatprep.subr.bf16.mxu0 0
        %2743 = vmatpush1.bf16.msra.mxu0 0
        %2744 = vmatprep.subr.bf16.mxu0 0
        %2745 = vmatpush1.bf16.msra.mxu0 0
        %2746 = vmatprep.subr.bf16.mxu0 0
        %2747 = vmatpush1.bf16.msra.mxu0 0
        %2748 = vmatprep.subr.bf16.mxu0 0
        %2749 = vmatpush1.bf16.msra.mxu0 0
        %2750 = vmatprep.subr.bf16.mxu0 0
        %2751 = vmatpush1.bf16.msra.mxu0 0
        %2752 = vmatprep.subr.bf16.mxu0 0
        %2753 = vmatpush1.bf16.msra.mxu0 0
        %2754 = vmatprep.subr.bf16.mxu0 0
        %2755 = vmatpush1.bf16.msra.mxu0 0
        %2756 = vmatprep.subr.bf16.mxu0 0
        %2757 = vmatpush1.bf16.msra.mxu0 %v2692
        %2758 = vmatprep.subr.bf16.mxu0 0
        %2759 = vmatpush2.bf16.msra.mxu0 0
        %2760 = vmatprep.subr.bf16.mxu0 0
        %2761 = vmatpush2.bf16.msra.mxu0 0
        %2762 = vmatprep.subr.bf16.mxu0 0
        %2763 = vmatpush2.bf16.msra.mxu0 0
        %2764 = vmatprep.subr.bf16.mxu0 0
        %2765 = vmatpush2.bf16.msra.mxu0 0
        %2766 = vmatprep.subr.bf16.mxu0 0
        %2767 = vmatpush2.bf16.msra.mxu0 0
        %2768 = vmatprep.subr.bf16.mxu0 0
        %2769 = vmatpush2.bf16.msra.mxu0 0
        %2770 = vmatprep.subr.bf16.mxu0 0
        %2771 = vmatpush2.bf16.msra.mxu0 0
        %2772 = vmatprep.subr.bf16.mxu0 0
        %2773 = vmatpush2.bf16.msra.mxu0 0
        %2774 = vmatprep.mubr.bf16.mxu0 0
        %2775 = vmatmul.mubr.bf16.gmra.mxu0 %v2695
        %v2776 = vpop.f32.mrf.mxu0
        %v2777 = vadd.f32 %v2482, %v2776
        %v2778 = vpop.f32.mrf.mxu0
        %v2779 = vpop.f32.mrf.mxu0
        %v2780 = vadd.f32 %v2485, %v2779
        %v2781 = vpop.f32.mrf.mxu0
        %2782 = vmatprep.mubr.bf16.mxu0 0
        %2783 = vmatmul.mubr.bf16.gmra.mxu0 %v2698
        %v2784 = vpop.f32.mrf.mxu0
        %v2785 = vadd.f32 %v2490, %v2784
        %v2786 = vpop.f32.mrf.mxu0
        %v2787 = vpop.f32.mrf.mxu0
        %v2788 = vadd.f32 %v2493, %v2787
        %v2789 = vpop.f32.mrf.mxu0
        %2790 = vmatprep.mubr.bf16.mxu0 0
        %2791 = vmatmul.mubr.bf16.gmra.mxu0 %v2701
        %v2792 = vpop.f32.mrf.mxu0
        %v2793 = vadd.f32 %v2498, %v2792
        %v2794 = vpop.f32.mrf.mxu0
        %v2795 = vpop.f32.mrf.mxu0
        %v2796 = vadd.f32 %v2501, %v2795
        %v2797 = vpop.f32.mrf.mxu0
        %2798 = vmatprep.mubr.bf16.mxu0 0
        %2799 = vmatmul.mubr.bf16.gmra.mxu0 %v2704
        %v2800 = vpop.f32.mrf.mxu0
        %v2801 = vadd.f32 %v2506, %v2800
        %v2802 = vpop.f32.mrf.mxu0
        %v2803 = vpop.f32.mrf.mxu0
        %v2804 = vadd.f32 %v2509, %v2803
        %v2805 = vpop.f32.mrf.mxu0
        %2806 = vmatprep.mubr.bf16.mxu0 0
        %2807 = vmatmul.mubr.bf16.gmra.mxu0 %v2707
        %v2808 = vpop.f32.mrf.mxu0
        %v2809 = vadd.f32 %v2514, %v2808
        %v2810 = vpop.f32.mrf.mxu0
        %v2811 = vpop.f32.mrf.mxu0
        %v2812 = vadd.f32 %v2517, %v2811
        %v2813 = vpop.f32.mrf.mxu0
        %2814 = vmatprep.mubr.bf16.mxu0 0
        %2815 = vmatmul.mubr.bf16.gmra.mxu0 %v2710
        %v2816 = vpop.f32.mrf.mxu0
        %v2817 = vadd.f32 %v2522, %v2816
        %v2818 = vpop.f32.mrf.mxu0
        %v2819 = vpop.f32.mrf.mxu0
        %v2820 = vadd.f32 %v2525, %v2819
        %v2821 = vpop.f32.mrf.mxu0
        %2822 = vmatprep.mubr.bf16.mxu0 0
        %2823 = vmatmul.mubr.bf16.gmra.mxu0 %v2713
        %v2824 = vpop.f32.mrf.mxu0
        %v2825 = vadd.f32 %v2530, %v2824
        %v2826 = vpop.f32.mrf.mxu0
        %v2827 = vpop.f32.mrf.mxu0
        %v2828 = vadd.f32 %v2533, %v2827
        %v2829 = vpop.f32.mrf.mxu0
        %2830 = vmatprep.mubr.bf16.mxu0 0
        %2831 = vmatmul.mubr.bf16.gmra.mxu0 %v2716
        %v2832 = vpop.f32.mrf.mxu0
        %v2833 = vadd.f32 %v2538, %v2832
        %v2834 = vpop.f32.mrf.mxu0
        %v2835 = vpop.f32.mrf.mxu0
        %v2836 = vadd.f32 %v2541, %v2835
        %v2837 = vpop.f32.mrf.mxu0
        %2838 = vmatprep.mubr.bf16.mxu0 0
        %2839 = vmatmul.mubr.bf16.gmra.mxu0 %v2719
        %v2840 = vpop.f32.mrf.mxu0
        %v2841 = vadd.f32 %v2546, %v2840
        %v2842 = vpop.f32.mrf.mxu0
        %v2843 = vpop.f32.mrf.mxu0
        %v2844 = vadd.f32 %v2549, %v2843
        %v2845 = vpop.f32.mrf.mxu0
        %2846 = vmatprep.mubr.bf16.mxu0 0
        %2847 = vmatmul.mubr.bf16.gmra.mxu0 %v2722
        %v2848 = vpop.f32.mrf.mxu0
        %v2849 = vadd.f32 %v2554, %v2848
        %v2850 = vpop.f32.mrf.mxu0
        %v2851 = vpop.f32.mrf.mxu0
        %v2852 = vadd.f32 %v2557, %v2851
        %v2853 = vpop.f32.mrf.mxu0
        %2854 = vmatprep.mubr.bf16.mxu0 0
        %2855 = vmatmul.mubr.bf16.gmra.mxu0 %v2725
        %v2856 = vpop.f32.mrf.mxu0
        %v2857 = vadd.f32 %v2562, %v2856
        %v2858 = vpop.f32.mrf.mxu0
        %v2859 = vpop.f32.mrf.mxu0
        %v2860 = vadd.f32 %v2565, %v2859
        %v2861 = vpop.f32.mrf.mxu0
        %2862 = vmatprep.mubr.bf16.mxu0 0
        %2863 = vmatmul.mubr.bf16.gmra.mxu0 %v2728
        %v2864 = vpop.f32.mrf.mxu0
        %v2865 = vadd.f32 %v2570, %v2864
        %v2866 = vpop.f32.mrf.mxu0
        %v2867 = vpop.f32.mrf.mxu0
        %v2868 = vadd.f32 %v2573, %v2867
        %v2869 = vpop.f32.mrf.mxu0
        %2870 = vmatprep.mubr.bf16.mxu0 0
        %2871 = vmatmul.mubr.bf16.gmra.mxu0 %v2731
        %v2872 = vpop.f32.mrf.mxu0
        %v2873 = vadd.f32 %v2578, %v2872
        %v2874 = vpop.f32.mrf.mxu0
        %v2875 = vpop.f32.mrf.mxu0
        %v2876 = vadd.f32 %v2581, %v2875
        %v2877 = vpop.f32.mrf.mxu0
        %2878 = vmatprep.mubr.bf16.mxu0 0
        %2879 = vmatmul.mubr.bf16.gmra.mxu0 %v2734
        %v2880 = vpop.f32.mrf.mxu0
        %v2881 = vadd.f32 %v2586, %v2880
        %v2882 = vpop.f32.mrf.mxu0
        %v2883 = vpop.f32.mrf.mxu0
        %v2884 = vadd.f32 %v2589, %v2883
        %v2885 = vpop.f32.mrf.mxu0
        %2886 = vmatprep.mubr.bf16.mxu0 0
        %2887 = vmatmul.mubr.bf16.gmra.mxu0 %v2737
        %v2888 = vpop.f32.mrf.mxu0
        %v2889 = vadd.f32 %v2594, %v2888
        %v2890 = vpop.f32.mrf.mxu0
        %v2891 = vpop.f32.mrf.mxu0
        %v2892 = vadd.f32 %v2597, %v2891
        %v2893 = vpop.f32.mrf.mxu0
        %2894 = vmatprep.mubr.bf16.mxu0 0
        %2895 = vmatmul.mubr.bf16.gmra.mxu0 %v2740
        %v2896 = vpop.f32.mrf.mxu0
        %v2897 = vadd.f32 %v2602, %v2896
        %v2898 = vpop.f32.mrf.mxu0
        %v2899 = vpop.f32.mrf.mxu0
        %v2900 = vadd.f32 %v2605, %v2899
        %v2901 = vpop.f32.mrf.mxu0
        %2902 = vdwg.mxu0
        %v2903 = vld [vmem:[#allocation3] sm:$0xe]
        %v2904 = vld [vmem:[#allocation3 + $0xc] sm:$0xe]
        %v2905 = vld [vmem:[#allocation3 + $0x18] sm:$0xe]
        %v2906 = vld [vmem:[#allocation3 + $0x24] sm:$0xe]
        %v2907 = vld [vmem:[#allocation3 + $0x30] sm:$0xe]
        %v2908 = vld [vmem:[#allocation3 + $0x3c] sm:$0xe]
        %v2909 = vld [vmem:[#allocation3 + $0x48] sm:$0xe]
        %v2910 = vld [vmem:[#allocation3 + $0x54] sm:$0xe]
        %v2911 = vld [vmem:[#allocation3 + $0x60] sm:$0xe]
        %v2912 = vld [vmem:[#allocation3 + $0x6c] sm:$0xe]
        %v2913 = vld [vmem:[#allocation3 + $0x78] sm:$0xe]
        %v2914 = vld [vmem:[#allocation3 + $0x84] sm:$0xe]
        %v2915 = vld [vmem:[#allocation3 + $0x90] sm:$0xe]
        %v2916 = vld [vmem:[#allocation3 + $0x9c] sm:$0xe]
        %v2917 = vld [vmem:[#allocation3 + $0xa8] sm:$0xe]
        %v2918 = vld [vmem:[#allocation3 + $0xb4] sm:$0xe]
        %vm2951 = vcmask 1042432
        %vm2952 = vcmask 1046532
        %vm2953 = vmor %vm2951, %vm2952
        %v2954 = vrot.slane %v2903, 5
        %v2955 = vrot.slane %v2954, 4
        %v2956 = vrot.slane %v1905, 5
        %v2957 = vsel %vm2953, %v2955, %v2956
        %v2958 = vrot.slane %v2956, 4
        %v2959 = vrot.slane %v1938, 5
        %v2960 = vsel %vm2953, %v2958, %v2959
        %v2961 = vrot.slane %v2904, 5
        %v2962 = vrot.slane %v2961, 4
        %v2963 = vrot.slane %v1907, 5
        %v2964 = vsel %vm2953, %v2962, %v2963
        %v2965 = vrot.slane %v2963, 4
        %v2966 = vrot.slane %v1939, 5
        %v2967 = vsel %vm2953, %v2965, %v2966
        %v2968 = vrot.slane %v2905, 5
        %v2969 = vrot.slane %v2968, 4
        %v2970 = vrot.slane %v1909, 5
        %v2971 = vsel %vm2953, %v2969, %v2970
        %v2972 = vrot.slane %v2970, 4
        %v2973 = vrot.slane %v1940, 5
        %v2974 = vsel %vm2953, %v2972, %v2973
        %v2975 = vrot.slane %v2906, 5
        %v2976 = vrot.slane %v2975, 4
        %v2977 = vrot.slane %v1911, 5
        %v2978 = vsel %vm2953, %v2976, %v2977
        %v2979 = vrot.slane %v2977, 4
        %v2980 = vrot.slane %v1941, 5
        %v2981 = vsel %vm2953, %v2979, %v2980
        %v2982 = vrot.slane %v2907, 5
        %v2983 = vrot.slane %v2982, 4
        %v2984 = vrot.slane %v1913, 5
        %v2985 = vsel %vm2953, %v2983, %v2984
        %v2986 = vrot.slane %v2984, 4
        %v2987 = vrot.slane %v1942, 5
        %v2988 = vsel %vm2953, %v2986, %v2987
        %v2989 = vrot.slane %v2908, 5
        %v2990 = vrot.slane %v2989, 4
        %v2991 = vrot.slane %v1915, 5
        %v2992 = vsel %vm2953, %v2990, %v2991
        %v2993 = vrot.slane %v2991, 4
        %v2994 = vrot.slane %v1943, 5
        %v2995 = vsel %vm2953, %v2993, %v2994
        %v2996 = vrot.slane %v2909, 5
        %v2997 = vrot.slane %v2996, 4
        %v2998 = vrot.slane %v1917, 5
        %v2999 = vsel %vm2953, %v2997, %v2998
        %v3000 = vrot.slane %v2998, 4
        %v3001 = vrot.slane %v1944, 5
        %v3002 = vsel %vm2953, %v3000, %v3001
        %v3003 = vrot.slane %v2910, 5
        %v3004 = vrot.slane %v3003, 4
        %v3005 = vrot.slane %v1919, 5
        %v3006 = vsel %vm2953, %v3004, %v3005
        %v3007 = vrot.slane %v3005, 4
        %v3008 = vrot.slane %v1945, 5
        %v3009 = vsel %vm2953, %v3007, %v3008
        %v3010 = vrot.slane %v2911, 5
        %v3011 = vrot.slane %v3010, 4
        %v3012 = vrot.slane %v1921, 5
        %v3013 = vsel %vm2953, %v3011, %v3012
        %v3014 = vrot.slane %v3012, 4
        %v3015 = vrot.slane %v1946, 5
        %v3016 = vsel %vm2953, %v3014, %v3015
        %v3017 = vrot.slane %v2912, 5
        %v3018 = vrot.slane %v3017, 4
        %v3019 = vrot.slane %v1923, 5
        %v3020 = vsel %vm2953, %v3018, %v3019
        %v3021 = vrot.slane %v3019, 4
        %v3022 = vrot.slane %v1947, 5
        %v3023 = vsel %vm2953, %v3021, %v3022
        %v3024 = vrot.slane %v2913, 5
        %v3025 = vrot.slane %v3024, 4
        %v3026 = vrot.slane %v1925, 5
        %v3027 = vsel %vm2953, %v3025, %v3026
        %v3028 = vrot.slane %v3026, 4
        %v3029 = vrot.slane %v1948, 5
        %v3030 = vsel %vm2953, %v3028, %v3029
        %v3031 = vrot.slane %v2914, 5
        %v3032 = vrot.slane %v3031, 4
        %v3033 = vrot.slane %v1927, 5
        %v3034 = vsel %vm2953, %v3032, %v3033
        %v3035 = vrot.slane %v3033, 4
        %v3036 = vrot.slane %v1949, 5
        %v3037 = vsel %vm2953, %v3035, %v3036
        %v3038 = vrot.slane %v2915, 5
        %v3039 = vrot.slane %v3038, 4
        %v3040 = vrot.slane %v1929, 5
        %v3041 = vsel %vm2953, %v3039, %v3040
        %v3042 = vrot.slane %v3040, 4
        %v3043 = vrot.slane %v1950, 5
        %v3044 = vsel %vm2953, %v3042, %v3043
        %v3045 = vrot.slane %v2916, 5
        %v3046 = vrot.slane %v3045, 4
        %v3047 = vrot.slane %v1931, 5
        %v3048 = vsel %vm2953, %v3046, %v3047
        %v3049 = vrot.slane %v3047, 4
        %v3050 = vrot.slane %v1951, 5
        %v3051 = vsel %vm2953, %v3049, %v3050
        %v3052 = vrot.slane %v2917, 5
        %v3053 = vrot.slane %v3052, 4
        %v3054 = vrot.slane %v1933, 5
        %v3055 = vsel %vm2953, %v3053, %v3054
        %v3056 = vrot.slane %v3054, 4
        %v3057 = vrot.slane %v1952, 5
        %v3058 = vsel %vm2953, %v3056, %v3057
        %v3059 = vrot.slane %v2918, 5
        %v3060 = vrot.slane %v3059, 4
        %v3061 = vrot.slane %v1935, 5
        %v3062 = vsel %vm2953, %v3060, %v3061
        %v3063 = vrot.slane %v3061, 4
        %v3064 = vrot.slane %v1953, 5
        %v3065 = vsel %vm2953, %v3063, %v3064
        %s3066 = scalar_lea.vmem %s604, 16 [#allocation7]
        %v3067 = vld [vmem:[%s3066] sm:$0xf]
        %v3068 = vld [vmem:[%s3066 + $0x4] sm:$0xf]
        %v3069 = vunpack.c.l.b16 %v2957
        %v3070 = vunpack.c.l.b16 %v2960
        %v3071 = vunpack.c.l.b16 %v2964
        %v3072 = vunpack.c.l.b16 %v2967
        %v3073 = vunpack.c.l.b16 %v2971
        %v3074 = vunpack.c.l.b16 %v2974
        %v3075 = vunpack.c.l.b16 %v2978
        %v3076 = vunpack.c.l.b16 %v2981
        %v3077 = vunpack.c.l.b16 %v2985
        %v3078 = vunpack.c.l.b16 %v2988
        %v3079 = vunpack.c.l.b16 %v2992
        %v3080 = vunpack.c.l.b16 %v2995
        %v3081 = vunpack.c.l.b16 %v2999
        %v3082 = vunpack.c.l.b16 %v3002
        %v3083 = vunpack.c.l.b16 %v3006
        %v3084 = vunpack.c.l.b16 %v3009
        %v3085 = vunpack.c.l.b16 %v3013
        %v3086 = vunpack.c.l.b16 %v3016
        %v3087 = vunpack.c.l.b16 %v3020
        %v3088 = vunpack.c.l.b16 %v3023
        %v3089 = vunpack.c.l.b16 %v3027
        %v3090 = vunpack.c.l.b16 %v3030
        %v3091 = vunpack.c.l.b16 %v3034
        %v3092 = vunpack.c.l.b16 %v3037
        %v3093 = vunpack.c.l.b16 %v3041
        %v3094 = vunpack.c.l.b16 %v3044
        %v3095 = vunpack.c.l.b16 %v3048
        %v3096 = vunpack.c.l.b16 %v3051
        %v3097 = vunpack.c.l.b16 %v3055
        %v3098 = vunpack.c.l.b16 %v3058
        %v3099 = vunpack.c.l.b16 %v3062
        %v3100 = vunpack.c.l.b16 %v3065
        %v3101 = vpack.c.b16 %v3070, %v3069
        %v3102 = vpack.c.b16 %v3072, %v3071
        %v3103 = vpack.c.b16 %v3074, %v3073
        %v3104 = vpack.c.b16 %v3076, %v3075
        %v3105 = vpack.c.b16 %v3078, %v3077
        %v3106 = vpack.c.b16 %v3080, %v3079
        %v3107 = vpack.c.b16 %v3082, %v3081
        %v3108 = vpack.c.b16 %v3084, %v3083
        %v3109 = vpack.c.b16 %v3086, %v3085
        %v3110 = vpack.c.b16 %v3088, %v3087
        %v3111 = vpack.c.b16 %v3090, %v3089
        %v3112 = vpack.c.b16 %v3092, %v3091
        %v3113 = vpack.c.b16 %v3094, %v3093
        %v3114 = vpack.c.b16 %v3096, %v3095
        %v3115 = vpack.c.b16 %v3098, %v3097
        %v3116 = vpack.c.b16 %v3100, %v3099
        %v3119 = vunpack.c.l.b16 %v3067
        %v3120 = vunpack.c.l.b16 %v3068
        %v3121 = vpack.c.b16 %v3120, %v3119
        %v3124 = vsel %vm2398, %v3101, 0
        %v3127 = vsel %vm2398, %v3102, 0
        %v3130 = vsel %vm2398, %v3103, 0
        %v3133 = vsel %vm2398, %v3104, 0
        %v3136 = vsel %vm2398, %v3105, 0
        %v3139 = vsel %vm2398, %v3106, 0
        %v3142 = vsel %vm2398, %v3107, 0
        %v3145 = vsel %vm2398, %v3108, 0
        %v3148 = vsel %vm2398, %v3109, 0
        %v3151 = vsel %vm2398, %v3110, 0
        %v3154 = vsel %vm2398, %v3111, 0
        %v3157 = vsel %vm2398, %v3112, 0
        %v3160 = vsel %vm2398, %v3113, 0
        %v3163 = vsel %vm2398, %v3114, 0
        %v3166 = vsel %vm2398, %v3115, 0
        %v3169 = vsel %vm2398, %v3116, 0
        %3171 = vmatprep.subr.bf16.mxu0 0
        %3172 = vmatpush1.bf16.msra.mxu0 0
        %3173 = vmatprep.subr.bf16.mxu0 0
        %3174 = vmatpush1.bf16.msra.mxu0 0
        %3175 = vmatprep.subr.bf16.mxu0 0
        %3176 = vmatpush1.bf16.msra.mxu0 0
        %3177 = vmatprep.subr.bf16.mxu0 0
        %3178 = vmatpush1.bf16.msra.mxu0 0
        %3179 = vmatprep.subr.bf16.mxu0 0
        %3180 = vmatpush1.bf16.msra.mxu0 0
        %3181 = vmatprep.subr.bf16.mxu0 0
        %3182 = vmatpush1.bf16.msra.mxu0 0
        %3183 = vmatprep.subr.bf16.mxu0 0
        %3184 = vmatpush1.bf16.msra.mxu0 0
        %3185 = vmatprep.subr.bf16.mxu0 0
        %3186 = vmatpush1.bf16.msra.mxu0 %v3121
        %3187 = vmatprep.subr.bf16.mxu0 0
        %3188 = vmatpush2.bf16.msra.mxu0 0
        %3189 = vmatprep.subr.bf16.mxu0 0
        %3190 = vmatpush2.bf16.msra.mxu0 0
        %3191 = vmatprep.subr.bf16.mxu0 0
        %3192 = vmatpush2.bf16.msra.mxu0 0
        %3193 = vmatprep.subr.bf16.mxu0 0
        %3194 = vmatpush2.bf16.msra.mxu0 0
        %3195 = vmatprep.subr.bf16.mxu0 0
        %3196 = vmatpush2.bf16.msra.mxu0 0
        %3197 = vmatprep.subr.bf16.mxu0 0
        %3198 = vmatpush2.bf16.msra.mxu0 0
        %3199 = vmatprep.subr.bf16.mxu0 0
        %3200 = vmatpush2.bf16.msra.mxu0 0
        %3201 = vmatprep.subr.bf16.mxu0 0
        %3202 = vmatpush2.bf16.msra.mxu0 0
        %3203 = vmatprep.mubr.bf16.mxu0 0
        %3204 = vmatmul.mubr.bf16.gmra.mxu0 %v3124
        %v3205 = vpop.f32.mrf.mxu0
        %v3206 = vadd.f32 0.0, %v3205
        %v3207 = vpop.f32.mrf.mxu0
        %v3208 = vpop.f32.mrf.mxu0
        %v3209 = vadd.f32 0.0, %v3208
        %v3210 = vpop.f32.mrf.mxu0
        %3211 = vmatprep.mubr.bf16.mxu0 0
        %3212 = vmatmul.mubr.bf16.gmra.mxu0 %v3127
        %v3213 = vpop.f32.mrf.mxu0
        %v3214 = vadd.f32 0.0, %v3213
        %v3215 = vpop.f32.mrf.mxu0
        %v3216 = vpop.f32.mrf.mxu0
        %v3217 = vadd.f32 0.0, %v3216
        %v3218 = vpop.f32.mrf.mxu0
        %3219 = vmatprep.mubr.bf16.mxu0 0
        %3220 = vmatmul.mubr.bf16.gmra.mxu0 %v3130
        %v3221 = vpop.f32.mrf.mxu0
        %v3222 = vadd.f32 0.0, %v3221
        %v3223 = vpop.f32.mrf.mxu0
        %v3224 = vpop.f32.mrf.mxu0
        %v3225 = vadd.f32 0.0, %v3224
        %v3226 = vpop.f32.mrf.mxu0
        %3227 = vmatprep.mubr.bf16.mxu0 0
        %3228 = vmatmul.mubr.bf16.gmra.mxu0 %v3133
        %v3229 = vpop.f32.mrf.mxu0
        %v3230 = vadd.f32 0.0, %v3229
        %v3231 = vpop.f32.mrf.mxu0
        %v3232 = vpop.f32.mrf.mxu0
        %v3233 = vadd.f32 0.0, %v3232
        %v3234 = vpop.f32.mrf.mxu0
        %3235 = vmatprep.mubr.bf16.mxu0 0
        %3236 = vmatmul.mubr.bf16.gmra.mxu0 %v3136
        %v3237 = vpop.f32.mrf.mxu0
        %v3238 = vadd.f32 0.0, %v3237
        %v3239 = vpop.f32.mrf.mxu0
        %v3240 = vpop.f32.mrf.mxu0
        %v3241 = vadd.f32 0.0, %v3240
        %v3242 = vpop.f32.mrf.mxu0
        %3243 = vmatprep.mubr.bf16.mxu0 0
        %3244 = vmatmul.mubr.bf16.gmra.mxu0 %v3139
        %v3245 = vpop.f32.mrf.mxu0
        %v3246 = vadd.f32 0.0, %v3245
        %v3247 = vpop.f32.mrf.mxu0
        %v3248 = vpop.f32.mrf.mxu0
        %v3249 = vadd.f32 0.0, %v3248
        %v3250 = vpop.f32.mrf.mxu0
        %3251 = vmatprep.mubr.bf16.mxu0 0
        %3252 = vmatmul.mubr.bf16.gmra.mxu0 %v3142
        %v3253 = vpop.f32.mrf.mxu0
        %v3254 = vadd.f32 0.0, %v3253
        %v3255 = vpop.f32.mrf.mxu0
        %v3256 = vpop.f32.mrf.mxu0
        %v3257 = vadd.f32 0.0, %v3256
        %v3258 = vpop.f32.mrf.mxu0
        %3259 = vmatprep.mubr.bf16.mxu0 0
        %3260 = vmatmul.mubr.bf16.gmra.mxu0 %v3145
        %v3261 = vpop.f32.mrf.mxu0
        %v3262 = vadd.f32 0.0, %v3261
        %v3263 = vpop.f32.mrf.mxu0
        %v3264 = vpop.f32.mrf.mxu0
        %v3265 = vadd.f32 0.0, %v3264
        %v3266 = vpop.f32.mrf.mxu0
        %3267 = vmatprep.mubr.bf16.mxu0 0
        %3268 = vmatmul.mubr.bf16.gmra.mxu0 %v3148
        %v3269 = vpop.f32.mrf.mxu0
        %v3270 = vadd.f32 0.0, %v3269
        %v3271 = vpop.f32.mrf.mxu0
        %v3272 = vpop.f32.mrf.mxu0
        %v3273 = vadd.f32 0.0, %v3272
        %v3274 = vpop.f32.mrf.mxu0
        %3275 = vmatprep.mubr.bf16.mxu0 0
        %3276 = vmatmul.mubr.bf16.gmra.mxu0 %v3151
        %v3277 = vpop.f32.mrf.mxu0
        %v3278 = vadd.f32 0.0, %v3277
        %v3279 = vpop.f32.mrf.mxu0
        %v3280 = vpop.f32.mrf.mxu0
        %v3281 = vadd.f32 0.0, %v3280
        %v3282 = vpop.f32.mrf.mxu0
        %3283 = vmatprep.mubr.bf16.mxu0 0
        %3284 = vmatmul.mubr.bf16.gmra.mxu0 %v3154
        %v3285 = vpop.f32.mrf.mxu0
        %v3286 = vadd.f32 0.0, %v3285
        %v3287 = vpop.f32.mrf.mxu0
        %v3288 = vpop.f32.mrf.mxu0
        %v3289 = vadd.f32 0.0, %v3288
        %v3290 = vpop.f32.mrf.mxu0
        %3291 = vmatprep.mubr.bf16.mxu0 0
        %3292 = vmatmul.mubr.bf16.gmra.mxu0 %v3157
        %v3293 = vpop.f32.mrf.mxu0
        %v3294 = vadd.f32 0.0, %v3293
        %v3295 = vpop.f32.mrf.mxu0
        %v3296 = vpop.f32.mrf.mxu0
        %v3297 = vadd.f32 0.0, %v3296
        %v3298 = vpop.f32.mrf.mxu0
        %3299 = vmatprep.mubr.bf16.mxu0 0
        %3300 = vmatmul.mubr.bf16.gmra.mxu0 %v3160
        %v3301 = vpop.f32.mrf.mxu0
        %v3302 = vadd.f32 0.0, %v3301
        %v3303 = vpop.f32.mrf.mxu0
        %v3304 = vpop.f32.mrf.mxu0
        %v3305 = vadd.f32 0.0, %v3304
        %v3306 = vpop.f32.mrf.mxu0
        %3307 = vmatprep.mubr.bf16.mxu0 0
        %3308 = vmatmul.mubr.bf16.gmra.mxu0 %v3163
        %v3309 = vpop.f32.mrf.mxu0
        %v3310 = vadd.f32 0.0, %v3309
        %v3311 = vpop.f32.mrf.mxu0
        %v3312 = vpop.f32.mrf.mxu0
        %v3313 = vadd.f32 0.0, %v3312
        %v3314 = vpop.f32.mrf.mxu0
        %3315 = vmatprep.mubr.bf16.mxu0 0
        %3316 = vmatmul.mubr.bf16.gmra.mxu0 %v3166
        %v3317 = vpop.f32.mrf.mxu0
        %v3318 = vadd.f32 0.0, %v3317
        %v3319 = vpop.f32.mrf.mxu0
        %v3320 = vpop.f32.mrf.mxu0
        %v3321 = vadd.f32 0.0, %v3320
        %v3322 = vpop.f32.mrf.mxu0
        %3323 = vmatprep.mubr.bf16.mxu0 0
        %3324 = vmatmul.mubr.bf16.gmra.mxu0 %v3169
        %v3325 = vpop.f32.mrf.mxu0
        %v3326 = vadd.f32 0.0, %v3325
        %v3327 = vpop.f32.mrf.mxu0
        %v3328 = vpop.f32.mrf.mxu0
        %v3329 = vadd.f32 0.0, %v3328
        %v3330 = vpop.f32.mrf.mxu0
        %3331 = vdwg.mxu0
        %v3332 = vadd.f32 %v2777, %v3206
        %v3333 = vadd.f32 %v2780, %v3209
        %v3334 = vadd.f32 %v2785, %v3214
        %v3335 = vadd.f32 %v2788, %v3217
        %v3336 = vadd.f32 %v2793, %v3222
        %v3337 = vadd.f32 %v2796, %v3225
        %v3338 = vadd.f32 %v2801, %v3230
        %v3339 = vadd.f32 %v2804, %v3233
        %v3340 = vadd.f32 %v2809, %v3238
        %v3341 = vadd.f32 %v2812, %v3241
        %v3342 = vadd.f32 %v2817, %v3246
        %v3343 = vadd.f32 %v2820, %v3249
        %v3344 = vadd.f32 %v2825, %v3254
        %v3345 = vadd.f32 %v2828, %v3257
        %v3346 = vadd.f32 %v2833, %v3262
        %v3347 = vadd.f32 %v2836, %v3265
        %v3348 = vadd.f32 %v2841, %v3270
        %v3349 = vadd.f32 %v2844, %v3273
        %v3350 = vadd.f32 %v2849, %v3278
        %v3351 = vadd.f32 %v2852, %v3281
        %v3352 = vadd.f32 %v2857, %v3286
        %v3353 = vadd.f32 %v2860, %v3289
        %v3354 = vadd.f32 %v2865, %v3294
        %v3355 = vadd.f32 %v2868, %v3297
        %v3356 = vadd.f32 %v2873, %v3302
        %v3357 = vadd.f32 %v2876, %v3305
        %v3358 = vadd.f32 %v2881, %v3310
        %v3359 = vadd.f32 %v2884, %v3313
        %v3360 = vadd.f32 %v2889, %v3318
        %v3361 = vadd.f32 %v2892, %v3321
        %v3362 = vadd.f32 %v2897, %v3326
        %v3363 = vadd.f32 %v2900, %v3329
        %v3364 = vld [vmem:[%s1785] sm:$0xf]
        %v3365 = vld [vmem:[%s1785 + $0x4] sm:$0xf]
        %v3366 = vld [vmem:[%s1785 + $0xc] sm:$0xf]
        %v3367 = vld [vmem:[%s1785 + $0x10] sm:$0xf]
        %v3368 = vld [vmem:[%s1785 + $0x18] sm:$0xf]
        %v3369 = vld [vmem:[%s1785 + $0x1c] sm:$0xf]
        %v3370 = vld [vmem:[%s1785 + $0x24] sm:$0xf]
        %v3371 = vld [vmem:[%s1785 + $0x28] sm:$0xf]
        %v3372 = vld [vmem:[%s1785 + $0x30] sm:$0xf]
        %v3373 = vld [vmem:[%s1785 + $0x34] sm:$0xf]
        %v3374 = vld [vmem:[%s1785 + $0x3c] sm:$0xf]
        %v3375 = vld [vmem:[%s1785 + $0x40] sm:$0xf]
        %v3376 = vld [vmem:[%s1785 + $0x48] sm:$0xf]
        %v3377 = vld [vmem:[%s1785 + $0x4c] sm:$0xf]
        %v3378 = vld [vmem:[%s1785 + $0x54] sm:$0xf]
        %v3379 = vld [vmem:[%s1785 + $0x58] sm:$0xf]
        %v3380 = vld [vmem:[%s1785 + $0x60] sm:$0xf]
        %v3381 = vld [vmem:[%s1785 + $0x64] sm:$0xf]
        %v3382 = vld [vmem:[%s1785 + $0x6c] sm:$0xf]
        %v3383 = vld [vmem:[%s1785 + $0x70] sm:$0xf]
        %v3384 = vld [vmem:[%s1785 + $0x78] sm:$0xf]
        %v3385 = vld [vmem:[%s1785 + $0x7c] sm:$0xf]
        %v3386 = vld [vmem:[%s1785 + $0x84] sm:$0xf]
        %v3387 = vld [vmem:[%s1785 + $0x88] sm:$0xf]
        %v3388 = vld [vmem:[%s1785 + $0x90] sm:$0xf]
        %v3389 = vld [vmem:[%s1785 + $0x94] sm:$0xf]
        %v3390 = vld [vmem:[%s1785 + $0x9c] sm:$0xf]
        %v3391 = vld [vmem:[%s1785 + $0xa0] sm:$0xf]
        %v3392 = vld [vmem:[%s1785 + $0xa8] sm:$0xf]
        %v3393 = vld [vmem:[%s1785 + $0xac] sm:$0xf]
        %v3394 = vld [vmem:[%s1785 + $0xb4] sm:$0xf]
        %v3395 = vld [vmem:[%s1785 + $0xb8] sm:$0xf]
        %s3396 = scalar_lea.vmem %s604, 24 [#allocation7]
        %v3397 = vld [vmem:[%s3396] sm:$0xf]
        %v3398 = vld [vmem:[%s3396 + $0x4] sm:$0xf]
        %v3431 = vunpack.c.l.b16 %v3364
        %v3432 = vunpack.c.l.b16 %v3365
        %v3433 = vunpack.c.l.b16 %v3366
        %v3434 = vunpack.c.l.b16 %v3367
        %v3435 = vunpack.c.l.b16 %v3368
        %v3436 = vunpack.c.l.b16 %v3369
        %v3437 = vunpack.c.l.b16 %v3370
        %v3438 = vunpack.c.l.b16 %v3371
        %v3439 = vunpack.c.l.b16 %v3372
        %v3440 = vunpack.c.l.b16 %v3373
        %v3441 = vunpack.c.l.b16 %v3374
        %v3442 = vunpack.c.l.b16 %v3375
        %v3443 = vunpack.c.l.b16 %v3376
        %v3444 = vunpack.c.l.b16 %v3377
        %v3445 = vunpack.c.l.b16 %v3378
        %v3446 = vunpack.c.l.b16 %v3379
        %v3447 = vunpack.c.l.b16 %v3380
        %v3448 = vunpack.c.l.b16 %v3381
        %v3449 = vunpack.c.l.b16 %v3382
        %v3450 = vunpack.c.l.b16 %v3383
        %v3451 = vunpack.c.l.b16 %v3384
        %v3452 = vunpack.c.l.b16 %v3385
        %v3453 = vunpack.c.l.b16 %v3386
        %v3454 = vunpack.c.l.b16 %v3387
        %v3455 = vunpack.c.l.b16 %v3388
        %v3456 = vunpack.c.l.b16 %v3389
        %v3457 = vunpack.c.l.b16 %v3390
        %v3458 = vunpack.c.l.b16 %v3391
        %v3459 = vunpack.c.l.b16 %v3392
        %v3460 = vunpack.c.l.b16 %v3393
        %v3461 = vunpack.c.l.b16 %v3394
        %v3462 = vunpack.c.l.b16 %v3395
        %v3463 = vpack.c.b16 %v3432, %v3431
        %v3464 = vpack.c.b16 %v3434, %v3433
        %v3465 = vpack.c.b16 %v3436, %v3435
        %v3466 = vpack.c.b16 %v3438, %v3437
        %v3467 = vpack.c.b16 %v3440, %v3439
        %v3468 = vpack.c.b16 %v3442, %v3441
        %v3469 = vpack.c.b16 %v3444, %v3443
        %v3470 = vpack.c.b16 %v3446, %v3445
        %v3471 = vpack.c.b16 %v3448, %v3447
        %v3472 = vpack.c.b16 %v3450, %v3449
        %v3473 = vpack.c.b16 %v3452, %v3451
        %v3474 = vpack.c.b16 %v3454, %v3453
        %v3475 = vpack.c.b16 %v3456, %v3455
        %v3476 = vpack.c.b16 %v3458, %v3457
        %v3477 = vpack.c.b16 %v3460, %v3459
        %v3478 = vpack.c.b16 %v3462, %v3461
        %v3481 = vunpack.c.l.b16 %v3397
        %v3482 = vunpack.c.l.b16 %v3398
        %v3483 = vpack.c.b16 %v3482, %v3481
        %v3486 = vsel %vm2398, %v3463, 0
        %v3489 = vsel %vm2398, %v3464, 0
        %v3492 = vsel %vm2398, %v3465, 0
        %v3495 = vsel %vm2398, %v3466, 0
        %v3498 = vsel %vm2398, %v3467, 0
        %v3501 = vsel %vm2398, %v3468, 0
        %v3504 = vsel %vm2398, %v3469, 0
        %v3507 = vsel %vm2398, %v3470, 0
        %v3510 = vsel %vm2398, %v3471, 0
        %v3513 = vsel %vm2398, %v3472, 0
        %v3516 = vsel %vm2398, %v3473, 0
        %v3519 = vsel %vm2398, %v3474, 0
        %v3522 = vsel %vm2398, %v3475, 0
        %v3525 = vsel %vm2398, %v3476, 0
        %v3528 = vsel %vm2398, %v3477, 0
        %v3531 = vsel %vm2398, %v3478, 0
        %3533 = vmatprep.subr.bf16.mxu0 0
        %3534 = vmatpush1.bf16.msra.mxu0 0
        %3535 = vmatprep.subr.bf16.mxu0 0
        %3536 = vmatpush1.bf16.msra.mxu0 0
        %3537 = vmatprep.subr.bf16.mxu0 0
        %3538 = vmatpush1.bf16.msra.mxu0 0
        %3539 = vmatprep.subr.bf16.mxu0 0
        %3540 = vmatpush1.bf16.msra.mxu0 0
        %3541 = vmatprep.subr.bf16.mxu0 0
        %3542 = vmatpush1.bf16.msra.mxu0 0
        %3543 = vmatprep.subr.bf16.mxu0 0
        %3544 = vmatpush1.bf16.msra.mxu0 0
        %3545 = vmatprep.subr.bf16.mxu0 0
        %3546 = vmatpush1.bf16.msra.mxu0 0
        %3547 = vmatprep.subr.bf16.mxu0 0
        %3548 = vmatpush1.bf16.msra.mxu0 %v3483
        %3549 = vmatprep.subr.bf16.mxu0 0
        %3550 = vmatpush2.bf16.msra.mxu0 0
        %3551 = vmatprep.subr.bf16.mxu0 0
        %3552 = vmatpush2.bf16.msra.mxu0 0
        %3553 = vmatprep.subr.bf16.mxu0 0
        %3554 = vmatpush2.bf16.msra.mxu0 0
        %3555 = vmatprep.subr.bf16.mxu0 0
        %3556 = vmatpush2.bf16.msra.mxu0 0
        %3557 = vmatprep.subr.bf16.mxu0 0
        %3558 = vmatpush2.bf16.msra.mxu0 0
        %3559 = vmatprep.subr.bf16.mxu0 0
        %3560 = vmatpush2.bf16.msra.mxu0 0
        %3561 = vmatprep.subr.bf16.mxu0 0
        %3562 = vmatpush2.bf16.msra.mxu0 0
        %3563 = vmatprep.subr.bf16.mxu0 0
        %3564 = vmatpush2.bf16.msra.mxu0 0
        %3565 = vmatprep.mubr.bf16.mxu0 0
        %3566 = vmatmul.mubr.bf16.gmra.mxu0 %v3486
        %v3567 = vpop.f32.mrf.mxu0
        %v3568 = vadd.f32 0.0, %v3567
        %v3569 = vpop.f32.mrf.mxu0
        %v3570 = vpop.f32.mrf.mxu0
        %v3571 = vadd.f32 0.0, %v3570
        %v3572 = vpop.f32.mrf.mxu0
        %3573 = vmatprep.mubr.bf16.mxu0 0
        %3574 = vmatmul.mubr.bf16.gmra.mxu0 %v3489
        %v3575 = vpop.f32.mrf.mxu0
        %v3576 = vadd.f32 0.0, %v3575
        %v3577 = vpop.f32.mrf.mxu0
        %v3578 = vpop.f32.mrf.mxu0
        %v3579 = vadd.f32 0.0, %v3578
        %v3580 = vpop.f32.mrf.mxu0
        %3581 = vmatprep.mubr.bf16.mxu0 0
        %3582 = vmatmul.mubr.bf16.gmra.mxu0 %v3492
        %v3583 = vpop.f32.mrf.mxu0
        %v3584 = vadd.f32 0.0, %v3583
        %v3585 = vpop.f32.mrf.mxu0
        %v3586 = vpop.f32.mrf.mxu0
        %v3587 = vadd.f32 0.0, %v3586
        %v3588 = vpop.f32.mrf.mxu0
        %3589 = vmatprep.mubr.bf16.mxu0 0
        %3590 = vmatmul.mubr.bf16.gmra.mxu0 %v3495
        %v3591 = vpop.f32.mrf.mxu0
        %v3592 = vadd.f32 0.0, %v3591
        %v3593 = vpop.f32.mrf.mxu0
        %v3594 = vpop.f32.mrf.mxu0
        %v3595 = vadd.f32 0.0, %v3594
        %v3596 = vpop.f32.mrf.mxu0
        %3597 = vmatprep.mubr.bf16.mxu0 0
        %3598 = vmatmul.mubr.bf16.gmra.mxu0 %v3498
        %v3599 = vpop.f32.mrf.mxu0
        %v3600 = vadd.f32 0.0, %v3599
        %v3601 = vpop.f32.mrf.mxu0
        %v3602 = vpop.f32.mrf.mxu0
        %v3603 = vadd.f32 0.0, %v3602
        %v3604 = vpop.f32.mrf.mxu0
        %3605 = vmatprep.mubr.bf16.mxu0 0
        %3606 = vmatmul.mubr.bf16.gmra.mxu0 %v3501
        %v3607 = vpop.f32.mrf.mxu0
        %v3608 = vadd.f32 0.0, %v3607
        %v3609 = vpop.f32.mrf.mxu0
        %v3610 = vpop.f32.mrf.mxu0
        %v3611 = vadd.f32 0.0, %v3610
        %v3612 = vpop.f32.mrf.mxu0
        %3613 = vmatprep.mubr.bf16.mxu0 0
        %3614 = vmatmul.mubr.bf16.gmra.mxu0 %v3504
        %v3615 = vpop.f32.mrf.mxu0
        %v3616 = vadd.f32 0.0, %v3615
        %v3617 = vpop.f32.mrf.mxu0
        %v3618 = vpop.f32.mrf.mxu0
        %v3619 = vadd.f32 0.0, %v3618
        %v3620 = vpop.f32.mrf.mxu0
        %3621 = vmatprep.mubr.bf16.mxu0 0
        %3622 = vmatmul.mubr.bf16.gmra.mxu0 %v3507
        %v3623 = vpop.f32.mrf.mxu0
        %v3624 = vadd.f32 0.0, %v3623
        %v3625 = vpop.f32.mrf.mxu0
        %v3626 = vpop.f32.mrf.mxu0
        %v3627 = vadd.f32 0.0, %v3626
        %v3628 = vpop.f32.mrf.mxu0
        %3629 = vmatprep.mubr.bf16.mxu0 0
        %3630 = vmatmul.mubr.bf16.gmra.mxu0 %v3510
        %v3631 = vpop.f32.mrf.mxu0
        %v3632 = vadd.f32 0.0, %v3631
        %v3633 = vpop.f32.mrf.mxu0
        %v3634 = vpop.f32.mrf.mxu0
        %v3635 = vadd.f32 0.0, %v3634
        %v3636 = vpop.f32.mrf.mxu0
        %3637 = vmatprep.mubr.bf16.mxu0 0
        %3638 = vmatmul.mubr.bf16.gmra.mxu0 %v3513
        %v3639 = vpop.f32.mrf.mxu0
        %v3640 = vadd.f32 0.0, %v3639
        %v3641 = vpop.f32.mrf.mxu0
        %v3642 = vpop.f32.mrf.mxu0
        %v3643 = vadd.f32 0.0, %v3642
        %v3644 = vpop.f32.mrf.mxu0
        %3645 = vmatprep.mubr.bf16.mxu0 0
        %3646 = vmatmul.mubr.bf16.gmra.mxu0 %v3516
        %v3647 = vpop.f32.mrf.mxu0
        %v3648 = vadd.f32 0.0, %v3647
        %v3649 = vpop.f32.mrf.mxu0
        %v3650 = vpop.f32.mrf.mxu0
        %v3651 = vadd.f32 0.0, %v3650
        %v3652 = vpop.f32.mrf.mxu0
        %3653 = vmatprep.mubr.bf16.mxu0 0
        %3654 = vmatmul.mubr.bf16.gmra.mxu0 %v3519
        %v3655 = vpop.f32.mrf.mxu0
        %v3656 = vadd.f32 0.0, %v3655
        %v3657 = vpop.f32.mrf.mxu0
        %v3658 = vpop.f32.mrf.mxu0
        %v3659 = vadd.f32 0.0, %v3658
        %v3660 = vpop.f32.mrf.mxu0
        %3661 = vmatprep.mubr.bf16.mxu0 0
        %3662 = vmatmul.mubr.bf16.gmra.mxu0 %v3522
        %v3663 = vpop.f32.mrf.mxu0
        %v3664 = vadd.f32 0.0, %v3663
        %v3665 = vpop.f32.mrf.mxu0
        %v3666 = vpop.f32.mrf.mxu0
        %v3667 = vadd.f32 0.0, %v3666
        %v3668 = vpop.f32.mrf.mxu0
        %3669 = vmatprep.mubr.bf16.mxu0 0
        %3670 = vmatmul.mubr.bf16.gmra.mxu0 %v3525
        %v3671 = vpop.f32.mrf.mxu0
        %v3672 = vadd.f32 0.0, %v3671
        %v3673 = vpop.f32.mrf.mxu0
        %v3674 = vpop.f32.mrf.mxu0
        %v3675 = vadd.f32 0.0, %v3674
        %v3676 = vpop.f32.mrf.mxu0
        %3677 = vmatprep.mubr.bf16.mxu0 0
        %3678 = vmatmul.mubr.bf16.gmra.mxu0 %v3528
        %v3679 = vpop.f32.mrf.mxu0
        %v3680 = vadd.f32 0.0, %v3679
        %v3681 = vpop.f32.mrf.mxu0
        %v3682 = vpop.f32.mrf.mxu0
        %v3683 = vadd.f32 0.0, %v3682
        %v3684 = vpop.f32.mrf.mxu0
        %3685 = vmatprep.mubr.bf16.mxu0 0
        %3686 = vmatmul.mubr.bf16.gmra.mxu0 %v3531
        %v3687 = vpop.f32.mrf.mxu0
        %v3688 = vadd.f32 0.0, %v3687
        %v3689 = vpop.f32.mrf.mxu0
        %v3690 = vpop.f32.mrf.mxu0
        %v3691 = vadd.f32 0.0, %v3690
        %v3692 = vpop.f32.mrf.mxu0
        %3693 = vdwg.mxu0
        %v3694 = vadd.f32 %v3332, %v3568
        %v3695 = vadd.f32 %v3333, %v3571
        %v3696 = vadd.f32 %v3334, %v3576
        %v3697 = vadd.f32 %v3335, %v3579
        %v3698 = vadd.f32 %v3336, %v3584
        %v3699 = vadd.f32 %v3337, %v3587
        %v3700 = vadd.f32 %v3338, %v3592
        %v3701 = vadd.f32 %v3339, %v3595
        %v3702 = vadd.f32 %v3340, %v3600
        %v3703 = vadd.f32 %v3341, %v3603
        %v3704 = vadd.f32 %v3342, %v3608
        %v3705 = vadd.f32 %v3343, %v3611
        %v3706 = vadd.f32 %v3344, %v3616
        %v3707 = vadd.f32 %v3345, %v3619
        %v3708 = vadd.f32 %v3346, %v3624
        %v3709 = vadd.f32 %v3347, %v3627
        %v3710 = vadd.f32 %v3348, %v3632
        %v3711 = vadd.f32 %v3349, %v3635
        %v3712 = vadd.f32 %v3350, %v3640
        %v3713 = vadd.f32 %v3351, %v3643
        %v3714 = vadd.f32 %v3352, %v3648
        %v3715 = vadd.f32 %v3353, %v3651
        %v3716 = vadd.f32 %v3354, %v3656
        %v3717 = vadd.f32 %v3355, %v3659
        %v3718 = vadd.f32 %v3356, %v3664
        %v3719 = vadd.f32 %v3357, %v3667
        %v3720 = vadd.f32 %v3358, %v3672
        %v3721 = vadd.f32 %v3359, %v3675
        %v3722 = vadd.f32 %v3360, %v3680
        %v3723 = vadd.f32 %v3361, %v3683
        %v3724 = vadd.f32 %v3362, %v3688
        %v3725 = vadd.f32 %v3363, %v3691
        %v3726 = vld [vmem:[%s1785] sm:$0xf]
        %v3727 = vld [vmem:[%s1785 + $0x4] sm:$0xf]
        %v3728 = vld [vmem:[%s1785 + $0x8] sm:$0x1]
        %v3729 = vld [vmem:[%s1785 + $0xc] sm:$0xf]
        %v3730 = vld [vmem:[%s1785 + $0x10] sm:$0xf]
        %v3731 = vld [vmem:[%s1785 + $0x14] sm:$0x1]
        %v3732 = vld [vmem:[%s1785 + $0x18] sm:$0xf]
        %v3733 = vld [vmem:[%s1785 + $0x1c] sm:$0xf]
        %v3734 = vld [vmem:[%s1785 + $0x20] sm:$0x1]
        %v3735 = vld [vmem:[%s1785 + $0x24] sm:$0xf]
        %v3736 = vld [vmem:[%s1785 + $0x28] sm:$0xf]
        %v3737 = vld [vmem:[%s1785 + $0x2c] sm:$0x1]
        %v3738 = vld [vmem:[%s1785 + $0x30] sm:$0xf]
        %v3739 = vld [vmem:[%s1785 + $0x34] sm:$0xf]
        %v3740 = vld [vmem:[%s1785 + $0x38] sm:$0x1]
        %v3741 = vld [vmem:[%s1785 + $0x3c] sm:$0xf]
        %v3742 = vld [vmem:[%s1785 + $0x40] sm:$0xf]
        %v3743 = vld [vmem:[%s1785 + $0x44] sm:$0x1]
        %v3744 = vld [vmem:[%s1785 + $0x48] sm:$0xf]
        %v3745 = vld [vmem:[%s1785 + $0x4c] sm:$0xf]
        %v3746 = vld [vmem:[%s1785 + $0x50] sm:$0x1]
        %v3747 = vld [vmem:[%s1785 + $0x54] sm:$0xf]
        %v3748 = vld [vmem:[%s1785 + $0x58] sm:$0xf]
        %v3749 = vld [vmem:[%s1785 + $0x5c] sm:$0x1]
        %v3750 = vld [vmem:[%s1785 + $0x60] sm:$0xf]
        %v3751 = vld [vmem:[%s1785 + $0x64] sm:$0xf]
        %v3752 = vld [vmem:[%s1785 + $0x68] sm:$0x1]
        %v3753 = vld [vmem:[%s1785 + $0x6c] sm:$0xf]
        %v3754 = vld [vmem:[%s1785 + $0x70] sm:$0xf]
        %v3755 = vld [vmem:[%s1785 + $0x74] sm:$0x1]
        %v3756 = vld [vmem:[%s1785 + $0x78] sm:$0xf]
        %v3757 = vld [vmem:[%s1785 + $0x7c] sm:$0xf]
        %v3758 = vld [vmem:[%s1785 + $0x80] sm:$0x1]
        %v3759 = vld [vmem:[%s1785 + $0x84] sm:$0xf]
        %v3760 = vld [vmem:[%s1785 + $0x88] sm:$0xf]
        %v3761 = vld [vmem:[%s1785 + $0x8c] sm:$0x1]
        %v3762 = vld [vmem:[%s1785 + $0x90] sm:$0xf]
        %v3763 = vld [vmem:[%s1785 + $0x94] sm:$0xf]
        %v3764 = vld [vmem:[%s1785 + $0x98] sm:$0x1]
        %v3765 = vld [vmem:[%s1785 + $0x9c] sm:$0xf]
        %v3766 = vld [vmem:[%s1785 + $0xa0] sm:$0xf]
        %v3767 = vld [vmem:[%s1785 + $0xa4] sm:$0x1]
        %v3768 = vld [vmem:[%s1785 + $0xa8] sm:$0xf]
        %v3769 = vld [vmem:[%s1785 + $0xac] sm:$0xf]
        %v3770 = vld [vmem:[%s1785 + $0xb0] sm:$0x1]
        %v3771 = vld [vmem:[%s1785 + $0xb4] sm:$0xf]
        %v3772 = vld [vmem:[%s1785 + $0xb8] sm:$0xf]
        %v3773 = vld [vmem:[%s1785 + $0xbc] sm:$0x1]
        %v3775 = vshrl.u32 %v3726, 16
        %v3777 = vrot.slane %v3775, 4
        %v3778 = vshll.u32 %v3726, 16
        %v3780 = vrot.slane %v3778, 5
        %v3781 = vor.u32 %v3777, %v3780
        %v3782 = vrot.slane %v3781, 4
        %v3784 = vshll.u32 %v3727, 16
        %v3786 = vrot.slane %v3784, 5
        %v3787 = vsel %vm1956, %v3782, %v3786
        %v3788 = vshrl.u32 %v3727, 16
        %v3790 = vrot.slane %v3788, 4
        %v3791 = vor.u32 %v3790, %v3786
        %v3792 = vrot.slane %v3791, 4
        %v3794 = vshll.u32 %v3728, 16
        %v3796 = vrot.slane %v3794, 5
        %v3797 = vsel %vm1956, %v3792, %v3796
        %v3799 = vshrl.u32 %v3729, 16
        %v3801 = vrot.slane %v3799, 4
        %v3802 = vshll.u32 %v3729, 16
        %v3804 = vrot.slane %v3802, 5
        %v3805 = vor.u32 %v3801, %v3804
        %v3806 = vrot.slane %v3805, 4
        %v3808 = vshll.u32 %v3730, 16
        %v3810 = vrot.slane %v3808, 5
        %v3811 = vsel %vm1956, %v3806, %v3810
        %v3812 = vshrl.u32 %v3730, 16
        %v3814 = vrot.slane %v3812, 4
        %v3815 = vor.u32 %v3814, %v3810
        %v3816 = vrot.slane %v3815, 4
        %v3818 = vshll.u32 %v3731, 16
        %v3820 = vrot.slane %v3818, 5
        %v3821 = vsel %vm1956, %v3816, %v3820
        %v3823 = vshrl.u32 %v3732, 16
        %v3825 = vrot.slane %v3823, 4
        %v3826 = vshll.u32 %v3732, 16
        %v3828 = vrot.slane %v3826, 5
        %v3829 = vor.u32 %v3825, %v3828
        %v3830 = vrot.slane %v3829, 4
        %v3832 = vshll.u32 %v3733, 16
        %v3834 = vrot.slane %v3832, 5
        %v3835 = vsel %vm1956, %v3830, %v3834
        %v3836 = vshrl.u32 %v3733, 16
        %v3838 = vrot.slane %v3836, 4
        %v3839 = vor.u32 %v3838, %v3834
        %v3840 = vrot.slane %v3839, 4
        %v3842 = vshll.u32 %v3734, 16
        %v3844 = vrot.slane %v3842, 5
        %v3845 = vsel %vm1956, %v3840, %v3844
        %v3847 = vshrl.u32 %v3735, 16
        %v3849 = vrot.slane %v3847, 4
        %v3850 = vshll.u32 %v3735, 16
        %v3852 = vrot.slane %v3850, 5
        %v3853 = vor.u32 %v3849, %v3852
        %v3854 = vrot.slane %v3853, 4
        %v3856 = vshll.u32 %v3736, 16
        %v3858 = vrot.slane %v3856, 5
        %v3859 = vsel %vm1956, %v3854, %v3858
        %v3860 = vshrl.u32 %v3736, 16
        %v3862 = vrot.slane %v3860, 4
        %v3863 = vor.u32 %v3862, %v3858
        %v3864 = vrot.slane %v3863, 4
        %v3866 = vshll.u32 %v3737, 16
        %v3868 = vrot.slane %v3866, 5
        %v3869 = vsel %vm1956, %v3864, %v3868
        %v3871 = vshrl.u32 %v3738, 16
        %v3873 = vrot.slane %v3871, 4
        %v3874 = vshll.u32 %v3738, 16
        %v3876 = vrot.slane %v3874, 5
        %v3877 = vor.u32 %v3873, %v3876
        %v3878 = vrot.slane %v3877, 4
        %v3880 = vshll.u32 %v3739, 16
        %v3882 = vrot.slane %v3880, 5
        %v3883 = vsel %vm1956, %v3878, %v3882
        %v3884 = vshrl.u32 %v3739, 16
        %v3886 = vrot.slane %v3884, 4
        %v3887 = vor.u32 %v3886, %v3882
        %v3888 = vrot.slane %v3887, 4
        %v3890 = vshll.u32 %v3740, 16
        %v3892 = vrot.slane %v3890, 5
        %v3893 = vsel %vm1956, %v3888, %v3892
        %v3895 = vshrl.u32 %v3741, 16
        %v3897 = vrot.slane %v3895, 4
        %v3898 = vshll.u32 %v3741, 16
        %v3900 = vrot.slane %v3898, 5
        %v3901 = vor.u32 %v3897, %v3900
        %v3902 = vrot.slane %v3901, 4
        %v3904 = vshll.u32 %v3742, 16
        %v3906 = vrot.slane %v3904, 5
        %v3907 = vsel %vm1956, %v3902, %v3906
        %v3908 = vshrl.u32 %v3742, 16
        %v3910 = vrot.slane %v3908, 4
        %v3911 = vor.u32 %v3910, %v3906
        %v3912 = vrot.slane %v3911, 4
        %v3914 = vshll.u32 %v3743, 16
        %v3916 = vrot.slane %v3914, 5
        %v3917 = vsel %vm1956, %v3912, %v3916
        %v3919 = vshrl.u32 %v3744, 16
        %v3921 = vrot.slane %v3919, 4
        %v3922 = vshll.u32 %v3744, 16
        %v3924 = vrot.slane %v3922, 5
        %v3925 = vor.u32 %v3921, %v3924
        %v3926 = vrot.slane %v3925, 4
        %v3928 = vshll.u32 %v3745, 16
        %v3930 = vrot.slane %v3928, 5
        %v3931 = vsel %vm1956, %v3926, %v3930
        %v3932 = vshrl.u32 %v3745, 16
        %v3934 = vrot.slane %v3932, 4
        %v3935 = vor.u32 %v3934, %v3930
        %v3936 = vrot.slane %v3935, 4
        %v3938 = vshll.u32 %v3746, 16
        %v3940 = vrot.slane %v3938, 5
        %v3941 = vsel %vm1956, %v3936, %v3940
        %v3943 = vshrl.u32 %v3747, 16
        %v3945 = vrot.slane %v3943, 4
        %v3946 = vshll.u32 %v3747, 16
        %v3948 = vrot.slane %v3946, 5
        %v3949 = vor.u32 %v3945, %v3948
        %v3950 = vrot.slane %v3949, 4
        %v3952 = vshll.u32 %v3748, 16
        %v3954 = vrot.slane %v3952, 5
        %v3955 = vsel %vm1956, %v3950, %v3954
        %v3956 = vshrl.u32 %v3748, 16
        %v3958 = vrot.slane %v3956, 4
        %v3959 = vor.u32 %v3958, %v3954
        %v3960 = vrot.slane %v3959, 4
        %v3962 = vshll.u32 %v3749, 16
        %v3964 = vrot.slane %v3962, 5
        %v3965 = vsel %vm1956, %v3960, %v3964
        %v3967 = vshrl.u32 %v3750, 16
        %v3969 = vrot.slane %v3967, 4
        %v3970 = vshll.u32 %v3750, 16
        %v3972 = vrot.slane %v3970, 5
        %v3973 = vor.u32 %v3969, %v3972
        %v3974 = vrot.slane %v3973, 4
        %v3976 = vshll.u32 %v3751, 16
        %v3978 = vrot.slane %v3976, 5
        %v3979 = vsel %vm1956, %v3974, %v3978
        %v3980 = vshrl.u32 %v3751, 16
        %v3982 = vrot.slane %v3980, 4
        %v3983 = vor.u32 %v3982, %v3978
        %v3984 = vrot.slane %v3983, 4
        %v3986 = vshll.u32 %v3752, 16
        %v3988 = vrot.slane %v3986, 5
        %v3989 = vsel %vm1956, %v3984, %v3988
        %v3991 = vshrl.u32 %v3753, 16
        %v3993 = vrot.slane %v3991, 4
        %v3994 = vshll.u32 %v3753, 16
        %v3996 = vrot.slane %v3994, 5
        %v3997 = vor.u32 %v3993, %v3996
        %v3998 = vrot.slane %v3997, 4
        %v4000 = vshll.u32 %v3754, 16
        %v4002 = vrot.slane %v4000, 5
        %v4003 = vsel %vm1956, %v3998, %v4002
        %v4004 = vshrl.u32 %v3754, 16
        %v4006 = vrot.slane %v4004, 4
        %v4007 = vor.u32 %v4006, %v4002
        %v4008 = vrot.slane %v4007, 4
        %v4010 = vshll.u32 %v3755, 16
        %v4012 = vrot.slane %v4010, 5
        %v4013 = vsel %vm1956, %v4008, %v4012
        %v4015 = vshrl.u32 %v3756, 16
        %v4017 = vrot.slane %v4015, 4
        %v4018 = vshll.u32 %v3756, 16
        %v4020 = vrot.slane %v4018, 5
        %v4021 = vor.u32 %v4017, %v4020
        %v4022 = vrot.slane %v4021, 4
        %v4024 = vshll.u32 %v3757, 16
        %v4026 = vrot.slane %v4024, 5
        %v4027 = vsel %vm1956, %v4022, %v4026
        %v4028 = vshrl.u32 %v3757, 16
        %v4030 = vrot.slane %v4028, 4
        %v4031 = vor.u32 %v4030, %v4026
        %v4032 = vrot.slane %v4031, 4
        %v4034 = vshll.u32 %v3758, 16
        %v4036 = vrot.slane %v4034, 5
        %v4037 = vsel %vm1956, %v4032, %v4036
        %v4039 = vshrl.u32 %v3759, 16
        %v4041 = vrot.slane %v4039, 4
        %v4042 = vshll.u32 %v3759, 16
        %v4044 = vrot.slane %v4042, 5
        %v4045 = vor.u32 %v4041, %v4044
        %v4046 = vrot.slane %v4045, 4
        %v4048 = vshll.u32 %v3760, 16
        %v4050 = vrot.slane %v4048, 5
        %v4051 = vsel %vm1956, %v4046, %v4050
        %v4052 = vshrl.u32 %v3760, 16
        %v4054 = vrot.slane %v4052, 4
        %v4055 = vor.u32 %v4054, %v4050
        %v4056 = vrot.slane %v4055, 4
        %v4058 = vshll.u32 %v3761, 16
        %v4060 = vrot.slane %v4058, 5
        %v4061 = vsel %vm1956, %v4056, %v4060
        %v4063 = vshrl.u32 %v3762, 16
        %v4065 = vrot.slane %v4063, 4
        %v4066 = vshll.u32 %v3762, 16
        %v4068 = vrot.slane %v4066, 5
        %v4069 = vor.u32 %v4065, %v4068
        %v4070 = vrot.slane %v4069, 4
        %v4072 = vshll.u32 %v3763, 16
        %v4074 = vrot.slane %v4072, 5
        %v4075 = vsel %vm1956, %v4070, %v4074
        %v4076 = vshrl.u32 %v3763, 16
        %v4078 = vrot.slane %v4076, 4
        %v4079 = vor.u32 %v4078, %v4074
        %v4080 = vrot.slane %v4079, 4
        %v4082 = vshll.u32 %v3764, 16
        %v4084 = vrot.slane %v4082, 5
        %v4085 = vsel %vm1956, %v4080, %v4084
        %v4087 = vshrl.u32 %v3765, 16
        %v4089 = vrot.slane %v4087, 4
        %v4090 = vshll.u32 %v3765, 16
        %v4092 = vrot.slane %v4090, 5
        %v4093 = vor.u32 %v4089, %v4092
        %v4094 = vrot.slane %v4093, 4
        %v4096 = vshll.u32 %v3766, 16
        %v4098 = vrot.slane %v4096, 5
        %v4099 = vsel %vm1956, %v4094, %v4098
        %v4100 = vshrl.u32 %v3766, 16
        %v4102 = vrot.slane %v4100, 4
        %v4103 = vor.u32 %v4102, %v4098
        %v4104 = vrot.slane %v4103, 4
        %v4106 = vshll.u32 %v3767, 16
        %v4108 = vrot.slane %v4106, 5
        %v4109 = vsel %vm1956, %v4104, %v4108
        %v4111 = vshrl.u32 %v3768, 16
        %v4113 = vrot.slane %v4111, 4
        %v4114 = vshll.u32 %v3768, 16
        %v4116 = vrot.slane %v4114, 5
        %v4117 = vor.u32 %v4113, %v4116
        %v4118 = vrot.slane %v4117, 4
        %v4120 = vshll.u32 %v3769, 16
        %v4122 = vrot.slane %v4120, 5
        %v4123 = vsel %vm1956, %v4118, %v4122
        %v4124 = vshrl.u32 %v3769, 16
        %v4126 = vrot.slane %v4124, 4
        %v4127 = vor.u32 %v4126, %v4122
        %v4128 = vrot.slane %v4127, 4
        %v4130 = vshll.u32 %v3770, 16
        %v4132 = vrot.slane %v4130, 5
        %v4133 = vsel %vm1956, %v4128, %v4132
        %v4135 = vshrl.u32 %v3771, 16
        %v4137 = vrot.slane %v4135, 4
        %v4138 = vshll.u32 %v3771, 16
        %v4140 = vrot.slane %v4138, 5
        %v4141 = vor.u32 %v4137, %v4140
        %v4142 = vrot.slane %v4141, 4
        %v4144 = vshll.u32 %v3772, 16
        %v4146 = vrot.slane %v4144, 5
        %v4147 = vsel %vm1956, %v4142, %v4146
        %v4148 = vshrl.u32 %v3772, 16
        %v4150 = vrot.slane %v4148, 4
        %v4151 = vor.u32 %v4150, %v4146
        %v4152 = vrot.slane %v4151, 4
        %v4154 = vshll.u32 %v3773, 16
        %v4156 = vrot.slane %v4154, 5
        %v4157 = vsel %vm1956, %v4152, %v4156
        %s4158 = scalar_lea.vmem %s604, 32 [#allocation7]
        %v4159 = vld [vmem:[%s4158] sm:$0xf]
        %v4160 = vld [vmem:[%s4158 + $0x4] sm:$0xf]
        %v4161 = vunpack.c.l.b16 %v3787
        %v4162 = vunpack.c.l.b16 %v3797
        %v4163 = vunpack.c.l.b16 %v3811
        %v4164 = vunpack.c.l.b16 %v3821
        %v4165 = vunpack.c.l.b16 %v3835
        %v4166 = vunpack.c.l.b16 %v3845
        %v4167 = vunpack.c.l.b16 %v3859
        %v4168 = vunpack.c.l.b16 %v3869
        %v4169 = vunpack.c.l.b16 %v3883
        %v4170 = vunpack.c.l.b16 %v3893
        %v4171 = vunpack.c.l.b16 %v3907
        %v4172 = vunpack.c.l.b16 %v3917
        %v4173 = vunpack.c.l.b16 %v3931
        %v4174 = vunpack.c.l.b16 %v3941
        %v4175 = vunpack.c.l.b16 %v3955
        %v4176 = vunpack.c.l.b16 %v3965
        %v4177 = vunpack.c.l.b16 %v3979
        %v4178 = vunpack.c.l.b16 %v3989
        %v4179 = vunpack.c.l.b16 %v4003
        %v4180 = vunpack.c.l.b16 %v4013
        %v4181 = vunpack.c.l.b16 %v4027
        %v4182 = vunpack.c.l.b16 %v4037
        %v4183 = vunpack.c.l.b16 %v4051
        %v4184 = vunpack.c.l.b16 %v4061
        %v4185 = vunpack.c.l.b16 %v4075
        %v4186 = vunpack.c.l.b16 %v4085
        %v4187 = vunpack.c.l.b16 %v4099
        %v4188 = vunpack.c.l.b16 %v4109
        %v4189 = vunpack.c.l.b16 %v4123
        %v4190 = vunpack.c.l.b16 %v4133
        %v4191 = vunpack.c.l.b16 %v4147
        %v4192 = vunpack.c.l.b16 %v4157
        %v4193 = vpack.c.b16 %v4162, %v4161
        %v4194 = vpack.c.b16 %v4164, %v4163
        %v4195 = vpack.c.b16 %v4166, %v4165
        %v4196 = vpack.c.b16 %v4168, %v4167
        %v4197 = vpack.c.b16 %v4170, %v4169
        %v4198 = vpack.c.b16 %v4172, %v4171
        %v4199 = vpack.c.b16 %v4174, %v4173
        %v4200 = vpack.c.b16 %v4176, %v4175
        %v4201 = vpack.c.b16 %v4178, %v4177
        %v4202 = vpack.c.b16 %v4180, %v4179
        %v4203 = vpack.c.b16 %v4182, %v4181
        %v4204 = vpack.c.b16 %v4184, %v4183
        %v4205 = vpack.c.b16 %v4186, %v4185
        %v4206 = vpack.c.b16 %v4188, %v4187
        %v4207 = vpack.c.b16 %v4190, %v4189
        %v4208 = vpack.c.b16 %v4192, %v4191
        %v4211 = vunpack.c.l.b16 %v4159
        %v4212 = vunpack.c.l.b16 %v4160
        %v4213 = vpack.c.b16 %v4212, %v4211
        %v4216 = vsel %vm2398, %v4193, 0
        %v4219 = vsel %vm2398, %v4194, 0
        %v4222 = vsel %vm2398, %v4195, 0
        %v4225 = vsel %vm2398, %v4196, 0
        %v4228 = vsel %vm2398, %v4197, 0
        %v4231 = vsel %vm2398, %v4198, 0
        %v4234 = vsel %vm2398, %v4199, 0
        %v4237 = vsel %vm2398, %v4200, 0
        %v4240 = vsel %vm2398, %v4201, 0
        %v4243 = vsel %vm2398, %v4202, 0
        %v4246 = vsel %vm2398, %v4203, 0
        %v4249 = vsel %vm2398, %v4204, 0
        %v4252 = vsel %vm2398, %v4205, 0
        %v4255 = vsel %vm2398, %v4206, 0
        %v4258 = vsel %vm2398, %v4207, 0
        %v4261 = vsel %vm2398, %v4208, 0
        %4263 = vmatprep.subr.bf16.mxu0 0
        %4264 = vmatpush1.bf16.msra.mxu0 0
        %4265 = vmatprep.subr.bf16.mxu0 0
        %4266 = vmatpush1.bf16.msra.mxu0 0
        %4267 = vmatprep.subr.bf16.mxu0 0
        %4268 = vmatpush1.bf16.msra.mxu0 0
        %4269 = vmatprep.subr.bf16.mxu0 0
        %4270 = vmatpush1.bf16.msra.mxu0 0
        %4271 = vmatprep.subr.bf16.mxu0 0
        %4272 = vmatpush1.bf16.msra.mxu0 0
        %4273 = vmatprep.subr.bf16.mxu0 0
        %4274 = vmatpush1.bf16.msra.mxu0 0
        %4275 = vmatprep.subr.bf16.mxu0 0
        %4276 = vmatpush1.bf16.msra.mxu0 0
        %4277 = vmatprep.subr.bf16.mxu0 0
        %4278 = vmatpush1.bf16.msra.mxu0 %v4213
        %4279 = vmatprep.subr.bf16.mxu0 0
        %4280 = vmatpush2.bf16.msra.mxu0 0
        %4281 = vmatprep.subr.bf16.mxu0 0
        %4282 = vmatpush2.bf16.msra.mxu0 0
        %4283 = vmatprep.subr.bf16.mxu0 0
        %4284 = vmatpush2.bf16.msra.mxu0 0
        %4285 = vmatprep.subr.bf16.mxu0 0
        %4286 = vmatpush2.bf16.msra.mxu0 0
        %4287 = vmatprep.subr.bf16.mxu0 0
        %4288 = vmatpush2.bf16.msra.mxu0 0
        %4289 = vmatprep.subr.bf16.mxu0 0
        %4290 = vmatpush2.bf16.msra.mxu0 0
        %4291 = vmatprep.subr.bf16.mxu0 0
        %4292 = vmatpush2.bf16.msra.mxu0 0
        %4293 = vmatprep.subr.bf16.mxu0 0
        %4294 = vmatpush2.bf16.msra.mxu0 0
        %4295 = vmatprep.mubr.bf16.mxu0 0
        %4296 = vmatmul.mubr.bf16.gmra.mxu0 %v4216
        %v4297 = vpop.f32.mrf.mxu0
        %v4298 = vadd.f32 0.0, %v4297
        %v4299 = vpop.f32.mrf.mxu0
        %v4300 = vpop.f32.mrf.mxu0
        %v4301 = vadd.f32 0.0, %v4300
        %v4302 = vpop.f32.mrf.mxu0
        %4303 = vmatprep.mubr.bf16.mxu0 0
        %4304 = vmatmul.mubr.bf16.gmra.mxu0 %v4219
        %v4305 = vpop.f32.mrf.mxu0
        %v4306 = vadd.f32 0.0, %v4305
        %v4307 = vpop.f32.mrf.mxu0
        %v4308 = vpop.f32.mrf.mxu0
        %v4309 = vadd.f32 0.0, %v4308
        %v4310 = vpop.f32.mrf.mxu0
        %4311 = vmatprep.mubr.bf16.mxu0 0
        %4312 = vmatmul.mubr.bf16.gmra.mxu0 %v4222
        %v4313 = vpop.f32.mrf.mxu0
        %v4314 = vadd.f32 0.0, %v4313
        %v4315 = vpop.f32.mrf.mxu0
        %v4316 = vpop.f32.mrf.mxu0
        %v4317 = vadd.f32 0.0, %v4316
        %v4318 = vpop.f32.mrf.mxu0
        %4319 = vmatprep.mubr.bf16.mxu0 0
        %4320 = vmatmul.mubr.bf16.gmra.mxu0 %v4225
        %v4321 = vpop.f32.mrf.mxu0
        %v4322 = vadd.f32 0.0, %v4321
        %v4323 = vpop.f32.mrf.mxu0
        %v4324 = vpop.f32.mrf.mxu0
        %v4325 = vadd.f32 0.0, %v4324
        %v4326 = vpop.f32.mrf.mxu0
        %4327 = vmatprep.mubr.bf16.mxu0 0
        %4328 = vmatmul.mubr.bf16.gmra.mxu0 %v4228
        %v4329 = vpop.f32.mrf.mxu0
        %v4330 = vadd.f32 0.0, %v4329
        %v4331 = vpop.f32.mrf.mxu0
        %v4332 = vpop.f32.mrf.mxu0
        %v4333 = vadd.f32 0.0, %v4332
        %v4334 = vpop.f32.mrf.mxu0
        %4335 = vmatprep.mubr.bf16.mxu0 0
        %4336 = vmatmul.mubr.bf16.gmra.mxu0 %v4231
        %v4337 = vpop.f32.mrf.mxu0
        %v4338 = vadd.f32 0.0, %v4337
        %v4339 = vpop.f32.mrf.mxu0
        %v4340 = vpop.f32.mrf.mxu0
        %v4341 = vadd.f32 0.0, %v4340
        %v4342 = vpop.f32.mrf.mxu0
        %4343 = vmatprep.mubr.bf16.mxu0 0
        %4344 = vmatmul.mubr.bf16.gmra.mxu0 %v4234
        %v4345 = vpop.f32.mrf.mxu0
        %v4346 = vadd.f32 0.0, %v4345
        %v4347 = vpop.f32.mrf.mxu0
        %v4348 = vpop.f32.mrf.mxu0
        %v4349 = vadd.f32 0.0, %v4348
        %v4350 = vpop.f32.mrf.mxu0
        %4351 = vmatprep.mubr.bf16.mxu0 0
        %4352 = vmatmul.mubr.bf16.gmra.mxu0 %v4237
        %v4353 = vpop.f32.mrf.mxu0
        %v4354 = vadd.f32 0.0, %v4353
        %v4355 = vpop.f32.mrf.mxu0
        %v4356 = vpop.f32.mrf.mxu0
        %v4357 = vadd.f32 0.0, %v4356
        %v4358 = vpop.f32.mrf.mxu0
        %4359 = vmatprep.mubr.bf16.mxu0 0
        %4360 = vmatmul.mubr.bf16.gmra.mxu0 %v4240
        %v4361 = vpop.f32.mrf.mxu0
        %v4362 = vadd.f32 0.0, %v4361
        %v4363 = vpop.f32.mrf.mxu0
        %v4364 = vpop.f32.mrf.mxu0
        %v4365 = vadd.f32 0.0, %v4364
        %v4366 = vpop.f32.mrf.mxu0
        %4367 = vmatprep.mubr.bf16.mxu0 0
        %4368 = vmatmul.mubr.bf16.gmra.mxu0 %v4243
        %v4369 = vpop.f32.mrf.mxu0
        %v4370 = vadd.f32 0.0, %v4369
        %v4371 = vpop.f32.mrf.mxu0
        %v4372 = vpop.f32.mrf.mxu0
        %v4373 = vadd.f32 0.0, %v4372
        %v4374 = vpop.f32.mrf.mxu0
        %4375 = vmatprep.mubr.bf16.mxu0 0
        %4376 = vmatmul.mubr.bf16.gmra.mxu0 %v4246
        %v4377 = vpop.f32.mrf.mxu0
        %v4378 = vadd.f32 0.0, %v4377
        %v4379 = vpop.f32.mrf.mxu0
        %v4380 = vpop.f32.mrf.mxu0
        %v4381 = vadd.f32 0.0, %v4380
        %v4382 = vpop.f32.mrf.mxu0
        %4383 = vmatprep.mubr.bf16.mxu0 0
        %4384 = vmatmul.mubr.bf16.gmra.mxu0 %v4249
        %v4385 = vpop.f32.mrf.mxu0
        %v4386 = vadd.f32 0.0, %v4385
        %v4387 = vpop.f32.mrf.mxu0
        %v4388 = vpop.f32.mrf.mxu0
        %v4389 = vadd.f32 0.0, %v4388
        %v4390 = vpop.f32.mrf.mxu0
        %4391 = vmatprep.mubr.bf16.mxu0 0
        %4392 = vmatmul.mubr.bf16.gmra.mxu0 %v4252
        %v4393 = vpop.f32.mrf.mxu0
        %v4394 = vadd.f32 0.0, %v4393
        %v4395 = vpop.f32.mrf.mxu0
        %v4396 = vpop.f32.mrf.mxu0
        %v4397 = vadd.f32 0.0, %v4396
        %v4398 = vpop.f32.mrf.mxu0
        %4399 = vmatprep.mubr.bf16.mxu0 0
        %4400 = vmatmul.mubr.bf16.gmra.mxu0 %v4255
        %v4401 = vpop.f32.mrf.mxu0
        %v4402 = vadd.f32 0.0, %v4401
        %v4403 = vpop.f32.mrf.mxu0
        %v4404 = vpop.f32.mrf.mxu0
        %v4405 = vadd.f32 0.0, %v4404
        %v4406 = vpop.f32.mrf.mxu0
        %4407 = vmatprep.mubr.bf16.mxu0 0
        %4408 = vmatmul.mubr.bf16.gmra.mxu0 %v4258
        %v4409 = vpop.f32.mrf.mxu0
        %v4410 = vadd.f32 0.0, %v4409
        %v4411 = vpop.f32.mrf.mxu0
        %v4412 = vpop.f32.mrf.mxu0
        %v4413 = vadd.f32 0.0, %v4412
        %v4414 = vpop.f32.mrf.mxu0
        %4415 = vmatprep.mubr.bf16.mxu0 0
        %4416 = vmatmul.mubr.bf16.gmra.mxu0 %v4261
        %v4417 = vpop.f32.mrf.mxu0
        %v4418 = vadd.f32 0.0, %v4417
        %v4419 = vpop.f32.mrf.mxu0
        %v4420 = vpop.f32.mrf.mxu0
        %v4421 = vadd.f32 0.0, %v4420
        %v4422 = vpop.f32.mrf.mxu0
        %4423 = vdwg.mxu0
        %v4424 = vadd.f32 %v3694, %v4298
        %v4425 = vadd.f32 %v3695, %v4301
        %v4426 = vadd.f32 %v3696, %v4306
        %v4427 = vadd.f32 %v3697, %v4309
        %v4428 = vadd.f32 %v3698, %v4314
        %v4429 = vadd.f32 %v3699, %v4317
        %v4430 = vadd.f32 %v3700, %v4322
        %v4431 = vadd.f32 %v3701, %v4325
        %v4432 = vadd.f32 %v3702, %v4330
        %v4433 = vadd.f32 %v3703, %v4333
        %v4434 = vadd.f32 %v3704, %v4338
        %v4435 = vadd.f32 %v3705, %v4341
        %v4436 = vadd.f32 %v3706, %v4346
        %v4437 = vadd.f32 %v3707, %v4349
        %v4438 = vadd.f32 %v3708, %v4354
        %v4439 = vadd.f32 %v3709, %v4357
        %v4440 = vadd.f32 %v3710, %v4362
        %v4441 = vadd.f32 %v3711, %v4365
        %v4442 = vadd.f32 %v3712, %v4370
        %v4443 = vadd.f32 %v3713, %v4373
        %v4444 = vadd.f32 %v3714, %v4378
        %v4445 = vadd.f32 %v3715, %v4381
        %v4446 = vadd.f32 %v3716, %v4386
        %v4447 = vadd.f32 %v3717, %v4389
        %v4448 = vadd.f32 %v3718, %v4394
        %v4449 = vadd.f32 %v3719, %v4397
        %v4450 = vadd.f32 %v3720, %v4402
        %v4451 = vadd.f32 %v3721, %v4405
        %v4452 = vadd.f32 %v3722, %v4410
        %v4453 = vadd.f32 %v3723, %v4413
        %v4454 = vadd.f32 %v3724, %v4418
        %v4455 = vadd.f32 %v3725, %v4421
        %v4456 = vld [vmem:[%s1785] sm:$0xe]
        %v4457 = vld [vmem:[%s1785 + $0xc] sm:$0xe]
        %v4458 = vld [vmem:[%s1785 + $0x18] sm:$0xe]
        %v4459 = vld [vmem:[%s1785 + $0x24] sm:$0xe]
        %v4460 = vld [vmem:[%s1785 + $0x30] sm:$0xe]
        %v4461 = vld [vmem:[%s1785 + $0x3c] sm:$0xe]
        %v4462 = vld [vmem:[%s1785 + $0x48] sm:$0xe]
        %v4463 = vld [vmem:[%s1785 + $0x54] sm:$0xe]
        %v4464 = vld [vmem:[%s1785 + $0x60] sm:$0xe]
        %v4465 = vld [vmem:[%s1785 + $0x6c] sm:$0xe]
        %v4466 = vld [vmem:[%s1785 + $0x78] sm:$0xe]
        %v4467 = vld [vmem:[%s1785 + $0x84] sm:$0xe]
        %v4468 = vld [vmem:[%s1785 + $0x90] sm:$0xe]
        %v4469 = vld [vmem:[%s1785 + $0x9c] sm:$0xe]
        %v4470 = vld [vmem:[%s1785 + $0xa8] sm:$0xe]
        %v4471 = vld [vmem:[%s1785 + $0xb4] sm:$0xe]
        %v4520 = vrot.slane %v4456, 5
        %v4521 = vrot.slane %v4520, 4
        %v4522 = vrot.slane %v3727, 5
        %v4523 = vsel %vm2953, %v4521, %v4522
        %v4524 = vrot.slane %v4522, 4
        %v4525 = vrot.slane %v3728, 5
        %v4526 = vsel %vm2953, %v4524, %v4525
        %v4527 = vrot.slane %v4457, 5
        %v4528 = vrot.slane %v4527, 4
        %v4529 = vrot.slane %v3730, 5
        %v4530 = vsel %vm2953, %v4528, %v4529
        %v4531 = vrot.slane %v4529, 4
        %v4532 = vrot.slane %v3731, 5
        %v4533 = vsel %vm2953, %v4531, %v4532
        %v4534 = vrot.slane %v4458, 5
        %v4535 = vrot.slane %v4534, 4
        %v4536 = vrot.slane %v3733, 5
        %v4537 = vsel %vm2953, %v4535, %v4536
        %v4538 = vrot.slane %v4536, 4
        %v4539 = vrot.slane %v3734, 5
        %v4540 = vsel %vm2953, %v4538, %v4539
        %v4541 = vrot.slane %v4459, 5
        %v4542 = vrot.slane %v4541, 4
        %v4543 = vrot.slane %v3736, 5
        %v4544 = vsel %vm2953, %v4542, %v4543
        %v4545 = vrot.slane %v4543, 4
        %v4546 = vrot.slane %v3737, 5
        %v4547 = vsel %vm2953, %v4545, %v4546
        %v4548 = vrot.slane %v4460, 5
        %v4549 = vrot.slane %v4548, 4
        %v4550 = vrot.slane %v3739, 5
        %v4551 = vsel %vm2953, %v4549, %v4550
        %v4552 = vrot.slane %v4550, 4
        %v4553 = vrot.slane %v3740, 5
        %v4554 = vsel %vm2953, %v4552, %v4553
        %v4555 = vrot.slane %v4461, 5
        %v4556 = vrot.slane %v4555, 4
        %v4557 = vrot.slane %v3742, 5
        %v4558 = vsel %vm2953, %v4556, %v4557
        %v4559 = vrot.slane %v4557, 4
        %v4560 = vrot.slane %v3743, 5
        %v4561 = vsel %vm2953, %v4559, %v4560
        %v4562 = vrot.slane %v4462, 5
        %v4563 = vrot.slane %v4562, 4
        %v4564 = vrot.slane %v3745, 5
        %v4565 = vsel %vm2953, %v4563, %v4564
        %v4566 = vrot.slane %v4564, 4
        %v4567 = vrot.slane %v3746, 5
        %v4568 = vsel %vm2953, %v4566, %v4567
        %v4569 = vrot.slane %v4463, 5
        %v4570 = vrot.slane %v4569, 4
        %v4571 = vrot.slane %v3748, 5
        %v4572 = vsel %vm2953, %v4570, %v4571
        %v4573 = vrot.slane %v4571, 4
        %v4574 = vrot.slane %v3749, 5
        %v4575 = vsel %vm2953, %v4573, %v4574
        %v4576 = vrot.slane %v4464, 5
        %v4577 = vrot.slane %v4576, 4
        %v4578 = vrot.slane %v3751, 5
        %v4579 = vsel %vm2953, %v4577, %v4578
        %v4580 = vrot.slane %v4578, 4
        %v4581 = vrot.slane %v3752, 5
        %v4582 = vsel %vm2953, %v4580, %v4581
        %v4583 = vrot.slane %v4465, 5
        %v4584 = vrot.slane %v4583, 4
        %v4585 = vrot.slane %v3754, 5
        %v4586 = vsel %vm2953, %v4584, %v4585
        %v4587 = vrot.slane %v4585, 4
        %v4588 = vrot.slane %v3755, 5
        %v4589 = vsel %vm2953, %v4587, %v4588
        %v4590 = vrot.slane %v4466, 5
        %v4591 = vrot.slane %v4590, 4
        %v4592 = vrot.slane %v3757, 5
        %v4593 = vsel %vm2953, %v4591, %v4592
        %v4594 = vrot.slane %v4592, 4
        %v4595 = vrot.slane %v3758, 5
        %v4596 = vsel %vm2953, %v4594, %v4595
        %v4597 = vrot.slane %v4467, 5
        %v4598 = vrot.slane %v4597, 4
        %v4599 = vrot.slane %v3760, 5
        %v4600 = vsel %vm2953, %v4598, %v4599
        %v4601 = vrot.slane %v4599, 4
        %v4602 = vrot.slane %v3761, 5
        %v4603 = vsel %vm2953, %v4601, %v4602
        %v4604 = vrot.slane %v4468, 5
        %v4605 = vrot.slane %v4604, 4
        %v4606 = vrot.slane %v3763, 5
        %v4607 = vsel %vm2953, %v4605, %v4606
        %v4608 = vrot.slane %v4606, 4
        %v4609 = vrot.slane %v3764, 5
        %v4610 = vsel %vm2953, %v4608, %v4609
        %v4611 = vrot.slane %v4469, 5
        %v4612 = vrot.slane %v4611, 4
        %v4613 = vrot.slane %v3766, 5
        %v4614 = vsel %vm2953, %v4612, %v4613
        %v4615 = vrot.slane %v4613, 4
        %v4616 = vrot.slane %v3767, 5
        %v4617 = vsel %vm2953, %v4615, %v4616
        %v4618 = vrot.slane %v4470, 5
        %v4619 = vrot.slane %v4618, 4
        %v4620 = vrot.slane %v3769, 5
        %v4621 = vsel %vm2953, %v4619, %v4620
        %v4622 = vrot.slane %v4620, 4
        %v4623 = vrot.slane %v3770, 5
        %v4624 = vsel %vm2953, %v4622, %v4623
        %v4625 = vrot.slane %v4471, 5
        %v4626 = vrot.slane %v4625, 4
        %v4627 = vrot.slane %v3772, 5
        %v4628 = vsel %vm2953, %v4626, %v4627
        %v4629 = vrot.slane %v4627, 4
        %v4630 = vrot.slane %v3773, 5
        %v4631 = vsel %vm2953, %v4629, %v4630
        %s4632 = scalar_lea.vmem %s604, 40 [#allocation7]
        %v4633 = vld [vmem:[%s4632] sm:$0xf]
        %v4634 = vld [vmem:[%s4632 + $0x4] sm:$0xf]
        %v4635 = vunpack.c.l.b16 %v4523
        %v4636 = vunpack.c.l.b16 %v4526
        %v4637 = vunpack.c.l.b16 %v4530
        %v4638 = vunpack.c.l.b16 %v4533
        %v4639 = vunpack.c.l.b16 %v4537
        %v4640 = vunpack.c.l.b16 %v4540
        %v4641 = vunpack.c.l.b16 %v4544
        %v4642 = vunpack.c.l.b16 %v4547
        %v4643 = vunpack.c.l.b16 %v4551
        %v4644 = vunpack.c.l.b16 %v4554
        %v4645 = vunpack.c.l.b16 %v4558
        %v4646 = vunpack.c.l.b16 %v4561
        %v4647 = vunpack.c.l.b16 %v4565
        %v4648 = vunpack.c.l.b16 %v4568
        %v4649 = vunpack.c.l.b16 %v4572
        %v4650 = vunpack.c.l.b16 %v4575
        %v4651 = vunpack.c.l.b16 %v4579
        %v4652 = vunpack.c.l.b16 %v4582
        %v4653 = vunpack.c.l.b16 %v4586
        %v4654 = vunpack.c.l.b16 %v4589
        %v4655 = vunpack.c.l.b16 %v4593
        %v4656 = vunpack.c.l.b16 %v4596
        %v4657 = vunpack.c.l.b16 %v4600
        %v4658 = vunpack.c.l.b16 %v4603
        %v4659 = vunpack.c.l.b16 %v4607
        %v4660 = vunpack.c.l.b16 %v4610
        %v4661 = vunpack.c.l.b16 %v4614
        %v4662 = vunpack.c.l.b16 %v4617
        %v4663 = vunpack.c.l.b16 %v4621
        %v4664 = vunpack.c.l.b16 %v4624
        %v4665 = vunpack.c.l.b16 %v4628
        %v4666 = vunpack.c.l.b16 %v4631
        %v4667 = vpack.c.b16 %v4636, %v4635
        %v4668 = vpack.c.b16 %v4638, %v4637
        %v4669 = vpack.c.b16 %v4640, %v4639
        %v4670 = vpack.c.b16 %v4642, %v4641
        %v4671 = vpack.c.b16 %v4644, %v4643
        %v4672 = vpack.c.b16 %v4646, %v4645
        %v4673 = vpack.c.b16 %v4648, %v4647
        %v4674 = vpack.c.b16 %v4650, %v4649
        %v4675 = vpack.c.b16 %v4652, %v4651
        %v4676 = vpack.c.b16 %v4654, %v4653
        %v4677 = vpack.c.b16 %v4656, %v4655
        %v4678 = vpack.c.b16 %v4658, %v4657
        %v4679 = vpack.c.b16 %v4660, %v4659
        %v4680 = vpack.c.b16 %v4662, %v4661
        %v4681 = vpack.c.b16 %v4664, %v4663
        %v4682 = vpack.c.b16 %v4666, %v4665
        %v4685 = vunpack.c.l.b16 %v4633
        %v4686 = vunpack.c.l.b16 %v4634
        %v4687 = vpack.c.b16 %v4686, %v4685
        %v4690 = vsel %vm2398, %v4667, 0
        %v4693 = vsel %vm2398, %v4668, 0
        %v4696 = vsel %vm2398, %v4669, 0
        %v4699 = vsel %vm2398, %v4670, 0
        %v4702 = vsel %vm2398, %v4671, 0
        %v4705 = vsel %vm2398, %v4672, 0
        %v4708 = vsel %vm2398, %v4673, 0
        %v4711 = vsel %vm2398, %v4674, 0
        %v4714 = vsel %vm2398, %v4675, 0
        %v4717 = vsel %vm2398, %v4676, 0
        %v4720 = vsel %vm2398, %v4677, 0
        %v4723 = vsel %vm2398, %v4678, 0
        %v4726 = vsel %vm2398, %v4679, 0
        %v4729 = vsel %vm2398, %v4680, 0
        %v4732 = vsel %vm2398, %v4681, 0
        %v4735 = vsel %vm2398, %v4682, 0
        %4737 = vmatprep.subr.bf16.mxu0 0
        %4738 = vmatpush1.bf16.msra.mxu0 0
        %4739 = vmatprep.subr.bf16.mxu0 0
        %4740 = vmatpush1.bf16.msra.mxu0 0
        %4741 = vmatprep.subr.bf16.mxu0 0
        %4742 = vmatpush1.bf16.msra.mxu0 0
        %4743 = vmatprep.subr.bf16.mxu0 0
        %4744 = vmatpush1.bf16.msra.mxu0 0
        %4745 = vmatprep.subr.bf16.mxu0 0
        %4746 = vmatpush1.bf16.msra.mxu0 0
        %4747 = vmatprep.subr.bf16.mxu0 0
        %4748 = vmatpush1.bf16.msra.mxu0 0
        %4749 = vmatprep.subr.bf16.mxu0 0
        %4750 = vmatpush1.bf16.msra.mxu0 0
        %4751 = vmatprep.subr.bf16.mxu0 0
        %4752 = vmatpush1.bf16.msra.mxu0 %v4687
        %4753 = vmatprep.subr.bf16.mxu0 0
        %4754 = vmatpush2.bf16.msra.mxu0 0
        %4755 = vmatprep.subr.bf16.mxu0 0
        %4756 = vmatpush2.bf16.msra.mxu0 0
        %4757 = vmatprep.subr.bf16.mxu0 0
        %4758 = vmatpush2.bf16.msra.mxu0 0
        %4759 = vmatprep.subr.bf16.mxu0 0
        %4760 = vmatpush2.bf16.msra.mxu0 0
        %4761 = vmatprep.subr.bf16.mxu0 0
        %4762 = vmatpush2.bf16.msra.mxu0 0
        %4763 = vmatprep.subr.bf16.mxu0 0
        %4764 = vmatpush2.bf16.msra.mxu0 0
        %4765 = vmatprep.subr.bf16.mxu0 0
        %4766 = vmatpush2.bf16.msra.mxu0 0
        %4767 = vmatprep.subr.bf16.mxu0 0
        %4768 = vmatpush2.bf16.msra.mxu0 0
        %4769 = vmatprep.mubr.bf16.mxu0 0
        %4770 = vmatmul.mubr.bf16.gmra.mxu0 %v4690
        %v4771 = vpop.f32.mrf.mxu0
        %v4772 = vadd.f32 0.0, %v4771
        %v4773 = vpop.f32.mrf.mxu0
        %v4774 = vpop.f32.mrf.mxu0
        %v4775 = vadd.f32 0.0, %v4774
        %v4776 = vpop.f32.mrf.mxu0
        %4777 = vmatprep.mubr.bf16.mxu0 0
        %4778 = vmatmul.mubr.bf16.gmra.mxu0 %v4693
        %v4779 = vpop.f32.mrf.mxu0
        %v4780 = vadd.f32 0.0, %v4779
        %v4781 = vpop.f32.mrf.mxu0
        %v4782 = vpop.f32.mrf.mxu0
        %v4783 = vadd.f32 0.0, %v4782
        %v4784 = vpop.f32.mrf.mxu0
        %4785 = vmatprep.mubr.bf16.mxu0 0
        %4786 = vmatmul.mubr.bf16.gmra.mxu0 %v4696
        %v4787 = vpop.f32.mrf.mxu0
        %v4788 = vadd.f32 0.0, %v4787
        %v4789 = vpop.f32.mrf.mxu0
        %v4790 = vpop.f32.mrf.mxu0
        %v4791 = vadd.f32 0.0, %v4790
        %v4792 = vpop.f32.mrf.mxu0
        %4793 = vmatprep.mubr.bf16.mxu0 0
        %4794 = vmatmul.mubr.bf16.gmra.mxu0 %v4699
        %v4795 = vpop.f32.mrf.mxu0
        %v4796 = vadd.f32 0.0, %v4795
        %v4797 = vpop.f32.mrf.mxu0
        %v4798 = vpop.f32.mrf.mxu0
        %v4799 = vadd.f32 0.0, %v4798
        %v4800 = vpop.f32.mrf.mxu0
        %4801 = vmatprep.mubr.bf16.mxu0 0
        %4802 = vmatmul.mubr.bf16.gmra.mxu0 %v4702
        %v4803 = vpop.f32.mrf.mxu0
        %v4804 = vadd.f32 0.0, %v4803
        %v4805 = vpop.f32.mrf.mxu0
        %v4806 = vpop.f32.mrf.mxu0
        %v4807 = vadd.f32 0.0, %v4806
        %v4808 = vpop.f32.mrf.mxu0
        %4809 = vmatprep.mubr.bf16.mxu0 0
        %4810 = vmatmul.mubr.bf16.gmra.mxu0 %v4705
        %v4811 = vpop.f32.mrf.mxu0
        %v4812 = vadd.f32 0.0, %v4811
        %v4813 = vpop.f32.mrf.mxu0
        %v4814 = vpop.f32.mrf.mxu0
        %v4815 = vadd.f32 0.0, %v4814
        %v4816 = vpop.f32.mrf.mxu0
        %4817 = vmatprep.mubr.bf16.mxu0 0
        %4818 = vmatmul.mubr.bf16.gmra.mxu0 %v4708
        %v4819 = vpop.f32.mrf.mxu0
        %v4820 = vadd.f32 0.0, %v4819
        %v4821 = vpop.f32.mrf.mxu0
        %v4822 = vpop.f32.mrf.mxu0
        %v4823 = vadd.f32 0.0, %v4822
        %v4824 = vpop.f32.mrf.mxu0
        %4825 = vmatprep.mubr.bf16.mxu0 0
        %4826 = vmatmul.mubr.bf16.gmra.mxu0 %v4711
        %v4827 = vpop.f32.mrf.mxu0
        %v4828 = vadd.f32 0.0, %v4827
        %v4829 = vpop.f32.mrf.mxu0
        %v4830 = vpop.f32.mrf.mxu0
        %v4831 = vadd.f32 0.0, %v4830
        %v4832 = vpop.f32.mrf.mxu0
        %4833 = vmatprep.mubr.bf16.mxu0 0
        %4834 = vmatmul.mubr.bf16.gmra.mxu0 %v4714
        %v4835 = vpop.f32.mrf.mxu0
        %v4836 = vadd.f32 0.0, %v4835
        %v4837 = vpop.f32.mrf.mxu0
        %v4838 = vpop.f32.mrf.mxu0
        %v4839 = vadd.f32 0.0, %v4838
        %v4840 = vpop.f32.mrf.mxu0
        %4841 = vmatprep.mubr.bf16.mxu0 0
        %4842 = vmatmul.mubr.bf16.gmra.mxu0 %v4717
        %v4843 = vpop.f32.mrf.mxu0
        %v4844 = vadd.f32 0.0, %v4843
        %v4845 = vpop.f32.mrf.mxu0
        %v4846 = vpop.f32.mrf.mxu0
        %v4847 = vadd.f32 0.0, %v4846
        %v4848 = vpop.f32.mrf.mxu0
        %4849 = vmatprep.mubr.bf16.mxu0 0
        %4850 = vmatmul.mubr.bf16.gmra.mxu0 %v4720
        %v4851 = vpop.f32.mrf.mxu0
        %v4852 = vadd.f32 0.0, %v4851
        %v4853 = vpop.f32.mrf.mxu0
        %v4854 = vpop.f32.mrf.mxu0
        %v4855 = vadd.f32 0.0, %v4854
        %v4856 = vpop.f32.mrf.mxu0
        %4857 = vmatprep.mubr.bf16.mxu0 0
        %4858 = vmatmul.mubr.bf16.gmra.mxu0 %v4723
        %v4859 = vpop.f32.mrf.mxu0
        %v4860 = vadd.f32 0.0, %v4859
        %v4861 = vpop.f32.mrf.mxu0
        %v4862 = vpop.f32.mrf.mxu0
        %v4863 = vadd.f32 0.0, %v4862
        %v4864 = vpop.f32.mrf.mxu0
        %4865 = vmatprep.mubr.bf16.mxu0 0
        %4866 = vmatmul.mubr.bf16.gmra.mxu0 %v4726
        %v4867 = vpop.f32.mrf.mxu0
        %v4868 = vadd.f32 0.0, %v4867
        %v4869 = vpop.f32.mrf.mxu0
        %v4870 = vpop.f32.mrf.mxu0
        %v4871 = vadd.f32 0.0, %v4870
        %v4872 = vpop.f32.mrf.mxu0
        %4873 = vmatprep.mubr.bf16.mxu0 0
        %4874 = vmatmul.mubr.bf16.gmra.mxu0 %v4729
        %v4875 = vpop.f32.mrf.mxu0
        %v4876 = vadd.f32 0.0, %v4875
        %v4877 = vpop.f32.mrf.mxu0
        %v4878 = vpop.f32.mrf.mxu0
        %v4879 = vadd.f32 0.0, %v4878
        %v4880 = vpop.f32.mrf.mxu0
        %4881 = vmatprep.mubr.bf16.mxu0 0
        %4882 = vmatmul.mubr.bf16.gmra.mxu0 %v4732
        %v4883 = vpop.f32.mrf.mxu0
        %v4884 = vadd.f32 0.0, %v4883
        %v4885 = vpop.f32.mrf.mxu0
        %v4886 = vpop.f32.mrf.mxu0
        %v4887 = vadd.f32 0.0, %v4886
        %v4888 = vpop.f32.mrf.mxu0
        %4889 = vmatprep.mubr.bf16.mxu0 0
        %4890 = vmatmul.mubr.bf16.gmra.mxu0 %v4735
        %v4891 = vpop.f32.mrf.mxu0
        %v4892 = vadd.f32 0.0, %v4891
        %v4893 = vpop.f32.mrf.mxu0
        %v4894 = vpop.f32.mrf.mxu0
        %v4895 = vadd.f32 0.0, %v4894
        %v4896 = vpop.f32.mrf.mxu0
        %4897 = vdwg.mxu0
        %v4898 = vadd.f32 %v4424, %v4772
        %v4899 = vadd.f32 %v4425, %v4775
        %v4900 = vadd.f32 %v4426, %v4780
        %v4901 = vadd.f32 %v4427, %v4783
        %v4902 = vadd.f32 %v4428, %v4788
        %v4903 = vadd.f32 %v4429, %v4791
        %v4904 = vadd.f32 %v4430, %v4796
        %v4905 = vadd.f32 %v4431, %v4799
        %v4906 = vadd.f32 %v4432, %v4804
        %v4907 = vadd.f32 %v4433, %v4807
        %v4908 = vadd.f32 %v4434, %v4812
        %v4909 = vadd.f32 %v4435, %v4815
        %v4910 = vadd.f32 %v4436, %v4820
        %v4911 = vadd.f32 %v4437, %v4823
        %v4912 = vadd.f32 %v4438, %v4828
        %v4913 = vadd.f32 %v4439, %v4831
        %v4914 = vadd.f32 %v4440, %v4836
        %v4915 = vadd.f32 %v4441, %v4839
        %v4916 = vadd.f32 %v4442, %v4844
        %v4917 = vadd.f32 %v4443, %v4847
        %v4918 = vadd.f32 %v4444, %v4852
        %v4919 = vadd.f32 %v4445, %v4855
        %v4920 = vadd.f32 %v4446, %v4860
        %v4921 = vadd.f32 %v4447, %v4863
        %v4922 = vadd.f32 %v4448, %v4868
        %v4923 = vadd.f32 %v4449, %v4871
        %v4924 = vadd.f32 %v4450, %v4876
        %v4925 = vadd.f32 %v4451, %v4879
        %v4926 = vadd.f32 %v4452, %v4884
        %v4927 = vadd.f32 %v4453, %v4887
        %v4928 = vadd.f32 %v4454, %v4892
        %v4929 = vadd.f32 %v4455, %v4895
        %s4930 = scalar_lea.vmem [#allocation3], 24
        %v4931 = vld [vmem:[%s4930] sm:$0xf]
        %v4932 = vld [vmem:[%s4930 + $0x4] sm:$0xf]
        %v4933 = vld [vmem:[%s4930 + $0xc] sm:$0xf]
        %v4934 = vld [vmem:[%s4930 + $0x10] sm:$0xf]
        %v4935 = vld [vmem:[%s4930 + $0x18] sm:$0xf]
        %v4936 = vld [vmem:[%s4930 + $0x1c] sm:$0xf]
        %v4937 = vld [vmem:[%s4930 + $0x24] sm:$0xf]
        %v4938 = vld [vmem:[%s4930 + $0x28] sm:$0xf]
        %v4939 = vld [vmem:[%s4930 + $0x30] sm:$0xf]
        %v4940 = vld [vmem:[%s4930 + $0x34] sm:$0xf]
        %v4941 = vld [vmem:[%s4930 + $0x3c] sm:$0xf]
        %v4942 = vld [vmem:[%s4930 + $0x40] sm:$0xf]
        %v4943 = vld [vmem:[%s4930 + $0x48] sm:$0xf]
        %v4944 = vld [vmem:[%s4930 + $0x4c] sm:$0xf]
        %v4945 = vld [vmem:[%s4930 + $0x54] sm:$0xf]
        %v4946 = vld [vmem:[%s4930 + $0x58] sm:$0xf]
        %v4947 = vld [vmem:[%s4930 + $0x60] sm:$0xf]
        %v4948 = vld [vmem:[%s4930 + $0x64] sm:$0xf]
        %v4949 = vld [vmem:[%s4930 + $0x6c] sm:$0xf]
        %v4950 = vld [vmem:[%s4930 + $0x70] sm:$0xf]
        %v4951 = vld [vmem:[%s4930 + $0x78] sm:$0xf]
        %v4952 = vld [vmem:[%s4930 + $0x7c] sm:$0xf]
        %v4953 = vld [vmem:[%s4930 + $0x84] sm:$0xf]
        %v4954 = vld [vmem:[%s4930 + $0x88] sm:$0xf]
        %v4955 = vld [vmem:[%s4930 + $0x90] sm:$0xf]
        %v4956 = vld [vmem:[%s4930 + $0x94] sm:$0xf]
        %v4957 = vld [vmem:[%s4930 + $0x9c] sm:$0xf]
        %v4958 = vld [vmem:[%s4930 + $0xa0] sm:$0xf]
        %v4959 = vld [vmem:[%s4930 + $0xa8] sm:$0xf]
        %v4960 = vld [vmem:[%s4930 + $0xac] sm:$0xf]
        %v4961 = vld [vmem:[%s4930 + $0xb4] sm:$0xf]
        %v4962 = vld [vmem:[%s4930 + $0xb8] sm:$0xf]
        %s4963 = scalar_lea.vmem %s604, 48 [#allocation7]
        %v4964 = vld [vmem:[%s4963] sm:$0xf]
        %v4965 = vld [vmem:[%s4963 + $0x4] sm:$0xf]
        %v4998 = vunpack.c.l.b16 %v4931
        %v4999 = vunpack.c.l.b16 %v4932
        %v5000 = vunpack.c.l.b16 %v4933
        %v5001 = vunpack.c.l.b16 %v4934
        %v5002 = vunpack.c.l.b16 %v4935
        %v5003 = vunpack.c.l.b16 %v4936
        %v5004 = vunpack.c.l.b16 %v4937
        %v5005 = vunpack.c.l.b16 %v4938
        %v5006 = vunpack.c.l.b16 %v4939
        %v5007 = vunpack.c.l.b16 %v4940
        %v5008 = vunpack.c.l.b16 %v4941
        %v5009 = vunpack.c.l.b16 %v4942
        %v5010 = vunpack.c.l.b16 %v4943
        %v5011 = vunpack.c.l.b16 %v4944
        %v5012 = vunpack.c.l.b16 %v4945
        %v5013 = vunpack.c.l.b16 %v4946
        %v5014 = vunpack.c.l.b16 %v4947
        %v5015 = vunpack.c.l.b16 %v4948
        %v5016 = vunpack.c.l.b16 %v4949
        %v5017 = vunpack.c.l.b16 %v4950
        %v5018 = vunpack.c.l.b16 %v4951
        %v5019 = vunpack.c.l.b16 %v4952
        %v5020 = vunpack.c.l.b16 %v4953
        %v5021 = vunpack.c.l.b16 %v4954
        %v5022 = vunpack.c.l.b16 %v4955
        %v5023 = vunpack.c.l.b16 %v4956
        %v5024 = vunpack.c.l.b16 %v4957
        %v5025 = vunpack.c.l.b16 %v4958
        %v5026 = vunpack.c.l.b16 %v4959
        %v5027 = vunpack.c.l.b16 %v4960
        %v5028 = vunpack.c.l.b16 %v4961
        %v5029 = vunpack.c.l.b16 %v4962
        %v5030 = vpack.c.b16 %v4999, %v4998
        %v5031 = vpack.c.b16 %v5001, %v5000
        %v5032 = vpack.c.b16 %v5003, %v5002
        %v5033 = vpack.c.b16 %v5005, %v5004
        %v5034 = vpack.c.b16 %v5007, %v5006
        %v5035 = vpack.c.b16 %v5009, %v5008
        %v5036 = vpack.c.b16 %v5011, %v5010
        %v5037 = vpack.c.b16 %v5013, %v5012
        %v5038 = vpack.c.b16 %v5015, %v5014
        %v5039 = vpack.c.b16 %v5017, %v5016
        %v5040 = vpack.c.b16 %v5019, %v5018
        %v5041 = vpack.c.b16 %v5021, %v5020
        %v5042 = vpack.c.b16 %v5023, %v5022
        %v5043 = vpack.c.b16 %v5025, %v5024
        %v5044 = vpack.c.b16 %v5027, %v5026
        %v5045 = vpack.c.b16 %v5029, %v5028
        %v5048 = vunpack.c.l.b16 %v4964
        %v5049 = vunpack.c.l.b16 %v4965
        %v5050 = vpack.c.b16 %v5049, %v5048
        %v5053 = vsel %vm2398, %v5030, 0
        %v5056 = vsel %vm2398, %v5031, 0
        %v5059 = vsel %vm2398, %v5032, 0
        %v5062 = vsel %vm2398, %v5033, 0
        %v5065 = vsel %vm2398, %v5034, 0
        %v5068 = vsel %vm2398, %v5035, 0
        %v5071 = vsel %vm2398, %v5036, 0
        %v5074 = vsel %vm2398, %v5037, 0
        %v5077 = vsel %vm2398, %v5038, 0
        %v5080 = vsel %vm2398, %v5039, 0
        %v5083 = vsel %vm2398, %v5040, 0
        %v5086 = vsel %vm2398, %v5041, 0
        %v5089 = vsel %vm2398, %v5042, 0
        %v5092 = vsel %vm2398, %v5043, 0
        %v5095 = vsel %vm2398, %v5044, 0
        %v5098 = vsel %vm2398, %v5045, 0
        %5100 = vmatprep.subr.bf16.mxu0 0
        %5101 = vmatpush1.bf16.msra.mxu0 0
        %5102 = vmatprep.subr.bf16.mxu0 0
        %5103 = vmatpush1.bf16.msra.mxu0 0
        %5104 = vmatprep.subr.bf16.mxu0 0
        %5105 = vmatpush1.bf16.msra.mxu0 0
        %5106 = vmatprep.subr.bf16.mxu0 0
        %5107 = vmatpush1.bf16.msra.mxu0 0
        %5108 = vmatprep.subr.bf16.mxu0 0
        %5109 = vmatpush1.bf16.msra.mxu0 0
        %5110 = vmatprep.subr.bf16.mxu0 0
        %5111 = vmatpush1.bf16.msra.mxu0 0
        %5112 = vmatprep.subr.bf16.mxu0 0
        %5113 = vmatpush1.bf16.msra.mxu0 0
        %5114 = vmatprep.subr.bf16.mxu0 0
        %5115 = vmatpush1.bf16.msra.mxu0 %v5050
        %5116 = vmatprep.subr.bf16.mxu0 0
        %5117 = vmatpush2.bf16.msra.mxu0 0
        %5118 = vmatprep.subr.bf16.mxu0 0
        %5119 = vmatpush2.bf16.msra.mxu0 0
        %5120 = vmatprep.subr.bf16.mxu0 0
        %5121 = vmatpush2.bf16.msra.mxu0 0
        %5122 = vmatprep.subr.bf16.mxu0 0
        %5123 = vmatpush2.bf16.msra.mxu0 0
        %5124 = vmatprep.subr.bf16.mxu0 0
        %5125 = vmatpush2.bf16.msra.mxu0 0
        %5126 = vmatprep.subr.bf16.mxu0 0
        %5127 = vmatpush2.bf16.msra.mxu0 0
        %5128 = vmatprep.subr.bf16.mxu0 0
        %5129 = vmatpush2.bf16.msra.mxu0 0
        %5130 = vmatprep.subr.bf16.mxu0 0
        %5131 = vmatpush2.bf16.msra.mxu0 0
        %5132 = vmatprep.mubr.bf16.mxu0 0
        %5133 = vmatmul.mubr.bf16.gmra.mxu0 %v5053
        %v5134 = vpop.f32.mrf.mxu0
        %v5135 = vadd.f32 0.0, %v5134
        %v5136 = vpop.f32.mrf.mxu0
        %v5137 = vpop.f32.mrf.mxu0
        %v5138 = vadd.f32 0.0, %v5137
        %v5139 = vpop.f32.mrf.mxu0
        %5140 = vmatprep.mubr.bf16.mxu0 0
        %5141 = vmatmul.mubr.bf16.gmra.mxu0 %v5056
        %v5142 = vpop.f32.mrf.mxu0
        %v5143 = vadd.f32 0.0, %v5142
        %v5144 = vpop.f32.mrf.mxu0
        %v5145 = vpop.f32.mrf.mxu0
        %v5146 = vadd.f32 0.0, %v5145
        %v5147 = vpop.f32.mrf.mxu0
        %5148 = vmatprep.mubr.bf16.mxu0 0
        %5149 = vmatmul.mubr.bf16.gmra.mxu0 %v5059
        %v5150 = vpop.f32.mrf.mxu0
        %v5151 = vadd.f32 0.0, %v5150
        %v5152 = vpop.f32.mrf.mxu0
        %v5153 = vpop.f32.mrf.mxu0
        %v5154 = vadd.f32 0.0, %v5153
        %v5155 = vpop.f32.mrf.mxu0
        %5156 = vmatprep.mubr.bf16.mxu0 0
        %5157 = vmatmul.mubr.bf16.gmra.mxu0 %v5062
        %v5158 = vpop.f32.mrf.mxu0
        %v5159 = vadd.f32 0.0, %v5158
        %v5160 = vpop.f32.mrf.mxu0
        %v5161 = vpop.f32.mrf.mxu0
        %v5162 = vadd.f32 0.0, %v5161
        %v5163 = vpop.f32.mrf.mxu0
        %5164 = vmatprep.mubr.bf16.mxu0 0
        %5165 = vmatmul.mubr.bf16.gmra.mxu0 %v5065
        %v5166 = vpop.f32.mrf.mxu0
        %v5167 = vadd.f32 0.0, %v5166
        %v5168 = vpop.f32.mrf.mxu0
        %v5169 = vpop.f32.mrf.mxu0
        %v5170 = vadd.f32 0.0, %v5169
        %v5171 = vpop.f32.mrf.mxu0
        %5172 = vmatprep.mubr.bf16.mxu0 0
        %5173 = vmatmul.mubr.bf16.gmra.mxu0 %v5068
        %v5174 = vpop.f32.mrf.mxu0
        %v5175 = vadd.f32 0.0, %v5174
        %v5176 = vpop.f32.mrf.mxu0
        %v5177 = vpop.f32.mrf.mxu0
        %v5178 = vadd.f32 0.0, %v5177
        %v5179 = vpop.f32.mrf.mxu0
        %5180 = vmatprep.mubr.bf16.mxu0 0
        %5181 = vmatmul.mubr.bf16.gmra.mxu0 %v5071
        %v5182 = vpop.f32.mrf.mxu0
        %v5183 = vadd.f32 0.0, %v5182
        %v5184 = vpop.f32.mrf.mxu0
        %v5185 = vpop.f32.mrf.mxu0
        %v5186 = vadd.f32 0.0, %v5185
        %v5187 = vpop.f32.mrf.mxu0
        %5188 = vmatprep.mubr.bf16.mxu0 0
        %5189 = vmatmul.mubr.bf16.gmra.mxu0 %v5074
        %v5190 = vpop.f32.mrf.mxu0
        %v5191 = vadd.f32 0.0, %v5190
        %v5192 = vpop.f32.mrf.mxu0
        %v5193 = vpop.f32.mrf.mxu0
        %v5194 = vadd.f32 0.0, %v5193
        %v5195 = vpop.f32.mrf.mxu0
        %5196 = vmatprep.mubr.bf16.mxu0 0
        %5197 = vmatmul.mubr.bf16.gmra.mxu0 %v5077
        %v5198 = vpop.f32.mrf.mxu0
        %v5199 = vadd.f32 0.0, %v5198
        %v5200 = vpop.f32.mrf.mxu0
        %v5201 = vpop.f32.mrf.mxu0
        %v5202 = vadd.f32 0.0, %v5201
        %v5203 = vpop.f32.mrf.mxu0
        %5204 = vmatprep.mubr.bf16.mxu0 0
        %5205 = vmatmul.mubr.bf16.gmra.mxu0 %v5080
        %v5206 = vpop.f32.mrf.mxu0
        %v5207 = vadd.f32 0.0, %v5206
        %v5208 = vpop.f32.mrf.mxu0
        %v5209 = vpop.f32.mrf.mxu0
        %v5210 = vadd.f32 0.0, %v5209
        %v5211 = vpop.f32.mrf.mxu0
        %5212 = vmatprep.mubr.bf16.mxu0 0
        %5213 = vmatmul.mubr.bf16.gmra.mxu0 %v5083
        %v5214 = vpop.f32.mrf.mxu0
        %v5215 = vadd.f32 0.0, %v5214
        %v5216 = vpop.f32.mrf.mxu0
        %v5217 = vpop.f32.mrf.mxu0
        %v5218 = vadd.f32 0.0, %v5217
        %v5219 = vpop.f32.mrf.mxu0
        %5220 = vmatprep.mubr.bf16.mxu0 0
        %5221 = vmatmul.mubr.bf16.gmra.mxu0 %v5086
        %v5222 = vpop.f32.mrf.mxu0
        %v5223 = vadd.f32 0.0, %v5222
        %v5224 = vpop.f32.mrf.mxu0
        %v5225 = vpop.f32.mrf.mxu0
        %v5226 = vadd.f32 0.0, %v5225
        %v5227 = vpop.f32.mrf.mxu0
        %5228 = vmatprep.mubr.bf16.mxu0 0
        %5229 = vmatmul.mubr.bf16.gmra.mxu0 %v5089
        %v5230 = vpop.f32.mrf.mxu0
        %v5231 = vadd.f32 0.0, %v5230
        %v5232 = vpop.f32.mrf.mxu0
        %v5233 = vpop.f32.mrf.mxu0
        %v5234 = vadd.f32 0.0, %v5233
        %v5235 = vpop.f32.mrf.mxu0
        %5236 = vmatprep.mubr.bf16.mxu0 0
        %5237 = vmatmul.mubr.bf16.gmra.mxu0 %v5092
        %v5238 = vpop.f32.mrf.mxu0
        %v5239 = vadd.f32 0.0, %v5238
        %v5240 = vpop.f32.mrf.mxu0
        %v5241 = vpop.f32.mrf.mxu0
        %v5242 = vadd.f32 0.0, %v5241
        %v5243 = vpop.f32.mrf.mxu0
        %5244 = vmatprep.mubr.bf16.mxu0 0
        %5245 = vmatmul.mubr.bf16.gmra.mxu0 %v5095
        %v5246 = vpop.f32.mrf.mxu0
        %v5247 = vadd.f32 0.0, %v5246
        %v5248 = vpop.f32.mrf.mxu0
        %v5249 = vpop.f32.mrf.mxu0
        %v5250 = vadd.f32 0.0, %v5249
        %v5251 = vpop.f32.mrf.mxu0
        %5252 = vmatprep.mubr.bf16.mxu0 0
        %5253 = vmatmul.mubr.bf16.gmra.mxu0 %v5098
        %v5254 = vpop.f32.mrf.mxu0
        %v5255 = vadd.f32 0.0, %v5254
        %v5256 = vpop.f32.mrf.mxu0
        %v5257 = vpop.f32.mrf.mxu0
        %v5258 = vadd.f32 0.0, %v5257
        %v5259 = vpop.f32.mrf.mxu0
        %5260 = vdwg.mxu0
        %v5261 = vadd.f32 %v4898, %v5135
        %v5262 = vadd.f32 %v4899, %v5138
        %v5263 = vadd.f32 %v4900, %v5143
        %v5264 = vadd.f32 %v4901, %v5146
        %v5265 = vadd.f32 %v4902, %v5151
        %v5266 = vadd.f32 %v4903, %v5154
        %v5267 = vadd.f32 %v4904, %v5159
        %v5268 = vadd.f32 %v4905, %v5162
        %v5269 = vadd.f32 %v4906, %v5167
        %v5270 = vadd.f32 %v4907, %v5170
        %v5271 = vadd.f32 %v4908, %v5175
        %v5272 = vadd.f32 %v4909, %v5178
        %v5273 = vadd.f32 %v4910, %v5183
        %v5274 = vadd.f32 %v4911, %v5186
        %v5275 = vadd.f32 %v4912, %v5191
        %v5276 = vadd.f32 %v4913, %v5194
        %v5277 = vadd.f32 %v4914, %v5199
        %v5278 = vadd.f32 %v4915, %v5202
        %v5279 = vadd.f32 %v4916, %v5207
        %v5280 = vadd.f32 %v4917, %v5210
        %v5281 = vadd.f32 %v4918, %v5215
        %v5282 = vadd.f32 %v4919, %v5218
        %v5283 = vadd.f32 %v4920, %v5223
        %v5284 = vadd.f32 %v4921, %v5226
        %v5285 = vadd.f32 %v4922, %v5231
        %v5286 = vadd.f32 %v4923, %v5234
        %v5287 = vadd.f32 %v4924, %v5239
        %v5288 = vadd.f32 %v4925, %v5242
        %v5289 = vadd.f32 %v4926, %v5247
        %v5290 = vadd.f32 %v4927, %v5250
        %v5291 = vadd.f32 %v4928, %v5255
        %v5292 = vadd.f32 %v4929, %v5258
        %v5293 = vld [vmem:[%s4930] sm:$0xf]
        %v5294 = vld [vmem:[%s4930 + $0x4] sm:$0xf]
        %v5295 = vld [vmem:[%s4930 + $0x8] sm:$0x1]
        %v5296 = vld [vmem:[%s4930 + $0xc] sm:$0xf]
        %v5297 = vld [vmem:[%s4930 + $0x10] sm:$0xf]
        %v5298 = vld [vmem:[%s4930 + $0x14] sm:$0x1]
        %v5299 = vld [vmem:[%s4930 + $0x18] sm:$0xf]
        %v5300 = vld [vmem:[%s4930 + $0x1c] sm:$0xf]
        %v5301 = vld [vmem:[%s4930 + $0x20] sm:$0x1]
        %v5302 = vld [vmem:[%s4930 + $0x24] sm:$0xf]
        %v5303 = vld [vmem:[%s4930 + $0x28] sm:$0xf]
        %v5304 = vld [vmem:[%s4930 + $0x2c] sm:$0x1]
        %v5305 = vld [vmem:[%s4930 + $0x30] sm:$0xf]
        %v5306 = vld [vmem:[%s4930 + $0x34] sm:$0xf]
        %v5307 = vld [vmem:[%s4930 + $0x38] sm:$0x1]
        %v5308 = vld [vmem:[%s4930 + $0x3c] sm:$0xf]
        %v5309 = vld [vmem:[%s4930 + $0x40] sm:$0xf]
        %v5310 = vld [vmem:[%s4930 + $0x44] sm:$0x1]
        %v5311 = vld [vmem:[%s4930 + $0x48] sm:$0xf]
        %v5312 = vld [vmem:[%s4930 + $0x4c] sm:$0xf]
        %v5313 = vld [vmem:[%s4930 + $0x50] sm:$0x1]
        %v5314 = vld [vmem:[%s4930 + $0x54] sm:$0xf]
        %v5315 = vld [vmem:[%s4930 + $0x58] sm:$0xf]
        %v5316 = vld [vmem:[%s4930 + $0x5c] sm:$0x1]
        %v5317 = vld [vmem:[%s4930 + $0x60] sm:$0xf]
        %v5318 = vld [vmem:[%s4930 + $0x64] sm:$0xf]
        %v5319 = vld [vmem:[%s4930 + $0x68] sm:$0x1]
        %v5320 = vld [vmem:[%s4930 + $0x6c] sm:$0xf]
        %v5321 = vld [vmem:[%s4930 + $0x70] sm:$0xf]
        %v5322 = vld [vmem:[%s4930 + $0x74] sm:$0x1]
        %v5323 = vld [vmem:[%s4930 + $0x78] sm:$0xf]
        %v5324 = vld [vmem:[%s4930 + $0x7c] sm:$0xf]
        %v5325 = vld [vmem:[%s4930 + $0x80] sm:$0x1]
        %v5326 = vld [vmem:[%s4930 + $0x84] sm:$0xf]
        %v5327 = vld [vmem:[%s4930 + $0x88] sm:$0xf]
        %v5328 = vld [vmem:[%s4930 + $0x8c] sm:$0x1]
        %v5329 = vld [vmem:[%s4930 + $0x90] sm:$0xf]
        %v5330 = vld [vmem:[%s4930 + $0x94] sm:$0xf]
        %v5331 = vld [vmem:[%s4930 + $0x98] sm:$0x1]
        %v5332 = vld [vmem:[%s4930 + $0x9c] sm:$0xf]
        %v5333 = vld [vmem:[%s4930 + $0xa0] sm:$0xf]
        %v5334 = vld [vmem:[%s4930 + $0xa4] sm:$0x1]
        %v5335 = vld [vmem:[%s4930 + $0xa8] sm:$0xf]
        %v5336 = vld [vmem:[%s4930 + $0xac] sm:$0xf]
        %v5337 = vld [vmem:[%s4930 + $0xb0] sm:$0x1]
        %v5338 = vld [vmem:[%s4930 + $0xb4] sm:$0xf]
        %v5339 = vld [vmem:[%s4930 + $0xb8] sm:$0xf]
        %v5340 = vld [vmem:[%s4930 + $0xbc] sm:$0x1]
        %v5342 = vshrl.u32 %v5293, 16
        %v5344 = vrot.slane %v5342, 4
        %v5345 = vshll.u32 %v5293, 16
        %v5347 = vrot.slane %v5345, 5
        %v5348 = vor.u32 %v5344, %v5347
        %v5349 = vrot.slane %v5348, 4
        %v5351 = vshll.u32 %v5294, 16
        %v5353 = vrot.slane %v5351, 5
        %v5354 = vsel %vm1956, %v5349, %v5353
        %v5355 = vshrl.u32 %v5294, 16
        %v5357 = vrot.slane %v5355, 4
        %v5358 = vor.u32 %v5357, %v5353
        %v5359 = vrot.slane %v5358, 4
        %v5361 = vshll.u32 %v5295, 16
        %v5363 = vrot.slane %v5361, 5
        %v5364 = vsel %vm1956, %v5359, %v5363
        %v5366 = vshrl.u32 %v5296, 16
        %v5368 = vrot.slane %v5366, 4
        %v5369 = vshll.u32 %v5296, 16
        %v5371 = vrot.slane %v5369, 5
        %v5372 = vor.u32 %v5368, %v5371
        %v5373 = vrot.slane %v5372, 4
        %v5375 = vshll.u32 %v5297, 16
        %v5377 = vrot.slane %v5375, 5
        %v5378 = vsel %vm1956, %v5373, %v5377
        %v5379 = vshrl.u32 %v5297, 16
        %v5381 = vrot.slane %v5379, 4
        %v5382 = vor.u32 %v5381, %v5377
        %v5383 = vrot.slane %v5382, 4
        %v5385 = vshll.u32 %v5298, 16
        %v5387 = vrot.slane %v5385, 5
        %v5388 = vsel %vm1956, %v5383, %v5387
        %v5390 = vshrl.u32 %v5299, 16
        %v5392 = vrot.slane %v5390, 4
        %v5393 = vshll.u32 %v5299, 16
        %v5395 = vrot.slane %v5393, 5
        %v5396 = vor.u32 %v5392, %v5395
        %v5397 = vrot.slane %v5396, 4
        %v5399 = vshll.u32 %v5300, 16
        %v5401 = vrot.slane %v5399, 5
        %v5402 = vsel %vm1956, %v5397, %v5401
        %v5403 = vshrl.u32 %v5300, 16
        %v5405 = vrot.slane %v5403, 4
        %v5406 = vor.u32 %v5405, %v5401
        %v5407 = vrot.slane %v5406, 4
        %v5409 = vshll.u32 %v5301, 16
        %v5411 = vrot.slane %v5409, 5
        %v5412 = vsel %vm1956, %v5407, %v5411
        %v5414 = vshrl.u32 %v5302, 16
        %v5416 = vrot.slane %v5414, 4
        %v5417 = vshll.u32 %v5302, 16
        %v5419 = vrot.slane %v5417, 5
        %v5420 = vor.u32 %v5416, %v5419
        %v5421 = vrot.slane %v5420, 4
        %v5423 = vshll.u32 %v5303, 16
        %v5425 = vrot.slane %v5423, 5
        %v5426 = vsel %vm1956, %v5421, %v5425
        %v5427 = vshrl.u32 %v5303, 16
        %v5429 = vrot.slane %v5427, 4
        %v5430 = vor.u32 %v5429, %v5425
        %v5431 = vrot.slane %v5430, 4
        %v5433 = vshll.u32 %v5304, 16
        %v5435 = vrot.slane %v5433, 5
        %v5436 = vsel %vm1956, %v5431, %v5435
        %v5438 = vshrl.u32 %v5305, 16
        %v5440 = vrot.slane %v5438, 4
        %v5441 = vshll.u32 %v5305, 16
        %v5443 = vrot.slane %v5441, 5
        %v5444 = vor.u32 %v5440, %v5443
        %v5445 = vrot.slane %v5444, 4
        %v5447 = vshll.u32 %v5306, 16
        %v5449 = vrot.slane %v5447, 5
        %v5450 = vsel %vm1956, %v5445, %v5449
        %v5451 = vshrl.u32 %v5306, 16
        %v5453 = vrot.slane %v5451, 4
        %v5454 = vor.u32 %v5453, %v5449
        %v5455 = vrot.slane %v5454, 4
        %v5457 = vshll.u32 %v5307, 16
        %v5459 = vrot.slane %v5457, 5
        %v5460 = vsel %vm1956, %v5455, %v5459
        %v5462 = vshrl.u32 %v5308, 16
        %v5464 = vrot.slane %v5462, 4
        %v5465 = vshll.u32 %v5308, 16
        %v5467 = vrot.slane %v5465, 5
        %v5468 = vor.u32 %v5464, %v5467
        %v5469 = vrot.slane %v5468, 4
        %v5471 = vshll.u32 %v5309, 16
        %v5473 = vrot.slane %v5471, 5
        %v5474 = vsel %vm1956, %v5469, %v5473
        %v5475 = vshrl.u32 %v5309, 16
        %v5477 = vrot.slane %v5475, 4
        %v5478 = vor.u32 %v5477, %v5473
        %v5479 = vrot.slane %v5478, 4
        %v5481 = vshll.u32 %v5310, 16
        %v5483 = vrot.slane %v5481, 5
        %v5484 = vsel %vm1956, %v5479, %v5483
        %v5486 = vshrl.u32 %v5311, 16
        %v5488 = vrot.slane %v5486, 4
        %v5489 = vshll.u32 %v5311, 16
        %v5491 = vrot.slane %v5489, 5
        %v5492 = vor.u32 %v5488, %v5491
        %v5493 = vrot.slane %v5492, 4
        %v5495 = vshll.u32 %v5312, 16
        %v5497 = vrot.slane %v5495, 5
        %v5498 = vsel %vm1956, %v5493, %v5497
        %v5499 = vshrl.u32 %v5312, 16
        %v5501 = vrot.slane %v5499, 4
        %v5502 = vor.u32 %v5501, %v5497
        %v5503 = vrot.slane %v5502, 4
        %v5505 = vshll.u32 %v5313, 16
        %v5507 = vrot.slane %v5505, 5
        %v5508 = vsel %vm1956, %v5503, %v5507
        %v5510 = vshrl.u32 %v5314, 16
        %v5512 = vrot.slane %v5510, 4
        %v5513 = vshll.u32 %v5314, 16
        %v5515 = vrot.slane %v5513, 5
        %v5516 = vor.u32 %v5512, %v5515
        %v5517 = vrot.slane %v5516, 4
        %v5519 = vshll.u32 %v5315, 16
        %v5521 = vrot.slane %v5519, 5
        %v5522 = vsel %vm1956, %v5517, %v5521
        %v5523 = vshrl.u32 %v5315, 16
        %v5525 = vrot.slane %v5523, 4
        %v5526 = vor.u32 %v5525, %v5521
        %v5527 = vrot.slane %v5526, 4
        %v5529 = vshll.u32 %v5316, 16
        %v5531 = vrot.slane %v5529, 5
        %v5532 = vsel %vm1956, %v5527, %v5531
        %v5534 = vshrl.u32 %v5317, 16
        %v5536 = vrot.slane %v5534, 4
        %v5537 = vshll.u32 %v5317, 16
        %v5539 = vrot.slane %v5537, 5
        %v5540 = vor.u32 %v5536, %v5539
        %v5541 = vrot.slane %v5540, 4
        %v5543 = vshll.u32 %v5318, 16
        %v5545 = vrot.slane %v5543, 5
        %v5546 = vsel %vm1956, %v5541, %v5545
        %v5547 = vshrl.u32 %v5318, 16
        %v5549 = vrot.slane %v5547, 4
        %v5550 = vor.u32 %v5549, %v5545
        %v5551 = vrot.slane %v5550, 4
        %v5553 = vshll.u32 %v5319, 16
        %v5555 = vrot.slane %v5553, 5
        %v5556 = vsel %vm1956, %v5551, %v5555
        %v5558 = vshrl.u32 %v5320, 16
        %v5560 = vrot.slane %v5558, 4
        %v5561 = vshll.u32 %v5320, 16
        %v5563 = vrot.slane %v5561, 5
        %v5564 = vor.u32 %v5560, %v5563
        %v5565 = vrot.slane %v5564, 4
        %v5567 = vshll.u32 %v5321, 16
        %v5569 = vrot.slane %v5567, 5
        %v5570 = vsel %vm1956, %v5565, %v5569
        %v5571 = vshrl.u32 %v5321, 16
        %v5573 = vrot.slane %v5571, 4
        %v5574 = vor.u32 %v5573, %v5569
        %v5575 = vrot.slane %v5574, 4
        %v5577 = vshll.u32 %v5322, 16
        %v5579 = vrot.slane %v5577, 5
        %v5580 = vsel %vm1956, %v5575, %v5579
        %v5582 = vshrl.u32 %v5323, 16
        %v5584 = vrot.slane %v5582, 4
        %v5585 = vshll.u32 %v5323, 16
        %v5587 = vrot.slane %v5585, 5
        %v5588 = vor.u32 %v5584, %v5587
        %v5589 = vrot.slane %v5588, 4
        %v5591 = vshll.u32 %v5324, 16
        %v5593 = vrot.slane %v5591, 5
        %v5594 = vsel %vm1956, %v5589, %v5593
        %v5595 = vshrl.u32 %v5324, 16
        %v5597 = vrot.slane %v5595, 4
        %v5598 = vor.u32 %v5597, %v5593
        %v5599 = vrot.slane %v5598, 4
        %v5601 = vshll.u32 %v5325, 16
        %v5603 = vrot.slane %v5601, 5
        %v5604 = vsel %vm1956, %v5599, %v5603
        %v5606 = vshrl.u32 %v5326, 16
        %v5608 = vrot.slane %v5606, 4
        %v5609 = vshll.u32 %v5326, 16
        %v5611 = vrot.slane %v5609, 5
        %v5612 = vor.u32 %v5608, %v5611
        %v5613 = vrot.slane %v5612, 4
        %v5615 = vshll.u32 %v5327, 16
        %v5617 = vrot.slane %v5615, 5
        %v5618 = vsel %vm1956, %v5613, %v5617
        %v5619 = vshrl.u32 %v5327, 16
        %v5621 = vrot.slane %v5619, 4
        %v5622 = vor.u32 %v5621, %v5617
        %v5623 = vrot.slane %v5622, 4
        %v5625 = vshll.u32 %v5328, 16
        %v5627 = vrot.slane %v5625, 5
        %v5628 = vsel %vm1956, %v5623, %v5627
        %v5630 = vshrl.u32 %v5329, 16
        %v5632 = vrot.slane %v5630, 4
        %v5633 = vshll.u32 %v5329, 16
        %v5635 = vrot.slane %v5633, 5
        %v5636 = vor.u32 %v5632, %v5635
        %v5637 = vrot.slane %v5636, 4
        %v5639 = vshll.u32 %v5330, 16
        %v5641 = vrot.slane %v5639, 5
        %v5642 = vsel %vm1956, %v5637, %v5641
        %v5643 = vshrl.u32 %v5330, 16
        %v5645 = vrot.slane %v5643, 4
        %v5646 = vor.u32 %v5645, %v5641
        %v5647 = vrot.slane %v5646, 4
        %v5649 = vshll.u32 %v5331, 16
        %v5651 = vrot.slane %v5649, 5
        %v5652 = vsel %vm1956, %v5647, %v5651
        %v5654 = vshrl.u32 %v5332, 16
        %v5656 = vrot.slane %v5654, 4
        %v5657 = vshll.u32 %v5332, 16
        %v5659 = vrot.slane %v5657, 5
        %v5660 = vor.u32 %v5656, %v5659
        %v5661 = vrot.slane %v5660, 4
        %v5663 = vshll.u32 %v5333, 16
        %v5665 = vrot.slane %v5663, 5
        %v5666 = vsel %vm1956, %v5661, %v5665
        %v5667 = vshrl.u32 %v5333, 16
        %v5669 = vrot.slane %v5667, 4
        %v5670 = vor.u32 %v5669, %v5665
        %v5671 = vrot.slane %v5670, 4
        %v5673 = vshll.u32 %v5334, 16
        %v5675 = vrot.slane %v5673, 5
        %v5676 = vsel %vm1956, %v5671, %v5675
        %v5678 = vshrl.u32 %v5335, 16
        %v5680 = vrot.slane %v5678, 4
        %v5681 = vshll.u32 %v5335, 16
        %v5683 = vrot.slane %v5681, 5
        %v5684 = vor.u32 %v5680, %v5683
        %v5685 = vrot.slane %v5684, 4
        %v5687 = vshll.u32 %v5336, 16
        %v5689 = vrot.slane %v5687, 5
        %v5690 = vsel %vm1956, %v5685, %v5689
        %v5691 = vshrl.u32 %v5336, 16
        %v5693 = vrot.slane %v5691, 4
        %v5694 = vor.u32 %v5693, %v5689
        %v5695 = vrot.slane %v5694, 4
        %v5697 = vshll.u32 %v5337, 16
        %v5699 = vrot.slane %v5697, 5
        %v5700 = vsel %vm1956, %v5695, %v5699
        %v5702 = vshrl.u32 %v5338, 16
        %v5704 = vrot.slane %v5702, 4
        %v5705 = vshll.u32 %v5338, 16
        %v5707 = vrot.slane %v5705, 5
        %v5708 = vor.u32 %v5704, %v5707
        %v5709 = vrot.slane %v5708, 4
        %v5711 = vshll.u32 %v5339, 16
        %v5713 = vrot.slane %v5711, 5
        %v5714 = vsel %vm1956, %v5709, %v5713
        %v5715 = vshrl.u32 %v5339, 16
        %v5717 = vrot.slane %v5715, 4
        %v5718 = vor.u32 %v5717, %v5713
        %v5719 = vrot.slane %v5718, 4
        %v5721 = vshll.u32 %v5340, 16
        %v5723 = vrot.slane %v5721, 5
        %v5724 = vsel %vm1956, %v5719, %v5723
        %s5725 = scalar_lea.vmem %s604, 56 [#allocation7]
        %v5726 = vld [vmem:[%s5725] sm:$0xf]
        %v5727 = vld [vmem:[%s5725 + $0x4] sm:$0xf]
        %v5728 = vunpack.c.l.b16 %v5354
        %v5729 = vunpack.c.l.b16 %v5364
        %v5730 = vunpack.c.l.b16 %v5378
        %v5731 = vunpack.c.l.b16 %v5388
        %v5732 = vunpack.c.l.b16 %v5402
        %v5733 = vunpack.c.l.b16 %v5412
        %v5734 = vunpack.c.l.b16 %v5426
        %v5735 = vunpack.c.l.b16 %v5436
        %v5736 = vunpack.c.l.b16 %v5450
        %v5737 = vunpack.c.l.b16 %v5460
        %v5738 = vunpack.c.l.b16 %v5474
        %v5739 = vunpack.c.l.b16 %v5484
        %v5740 = vunpack.c.l.b16 %v5498
        %v5741 = vunpack.c.l.b16 %v5508
        %v5742 = vunpack.c.l.b16 %v5522
        %v5743 = vunpack.c.l.b16 %v5532
        %v5744 = vunpack.c.l.b16 %v5546
        %v5745 = vunpack.c.l.b16 %v5556
        %v5746 = vunpack.c.l.b16 %v5570
        %v5747 = vunpack.c.l.b16 %v5580
        %v5748 = vunpack.c.l.b16 %v5594
        %v5749 = vunpack.c.l.b16 %v5604
        %v5750 = vunpack.c.l.b16 %v5618
        %v5751 = vunpack.c.l.b16 %v5628
        %v5752 = vunpack.c.l.b16 %v5642
        %v5753 = vunpack.c.l.b16 %v5652
        %v5754 = vunpack.c.l.b16 %v5666
        %v5755 = vunpack.c.l.b16 %v5676
        %v5756 = vunpack.c.l.b16 %v5690
        %v5757 = vunpack.c.l.b16 %v5700
        %v5758 = vunpack.c.l.b16 %v5714
        %v5759 = vunpack.c.l.b16 %v5724
        %v5760 = vpack.c.b16 %v5729, %v5728
        %v5761 = vpack.c.b16 %v5731, %v5730
        %v5762 = vpack.c.b16 %v5733, %v5732
        %v5763 = vpack.c.b16 %v5735, %v5734
        %v5764 = vpack.c.b16 %v5737, %v5736
        %v5765 = vpack.c.b16 %v5739, %v5738
        %v5766 = vpack.c.b16 %v5741, %v5740
        %v5767 = vpack.c.b16 %v5743, %v5742
        %v5768 = vpack.c.b16 %v5745, %v5744
        %v5769 = vpack.c.b16 %v5747, %v5746
        %v5770 = vpack.c.b16 %v5749, %v5748
        %v5771 = vpack.c.b16 %v5751, %v5750
        %v5772 = vpack.c.b16 %v5753, %v5752
        %v5773 = vpack.c.b16 %v5755, %v5754
        %v5774 = vpack.c.b16 %v5757, %v5756
        %v5775 = vpack.c.b16 %v5759, %v5758
        %v5778 = vunpack.c.l.b16 %v5726
        %v5779 = vunpack.c.l.b16 %v5727
        %v5780 = vpack.c.b16 %v5779, %v5778
        %v5783 = vsel %vm2398, %v5760, 0
        %v5786 = vsel %vm2398, %v5761, 0
        %v5789 = vsel %vm2398, %v5762, 0
        %v5792 = vsel %vm2398, %v5763, 0
        %v5795 = vsel %vm2398, %v5764, 0
        %v5798 = vsel %vm2398, %v5765, 0
        %v5801 = vsel %vm2398, %v5766, 0
        %v5804 = vsel %vm2398, %v5767, 0
        %v5807 = vsel %vm2398, %v5768, 0
        %v5810 = vsel %vm2398, %v5769, 0
        %v5813 = vsel %vm2398, %v5770, 0
        %v5816 = vsel %vm2398, %v5771, 0
        %v5819 = vsel %vm2398, %v5772, 0
        %v5822 = vsel %vm2398, %v5773, 0
        %v5825 = vsel %vm2398, %v5774, 0
        %v5828 = vsel %vm2398, %v5775, 0
        %5830 = vmatprep.subr.bf16.mxu0 0
        %5831 = vmatpush1.bf16.msra.mxu0 0
        %5832 = vmatprep.subr.bf16.mxu0 0
        %5833 = vmatpush1.bf16.msra.mxu0 0
        %5834 = vmatprep.subr.bf16.mxu0 0
        %5835 = vmatpush1.bf16.msra.mxu0 0
        %5836 = vmatprep.subr.bf16.mxu0 0
        %5837 = vmatpush1.bf16.msra.mxu0 0
        %5838 = vmatprep.subr.bf16.mxu0 0
        %5839 = vmatpush1.bf16.msra.mxu0 0
        %5840 = vmatprep.subr.bf16.mxu0 0
        %5841 = vmatpush1.bf16.msra.mxu0 0
        %5842 = vmatprep.subr.bf16.mxu0 0
        %5843 = vmatpush1.bf16.msra.mxu0 0
        %5844 = vmatprep.subr.bf16.mxu0 0
        %5845 = vmatpush1.bf16.msra.mxu0 %v5780
        %5846 = vmatprep.subr.bf16.mxu0 0
        %5847 = vmatpush2.bf16.msra.mxu0 0
        %5848 = vmatprep.subr.bf16.mxu0 0
        %5849 = vmatpush2.bf16.msra.mxu0 0
        %5850 = vmatprep.subr.bf16.mxu0 0
        %5851 = vmatpush2.bf16.msra.mxu0 0
        %5852 = vmatprep.subr.bf16.mxu0 0
        %5853 = vmatpush2.bf16.msra.mxu0 0
        %5854 = vmatprep.subr.bf16.mxu0 0
        %5855 = vmatpush2.bf16.msra.mxu0 0
        %5856 = vmatprep.subr.bf16.mxu0 0
        %5857 = vmatpush2.bf16.msra.mxu0 0
        %5858 = vmatprep.subr.bf16.mxu0 0
        %5859 = vmatpush2.bf16.msra.mxu0 0
        %5860 = vmatprep.subr.bf16.mxu0 0
        %5861 = vmatpush2.bf16.msra.mxu0 0
        %5862 = vmatprep.mubr.bf16.mxu0 0
        %5863 = vmatmul.mubr.bf16.gmra.mxu0 %v5783
        %v5864 = vpop.f32.mrf.mxu0
        %v5865 = vadd.f32 0.0, %v5864
        %v5866 = vpop.f32.mrf.mxu0
        %v5867 = vpop.f32.mrf.mxu0
        %v5868 = vadd.f32 0.0, %v5867
        %v5869 = vpop.f32.mrf.mxu0
        %5870 = vmatprep.mubr.bf16.mxu0 0
        %5871 = vmatmul.mubr.bf16.gmra.mxu0 %v5786
        %v5872 = vpop.f32.mrf.mxu0
        %v5873 = vadd.f32 0.0, %v5872
        %v5874 = vpop.f32.mrf.mxu0
        %v5875 = vpop.f32.mrf.mxu0
        %v5876 = vadd.f32 0.0, %v5875
        %v5877 = vpop.f32.mrf.mxu0
        %5878 = vmatprep.mubr.bf16.mxu0 0
        %5879 = vmatmul.mubr.bf16.gmra.mxu0 %v5789
        %v5880 = vpop.f32.mrf.mxu0
        %v5881 = vadd.f32 0.0, %v5880
        %v5882 = vpop.f32.mrf.mxu0
        %v5883 = vpop.f32.mrf.mxu0
        %v5884 = vadd.f32 0.0, %v5883
        %v5885 = vpop.f32.mrf.mxu0
        %5886 = vmatprep.mubr.bf16.mxu0 0
        %5887 = vmatmul.mubr.bf16.gmra.mxu0 %v5792
        %v5888 = vpop.f32.mrf.mxu0
        %v5889 = vadd.f32 0.0, %v5888
        %v5890 = vpop.f32.mrf.mxu0
        %v5891 = vpop.f32.mrf.mxu0
        %v5892 = vadd.f32 0.0, %v5891
        %v5893 = vpop.f32.mrf.mxu0
        %5894 = vmatprep.mubr.bf16.mxu0 0
        %5895 = vmatmul.mubr.bf16.gmra.mxu0 %v5795
        %v5896 = vpop.f32.mrf.mxu0
        %v5897 = vadd.f32 0.0, %v5896
        %v5898 = vpop.f32.mrf.mxu0
        %v5899 = vpop.f32.mrf.mxu0
        %v5900 = vadd.f32 0.0, %v5899
        %v5901 = vpop.f32.mrf.mxu0
        %5902 = vmatprep.mubr.bf16.mxu0 0
        %5903 = vmatmul.mubr.bf16.gmra.mxu0 %v5798
        %v5904 = vpop.f32.mrf.mxu0
        %v5905 = vadd.f32 0.0, %v5904
        %v5906 = vpop.f32.mrf.mxu0
        %v5907 = vpop.f32.mrf.mxu0
        %v5908 = vadd.f32 0.0, %v5907
        %v5909 = vpop.f32.mrf.mxu0
        %5910 = vmatprep.mubr.bf16.mxu0 0
        %5911 = vmatmul.mubr.bf16.gmra.mxu0 %v5801
        %v5912 = vpop.f32.mrf.mxu0
        %v5913 = vadd.f32 0.0, %v5912
        %v5914 = vpop.f32.mrf.mxu0
        %v5915 = vpop.f32.mrf.mxu0
        %v5916 = vadd.f32 0.0, %v5915
        %v5917 = vpop.f32.mrf.mxu0
        %5918 = vmatprep.mubr.bf16.mxu0 0
        %5919 = vmatmul.mubr.bf16.gmra.mxu0 %v5804
        %v5920 = vpop.f32.mrf.mxu0
        %v5921 = vadd.f32 0.0, %v5920
        %v5922 = vpop.f32.mrf.mxu0
        %v5923 = vpop.f32.mrf.mxu0
        %v5924 = vadd.f32 0.0, %v5923
        %v5925 = vpop.f32.mrf.mxu0
        %5926 = vmatprep.mubr.bf16.mxu0 0
        %5927 = vmatmul.mubr.bf16.gmra.mxu0 %v5807
        %v5928 = vpop.f32.mrf.mxu0
        %v5929 = vadd.f32 0.0, %v5928
        %v5930 = vpop.f32.mrf.mxu0
        %v5931 = vpop.f32.mrf.mxu0
        %v5932 = vadd.f32 0.0, %v5931
        %v5933 = vpop.f32.mrf.mxu0
        %5934 = vmatprep.mubr.bf16.mxu0 0
        %5935 = vmatmul.mubr.bf16.gmra.mxu0 %v5810
        %v5936 = vpop.f32.mrf.mxu0
        %v5937 = vadd.f32 0.0, %v5936
        %v5938 = vpop.f32.mrf.mxu0
        %v5939 = vpop.f32.mrf.mxu0
        %v5940 = vadd.f32 0.0, %v5939
        %v5941 = vpop.f32.mrf.mxu0
        %5942 = vmatprep.mubr.bf16.mxu0 0
        %5943 = vmatmul.mubr.bf16.gmra.mxu0 %v5813
        %v5944 = vpop.f32.mrf.mxu0
        %v5945 = vadd.f32 0.0, %v5944
        %v5946 = vpop.f32.mrf.mxu0
        %v5947 = vpop.f32.mrf.mxu0
        %v5948 = vadd.f32 0.0, %v5947
        %v5949 = vpop.f32.mrf.mxu0
        %5950 = vmatprep.mubr.bf16.mxu0 0
        %5951 = vmatmul.mubr.bf16.gmra.mxu0 %v5816
        %v5952 = vpop.f32.mrf.mxu0
        %v5953 = vadd.f32 0.0, %v5952
        %v5954 = vpop.f32.mrf.mxu0
        %v5955 = vpop.f32.mrf.mxu0
        %v5956 = vadd.f32 0.0, %v5955
        %v5957 = vpop.f32.mrf.mxu0
        %5958 = vmatprep.mubr.bf16.mxu0 0
        %5959 = vmatmul.mubr.bf16.gmra.mxu0 %v5819
        %v5960 = vpop.f32.mrf.mxu0
        %v5961 = vadd.f32 0.0, %v5960
        %v5962 = vpop.f32.mrf.mxu0
        %v5963 = vpop.f32.mrf.mxu0
        %v5964 = vadd.f32 0.0, %v5963
        %v5965 = vpop.f32.mrf.mxu0
        %5966 = vmatprep.mubr.bf16.mxu0 0
        %5967 = vmatmul.mubr.bf16.gmra.mxu0 %v5822
        %v5968 = vpop.f32.mrf.mxu0
        %v5969 = vadd.f32 0.0, %v5968
        %v5970 = vpop.f32.mrf.mxu0
        %v5971 = vpop.f32.mrf.mxu0
        %v5972 = vadd.f32 0.0, %v5971
        %v5973 = vpop.f32.mrf.mxu0
        %5974 = vmatprep.mubr.bf16.mxu0 0
        %5975 = vmatmul.mubr.bf16.gmra.mxu0 %v5825
        %v5976 = vpop.f32.mrf.mxu0
        %v5977 = vadd.f32 0.0, %v5976
        %v5978 = vpop.f32.mrf.mxu0
        %v5979 = vpop.f32.mrf.mxu0
        %v5980 = vadd.f32 0.0, %v5979
        %v5981 = vpop.f32.mrf.mxu0
        %5982 = vmatprep.mubr.bf16.mxu0 0
        %5983 = vmatmul.mubr.bf16.gmra.mxu0 %v5828
        %v5984 = vpop.f32.mrf.mxu0
        %v5985 = vadd.f32 0.0, %v5984
        %v5986 = vpop.f32.mrf.mxu0
        %v5987 = vpop.f32.mrf.mxu0
        %v5988 = vadd.f32 0.0, %v5987
        %v5989 = vpop.f32.mrf.mxu0
        %5990 = vdwg.mxu0
        %v5991 = vadd.f32 %v5261, %v5865
        %v5992 = vadd.f32 %v5262, %v5868
        %v5993 = vadd.f32 %v5263, %v5873
        %v5994 = vadd.f32 %v5264, %v5876
        %v5995 = vadd.f32 %v5265, %v5881
        %v5996 = vadd.f32 %v5266, %v5884
        %v5997 = vadd.f32 %v5267, %v5889
        %v5998 = vadd.f32 %v5268, %v5892
        %v5999 = vadd.f32 %v5269, %v5897
        %v6000 = vadd.f32 %v5270, %v5900
        %v6001 = vadd.f32 %v5271, %v5905
        %v6002 = vadd.f32 %v5272, %v5908
        %v6003 = vadd.f32 %v5273, %v5913
        %v6004 = vadd.f32 %v5274, %v5916
        %v6005 = vadd.f32 %v5275, %v5921
        %v6006 = vadd.f32 %v5276, %v5924
        %v6007 = vadd.f32 %v5277, %v5929
        %v6008 = vadd.f32 %v5278, %v5932
        %v6009 = vadd.f32 %v5279, %v5937
        %v6010 = vadd.f32 %v5280, %v5940
        %v6011 = vadd.f32 %v5281, %v5945
        %v6012 = vadd.f32 %v5282, %v5948
        %v6013 = vadd.f32 %v5283, %v5953
        %v6014 = vadd.f32 %v5284, %v5956
        %v6015 = vadd.f32 %v5285, %v5961
        %v6016 = vadd.f32 %v5286, %v5964
        %v6017 = vadd.f32 %v5287, %v5969
        %v6018 = vadd.f32 %v5288, %v5972
        %v6019 = vadd.f32 %v5289, %v5977
        %v6020 = vadd.f32 %v5290, %v5980
        %v6021 = vadd.f32 %v5291, %v5985
        %v6022 = vadd.f32 %v5292, %v5988
        %v6023 = vld [vmem:[%s4930] sm:$0xe]
        %v6024 = vld [vmem:[%s4930 + $0xc] sm:$0xe]
        %v6025 = vld [vmem:[%s4930 + $0x18] sm:$0xe]
        %v6026 = vld [vmem:[%s4930 + $0x24] sm:$0xe]
        %v6027 = vld [vmem:[%s4930 + $0x30] sm:$0xe]
        %v6028 = vld [vmem:[%s4930 + $0x3c] sm:$0xe]
        %v6029 = vld [vmem:[%s4930 + $0x48] sm:$0xe]
        %v6030 = vld [vmem:[%s4930 + $0x54] sm:$0xe]
        %v6031 = vld [vmem:[%s4930 + $0x60] sm:$0xe]
        %v6032 = vld [vmem:[%s4930 + $0x6c] sm:$0xe]
        %v6033 = vld [vmem:[%s4930 + $0x78] sm:$0xe]
        %v6034 = vld [vmem:[%s4930 + $0x84] sm:$0xe]
        %v6035 = vld [vmem:[%s4930 + $0x90] sm:$0xe]
        %v6036 = vld [vmem:[%s4930 + $0x9c] sm:$0xe]
        %v6037 = vld [vmem:[%s4930 + $0xa8] sm:$0xe]
        %v6038 = vld [vmem:[%s4930 + $0xb4] sm:$0xe]
        %v6087 = vrot.slane %v6023, 5
        %v6088 = vrot.slane %v6087, 4
        %v6089 = vrot.slane %v5294, 5
        %v6090 = vsel %vm2953, %v6088, %v6089
        %v6091 = vrot.slane %v6089, 4
        %v6092 = vrot.slane %v5295, 5
        %v6093 = vsel %vm2953, %v6091, %v6092
        %v6094 = vrot.slane %v6024, 5
        %v6095 = vrot.slane %v6094, 4
        %v6096 = vrot.slane %v5297, 5
        %v6097 = vsel %vm2953, %v6095, %v6096
        %v6098 = vrot.slane %v6096, 4
        %v6099 = vrot.slane %v5298, 5
        %v6100 = vsel %vm2953, %v6098, %v6099
        %v6101 = vrot.slane %v6025, 5
        %v6102 = vrot.slane %v6101, 4
        %v6103 = vrot.slane %v5300, 5
        %v6104 = vsel %vm2953, %v6102, %v6103
        %v6105 = vrot.slane %v6103, 4
        %v6106 = vrot.slane %v5301, 5
        %v6107 = vsel %vm2953, %v6105, %v6106
        %v6108 = vrot.slane %v6026, 5
        %v6109 = vrot.slane %v6108, 4
        %v6110 = vrot.slane %v5303, 5
        %v6111 = vsel %vm2953, %v6109, %v6110
        %v6112 = vrot.slane %v6110, 4
        %v6113 = vrot.slane %v5304, 5
        %v6114 = vsel %vm2953, %v6112, %v6113
        %v6115 = vrot.slane %v6027, 5
        %v6116 = vrot.slane %v6115, 4
        %v6117 = vrot.slane %v5306, 5
        %v6118 = vsel %vm2953, %v6116, %v6117
        %v6119 = vrot.slane %v6117, 4
        %v6120 = vrot.slane %v5307, 5
        %v6121 = vsel %vm2953, %v6119, %v6120
        %v6122 = vrot.slane %v6028, 5
        %v6123 = vrot.slane %v6122, 4
        %v6124 = vrot.slane %v5309, 5
        %v6125 = vsel %vm2953, %v6123, %v6124
        %v6126 = vrot.slane %v6124, 4
        %v6127 = vrot.slane %v5310, 5
        %v6128 = vsel %vm2953, %v6126, %v6127
        %v6129 = vrot.slane %v6029, 5
        %v6130 = vrot.slane %v6129, 4
        %v6131 = vrot.slane %v5312, 5
        %v6132 = vsel %vm2953, %v6130, %v6131
        %v6133 = vrot.slane %v6131, 4
        %v6134 = vrot.slane %v5313, 5
        %v6135 = vsel %vm2953, %v6133, %v6134
        %v6136 = vrot.slane %v6030, 5
        %v6137 = vrot.slane %v6136, 4
        %v6138 = vrot.slane %v5315, 5
        %v6139 = vsel %vm2953, %v6137, %v6138
        %v6140 = vrot.slane %v6138, 4
        %v6141 = vrot.slane %v5316, 5
        %v6142 = vsel %vm2953, %v6140, %v6141
        %v6143 = vrot.slane %v6031, 5
        %v6144 = vrot.slane %v6143, 4
        %v6145 = vrot.slane %v5318, 5
        %v6146 = vsel %vm2953, %v6144, %v6145
        %v6147 = vrot.slane %v6145, 4
        %v6148 = vrot.slane %v5319, 5
        %v6149 = vsel %vm2953, %v6147, %v6148
        %v6150 = vrot.slane %v6032, 5
        %v6151 = vrot.slane %v6150, 4
        %v6152 = vrot.slane %v5321, 5
        %v6153 = vsel %vm2953, %v6151, %v6152
        %v6154 = vrot.slane %v6152, 4
        %v6155 = vrot.slane %v5322, 5
        %v6156 = vsel %vm2953, %v6154, %v6155
        %v6157 = vrot.slane %v6033, 5
        %v6158 = vrot.slane %v6157, 4
        %v6159 = vrot.slane %v5324, 5
        %v6160 = vsel %vm2953, %v6158, %v6159
        %v6161 = vrot.slane %v6159, 4
        %v6162 = vrot.slane %v5325, 5
        %v6163 = vsel %vm2953, %v6161, %v6162
        %v6164 = vrot.slane %v6034, 5
        %v6165 = vrot.slane %v6164, 4
        %v6166 = vrot.slane %v5327, 5
        %v6167 = vsel %vm2953, %v6165, %v6166
        %v6168 = vrot.slane %v6166, 4
        %v6169 = vrot.slane %v5328, 5
        %v6170 = vsel %vm2953, %v6168, %v6169
        %v6171 = vrot.slane %v6035, 5
        %v6172 = vrot.slane %v6171, 4
        %v6173 = vrot.slane %v5330, 5
        %v6174 = vsel %vm2953, %v6172, %v6173
        %v6175 = vrot.slane %v6173, 4
        %v6176 = vrot.slane %v5331, 5
        %v6177 = vsel %vm2953, %v6175, %v6176
        %v6178 = vrot.slane %v6036, 5
        %v6179 = vrot.slane %v6178, 4
        %v6180 = vrot.slane %v5333, 5
        %v6181 = vsel %vm2953, %v6179, %v6180
        %v6182 = vrot.slane %v6180, 4
        %v6183 = vrot.slane %v5334, 5
        %v6184 = vsel %vm2953, %v6182, %v6183
        %v6185 = vrot.slane %v6037, 5
        %v6186 = vrot.slane %v6185, 4
        %v6187 = vrot.slane %v5336, 5
        %v6188 = vsel %vm2953, %v6186, %v6187
        %v6189 = vrot.slane %v6187, 4
        %v6190 = vrot.slane %v5337, 5
        %v6191 = vsel %vm2953, %v6189, %v6190
        %v6192 = vrot.slane %v6038, 5
        %v6193 = vrot.slane %v6192, 4
        %v6194 = vrot.slane %v5339, 5
        %v6195 = vsel %vm2953, %v6193, %v6194
        %v6196 = vrot.slane %v6194, 4
        %v6197 = vrot.slane %v5340, 5
        %v6198 = vsel %vm2953, %v6196, %v6197
        %s6199 = scalar_lea.vmem %s604, 64 [#allocation7]
        %v6200 = vld [vmem:[%s6199] sm:$0xf]
        %v6201 = vld [vmem:[%s6199 + $0x4] sm:$0xf]
        %v6202 = vunpack.c.l.b16 %v6090
        %v6203 = vunpack.c.l.b16 %v6093
        %v6204 = vunpack.c.l.b16 %v6097
        %v6205 = vunpack.c.l.b16 %v6100
        %v6206 = vunpack.c.l.b16 %v6104
        %v6207 = vunpack.c.l.b16 %v6107
        %v6208 = vunpack.c.l.b16 %v6111
        %v6209 = vunpack.c.l.b16 %v6114
        %v6210 = vunpack.c.l.b16 %v6118
        %v6211 = vunpack.c.l.b16 %v6121
        %v6212 = vunpack.c.l.b16 %v6125
        %v6213 = vunpack.c.l.b16 %v6128
        %v6214 = vunpack.c.l.b16 %v6132
        %v6215 = vunpack.c.l.b16 %v6135
        %v6216 = vunpack.c.l.b16 %v6139
        %v6217 = vunpack.c.l.b16 %v6142
        %v6218 = vunpack.c.l.b16 %v6146
        %v6219 = vunpack.c.l.b16 %v6149
        %v6220 = vunpack.c.l.b16 %v6153
        %v6221 = vunpack.c.l.b16 %v6156
        %v6222 = vunpack.c.l.b16 %v6160
        %v6223 = vunpack.c.l.b16 %v6163
        %v6224 = vunpack.c.l.b16 %v6167
        %v6225 = vunpack.c.l.b16 %v6170
        %v6226 = vunpack.c.l.b16 %v6174
        %v6227 = vunpack.c.l.b16 %v6177
        %v6228 = vunpack.c.l.b16 %v6181
        %v6229 = vunpack.c.l.b16 %v6184
        %v6230 = vunpack.c.l.b16 %v6188
        %v6231 = vunpack.c.l.b16 %v6191
        %v6232 = vunpack.c.l.b16 %v6195
        %v6233 = vunpack.c.l.b16 %v6198
        %v6234 = vpack.c.b16 %v6203, %v6202
        %v6235 = vpack.c.b16 %v6205, %v6204
        %v6236 = vpack.c.b16 %v6207, %v6206
        %v6237 = vpack.c.b16 %v6209, %v6208
        %v6238 = vpack.c.b16 %v6211, %v6210
        %v6239 = vpack.c.b16 %v6213, %v6212
        %v6240 = vpack.c.b16 %v6215, %v6214
        %v6241 = vpack.c.b16 %v6217, %v6216
        %v6242 = vpack.c.b16 %v6219, %v6218
        %v6243 = vpack.c.b16 %v6221, %v6220
        %v6244 = vpack.c.b16 %v6223, %v6222
        %v6245 = vpack.c.b16 %v6225, %v6224
        %v6246 = vpack.c.b16 %v6227, %v6226
        %v6247 = vpack.c.b16 %v6229, %v6228
        %v6248 = vpack.c.b16 %v6231, %v6230
        %v6249 = vpack.c.b16 %v6233, %v6232
        %v6252 = vunpack.c.l.b16 %v6200
        %v6253 = vunpack.c.l.b16 %v6201
        %v6254 = vpack.c.b16 %v6253, %v6252
        %v6257 = vsel %vm2398, %v6234, 0
        %v6260 = vsel %vm2398, %v6235, 0
        %v6263 = vsel %vm2398, %v6236, 0
        %v6266 = vsel %vm2398, %v6237, 0
        %v6269 = vsel %vm2398, %v6238, 0
        %v6272 = vsel %vm2398, %v6239, 0
        %v6275 = vsel %vm2398, %v6240, 0
        %v6278 = vsel %vm2398, %v6241, 0
        %v6281 = vsel %vm2398, %v6242, 0
        %v6284 = vsel %vm2398, %v6243, 0
        %v6287 = vsel %vm2398, %v6244, 0
        %v6290 = vsel %vm2398, %v6245, 0
        %v6293 = vsel %vm2398, %v6246, 0
        %v6296 = vsel %vm2398, %v6247, 0
        %v6299 = vsel %vm2398, %v6248, 0
        %v6302 = vsel %vm2398, %v6249, 0
        %6304 = vmatprep.subr.bf16.mxu0 0
        %6305 = vmatpush1.bf16.msra.mxu0 0
        %6306 = vmatprep.subr.bf16.mxu0 0
        %6307 = vmatpush1.bf16.msra.mxu0 0
        %6308 = vmatprep.subr.bf16.mxu0 0
        %6309 = vmatpush1.bf16.msra.mxu0 0
        %6310 = vmatprep.subr.bf16.mxu0 0
        %6311 = vmatpush1.bf16.msra.mxu0 0
        %6312 = vmatprep.subr.bf16.mxu0 0
        %6313 = vmatpush1.bf16.msra.mxu0 0
        %6314 = vmatprep.subr.bf16.mxu0 0
        %6315 = vmatpush1.bf16.msra.mxu0 0
        %6316 = vmatprep.subr.bf16.mxu0 0
        %6317 = vmatpush1.bf16.msra.mxu0 0
        %6318 = vmatprep.subr.bf16.mxu0 0
        %6319 = vmatpush1.bf16.msra.mxu0 %v6254
        %6320 = vmatprep.subr.bf16.mxu0 0
        %6321 = vmatpush2.bf16.msra.mxu0 0
        %6322 = vmatprep.subr.bf16.mxu0 0
        %6323 = vmatpush2.bf16.msra.mxu0 0
        %6324 = vmatprep.subr.bf16.mxu0 0
        %6325 = vmatpush2.bf16.msra.mxu0 0
        %6326 = vmatprep.subr.bf16.mxu0 0
        %6327 = vmatpush2.bf16.msra.mxu0 0
        %6328 = vmatprep.subr.bf16.mxu0 0
        %6329 = vmatpush2.bf16.msra.mxu0 0
        %6330 = vmatprep.subr.bf16.mxu0 0
        %6331 = vmatpush2.bf16.msra.mxu0 0
        %6332 = vmatprep.subr.bf16.mxu0 0
        %6333 = vmatpush2.bf16.msra.mxu0 0
        %6334 = vmatprep.subr.bf16.mxu0 0
        %6335 = vmatpush2.bf16.msra.mxu0 0
        %6336 = vmatprep.mubr.bf16.mxu0 0
        %6337 = vmatmul.mubr.bf16.gmra.mxu0 %v6257
        %v6338 = vpop.f32.mrf.mxu0
        %v6339 = vadd.f32 0.0, %v6338
        %v6340 = vpop.f32.mrf.mxu0
        %v6341 = vpop.f32.mrf.mxu0
        %v6342 = vadd.f32 0.0, %v6341
        %v6343 = vpop.f32.mrf.mxu0
        %6344 = vmatprep.mubr.bf16.mxu0 0
        %6345 = vmatmul.mubr.bf16.gmra.mxu0 %v6260
        %v6346 = vpop.f32.mrf.mxu0
        %v6347 = vadd.f32 0.0, %v6346
        %v6348 = vpop.f32.mrf.mxu0
        %v6349 = vpop.f32.mrf.mxu0
        %v6350 = vadd.f32 0.0, %v6349
        %v6351 = vpop.f32.mrf.mxu0
        %6352 = vmatprep.mubr.bf16.mxu0 0
        %6353 = vmatmul.mubr.bf16.gmra.mxu0 %v6263
        %v6354 = vpop.f32.mrf.mxu0
        %v6355 = vadd.f32 0.0, %v6354
        %v6356 = vpop.f32.mrf.mxu0
        %v6357 = vpop.f32.mrf.mxu0
        %v6358 = vadd.f32 0.0, %v6357
        %v6359 = vpop.f32.mrf.mxu0
        %6360 = vmatprep.mubr.bf16.mxu0 0
        %6361 = vmatmul.mubr.bf16.gmra.mxu0 %v6266
        %v6362 = vpop.f32.mrf.mxu0
        %v6363 = vadd.f32 0.0, %v6362
        %v6364 = vpop.f32.mrf.mxu0
        %v6365 = vpop.f32.mrf.mxu0
        %v6366 = vadd.f32 0.0, %v6365
        %v6367 = vpop.f32.mrf.mxu0
        %6368 = vmatprep.mubr.bf16.mxu0 0
        %6369 = vmatmul.mubr.bf16.gmra.mxu0 %v6269
        %v6370 = vpop.f32.mrf.mxu0
        %v6371 = vadd.f32 0.0, %v6370
        %v6372 = vpop.f32.mrf.mxu0
        %v6373 = vpop.f32.mrf.mxu0
        %v6374 = vadd.f32 0.0, %v6373
        %v6375 = vpop.f32.mrf.mxu0
        %6376 = vmatprep.mubr.bf16.mxu0 0
        %6377 = vmatmul.mubr.bf16.gmra.mxu0 %v6272
        %v6378 = vpop.f32.mrf.mxu0
        %v6379 = vadd.f32 0.0, %v6378
        %v6380 = vpop.f32.mrf.mxu0
        %v6381 = vpop.f32.mrf.mxu0
        %v6382 = vadd.f32 0.0, %v6381
        %v6383 = vpop.f32.mrf.mxu0
        %6384 = vmatprep.mubr.bf16.mxu0 0
        %6385 = vmatmul.mubr.bf16.gmra.mxu0 %v6275
        %v6386 = vpop.f32.mrf.mxu0
        %v6387 = vadd.f32 0.0, %v6386
        %v6388 = vpop.f32.mrf.mxu0
        %v6389 = vpop.f32.mrf.mxu0
        %v6390 = vadd.f32 0.0, %v6389
        %v6391 = vpop.f32.mrf.mxu0
        %6392 = vmatprep.mubr.bf16.mxu0 0
        %6393 = vmatmul.mubr.bf16.gmra.mxu0 %v6278
        %v6394 = vpop.f32.mrf.mxu0
        %v6395 = vadd.f32 0.0, %v6394
        %v6396 = vpop.f32.mrf.mxu0
        %v6397 = vpop.f32.mrf.mxu0
        %v6398 = vadd.f32 0.0, %v6397
        %v6399 = vpop.f32.mrf.mxu0
        %6400 = vmatprep.mubr.bf16.mxu0 0
        %6401 = vmatmul.mubr.bf16.gmra.mxu0 %v6281
        %v6402 = vpop.f32.mrf.mxu0
        %v6403 = vadd.f32 0.0, %v6402
        %v6404 = vpop.f32.mrf.mxu0
        %v6405 = vpop.f32.mrf.mxu0
        %v6406 = vadd.f32 0.0, %v6405
        %v6407 = vpop.f32.mrf.mxu0
        %6408 = vmatprep.mubr.bf16.mxu0 0
        %6409 = vmatmul.mubr.bf16.gmra.mxu0 %v6284
        %v6410 = vpop.f32.mrf.mxu0
        %v6411 = vadd.f32 0.0, %v6410
        %v6412 = vpop.f32.mrf.mxu0
        %v6413 = vpop.f32.mrf.mxu0
        %v6414 = vadd.f32 0.0, %v6413
        %v6415 = vpop.f32.mrf.mxu0
        %6416 = vmatprep.mubr.bf16.mxu0 0
        %6417 = vmatmul.mubr.bf16.gmra.mxu0 %v6287
        %v6418 = vpop.f32.mrf.mxu0
        %v6419 = vadd.f32 0.0, %v6418
        %v6420 = vpop.f32.mrf.mxu0
        %v6421 = vpop.f32.mrf.mxu0
        %v6422 = vadd.f32 0.0, %v6421
        %v6423 = vpop.f32.mrf.mxu0
        %6424 = vmatprep.mubr.bf16.mxu0 0
        %6425 = vmatmul.mubr.bf16.gmra.mxu0 %v6290
        %v6426 = vpop.f32.mrf.mxu0
        %v6427 = vadd.f32 0.0, %v6426
        %v6428 = vpop.f32.mrf.mxu0
        %v6429 = vpop.f32.mrf.mxu0
        %v6430 = vadd.f32 0.0, %v6429
        %v6431 = vpop.f32.mrf.mxu0
        %6432 = vmatprep.mubr.bf16.mxu0 0
        %6433 = vmatmul.mubr.bf16.gmra.mxu0 %v6293
        %v6434 = vpop.f32.mrf.mxu0
        %v6435 = vadd.f32 0.0, %v6434
        %v6436 = vpop.f32.mrf.mxu0
        %v6437 = vpop.f32.mrf.mxu0
        %v6438 = vadd.f32 0.0, %v6437
        %v6439 = vpop.f32.mrf.mxu0
        %6440 = vmatprep.mubr.bf16.mxu0 0
        %6441 = vmatmul.mubr.bf16.gmra.mxu0 %v6296
        %v6442 = vpop.f32.mrf.mxu0
        %v6443 = vadd.f32 0.0, %v6442
        %v6444 = vpop.f32.mrf.mxu0
        %v6445 = vpop.f32.mrf.mxu0
        %v6446 = vadd.f32 0.0, %v6445
        %v6447 = vpop.f32.mrf.mxu0
        %6448 = vmatprep.mubr.bf16.mxu0 0
        %6449 = vmatmul.mubr.bf16.gmra.mxu0 %v6299
        %v6450 = vpop.f32.mrf.mxu0
        %v6451 = vadd.f32 0.0, %v6450
        %v6452 = vpop.f32.mrf.mxu0
        %v6453 = vpop.f32.mrf.mxu0
        %v6454 = vadd.f32 0.0, %v6453
        %v6455 = vpop.f32.mrf.mxu0
        %6456 = vmatprep.mubr.bf16.mxu0 0
        %6457 = vmatmul.mubr.bf16.gmra.mxu0 %v6302
        %v6458 = vpop.f32.mrf.mxu0
        %v6459 = vadd.f32 0.0, %v6458
        %v6460 = vpop.f32.mrf.mxu0
        %v6461 = vpop.f32.mrf.mxu0
        %v6462 = vadd.f32 0.0, %v6461
        %v6463 = vpop.f32.mrf.mxu0
        %6464 = vdwg.mxu0
        %v6465 = vadd.f32 %v5991, %v6339
        %v6466 = vadd.f32 %v5992, %v6342
        %v6467 = vadd.f32 %v5993, %v6347
        %v6468 = vadd.f32 %v5994, %v6350
        %v6469 = vadd.f32 %v5995, %v6355
        %v6470 = vadd.f32 %v5996, %v6358
        %v6471 = vadd.f32 %v5997, %v6363
        %v6472 = vadd.f32 %v5998, %v6366
        %v6473 = vadd.f32 %v5999, %v6371
        %v6474 = vadd.f32 %v6000, %v6374
        %v6475 = vadd.f32 %v6001, %v6379
        %v6476 = vadd.f32 %v6002, %v6382
        %v6477 = vadd.f32 %v6003, %v6387
        %v6478 = vadd.f32 %v6004, %v6390
        %v6479 = vadd.f32 %v6005, %v6395
        %v6480 = vadd.f32 %v6006, %v6398
        %v6481 = vadd.f32 %v6007, %v6403
        %v6482 = vadd.f32 %v6008, %v6406
        %v6483 = vadd.f32 %v6009, %v6411
        %v6484 = vadd.f32 %v6010, %v6414
        %v6485 = vadd.f32 %v6011, %v6419
        %v6486 = vadd.f32 %v6012, %v6422
        %v6487 = vadd.f32 %v6013, %v6427
        %v6488 = vadd.f32 %v6014, %v6430
        %v6489 = vadd.f32 %v6015, %v6435
        %v6490 = vadd.f32 %v6016, %v6438
        %v6491 = vadd.f32 %v6017, %v6443
        %v6492 = vadd.f32 %v6018, %v6446
        %v6493 = vadd.f32 %v6019, %v6451
        %v6494 = vadd.f32 %v6020, %v6454
        %v6495 = vadd.f32 %v6021, %v6459
        %v6496 = vadd.f32 %v6022, %v6462
        %v6497 = vld [vmem:[%s728] sm:$0x1]
        %v6499 = vlaneseq
        %v6500 = vshrl.u32 %v6499, 7
        %v6501 = vsub.s32 0, %v6500
        %v6502 = vrot.slane %v6497, %v6501
        %v6504 = vmul.f32 %v6465, %v6502
        %v6505 = vmul.f32 %v6466, %v6502
        %v6506 = vmul.f32 %v6467, %v6502
        %v6507 = vmul.f32 %v6468, %v6502
        %v6508 = vmul.f32 %v6469, %v6502
        %v6509 = vmul.f32 %v6470, %v6502
        %v6510 = vmul.f32 %v6471, %v6502
        %v6511 = vmul.f32 %v6472, %v6502
        %v6512 = vmul.f32 %v6473, %v6502
        %v6513 = vmul.f32 %v6474, %v6502
        %v6514 = vmul.f32 %v6475, %v6502
        %v6515 = vmul.f32 %v6476, %v6502
        %v6516 = vmul.f32 %v6477, %v6502
        %v6517 = vmul.f32 %v6478, %v6502
        %v6518 = vmul.f32 %v6479, %v6502
        %v6519 = vmul.f32 %v6480, %v6502
        %v6520 = vmul.f32 %v6481, %v6502
        %v6521 = vmul.f32 %v6482, %v6502
        %v6522 = vmul.f32 %v6483, %v6502
        %v6523 = vmul.f32 %v6484, %v6502
        %v6524 = vmul.f32 %v6485, %v6502
        %v6525 = vmul.f32 %v6486, %v6502
        %v6526 = vmul.f32 %v6487, %v6502
        %v6527 = vmul.f32 %v6488, %v6502
        %v6528 = vmul.f32 %v6489, %v6502
        %v6529 = vmul.f32 %v6490, %v6502
        %v6530 = vmul.f32 %v6491, %v6502
        %v6531 = vmul.f32 %v6492, %v6502
        %v6532 = vmul.f32 %v6493, %v6502
        %v6533 = vmul.f32 %v6494, %v6502
        %v6534 = vmul.f32 %v6495, %v6502
        %v6535 = vmul.f32 %v6496, %v6502
        %v6536 = vld [vmem:[%s731] sm:$0x1]
        %v6538 = vlaneseq
        %v6539 = vshrl.u32 %v6538, 7
        %v6540 = vsub.s32 0, %v6539
        %v6541 = vrot.slane %v6536, %v6540
        %v6543 = vadd.f32 %v6504, %v6541
        %v6544 = vadd.f32 %v6505, %v6541
        %v6545 = vadd.f32 %v6506, %v6541
        %v6546 = vadd.f32 %v6507, %v6541
        %v6547 = vadd.f32 %v6508, %v6541
        %v6548 = vadd.f32 %v6509, %v6541
        %v6549 = vadd.f32 %v6510, %v6541
        %v6550 = vadd.f32 %v6511, %v6541
        %v6551 = vadd.f32 %v6512, %v6541
        %v6552 = vadd.f32 %v6513, %v6541
        %v6553 = vadd.f32 %v6514, %v6541
        %v6554 = vadd.f32 %v6515, %v6541
        %v6555 = vadd.f32 %v6516, %v6541
        %v6556 = vadd.f32 %v6517, %v6541
        %v6557 = vadd.f32 %v6518, %v6541
        %v6558 = vadd.f32 %v6519, %v6541
        %v6559 = vadd.f32 %v6520, %v6541
        %v6560 = vadd.f32 %v6521, %v6541
        %v6561 = vadd.f32 %v6522, %v6541
        %v6562 = vadd.f32 %v6523, %v6541
        %v6563 = vadd.f32 %v6524, %v6541
        %v6564 = vadd.f32 %v6525, %v6541
        %v6565 = vadd.f32 %v6526, %v6541
        %v6566 = vadd.f32 %v6527, %v6541
        %v6567 = vadd.f32 %v6528, %v6541
        %v6568 = vadd.f32 %v6529, %v6541
        %v6569 = vadd.f32 %v6530, %v6541
        %v6570 = vadd.f32 %v6531, %v6541
        %v6571 = vadd.f32 %v6532, %v6541
        %v6572 = vadd.f32 %v6533, %v6541
        %v6573 = vadd.f32 %v6534, %v6541
        %v6574 = vadd.f32 %v6535, %v6541
        %v6575 = vmax.f32 %v6543, 0.0
        %v6576 = vmax.f32 %v6544, 0.0
        %v6577 = vmax.f32 %v6545, 0.0
        %v6578 = vmax.f32 %v6546, 0.0
        %v6579 = vmax.f32 %v6547, 0.0
        %v6580 = vmax.f32 %v6548, 0.0
        %v6581 = vmax.f32 %v6549, 0.0
        %v6582 = vmax.f32 %v6550, 0.0
        %v6583 = vmax.f32 %v6551, 0.0
        %v6584 = vmax.f32 %v6552, 0.0
        %v6585 = vmax.f32 %v6553, 0.0
        %v6586 = vmax.f32 %v6554, 0.0
        %v6587 = vmax.f32 %v6555, 0.0
        %v6588 = vmax.f32 %v6556, 0.0
        %v6589 = vmax.f32 %v6557, 0.0
        %v6590 = vmax.f32 %v6558, 0.0
        %v6591 = vmax.f32 %v6559, 0.0
        %v6592 = vmax.f32 %v6560, 0.0
        %v6593 = vmax.f32 %v6561, 0.0
        %v6594 = vmax.f32 %v6562, 0.0
        %v6595 = vmax.f32 %v6563, 0.0
        %v6596 = vmax.f32 %v6564, 0.0
        %v6597 = vmax.f32 %v6565, 0.0
        %v6598 = vmax.f32 %v6566, 0.0
        %v6599 = vmax.f32 %v6567, 0.0
        %v6600 = vmax.f32 %v6568, 0.0
        %v6601 = vmax.f32 %v6569, 0.0
        %v6602 = vmax.f32 %v6570, 0.0
        %v6603 = vmax.f32 %v6571, 0.0
        %v6604 = vmax.f32 %v6572, 0.0
        %v6605 = vmax.f32 %v6573, 0.0
        %v6606 = vmax.f32 %v6574, 0.0
        %v6607 = vpack.c.bf16 %v6576, %v6575
        %v6608 = vpack.c.bf16 %v6578, %v6577
        %v6609 = vpack.c.bf16 %v6580, %v6579
        %v6610 = vpack.c.bf16 %v6582, %v6581
        %v6611 = vpack.c.bf16 %v6584, %v6583
        %v6612 = vpack.c.bf16 %v6586, %v6585
        %v6613 = vpack.c.bf16 %v6588, %v6587
        %v6614 = vpack.c.bf16 %v6590, %v6589
        %v6615 = vpack.c.bf16 %v6592, %v6591
        %v6616 = vpack.c.bf16 %v6594, %v6593
        %v6617 = vpack.c.bf16 %v6596, %v6595
        %v6618 = vpack.c.bf16 %v6598, %v6597
        %v6619 = vpack.c.bf16 %v6600, %v6599
        %v6620 = vpack.c.bf16 %v6602, %v6601
        %v6621 = vpack.c.bf16 %v6604, %v6603
        %v6622 = vpack.c.bf16 %v6606, %v6605
        %v6623 = vld [vmem:[%s613] sm:$0xf]
        %v6624 = vld [vmem:[%s613 + $0x4] sm:$0xf]
        %v6627 = vunpack.c.l.b16 %v6623
        %v6628 = vunpack.c.l.b16 %v6624
        %v6629 = vpack.c.b16 %v6628, %v6627
        %v6632 = vsel %vm2398, %v6607, 0
        %v6635 = vsel %vm2398, %v6608, 0
        %v6638 = vsel %vm2398, %v6609, 0
        %v6641 = vsel %vm2398, %v6610, 0
        %v6644 = vsel %vm2398, %v6611, 0
        %v6647 = vsel %vm2398, %v6612, 0
        %v6650 = vsel %vm2398, %v6613, 0
        %v6653 = vsel %vm2398, %v6614, 0
        %v6656 = vsel %vm2398, %v6615, 0
        %v6659 = vsel %vm2398, %v6616, 0
        %v6662 = vsel %vm2398, %v6617, 0
        %v6665 = vsel %vm2398, %v6618, 0
        %v6668 = vsel %vm2398, %v6619, 0
        %v6671 = vsel %vm2398, %v6620, 0
        %v6674 = vsel %vm2398, %v6621, 0
        %v6677 = vsel %vm2398, %v6622, 0
        %6679 = vmatprep.subr.bf16.mxu0 0
        %6680 = vmatpush1.bf16.msra.mxu0 0
        %6681 = vmatprep.subr.bf16.mxu0 0
        %6682 = vmatpush1.bf16.msra.mxu0 0
        %6683 = vmatprep.subr.bf16.mxu0 0
        %6684 = vmatpush1.bf16.msra.mxu0 0
        %6685 = vmatprep.subr.bf16.mxu0 0
        %6686 = vmatpush1.bf16.msra.mxu0 0
        %6687 = vmatprep.subr.bf16.mxu0 0
        %6688 = vmatpush1.bf16.msra.mxu0 0
        %6689 = vmatprep.subr.bf16.mxu0 0
        %6690 = vmatpush1.bf16.msra.mxu0 0
        %6691 = vmatprep.subr.bf16.mxu0 0
        %6692 = vmatpush1.bf16.msra.mxu0 0
        %6693 = vmatprep.subr.bf16.mxu0 0
        %6694 = vmatpush1.bf16.msra.mxu0 %v6629
        %6695 = vmatprep.subr.bf16.mxu0 0
        %6696 = vmatpush2.bf16.msra.mxu0 0
        %6697 = vmatprep.subr.bf16.mxu0 0
        %6698 = vmatpush2.bf16.msra.mxu0 0
        %6699 = vmatprep.subr.bf16.mxu0 0
        %6700 = vmatpush2.bf16.msra.mxu0 0
        %6701 = vmatprep.subr.bf16.mxu0 0
        %6702 = vmatpush2.bf16.msra.mxu0 0
        %6703 = vmatprep.subr.bf16.mxu0 0
        %6704 = vmatpush2.bf16.msra.mxu0 0
        %6705 = vmatprep.subr.bf16.mxu0 0
        %6706 = vmatpush2.bf16.msra.mxu0 0
        %6707 = vmatprep.subr.bf16.mxu0 0
        %6708 = vmatpush2.bf16.msra.mxu0 0
        %6709 = vmatprep.subr.bf16.mxu0 0
        %6710 = vmatpush2.bf16.msra.mxu0 0
        %6711 = vmatprep.mubr.bf16.mxu0 0
        %6712 = vmatmul.mubr.bf16.gmra.mxu0 %v6632
        %v6713 = vpop.f32.mrf.mxu0
        %v6714 = vadd.f32 0.0, %v6713
        %v6715 = vpop.f32.mrf.mxu0
        %v6716 = vpop.f32.mrf.mxu0
        %v6717 = vadd.f32 0.0, %v6716
        %v6718 = vpop.f32.mrf.mxu0
        %6719 = vmatprep.mubr.bf16.mxu0 0
        %6720 = vmatmul.mubr.bf16.gmra.mxu0 %v6635
        %v6721 = vpop.f32.mrf.mxu0
        %v6722 = vadd.f32 0.0, %v6721
        %v6723 = vpop.f32.mrf.mxu0
        %v6724 = vpop.f32.mrf.mxu0
        %v6725 = vadd.f32 0.0, %v6724
        %v6726 = vpop.f32.mrf.mxu0
        %6727 = vmatprep.mubr.bf16.mxu0 0
        %6728 = vmatmul.mubr.bf16.gmra.mxu0 %v6638
        %v6729 = vpop.f32.mrf.mxu0
        %v6730 = vadd.f32 0.0, %v6729
        %v6731 = vpop.f32.mrf.mxu0
        %v6732 = vpop.f32.mrf.mxu0
        %v6733 = vadd.f32 0.0, %v6732
        %v6734 = vpop.f32.mrf.mxu0
        %6735 = vmatprep.mubr.bf16.mxu0 0
        %6736 = vmatmul.mubr.bf16.gmra.mxu0 %v6641
        %v6737 = vpop.f32.mrf.mxu0
        %v6738 = vadd.f32 0.0, %v6737
        %v6739 = vpop.f32.mrf.mxu0
        %v6740 = vpop.f32.mrf.mxu0
        %v6741 = vadd.f32 0.0, %v6740
        %v6742 = vpop.f32.mrf.mxu0
        %6743 = vmatprep.mubr.bf16.mxu0 0
        %6744 = vmatmul.mubr.bf16.gmra.mxu0 %v6644
        %v6745 = vpop.f32.mrf.mxu0
        %v6746 = vadd.f32 0.0, %v6745
        %v6747 = vpop.f32.mrf.mxu0
        %v6748 = vpop.f32.mrf.mxu0
        %v6749 = vadd.f32 0.0, %v6748
        %v6750 = vpop.f32.mrf.mxu0
        %6751 = vmatprep.mubr.bf16.mxu0 0
        %6752 = vmatmul.mubr.bf16.gmra.mxu0 %v6647
        %v6753 = vpop.f32.mrf.mxu0
        %v6754 = vadd.f32 0.0, %v6753
        %v6755 = vpop.f32.mrf.mxu0
        %v6756 = vpop.f32.mrf.mxu0
        %v6757 = vadd.f32 0.0, %v6756
        %v6758 = vpop.f32.mrf.mxu0
        %6759 = vmatprep.mubr.bf16.mxu0 0
        %6760 = vmatmul.mubr.bf16.gmra.mxu0 %v6650
        %v6761 = vpop.f32.mrf.mxu0
        %v6762 = vadd.f32 0.0, %v6761
        %v6763 = vpop.f32.mrf.mxu0
        %v6764 = vpop.f32.mrf.mxu0
        %v6765 = vadd.f32 0.0, %v6764
        %v6766 = vpop.f32.mrf.mxu0
        %6767 = vmatprep.mubr.bf16.mxu0 0
        %6768 = vmatmul.mubr.bf16.gmra.mxu0 %v6653
        %v6769 = vpop.f32.mrf.mxu0
        %v6770 = vadd.f32 0.0, %v6769
        %v6771 = vpop.f32.mrf.mxu0
        %v6772 = vpop.f32.mrf.mxu0
        %v6773 = vadd.f32 0.0, %v6772
        %v6774 = vpop.f32.mrf.mxu0
        %6775 = vmatprep.mubr.bf16.mxu0 0
        %6776 = vmatmul.mubr.bf16.gmra.mxu0 %v6656
        %v6777 = vpop.f32.mrf.mxu0
        %v6778 = vadd.f32 0.0, %v6777
        %v6779 = vpop.f32.mrf.mxu0
        %v6780 = vpop.f32.mrf.mxu0
        %v6781 = vadd.f32 0.0, %v6780
        %v6782 = vpop.f32.mrf.mxu0
        %6783 = vmatprep.mubr.bf16.mxu0 0
        %6784 = vmatmul.mubr.bf16.gmra.mxu0 %v6659
        %v6785 = vpop.f32.mrf.mxu0
        %v6786 = vadd.f32 0.0, %v6785
        %v6787 = vpop.f32.mrf.mxu0
        %v6788 = vpop.f32.mrf.mxu0
        %v6789 = vadd.f32 0.0, %v6788
        %v6790 = vpop.f32.mrf.mxu0
        %6791 = vmatprep.mubr.bf16.mxu0 0
        %6792 = vmatmul.mubr.bf16.gmra.mxu0 %v6662
        %v6793 = vpop.f32.mrf.mxu0
        %v6794 = vadd.f32 0.0, %v6793
        %v6795 = vpop.f32.mrf.mxu0
        %v6796 = vpop.f32.mrf.mxu0
        %v6797 = vadd.f32 0.0, %v6796
        %v6798 = vpop.f32.mrf.mxu0
        %6799 = vmatprep.mubr.bf16.mxu0 0
        %6800 = vmatmul.mubr.bf16.gmra.mxu0 %v6665
        %v6801 = vpop.f32.mrf.mxu0
        %v6802 = vadd.f32 0.0, %v6801
        %v6803 = vpop.f32.mrf.mxu0
        %v6804 = vpop.f32.mrf.mxu0
        %v6805 = vadd.f32 0.0, %v6804
        %v6806 = vpop.f32.mrf.mxu0
        %6807 = vmatprep.mubr.bf16.mxu0 0
        %6808 = vmatmul.mubr.bf16.gmra.mxu0 %v6668
        %v6809 = vpop.f32.mrf.mxu0
        %v6810 = vadd.f32 0.0, %v6809
        %v6811 = vpop.f32.mrf.mxu0
        %v6812 = vpop.f32.mrf.mxu0
        %v6813 = vadd.f32 0.0, %v6812
        %v6814 = vpop.f32.mrf.mxu0
        %6815 = vmatprep.mubr.bf16.mxu0 0
        %6816 = vmatmul.mubr.bf16.gmra.mxu0 %v6671
        %v6817 = vpop.f32.mrf.mxu0
        %v6818 = vadd.f32 0.0, %v6817
        %v6819 = vpop.f32.mrf.mxu0
        %v6820 = vpop.f32.mrf.mxu0
        %v6821 = vadd.f32 0.0, %v6820
        %v6822 = vpop.f32.mrf.mxu0
        %6823 = vmatprep.mubr.bf16.mxu0 0
        %6824 = vmatmul.mubr.bf16.gmra.mxu0 %v6674
        %v6825 = vpop.f32.mrf.mxu0
        %v6826 = vadd.f32 0.0, %v6825
        %v6827 = vpop.f32.mrf.mxu0
        %v6828 = vpop.f32.mrf.mxu0
        %v6829 = vadd.f32 0.0, %v6828
        %v6830 = vpop.f32.mrf.mxu0
        %6831 = vmatprep.mubr.bf16.mxu0 0
        %6832 = vmatmul.mubr.bf16.gmra.mxu0 %v6677
        %v6833 = vpop.f32.mrf.mxu0
        %v6834 = vadd.f32 0.0, %v6833
        %v6835 = vpop.f32.mrf.mxu0
        %v6836 = vpop.f32.mrf.mxu0
        %v6837 = vadd.f32 0.0, %v6836
        %v6838 = vpop.f32.mrf.mxu0
        %6839 = vdwg.mxu0
        %v6840 = vld [vmem:[%s734] sm:$0x1]
        %v6842 = vlaneseq
        %v6843 = vshrl.u32 %v6842, 7
        %v6844 = vsub.s32 0, %v6843
        %v6845 = vrot.slane %v6840, %v6844
        %v6847 = vmul.f32 %v6714, %v6845
        %v6848 = vmul.f32 %v6717, %v6845
        %v6849 = vmul.f32 %v6722, %v6845
        %v6850 = vmul.f32 %v6725, %v6845
        %v6851 = vmul.f32 %v6730, %v6845
        %v6852 = vmul.f32 %v6733, %v6845
        %v6853 = vmul.f32 %v6738, %v6845
        %v6854 = vmul.f32 %v6741, %v6845
        %v6855 = vmul.f32 %v6746, %v6845
        %v6856 = vmul.f32 %v6749, %v6845
        %v6857 = vmul.f32 %v6754, %v6845
        %v6858 = vmul.f32 %v6757, %v6845
        %v6859 = vmul.f32 %v6762, %v6845
        %v6860 = vmul.f32 %v6765, %v6845
        %v6861 = vmul.f32 %v6770, %v6845
        %v6862 = vmul.f32 %v6773, %v6845
        %v6863 = vmul.f32 %v6778, %v6845
        %v6864 = vmul.f32 %v6781, %v6845
        %v6865 = vmul.f32 %v6786, %v6845
        %v6866 = vmul.f32 %v6789, %v6845
        %v6867 = vmul.f32 %v6794, %v6845
        %v6868 = vmul.f32 %v6797, %v6845
        %v6869 = vmul.f32 %v6802, %v6845
        %v6870 = vmul.f32 %v6805, %v6845
        %v6871 = vmul.f32 %v6810, %v6845
        %v6872 = vmul.f32 %v6813, %v6845
        %v6873 = vmul.f32 %v6818, %v6845
        %v6874 = vmul.f32 %v6821, %v6845
        %v6875 = vmul.f32 %v6826, %v6845
        %v6876 = vmul.f32 %v6829, %v6845
        %v6877 = vmul.f32 %v6834, %v6845
        %v6878 = vmul.f32 %v6837, %v6845
        %v6879 = vld [vmem:[%s737] sm:$0x1]
        %v6881 = vlaneseq
        %v6882 = vshrl.u32 %v6881, 7
        %v6883 = vsub.s32 0, %v6882
        %v6884 = vrot.slane %v6879, %v6883
        %v6886 = vadd.f32 %v6847, %v6884
        %v6887 = vadd.f32 %v6848, %v6884
        %v6888 = vadd.f32 %v6849, %v6884
        %v6889 = vadd.f32 %v6850, %v6884
        %v6890 = vadd.f32 %v6851, %v6884
        %v6891 = vadd.f32 %v6852, %v6884
        %v6892 = vadd.f32 %v6853, %v6884
        %v6893 = vadd.f32 %v6854, %v6884
        %v6894 = vadd.f32 %v6855, %v6884
        %v6895 = vadd.f32 %v6856, %v6884
        %v6896 = vadd.f32 %v6857, %v6884
        %v6897 = vadd.f32 %v6858, %v6884
        %v6898 = vadd.f32 %v6859, %v6884
        %v6899 = vadd.f32 %v6860, %v6884
        %v6900 = vadd.f32 %v6861, %v6884
        %v6901 = vadd.f32 %v6862, %v6884
        %v6902 = vadd.f32 %v6863, %v6884
        %v6903 = vadd.f32 %v6864, %v6884
        %v6904 = vadd.f32 %v6865, %v6884
        %v6905 = vadd.f32 %v6866, %v6884
        %v6906 = vadd.f32 %v6867, %v6884
        %v6907 = vadd.f32 %v6868, %v6884
        %v6908 = vadd.f32 %v6869, %v6884
        %v6909 = vadd.f32 %v6870, %v6884
        %v6910 = vadd.f32 %v6871, %v6884
        %v6911 = vadd.f32 %v6872, %v6884
        %v6912 = vadd.f32 %v6873, %v6884
        %v6913 = vadd.f32 %v6874, %v6884
        %v6914 = vadd.f32 %v6875, %v6884
        %v6915 = vadd.f32 %v6876, %v6884
        %v6916 = vadd.f32 %v6877, %v6884
        %v6917 = vadd.f32 %v6878, %v6884
        %v6918 = vsel %vm1005, %v6886, 0.0
        %v6919 = vsel %vm1005, %v6887, 0.0
        %v6920 = vadd.f32 %v6918, %v6919
        %v6921 = vsel %vm1005, %v6888, 0.0
        %v6922 = vadd.f32 %v6920, %v6921
        %v6923 = vsel %vm1005, %v6889, 0.0
        %v6924 = vadd.f32 %v6922, %v6923
        %v6925 = vsel %vm1005, %v6890, 0.0
        %v6926 = vadd.f32 %v6924, %v6925
        %v6927 = vsel %vm1005, %v6891, 0.0
        %v6928 = vadd.f32 %v6926, %v6927
        %v6929 = vsel %vm1005, %v6892, 0.0
        %v6930 = vadd.f32 %v6928, %v6929
        %v6931 = vsel %vm1005, %v6893, 0.0
        %v6932 = vadd.f32 %v6930, %v6931
        %v6933 = vsel %vm1005, %v6894, 0.0
        %v6934 = vadd.f32 %v6932, %v6933
        %v6935 = vsel %vm1005, %v6895, 0.0
        %v6936 = vadd.f32 %v6934, %v6935
        %v6937 = vsel %vm1005, %v6896, 0.0
        %v6938 = vadd.f32 %v6936, %v6937
        %v6939 = vsel %vm1005, %v6897, 0.0
        %v6940 = vadd.f32 %v6938, %v6939
        %v6941 = vsel %vm1005, %v6898, 0.0
        %v6942 = vadd.f32 %v6940, %v6941
        %v6943 = vsel %vm1005, %v6899, 0.0
        %v6944 = vadd.f32 %v6942, %v6943
        %v6945 = vsel %vm1005, %v6900, 0.0
        %v6946 = vadd.f32 %v6944, %v6945
        %v6947 = vsel %vm1005, %v6901, 0.0
        %v6948 = vadd.f32 %v6946, %v6947
        %v6949 = vsel %vm1005, %v6902, 0.0
        %v6950 = vadd.f32 %v6948, %v6949
        %v6951 = vsel %vm1005, %v6903, 0.0
        %v6952 = vadd.f32 %v6950, %v6951
        %v6953 = vsel %vm1005, %v6904, 0.0
        %v6954 = vadd.f32 %v6952, %v6953
        %v6955 = vsel %vm1005, %v6905, 0.0
        %v6956 = vadd.f32 %v6954, %v6955
        %v6957 = vsel %vm1005, %v6906, 0.0
        %v6958 = vadd.f32 %v6956, %v6957
        %v6959 = vsel %vm1005, %v6907, 0.0
        %v6960 = vadd.f32 %v6958, %v6959
        %v6961 = vsel %vm1005, %v6908, 0.0
        %v6962 = vadd.f32 %v6960, %v6961
        %v6963 = vsel %vm1005, %v6909, 0.0
        %v6964 = vadd.f32 %v6962, %v6963
        %v6965 = vsel %vm1005, %v6910, 0.0
        %v6966 = vadd.f32 %v6964, %v6965
        %v6967 = vsel %vm1005, %v6911, 0.0
        %v6968 = vadd.f32 %v6966, %v6967
        %v6969 = vsel %vm1005, %v6912, 0.0
        %v6970 = vadd.f32 %v6968, %v6969
        %v6971 = vsel %vm1005, %v6913, 0.0
        %v6972 = vadd.f32 %v6970, %v6971
        %v6973 = vsel %vm1005, %v6914, 0.0
        %v6974 = vadd.f32 %v6972, %v6973
        %v6975 = vsel %vm1005, %v6915, 0.0
        %v6976 = vadd.f32 %v6974, %v6975
        %v6977 = vsel %vm1005, %v6916, 0.0
        %v6978 = vadd.f32 %v6976, %v6977
        %v6979 = vsel %vm1005, %v6917, 0.0
        %v6980 = vadd.f32 %v6978, %v6979
        %v6981 = vrot.slane %v6980, 4
        %v6982 = vadd.f32 %v6980, %v6981
        %v6983 = vrot.slane %v6982, 2
        %v6984 = vadd.f32 %v6982, %v6983
        %v6985 = vrot.slane %v6984, 1
        %v6986 = vadd.f32 %v6984, %v6985
        %v6987 = vrcp.pop 256.0
        %v6988 = vmul.f32 %v6986, %v6987
        %v6989 = vpack.c.bf16 %v6988, %v6988
        %v6990 = vld [vmem:[%s715] sm:$0xf]
        %v6991 = vld [vmem:[%s715 + $0x4] sm:$0xf]
        %v6992 = vld [vmem:[%s715 + $0x8] sm:$0xf]
        %v6993 = vld [vmem:[%s715 + $0xc] sm:$0xf]
        %v6994 = vld [vmem:[%s715 + $0x10] sm:$0xf]
        %v6995 = vld [vmem:[%s715 + $0x14] sm:$0xf]
        %v6996 = vld [vmem:[%s715 + $0x18] sm:$0xf]
        %v6997 = vld [vmem:[%s715 + $0x1c] sm:$0xf]
        %v7006 = vunpack.c.l.b16 %v6990
        %v7007 = vunpack.c.l.b16 %v6991
        %v7008 = vunpack.c.l.b16 %v6992
        %v7009 = vunpack.c.l.b16 %v6993
        %v7010 = vunpack.c.l.b16 %v6994
        %v7011 = vunpack.c.l.b16 %v6995
        %v7012 = vunpack.c.l.b16 %v6996
        %v7013 = vunpack.c.l.b16 %v6997
        %v7014 = vpack.c.b16 %v7007, %v7006
        %v7015 = vpack.c.b16 %v7009, %v7008
        %v7016 = vpack.c.b16 %v7011, %v7010
        %v7017 = vpack.c.b16 %v7013, %v7012
        %v7023 = vsel %vm1005, %v6989, 0
        %7025 = vmatprep.subr.bf16.mxu0 0
        %7026 = vmatpush1.bf16.msra.mxu0 0
        %7027 = vmatprep.subr.bf16.mxu0 0
        %7028 = vmatpush1.bf16.msra.mxu0 0
        %7029 = vmatprep.subr.bf16.mxu0 0
        %7030 = vmatpush1.bf16.msra.mxu0 0
        %7031 = vmatprep.subr.bf16.mxu0 0
        %7032 = vmatpush1.bf16.msra.mxu0 0
        %7033 = vmatprep.subr.bf16.mxu0 0
        %7034 = vmatpush1.bf16.msra.mxu0 %v7017
        %7035 = vmatprep.subr.bf16.mxu0 0
        %7036 = vmatpush1.bf16.msra.mxu0 %v7016
        %7037 = vmatprep.subr.bf16.mxu0 0
        %7038 = vmatpush1.bf16.msra.mxu0 %v7015
        %7039 = vmatprep.subr.bf16.mxu0 0
        %7040 = vmatpush1.bf16.msra.mxu0 %v7014
        %7041 = vmatprep.subr.bf16.mxu0 0
        %7042 = vmatpush2.bf16.msra.mxu0 0
        %7043 = vmatprep.subr.bf16.mxu0 0
        %7044 = vmatpush2.bf16.msra.mxu0 0
        %7045 = vmatprep.subr.bf16.mxu0 0
        %7046 = vmatpush2.bf16.msra.mxu0 0
        %7047 = vmatprep.subr.bf16.mxu0 0
        %7048 = vmatpush2.bf16.msra.mxu0 0
        %7049 = vmatprep.subr.bf16.mxu0 0
        %7050 = vmatpush2.bf16.msra.mxu0 0
        %7051 = vmatprep.subr.bf16.mxu0 0
        %7052 = vmatpush2.bf16.msra.mxu0 0
        %7053 = vmatprep.subr.bf16.mxu0 0
        %7054 = vmatpush2.bf16.msra.mxu0 0
        %7055 = vmatprep.subr.bf16.mxu0 0
        %7056 = vmatpush2.bf16.msra.mxu0 0
        %7057 = vmatprep.mubr.bf16.mxu0 0
        %7058 = vmatmul.mubr.bf16.gmra.mxu0 %v7023
        %v7059 = vpop.f32.mrf.mxu0
        %v7060 = vadd.f32 0.0, %v7059
        %v7061 = vpop.f32.mrf.mxu0
        %v7062 = vpop.f32.mrf.mxu0
        %v7063 = vpop.f32.mrf.mxu0
        %7064 = vdwg.mxu0
        %v7065 = vmax.f32 %v7060, 0.0
        %v7066 = vpack.c.bf16 %v7065, %v7065
        %v7067 = vld [vmem:[%s719] sm:$0x3]
        %vm7068 = vcmask 31744
        %v7070 = vsel %vm7068, %v7066, 0
        %vm7072 = vcmask 1041408
        %v7074 = vsel %vm7072, %v7067, 0
        %7076 = vmatprep.subr.bf16.mxu0 0
        %7077 = vmatpush1.bf16.msra.mxu0 0
        %7078 = vmatprep.subr.bf16.mxu0 0
        %7079 = vmatpush1.bf16.msra.mxu0 0
        %7080 = vmatprep.subr.bf16.mxu0 0
        %7081 = vmatpush1.bf16.msra.mxu0 0
        %7082 = vmatprep.subr.bf16.mxu0 0
        %7083 = vmatpush1.bf16.msra.mxu0 0
        %7084 = vmatprep.subr.bf16.mxu0 0
        %7085 = vmatpush1.bf16.msra.mxu0 0
        %7086 = vmatprep.subr.bf16.mxu0 0
        %7087 = vmatpush1.bf16.msra.mxu0 0
        %7088 = vmatprep.subr.bf16.mxu0 0
        %7089 = vmatpush1.bf16.msra.mxu0 0
        %7090 = vmatprep.subr.bf16.mxu0 0
        %7091 = vmatpush1.bf16.msra.mxu0 %v7074
        %7092 = vmatprep.subr.bf16.mxu0 0
        %7093 = vmatpush2.bf16.msra.mxu0 0
        %7094 = vmatprep.subr.bf16.mxu0 0
        %7095 = vmatpush2.bf16.msra.mxu0 0
        %7096 = vmatprep.subr.bf16.mxu0 0
        %7097 = vmatpush2.bf16.msra.mxu0 0
        %7098 = vmatprep.subr.bf16.mxu0 0
        %7099 = vmatpush2.bf16.msra.mxu0 0
        %7100 = vmatprep.subr.bf16.mxu0 0
        %7101 = vmatpush2.bf16.msra.mxu0 0
        %7102 = vmatprep.subr.bf16.mxu0 0
        %7103 = vmatpush2.bf16.msra.mxu0 0
        %7104 = vmatprep.subr.bf16.mxu0 0
        %7105 = vmatpush2.bf16.msra.mxu0 0
        %7106 = vmatprep.subr.bf16.mxu0 0
        %7107 = vmatpush2.bf16.msra.mxu0 0
        %7108 = vmatprep.mubr.bf16.mxu0 0
        %7109 = vmatmul.mubr.bf16.gmra.mxu0 %v7070
        %v7110 = vpop.f32.mrf.mxu0
        %v7111 = vadd.f32 0.0, %v7110
        %v7112 = vpop.f32.mrf.mxu0
        %v7113 = vpop.f32.mrf.mxu0
        %v7114 = vpop.f32.mrf.mxu0
        %7115 = vdwg.mxu0
        %v7116 = vxor.u32 %v7111, 2147483648
        %v7117 = vmul.f32 %v7116, 1.442695
        %v7118 = vpow.pop %v7117
        %v7119 = vadd.f32 %v7118, 1.0
        %v7120 = vrcp.pop %v7119
        %v7121 = vmul.f32 1.0, %v7120
        %v7122 = vld [vmem:[%s743] sm:$0x1]
        %v7124 = vlaneseq
        %v7125 = vshrl.u32 %v7124, 7
        %v7126 = vsub.s32 0, %v7125
        %v7127 = vrot.slane %v7122, %v7126
        %7128 = vset.pattern.permute.xlu0 0
        %7129 = vperm.xlu0 %7128, %v7127
        %v7130 = vpop.permute.xlu0 %7129
        %v7132 = vmul.f32 %v7130, %v1224
        %v7133 = vmul.f32 %v7130, %v1225
        %v7134 = vmul.f32 %v7130, %v1226
        %v7135 = vmul.f32 %v7130, %v1227
        %v7136 = vmul.f32 %v7130, %v1228
        %v7137 = vmul.f32 %v7130, %v1229
        %v7138 = vmul.f32 %v7130, %v1230
        %v7139 = vmul.f32 %v7130, %v1231
        %v7140 = vmul.f32 %v7130, %v1232
        %v7141 = vmul.f32 %v7130, %v1233
        %v7142 = vmul.f32 %v7130, %v1234
        %v7143 = vmul.f32 %v7130, %v1235
        %v7144 = vmul.f32 %v7130, %v1236
        %v7145 = vmul.f32 %v7130, %v1237
        %v7146 = vmul.f32 %v7130, %v1238
        %v7147 = vmul.f32 %v7130, %v1239
        %v7148 = vmul.f32 %v7130, %v1240
        %v7149 = vmul.f32 %v7130, %v1241
        %v7150 = vmul.f32 %v7130, %v1242
        %v7151 = vmul.f32 %v7130, %v1243
        %v7152 = vmul.f32 %v7130, %v1244
        %v7153 = vmul.f32 %v7130, %v1245
        %v7154 = vmul.f32 %v7130, %v1246
        %v7155 = vmul.f32 %v7130, %v1247
        %v7156 = vmul.f32 %v7130, %v1248
        %v7157 = vmul.f32 %v7130, %v1249
        %v7158 = vmul.f32 %v7130, %v1250
        %v7159 = vmul.f32 %v7130, %v1251
        %v7160 = vmul.f32 %v7130, %v1252
        %v7161 = vmul.f32 %v7130, %v1253
        %v7162 = vmul.f32 %v7130, %v1254
        %v7163 = vmul.f32 %v7130, %v1255
        %v7164 = vsub.f32 1.0, %v7122
        %v7166 = vlaneseq
        %v7167 = vshrl.u32 %v7166, 7
        %v7168 = vsub.s32 0, %v7167
        %v7169 = vrot.slane %v7164, %v7168
        %7170 = vset.pattern.permute.xlu0 0
        %7171 = vperm.xlu0 %7170, %v7169
        %v7172 = vpop.permute.xlu0 %7171
        %v7174 = vmul.f32 %v7172, %v925
        %v7175 = vmul.f32 %v7172, %v926
        %v7176 = vmul.f32 %v7172, %v927
        %v7177 = vmul.f32 %v7172, %v928
        %v7178 = vmul.f32 %v7172, %v929
        %v7179 = vmul.f32 %v7172, %v930
        %v7180 = vmul.f32 %v7172, %v931
        %v7181 = vmul.f32 %v7172, %v932
        %v7182 = vmul.f32 %v7172, %v933
        %v7183 = vmul.f32 %v7172, %v934
        %v7184 = vmul.f32 %v7172, %v935
        %v7185 = vmul.f32 %v7172, %v936
        %v7186 = vmul.f32 %v7172, %v937
        %v7187 = vmul.f32 %v7172, %v938
        %v7188 = vmul.f32 %v7172, %v939
        %v7189 = vmul.f32 %v7172, %v940
        %v7190 = vmul.f32 %v7172, %v941
        %v7191 = vmul.f32 %v7172, %v942
        %v7192 = vmul.f32 %v7172, %v943
        %v7193 = vmul.f32 %v7172, %v944
        %v7194 = vmul.f32 %v7172, %v945
        %v7195 = vmul.f32 %v7172, %v946
        %v7196 = vmul.f32 %v7172, %v947
        %v7197 = vmul.f32 %v7172, %v948
        %v7198 = vmul.f32 %v7172, %v949
        %v7199 = vmul.f32 %v7172, %v950
        %v7200 = vmul.f32 %v7172, %v951
        %v7201 = vmul.f32 %v7172, %v952
        %v7202 = vmul.f32 %v7172, %v953
        %v7203 = vmul.f32 %v7172, %v954
        %v7204 = vmul.f32 %v7172, %v955
        %v7205 = vmul.f32 %v7172, %v956
        %7238 = vrot.lane.b32.xlu0 %v7174, 16
        %v7239 = vpop.permute.xlu0 %7238
        %7240 = vrot.lane.b32.xlu0 %v7175, 16
        %v7241 = vpop.permute.xlu0 %7240
        %7242 = vrot.lane.b32.xlu0 %v7176, 16
        %v7243 = vpop.permute.xlu0 %7242
        %7244 = vrot.lane.b32.xlu0 %v7177, 16
        %v7245 = vpop.permute.xlu0 %7244
        %7246 = vrot.lane.b32.xlu0 %v7178, 16
        %v7247 = vpop.permute.xlu0 %7246
        %7248 = vrot.lane.b32.xlu0 %v7179, 16
        %v7249 = vpop.permute.xlu0 %7248
        %7250 = vrot.lane.b32.xlu0 %v7180, 16
        %v7251 = vpop.permute.xlu0 %7250
        %7252 = vrot.lane.b32.xlu0 %v7181, 16
        %v7253 = vpop.permute.xlu0 %7252
        %7254 = vrot.lane.b32.xlu0 %v7182, 16
        %v7255 = vpop.permute.xlu0 %7254
        %7256 = vrot.lane.b32.xlu0 %v7183, 16
        %v7257 = vpop.permute.xlu0 %7256
        %7258 = vrot.lane.b32.xlu0 %v7184, 16
        %v7259 = vpop.permute.xlu0 %7258
        %7260 = vrot.lane.b32.xlu0 %v7185, 16
        %v7261 = vpop.permute.xlu0 %7260
        %7262 = vrot.lane.b32.xlu0 %v7186, 16
        %v7263 = vpop.permute.xlu0 %7262
        %7264 = vrot.lane.b32.xlu0 %v7187, 16
        %v7265 = vpop.permute.xlu0 %7264
        %7266 = vrot.lane.b32.xlu0 %v7188, 16
        %v7267 = vpop.permute.xlu0 %7266
        %7268 = vrot.lane.b32.xlu0 %v7189, 16
        %v7269 = vpop.permute.xlu0 %7268
        %7270 = vrot.lane.b32.xlu0 %v7190, 16
        %v7271 = vpop.permute.xlu0 %7270
        %7272 = vrot.lane.b32.xlu0 %v7191, 16
        %v7273 = vpop.permute.xlu0 %7272
        %7274 = vrot.lane.b32.xlu0 %v7192, 16
        %v7275 = vpop.permute.xlu0 %7274
        %7276 = vrot.lane.b32.xlu0 %v7193, 16
        %v7277 = vpop.permute.xlu0 %7276
        %7278 = vrot.lane.b32.xlu0 %v7194, 16
        %v7279 = vpop.permute.xlu0 %7278
        %7280 = vrot.lane.b32.xlu0 %v7195, 16
        %v7281 = vpop.permute.xlu0 %7280
        %7282 = vrot.lane.b32.xlu0 %v7196, 16
        %v7283 = vpop.permute.xlu0 %7282
        %7284 = vrot.lane.b32.xlu0 %v7197, 16
        %v7285 = vpop.permute.xlu0 %7284
        %7286 = vrot.lane.b32.xlu0 %v7198, 16
        %v7287 = vpop.permute.xlu0 %7286
        %7288 = vrot.lane.b32.xlu0 %v7199, 16
        %v7289 = vpop.permute.xlu0 %7288
        %7290 = vrot.lane.b32.xlu0 %v7200, 16
        %v7291 = vpop.permute.xlu0 %7290
        %7292 = vrot.lane.b32.xlu0 %v7201, 16
        %v7293 = vpop.permute.xlu0 %7292
        %7294 = vrot.lane.b32.xlu0 %v7202, 16
        %v7295 = vpop.permute.xlu0 %7294
        %7296 = vrot.lane.b32.xlu0 %v7203, 16
        %v7297 = vpop.permute.xlu0 %7296
        %7298 = vrot.lane.b32.xlu0 %v7204, 16
        %v7299 = vpop.permute.xlu0 %7298
        %7300 = vrot.lane.b32.xlu0 %v7205, 16
        %v7301 = vpop.permute.xlu0 %7300
        %v7334 = vadd.f32 %v7132, %v7239
        %v7335 = vadd.f32 %v7133, %v7241
        %v7336 = vadd.f32 %v7134, %v7243
        %v7337 = vadd.f32 %v7135, %v7245
        %v7338 = vadd.f32 %v7136, %v7247
        %v7339 = vadd.f32 %v7137, %v7249
        %v7340 = vadd.f32 %v7138, %v7251
        %v7341 = vadd.f32 %v7139, %v7253
        %v7342 = vadd.f32 %v7140, %v7255
        %v7343 = vadd.f32 %v7141, %v7257
        %v7344 = vadd.f32 %v7142, %v7259
        %v7345 = vadd.f32 %v7143, %v7261
        %v7346 = vadd.f32 %v7144, %v7263
        %v7347 = vadd.f32 %v7145, %v7265
        %v7348 = vadd.f32 %v7146, %v7267
        %v7349 = vadd.f32 %v7147, %v7269
        %v7350 = vadd.f32 %v7148, %v7271
        %v7351 = vadd.f32 %v7149, %v7273
        %v7352 = vadd.f32 %v7150, %v7275
        %v7353 = vadd.f32 %v7151, %v7277
        %v7354 = vadd.f32 %v7152, %v7279
        %v7355 = vadd.f32 %v7153, %v7281
        %v7356 = vadd.f32 %v7154, %v7283
        %v7357 = vadd.f32 %v7155, %v7285
        %v7358 = vadd.f32 %v7156, %v7287
        %v7359 = vadd.f32 %v7157, %v7289
        %v7360 = vadd.f32 %v7158, %v7291
        %v7361 = vadd.f32 %v7159, %v7293
        %v7362 = vadd.f32 %v7160, %v7295
        %v7363 = vadd.f32 %v7161, %v7297
        %v7364 = vadd.f32 %v7162, %v7299
        %v7365 = vadd.f32 %v7163, %v7301
        %v7366 = vlaneseq
        %v7367 = vshrl.u32 %v7366, 7
        %v7368 = vsub.s32 0, %v7367
        %v7369 = vrot.slane %v7121, %v7368
        %v7370 = vmul.f32 %v6886, %v7369
        %v7371 = vmul.f32 %v6887, %v7369
        %v7372 = vmul.f32 %v6888, %v7369
        %v7373 = vmul.f32 %v6889, %v7369
        %v7374 = vmul.f32 %v6890, %v7369
        %v7375 = vmul.f32 %v6891, %v7369
        %v7376 = vmul.f32 %v6892, %v7369
        %v7377 = vmul.f32 %v6893, %v7369
        %v7378 = vmul.f32 %v6894, %v7369
        %v7379 = vmul.f32 %v6895, %v7369
        %v7380 = vmul.f32 %v6896, %v7369
        %v7381 = vmul.f32 %v6897, %v7369
        %v7382 = vmul.f32 %v6898, %v7369
        %v7383 = vmul.f32 %v6899, %v7369
        %v7384 = vmul.f32 %v6900, %v7369
        %v7385 = vmul.f32 %v6901, %v7369
        %v7386 = vmul.f32 %v6902, %v7369
        %v7387 = vmul.f32 %v6903, %v7369
        %v7388 = vmul.f32 %v6904, %v7369
        %v7389 = vmul.f32 %v6905, %v7369
        %v7390 = vmul.f32 %v6906, %v7369
        %v7391 = vmul.f32 %v6907, %v7369
        %v7392 = vmul.f32 %v6908, %v7369
        %v7393 = vmul.f32 %v6909, %v7369
        %v7394 = vmul.f32 %v6910, %v7369
        %v7395 = vmul.f32 %v6911, %v7369
        %v7396 = vmul.f32 %v6912, %v7369
        %v7397 = vmul.f32 %v6913, %v7369
        %v7398 = vmul.f32 %v6914, %v7369
        %v7399 = vmul.f32 %v6915, %v7369
        %v7400 = vmul.f32 %v6916, %v7369
        %v7401 = vmul.f32 %v6917, %v7369
        %7434 = vrot.lane.b32.xlu0 %v7334, 112
        %v7435 = vpop.permute.xlu0 %7434
        %7436 = vrot.lane.b32.xlu0 %v7335, 112
        %v7437 = vpop.permute.xlu0 %7436
        %7438 = vrot.lane.b32.xlu0 %v7336, 112
        %v7439 = vpop.permute.xlu0 %7438
        %7440 = vrot.lane.b32.xlu0 %v7337, 112
        %v7441 = vpop.permute.xlu0 %7440
        %7442 = vrot.lane.b32.xlu0 %v7338, 112
        %v7443 = vpop.permute.xlu0 %7442
        %7444 = vrot.lane.b32.xlu0 %v7339, 112
        %v7445 = vpop.permute.xlu0 %7444
        %7446 = vrot.lane.b32.xlu0 %v7340, 112
        %v7447 = vpop.permute.xlu0 %7446
        %7448 = vrot.lane.b32.xlu0 %v7341, 112
        %v7449 = vpop.permute.xlu0 %7448
        %7450 = vrot.lane.b32.xlu0 %v7342, 112
        %v7451 = vpop.permute.xlu0 %7450
        %7452 = vrot.lane.b32.xlu0 %v7343, 112
        %v7453 = vpop.permute.xlu0 %7452
        %7454 = vrot.lane.b32.xlu0 %v7344, 112
        %v7455 = vpop.permute.xlu0 %7454
        %7456 = vrot.lane.b32.xlu0 %v7345, 112
        %v7457 = vpop.permute.xlu0 %7456
        %7458 = vrot.lane.b32.xlu0 %v7346, 112
        %v7459 = vpop.permute.xlu0 %7458
        %7460 = vrot.lane.b32.xlu0 %v7347, 112
        %v7461 = vpop.permute.xlu0 %7460
        %7462 = vrot.lane.b32.xlu0 %v7348, 112
        %v7463 = vpop.permute.xlu0 %7462
        %7464 = vrot.lane.b32.xlu0 %v7349, 112
        %v7465 = vpop.permute.xlu0 %7464
        %7466 = vrot.lane.b32.xlu0 %v7350, 112
        %v7467 = vpop.permute.xlu0 %7466
        %7468 = vrot.lane.b32.xlu0 %v7351, 112
        %v7469 = vpop.permute.xlu0 %7468
        %7470 = vrot.lane.b32.xlu0 %v7352, 112
        %v7471 = vpop.permute.xlu0 %7470
        %7472 = vrot.lane.b32.xlu0 %v7353, 112
        %v7473 = vpop.permute.xlu0 %7472
        %7474 = vrot.lane.b32.xlu0 %v7354, 112
        %v7475 = vpop.permute.xlu0 %7474
        %7476 = vrot.lane.b32.xlu0 %v7355, 112
        %v7477 = vpop.permute.xlu0 %7476
        %7478 = vrot.lane.b32.xlu0 %v7356, 112
        %v7479 = vpop.permute.xlu0 %7478
        %7480 = vrot.lane.b32.xlu0 %v7357, 112
        %v7481 = vpop.permute.xlu0 %7480
        %7482 = vrot.lane.b32.xlu0 %v7358, 112
        %v7483 = vpop.permute.xlu0 %7482
        %7484 = vrot.lane.b32.xlu0 %v7359, 112
        %v7485 = vpop.permute.xlu0 %7484
        %7486 = vrot.lane.b32.xlu0 %v7360, 112
        %v7487 = vpop.permute.xlu0 %7486
        %7488 = vrot.lane.b32.xlu0 %v7361, 112
        %v7489 = vpop.permute.xlu0 %7488
        %7490 = vrot.lane.b32.xlu0 %v7362, 112
        %v7491 = vpop.permute.xlu0 %7490
        %7492 = vrot.lane.b32.xlu0 %v7363, 112
        %v7493 = vpop.permute.xlu0 %7492
        %7494 = vrot.lane.b32.xlu0 %v7364, 112
        %v7495 = vpop.permute.xlu0 %7494
        %7496 = vrot.lane.b32.xlu0 %v7365, 112
        %v7497 = vpop.permute.xlu0 %7496
        %v7530 = vadd.f32 %v7370, %v7435
        %v7531 = vadd.f32 %v7371, %v7437
        %v7532 = vadd.f32 %v7372, %v7439
        %v7533 = vadd.f32 %v7373, %v7441
        %v7534 = vadd.f32 %v7374, %v7443
        %v7535 = vadd.f32 %v7375, %v7445
        %v7536 = vadd.f32 %v7376, %v7447
        %v7537 = vadd.f32 %v7377, %v7449
        %v7538 = vadd.f32 %v7378, %v7451
        %v7539 = vadd.f32 %v7379, %v7453
        %v7540 = vadd.f32 %v7380, %v7455
        %v7541 = vadd.f32 %v7381, %v7457
        %v7542 = vadd.f32 %v7382, %v7459
        %v7543 = vadd.f32 %v7383, %v7461
        %v7544 = vadd.f32 %v7384, %v7463
        %v7545 = vadd.f32 %v7385, %v7465
        %v7546 = vadd.f32 %v7386, %v7467
        %v7547 = vadd.f32 %v7387, %v7469
        %v7548 = vadd.f32 %v7388, %v7471
        %v7549 = vadd.f32 %v7389, %v7473
        %v7550 = vadd.f32 %v7390, %v7475
        %v7551 = vadd.f32 %v7391, %v7477
        %v7552 = vadd.f32 %v7392, %v7479
        %v7553 = vadd.f32 %v7393, %v7481
        %v7554 = vadd.f32 %v7394, %v7483
        %v7555 = vadd.f32 %v7395, %v7485
        %v7556 = vadd.f32 %v7396, %v7487
        %v7557 = vadd.f32 %v7397, %v7489
        %v7558 = vadd.f32 %v7398, %v7491
        %v7559 = vadd.f32 %v7399, %v7493
        %v7560 = vadd.f32 %v7400, %v7495
        %v7561 = vadd.f32 %v7401, %v7497
        %v7562 = vmax.f32 %v7530, 0.0
        %v7563 = vmax.f32 %v7531, 0.0
        %v7564 = vmax.f32 %v7532, 0.0
        %v7565 = vmax.f32 %v7533, 0.0
        %v7566 = vmax.f32 %v7534, 0.0
        %v7567 = vmax.f32 %v7535, 0.0
        %v7568 = vmax.f32 %v7536, 0.0
        %v7569 = vmax.f32 %v7537, 0.0
        %v7570 = vmax.f32 %v7538, 0.0
        %v7571 = vmax.f32 %v7539, 0.0
        %v7572 = vmax.f32 %v7540, 0.0
        %v7573 = vmax.f32 %v7541, 0.0
        %v7574 = vmax.f32 %v7542, 0.0
        %v7575 = vmax.f32 %v7543, 0.0
        %v7576 = vmax.f32 %v7544, 0.0
        %v7577 = vmax.f32 %v7545, 0.0
        %v7578 = vmax.f32 %v7546, 0.0
        %v7579 = vmax.f32 %v7547, 0.0
        %v7580 = vmax.f32 %v7548, 0.0
        %v7581 = vmax.f32 %v7549, 0.0
        %v7582 = vmax.f32 %v7550, 0.0
        %v7583 = vmax.f32 %v7551, 0.0
        %v7584 = vmax.f32 %v7552, 0.0
        %v7585 = vmax.f32 %v7553, 0.0
        %v7586 = vmax.f32 %v7554, 0.0
        %v7587 = vmax.f32 %v7555, 0.0
        %v7588 = vmax.f32 %v7556, 0.0
        %v7589 = vmax.f32 %v7557, 0.0
        %v7590 = vmax.f32 %v7558, 0.0
        %v7591 = vmax.f32 %v7559, 0.0
        %v7592 = vmax.f32 %v7560, 0.0
        %v7593 = vmax.f32 %v7561, 0.0
        %p7594 = scmp.lt.s32.totalorder %s39, 1
        // Predicated region
        $region93: #{tpu_custom_call.1} parent=75 // pred_check
          %p7595 = pneg %p7594
        $region94: #{tpu_custom_call.1} parent=75 // pred_check_branch
          %7597 = sbr.rel (%p7595) target = $region96
        $region95: #{tpu_custom_call.1} parent=75 // pred_region
          %7598 = vst.msk [vmem:[#allocation2] sm:$0xff] %vm1005, %v7562
          %7599 = vst.msk [vmem:[#allocation2 + $0x8] sm:$0xff] %vm1005, %v7563
          %7600 = vst.msk [vmem:[#allocation2 + $0x10] sm:$0xff] %vm1005, %v7564
          %7601 = vst.msk [vmem:[#allocation2 + $0x18] sm:$0xff] %vm1005, %v7565
          %7602 = vst.msk [vmem:[#allocation2 + $0x20] sm:$0xff] %vm1005, %v7566
          %7603 = vst.msk [vmem:[#allocation2 + $0x28] sm:$0xff] %vm1005, %v7567
          %7604 = vst.msk [vmem:[#allocation2 + $0x30] sm:$0xff] %vm1005, %v7568
          %7605 = vst.msk [vmem:[#allocation2 + $0x38] sm:$0xff] %vm1005, %v7569
          %7606 = vst.msk [vmem:[#allocation2 + $0x40] sm:$0xff] %vm1005, %v7570
          %7607 = vst.msk [vmem:[#allocation2 + $0x48] sm:$0xff] %vm1005, %v7571
          %7608 = vst.msk [vmem:[#allocation2 + $0x50] sm:$0xff] %vm1005, %v7572
          %7609 = vst.msk [vmem:[#allocation2 + $0x58] sm:$0xff] %vm1005, %v7573
          %7610 = vst.msk [vmem:[#allocation2 + $0x60] sm:$0xff] %vm1005, %v7574
          %7611 = vst.msk [vmem:[#allocation2 + $0x68] sm:$0xff] %vm1005, %v7575
          %7612 = vst.msk [vmem:[#allocation2 + $0x70] sm:$0xff] %vm1005, %v7576
          %7613 = vst.msk [vmem:[#allocation2 + $0x78] sm:$0xff] %vm1005, %v7577
          %7614 = vst.msk [vmem:[#allocation2 + $0x80] sm:$0xff] %vm1005, %v7578
          %7615 = vst.msk [vmem:[#allocation2 + $0x88] sm:$0xff] %vm1005, %v7579
          %7616 = vst.msk [vmem:[#allocation2 + $0x90] sm:$0xff] %vm1005, %v7580
          %7617 = vst.msk [vmem:[#allocation2 + $0x98] sm:$0xff] %vm1005, %v7581
          %7618 = vst.msk [vmem:[#allocation2 + $0xa0] sm:$0xff] %vm1005, %v7582
          %7619 = vst.msk [vmem:[#allocation2 + $0xa8] sm:$0xff] %vm1005, %v7583
          %7620 = vst.msk [vmem:[#allocation2 + $0xb0] sm:$0xff] %vm1005, %v7584
          %7621 = vst.msk [vmem:[#allocation2 + $0xb8] sm:$0xff] %vm1005, %v7585
          %7622 = vst.msk [vmem:[#allocation2 + $0xc0] sm:$0xff] %vm1005, %v7586
          %7623 = vst.msk [vmem:[#allocation2 + $0xc8] sm:$0xff] %vm1005, %v7587
          %7624 = vst.msk [vmem:[#allocation2 + $0xd0] sm:$0xff] %vm1005, %v7588
          %7625 = vst.msk [vmem:[#allocation2 + $0xd8] sm:$0xff] %vm1005, %v7589
          %7626 = vst.msk [vmem:[#allocation2 + $0xe0] sm:$0xff] %vm1005, %v7590
          %7627 = vst.msk [vmem:[#allocation2 + $0xe8] sm:$0xff] %vm1005, %v7591
          %7628 = vst.msk [vmem:[#allocation2 + $0xf0] sm:$0xff] %vm1005, %v7592
          %7629 = vst.msk [vmem:[#allocation2 + $0xf8] sm:$0xff] %vm1005, %v7593
        $region96: #{tpu_custom_call.1} parent=75 // pred_fallthru
          _
        %p7630 = scmp.eq.s32.totalorder %s39, 1
        // Predicated region
        $region97: #{tpu_custom_call.1} parent=75 // pred_check
          %p7631 = pneg %p7630
        $region98: #{tpu_custom_call.1} parent=75 // pred_check_branch
          %7633 = sbr.rel (%p7631) target = $region100
        $region99: #{tpu_custom_call.1} parent=75 // pred_region
          %7634 = vst.msk [vmem:[%s705] sm:$0xff] %vm1005, %v7562
          %7635 = vst.msk [vmem:[%s705 + $0x8] sm:$0xff] %vm1005, %v7563
          %7636 = vst.msk [vmem:[%s705 + $0x10] sm:$0xff] %vm1005, %v7564
          %7637 = vst.msk [vmem:[%s705 + $0x18] sm:$0xff] %vm1005, %v7565
          %7638 = vst.msk [vmem:[%s705 + $0x20] sm:$0xff] %vm1005, %v7566
          %7639 = vst.msk [vmem:[%s705 + $0x28] sm:$0xff] %vm1005, %v7567
          %7640 = vst.msk [vmem:[%s705 + $0x30] sm:$0xff] %vm1005, %v7568
          %7641 = vst.msk [vmem:[%s705 + $0x38] sm:$0xff] %vm1005, %v7569
          %7642 = vst.msk [vmem:[%s705 + $0x40] sm:$0xff] %vm1005, %v7570
          %7643 = vst.msk [vmem:[%s705 + $0x48] sm:$0xff] %vm1005, %v7571
          %7644 = vst.msk [vmem:[%s705 + $0x50] sm:$0xff] %vm1005, %v7572
          %7645 = vst.msk [vmem:[%s705 + $0x58] sm:$0xff] %vm1005, %v7573
          %7646 = vst.msk [vmem:[%s705 + $0x60] sm:$0xff] %vm1005, %v7574
          %7647 = vst.msk [vmem:[%s705 + $0x68] sm:$0xff] %vm1005, %v7575
          %7648 = vst.msk [vmem:[%s705 + $0x70] sm:$0xff] %vm1005, %v7576
          %7649 = vst.msk [vmem:[%s705 + $0x78] sm:$0xff] %vm1005, %v7577
          %7650 = vst.msk [vmem:[%s705 + $0x80] sm:$0xff] %vm1005, %v7578
          %7651 = vst.msk [vmem:[%s705 + $0x88] sm:$0xff] %vm1005, %v7579
          %7652 = vst.msk [vmem:[%s705 + $0x90] sm:$0xff] %vm1005, %v7580
          %7653 = vst.msk [vmem:[%s705 + $0x98] sm:$0xff] %vm1005, %v7581
          %7654 = vst.msk [vmem:[%s705 + $0xa0] sm:$0xff] %vm1005, %v7582
          %7655 = vst.msk [vmem:[%s705 + $0xa8] sm:$0xff] %vm1005, %v7583
          %7656 = vst.msk [vmem:[%s705 + $0xb0] sm:$0xff] %vm1005, %v7584
          %7657 = vst.msk [vmem:[%s705 + $0xb8] sm:$0xff] %vm1005, %v7585
          %7658 = vst.msk [vmem:[%s705 + $0xc0] sm:$0xff] %vm1005, %v7586
          %7659 = vst.msk [vmem:[%s705 + $0xc8] sm:$0xff] %vm1005, %v7587
          %7660 = vst.msk [vmem:[%s705 + $0xd0] sm:$0xff] %vm1005, %v7588
          %7661 = vst.msk [vmem:[%s705 + $0xd8] sm:$0xff] %vm1005, %v7589
          %7662 = vst.msk [vmem:[%s705 + $0xe0] sm:$0xff] %vm1005, %v7590
          %7663 = vst.msk [vmem:[%s705 + $0xe8] sm:$0xff] %vm1005, %v7591
          %7664 = vst.msk [vmem:[%s705 + $0xf0] sm:$0xff] %vm1005, %v7592
          %7665 = vst.msk [vmem:[%s705 + $0xf8] sm:$0xff] %vm1005, %v7593
        $region100: #{tpu_custom_call.1} parent=75 // pred_fallthru
          _
        %s7666 = sand.u32 %s418, 1
        %s7667 = scalar_lea.sflag [#allocation6], %s7666
        %s7668 = sand.u32 %s418, 1
        %s7669 = smul.addr %s7668, 256
        %s7670 = scalar_lea.vmem [#allocation10], %s7669
        // Predicated region
        $region101: #{tpu_custom_call.1} parent=75 // pred_check
          %p7671 = pneg %p428
        $region102: #{tpu_custom_call.1} parent=75 // pred_check_branch
          %7673 = sbr.rel (%p7671) target = $region104
        $region103: #{tpu_custom_call.1} parent=75 // pred_region
          %s7675 = ssub.s32 4096, 4096
          %7676 = vsyncadd %s7667, %s7675
          %s7677 = smul.addr %s38, 32
          %s7678 = smul.addr %s7677, 128
          %s7679 = scalar_lea.hbm %s14, %s7678
          %s7680 = sshll.u32 %s7670, 4
          %s7681 = int_to_ptr.vmem [resolvable:$true] %s7680
          %7686 = dma.vmem_to_hbm [thread:$0]  %s7681, 4096, %s7679, %s7667, 128, 128, 8
        $region104: #{tpu_custom_call.1} parent=75 // pred_fallthru
          _
      $region76: #{tpu_custom_call.1} parent=5 // pred_fallthru
        _
      %p7687 = scmp.le.s32.totalorder 2, %s29
      // Predicated region
      $region105: #{tpu_custom_call.1} parent=5 // pred_check
        %p7688 = pneg %p7687
      $region106: #{tpu_custom_call.1} parent=5 // pred_check_branch
        %7690 = sbr.rel (%p7688) target = $region108
      $region107: #{tpu_custom_call.1} parent=5 // pred_region
        %s7691 = ssub.s32 %s29, 2
        // Predicated region
        $region109: #{tpu_custom_call.1} parent=107 // pred_check
          %p7692 = pneg %p434
        $region110: #{tpu_custom_call.1} parent=107 // pred_check_branch
          %7694 = sbr.rel (%p7692) target = $region112
        $region111: #{tpu_custom_call.1} parent=107 // pred_region
          %s7695 = sand.u32 %s419, 1
          %s7696 = scalar_lea.sflag [#allocation6], %s7695
          %s7697 = sand.u32 %s419, 1
          %s7698 = smul.addr %s7697, 256
          %s7699 = scalar_lea.vmem [#allocation10], %s7698
          %7700 = dma.done %s7696, 4096
        $region112: #{tpu_custom_call.1} parent=107 // pred_fallthru
          _
      $region108: #{tpu_custom_call.1} parent=5 // pred_fallthru
        _
    $region6: #{tpu_custom_call.1} parent=1 // loop_footer
      %s33 = sadd.s32 1, %s29
    $region7: #{tpu_custom_call.1} parent=1 // loop_footer_branch
      %28 = sbr.rel target = $region3
    $region8: #{tpu_custom_call.1} parent=1 // loop_exit
      _
    %7701 = vsyncpa [#allocation5], 1
    %s7702 = scalar_lea.sflag [#allocation5], 1
    %7703 = vsyncpa %s7702, 1
    %7704 = vsyncpa [#allocation8], 1
    %s7705 = scalar_lea.sflag [#allocation8], 1
    %7706 = vsyncpa %s7705, 1
    %7707 = vsyncpa [#allocation6], 1
    %s7708 = scalar_lea.sflag [#allocation6], 1
    %7709 = vsyncpa %s7708, 1

</llo_original>
